<compile_context>
chip_gen: v6e
topology: v6e:2x2x1
jax: 0.10.0
libtpu: 0.0.40
codegen_flags: <defaults>
</compile_context>

<pallas_src>
import jax
import jax.numpy as jnp
from jax.experimental import pallas as pl
from jax.experimental.pallas import tpu as pltpu

EPS = 1e-5  # torch.nn.GroupNorm default eps


# ---------------------------------------------------------------------------
# Kernel factory
# ---------------------------------------------------------------------------
def make_resnet_kernel(bB, H, W, Cin, Cout, G, has_cond, has_skip):
    n1 = float(H * W * (Cin // G))
    n2 = float(H * W * (Cout // G))
    f32, bf16 = jnp.float32, jnp.bfloat16

    def gn_silu(x3, gamma, beta, m, mt, n):
        """GroupNorm (affine) + SiLU on a (bB, H, W*C) slab; per-image f32 stats."""
        s = jnp.sum(x3, axis=1)                                    # (bB, W*C)
        ss = jnp.sum(x3 * x3, axis=1)                              # (bB, W*C)
        stats = jnp.concatenate([s, ss], axis=0)                   # (2bB, W*C)
        g = jnp.dot(stats, m, preferred_element_type=f32)          # one MXU call
        gmean = g[:bB] * (1.0 / n)                                 # (bB, G)
        gvar = jnp.maximum(g[bB:] * (1.0 / n) - gmean * gmean, 0.0)
        ginv = jax.lax.rsqrt(gvar + EPS)
        lane = jnp.dot(jnp.concatenate([gmean, ginv], axis=0), mt,
                       preferred_element_type=f32)                 # one MXU call, (2bB, W*C)
        scale = lane[bB:] * gamma                                  # inv_std * gamma
        shift = beta - lane[:bB] * scale
        y = x3 * scale[:, None, :] + shift[:, None, :]             # single FMA pass
        return y * jax.nn.sigmoid(y)                               # SiLU

    def conv3x3(y3, t_ref):
        """3x3 'same' conv via 3 block-Toeplitz matmuls with M = bB*H rows."""
        WCi = y3.shape[-1]
        WCo = t_ref.shape[-1]
        yb = y3.astype(bf16)                                       # single cast (hoisted)
        zrow = jnp.zeros((bB, 1, WCi), bf16)
        y_m1 = jnp.concatenate([zrow, yb[:, :H - 1, :]], axis=1)   # row h holds y[h-1]
        y_p1 = jnp.concatenate([yb[:, 1:, :], zrow], axis=1)       # row h holds y[h+1]
        M = bB * H
        acc = jnp.dot(y_m1.reshape(M, WCi), t_ref[0], preferred_element_type=f32)
        acc = acc + jnp.dot(yb.reshape(M, WCi), t_ref[1], preferred_element_type=f32)
        acc = acc + jnp.dot(y_p1.reshape(M, WCi), t_ref[2], preferred_element_type=f32)
        return acc.reshape(bB, H, WCo)

    def kernel(*refs):
        refs = list(refs)
        pop = lambda: refs.pop(0)
        x_ref = pop()
        c_ref = pop() if has_cond else None
        g1, b1, m1, m1t, t1, bias1 = pop(), pop(), pop(), pop(), pop(), pop()
        cw = pop() if has_cond else None
        ct = pop() if has_cond else None
        g2, b2, m2, m2t, t2, bias2 = pop(), pop(), pop(), pop(), pop(), pop()
        sw = pop() if has_skip else None
        sb = pop() if has_skip else None
        o_ref = pop()

        # --- net1: GroupNorm -> SiLU -> Conv3x3 (+bias) (+cond projection) ---
        y1 = gn_silu(x_ref[...], g1[...], b1[...], m1[...], m1t[...], n1)
        h = conv3x3(y1, t1) + bias1[...]
        if has_cond:
            proj = jnp.dot(c_ref[...], cw[...], preferred_element_type=f32)   # (bB, Cout)
            wide = jnp.dot(proj, ct[...], preferred_element_type=f32)         # (bB, W*Cout)
            h = h + wide[:, None, :]

        # --- net2: GroupNorm -> SiLU -> Dropout(p=0: identity) -> Conv3x3 (+bias) ---
        # TODO(synk): nn.Dropout with p>0 in training mode is not implemented.
        y2 = gn_silu(h, g2[...], b2[...], m2[...], m2t[...], n2)
        h = conv3x3(y2, t2) + bias2[...]

        # --- skip (1x1 conv / identity) + residual; re-read x_ref here so the f32
        #     input slab isn't kept live across both GN+conv stages. ---
        xe = x_ref[...]
        if has_skip:
            skip = (jnp.dot(xe.reshape(bB * H, xe.shape[-1]).astype(bf16), sw[...],
                            preferred_element_type=f32).reshape(bB, H, -1)
                    + sb[...])
        else:
            skip = xe                                              # exact f32 residual
        o_ref[...] = h + skip

    return kernel


# ---------------------------------------------------------------------------
# Wrapper-side weight plumbing (done ONCE per parameter set, outside the kernel)
# ---------------------------------------------------------------------------
def _toeplitz3x3(w, W):
    """(3,3,Ci,Co) HWIO kernel -> (3, W*Ci, W*Co) block-Toeplitz (zero-padded conv)."""
    _, _, Ci, Co = w.shape
    kx = jnp.arange(3)[:, None, None]
    wi = jnp.arange(W)[None, :, None]
    wo = jnp.arange(W)[None, None, :]
    sel = (wi == wo + kx - 1).astype(w.dtype)                      # (3, W, W)
    t = jnp.einsum('xab,yxco->yacbo', sel, w)                      # (3, W, Ci, W, Co)
    return t.reshape(3, W * Ci, W * Co)


def _blockdiag1x1(w, W):
    """(Ci,Co) 1x1-conv weight -> (W*Ci, W*Co) block-diagonal matrix."""
    Ci, Co = w.shape
    return jnp.einsum('ab,co->acbo', jnp.eye(W, dtype=w.dtype), w).reshape(W * Ci, W * Co)


def _group_onehot(C, G, W):
    """(W*C, G) one-hot: lane w*C + c belongs to group c // (C//G)."""
    lane_c = jnp.arange(W * C) % C
    return (lane_c[:, None] // (C // G) == jnp.arange(G)[None, :]).astype(jnp.float32)


def _chan_tile_onehot(C, W):
    """(C, W*C) one-hot: output lane w*C + c picks channel c (lane-tiling matmul)."""
    lane_c = jnp.arange(W * C) % C
    return (jnp.arange(C)[:, None] == lane_c[None, :]).astype(jnp.float32)


def prepare_params(params, W, norm_groups):
    """Build kernel-ready constant buffers (Toeplitz conv weights, one-hots, lane-tiled
    per-channel vectors).  Call once and reuse across forward calls."""
    f32, bf16 = jnp.float32, jnp.bfloat16
    Cin = params["gn1_gamma"].shape[0]
    Cout = params["conv1_w"].shape[-1]
    G = norm_groups
    has_cond = "cond_w" in params
    has_skip = "skip_w" in params

    def lane_tile(v):                       # (C,) -> (1, W*C) matching the lane layout
        return jnp.tile(v.astype(f32), W)[None, :]

    prep = {
        "g1": lane_tile(params["gn1_gamma"]),
        "b1": lane_tile(params["gn1_beta"]),
        "m1": _group_onehot(Cin, G, W),
        "t1": _toeplitz3x3(params["conv1_w"], W).astype(bf16),
        "bias1": lane_tile(params["conv1_b"]),
        "g2": lane_tile(params["gn2_gamma"]),
        "b2": lane_tile(params["gn2_beta"]),
        "m2": _group_onehot(Cout, G, W),
        "t2": _toeplitz3x3(params["conv2_w"], W).astype(bf16),
        "bias2": lane_tile(params["conv2_b"]),
    }
    prep["m1t"] = prep["m1"].T
    prep["m2t"] = prep["m2"].T
    if has_cond:
        prep["cond_w"] = params["cond_w"].astype(f32)              # untiled (D, Cout)
        prep["cond_tile"] = _chan_tile_onehot(Cout, W)             # (Cout, W*Cout)
    if has_skip:
        prep["skip_w"] = _blockdiag1x1(params["skip_w"], W).astype(bf16)
        prep["skip_b"] = lane_tile(params["skip_b"])

    meta = dict(W=W, Cin=Cin, Cout=Cout, G=G, has_cond=has_cond, has_skip=has_skip)
    return prep, meta


def _pick_batch_tile(B, H, target_m=256):
    """Images per grid step: raise MXU M = bB*H toward ~256, but keep >= 2 'parallel'
    grid steps (v7x megacore) whenever that still leaves M >= 128."""
    bB = max(1, min(B, max(1, target_m // max(H, 1))))
    while B % bB:
        bB -= 1
    if B // bB < 2 and B > 1 and (bB // 2) * H >= 128:
        bB = max(1, bB // 2)
        while B % bB:
            bB -= 1
    return bB


def resnet_block_forward_lane_dense(prep, meta, x_lane, condition=None, *, batch_tile=None):
    """Fused ResnetBlock forward on lane-dense activations.

    x_lane: (B, H, W*Cin) float32   ->   (B, H, W*Cout) float32
    Assumes W*Cin and W*Cout are multiples of 128 (lane-dense, unmasked stores).
    """
    f32 = jnp.float32
    x_lane = x_lane.astype(f32)
    B, H, WCi = x_lane.shape
    W, Cin, Cout, G = meta["W"], meta["Cin"], meta["Cout"], meta["G"]
    has_cond, has_skip = meta["has_cond"], meta["has_skip"]
    assert WCi == W * Cin
    assert (condition is not None) == has_cond
    WCo = W * Cout

    bB = batch_tile if batch_tile is not None else _pick_batch_tile(B, H)
    assert B % bB == 0

    const_keys = (["g1", "b1", "m1", "m1t", "t1", "bias1"]
                  + (["cond_w", "cond_tile"] if has_cond else [])
                  + ["g2", "b2", "m2", "m2t", "t2", "bias2"]
                  + (["skip_w", "skip_b"] if has_skip else []))

    buffered_cls = getattr(pl, "Buffered", None)

    def build_and_call(single_buffer_consts):
        args = [x_lane]
        in_specs = [pl.BlockSpec((bB, H, WCi), lambda b: (b, 0, 0))]
        if has_cond:
            D = condition.shape[1]
            args.append(condition.astype(f32))
            in_specs.append(pl.BlockSpec((bB, D), lambda b: (b, 0)))
        for k in const_keys:
            a = prep[k]
            idx = lambda b, _n=a.ndim: (0,) * _n
            if single_buffer_consts and buffered_cls is not None:
                # Constant-index weight blocks: single buffer (no pointless
                # double-buffering of weights -> VMEM headroom, esp. on v7x).
                spec = pl.BlockSpec(a.shape, idx, pipeline_mode=buffered_cls(1))
            else:
                spec = pl.BlockSpec(a.shape, idx)
            args.append(a)
            in_specs.append(spec)

        kernel = make_resnet_kernel(bB, H, W, Cin, Cout, G, has_cond, has_skip)
        return pl.pallas_call(
            kernel,
            out_shape=jax.ShapeDtypeStruct((B, H, WCo), f32),
            grid=(B // bB,),
            in_specs=in_specs,
            out_specs=pl.BlockSpec((bB, H, WCo), lambda b: (b, 0, 0)),
            compiler_params=pltpu.CompilerParams(
                dimension_semantics=("parallel",)),
        )(*args)

    try:
        return build_and_call(True)
    except Exception:
        # Fallback for JAX builds where pipeline_mode=Buffered(1) is unsupported on
        # the main pallas_call pipeline; semantics identical, just default buffering.
        return build_and_call(False)


def resnet_block_forward(params, x_nchw, condition, *, norm_groups, batch_tile=None):
    """NCHW compatibility wrapper (PyTorch layout).  A model that keeps activations in
    lane-dense (B, H, W*C) layout should call resnet_block_forward_lane_dense directly
    and skip these two transposes entirely."""
    B, Cin, H, W = x_nchw.shape
    prep, meta = prepare_params(params, W, norm_groups)
    x_lane = jnp.transpose(x_nchw, (0, 2, 3, 1)).reshape(B, H, W * Cin).astype(jnp.float32)
    out = resnet_block_forward_lane_dense(prep, meta, x_lane, condition,
                                          batch_tile=batch_tile)
    Cout = meta["Cout"]
    return jnp.transpose(out.reshape(B, H, W, Cout), (0, 3, 1, 2))   # -> NCHW


# ---------------------------------------------------------------------------
# Pure-JAX f32 reference (torch semantics) + param init
# ---------------------------------------------------------------------------
def resnet_block_ref(params, x_nchw, condition, *, norm_groups):
    x = jnp.transpose(x_nchw, (0, 2, 3, 1))

    def gn(z, g, b, G):
        Bz, Hz, Wz, C = z.shape
        zg = z.reshape(Bz, Hz, Wz, G, C // G)
        m = zg.mean(axis=(1, 2, 4), keepdims=True)
        v = zg.var(axis=(1, 2, 4), keepdims=True)
        zn = ((zg - m) / jnp.sqrt(v + EPS)).reshape(Bz, Hz, Wz, C)
        return zn * g.reshape(1, 1, 1, C) + b.reshape(1, 1, 1, C)

    def silu(z):
        return z * jax.nn.sigmoid(z)

    def conv(z, w, b):
        return jax.lax.conv_general_dilated(
            z, w, (1, 1), "SAME", dimension_numbers=("NHWC", "HWIO", "NHWC")) + b

    h = conv(silu(gn(x, params["gn1_gamma"], params["gn1_beta"], norm_groups)),
             params["conv1_w"], params["conv1_b"])
    if condition is not None:
        h = h + (condition @ params["cond_w"])[:, None, None, :]
    h = conv(silu(gn(h, params["gn2_gamma"], params["gn2_beta"], norm_groups)),
             params["conv2_w"], params["conv2_b"])
    if x.shape[-1] != h.shape[-1]:
        skip_w = params["skip_w"].reshape(1, 1, *params["skip_w"].shape)
        x = conv(x, skip_w, params["skip_b"])
    return jnp.transpose(x + h, (0, 3, 1, 2))


def init_params(key, ch_in, ch_out, condition_dim):
    ks = jax.random.split(key, 11)
    f32 = jnp.float32
    p = {
        "gn1_gamma": 1.0 + 0.1 * jax.random.normal(ks[0], (ch_in,), f32),
        "gn1_beta": 0.1 * jax.random.normal(ks[1], (ch_in,), f32),
        "conv1_w": 0.1 * jax.random.normal(ks[2], (3, 3, ch_in, ch_out), f32),
        "conv1_b": 0.1 * jax.random.normal(ks[3], (ch_out,), f32),
        "gn2_gamma": 1.0 + 0.1 * jax.random.normal(ks[4], (ch_out,), f32),
        "gn2_beta": 0.1 * jax.random.normal(ks[5], (ch_out,), f32),
        # torch zero-inits conv2 / cond_proj; random here so kernels do real work
        "conv2_w": 0.1 * jax.random.normal(ks[6], (3, 3, ch_out, ch_out), f32),
        "conv2_b": 0.1 * jax.random.normal(ks[7], (ch_out,), f32),
    }
    if condition_dim is not None:
        p["cond_w"] = 0.1 * jax.random.normal(ks[8], (condition_dim, ch_out), f32)
    if ch_in != ch_out:
        p["skip_w"] = 0.1 * jax.random.normal(ks[9], (ch_in, ch_out), f32)
        p["skip_b"] = 0.1 * jax.random.normal(ks[10], (ch_out,), f32)
    return p


if __name__ == "__main__":
    key = jax.random.PRNGKey(0)
    kx, kc, kp1, kp2, kx2 = jax.random.split(key, 5)

    ATOL = RTOL = 5e-2  # bf16 MXU operands vs f32 reference

    # Config A: ch_in != ch_out, with conditioning (skip 1x1 conv + cond proj fused).
    # Batch tile chosen automatically -> all 4 images stacked into one M=64 block.
    B, C_IN, C_OUT, H, W, G, COND = 4, 8, 16, 16, 16, 4, 8
    x = jax.random.normal(kx, (B, C_IN, H, W), jnp.float32)        # NCHW like PyTorch
    cond = jax.random.normal(kc, (B, COND), jnp.float32)
    params_a = init_params(kp1, C_IN, C_OUT, COND)

    out_a = jax.block_until_ready(resnet_block_forward(params_a, x, cond, norm_groups=G))
    ref_a = resnet_block_ref(params_a, x, cond, norm_groups=G)
    assert out_a.shape == (B, C_OUT, H, W)
    assert jnp.allclose(out_a, ref_a, atol=ATOL, rtol=RTOL)

    # Config B: ch_out=None (== ch_in), condition=None; explicit batch_tile=2 to also
    # exercise a multi-step "parallel" grid (2 blocks of 2 images).
    params_b = init_params(kp2, C_OUT, C_OUT, None)
    x_b = jax.random.normal(kx2, (B, C_OUT, H, W), jnp.float32)
    out_b = jax.block_until_ready(
        resnet_block_forward(params_b, x_b, None, norm_groups=G, batch_tile=2))
    ref_b = resnet_block_ref(params_b, x_b, None, norm_groups=G)
    assert out_b.shape == (B, C_OUT, H, W)
    assert jnp.allclose(out_b, ref_b, atol=ATOL, rtol=RTOL)

    print("KERNEL_OK")
</pallas_src>

<mosaic_0001>
module attributes {stable_mosaic.version = 11 : i64} {
  func.func @kernel(%arg0: i32, %arg1: memref<4x16x128xf32, #tpu.memory_space<vmem>>, %arg2: memref<4x8xf32, #tpu.memory_space<vmem>>, %arg3: memref<1x128xf32, #tpu.memory_space<vmem>>, %arg4: memref<1x128xf32, #tpu.memory_space<vmem>>, %arg5: memref<128x4xf32, #tpu.memory_space<vmem>>, %arg6: memref<4x128xf32, #tpu.memory_space<vmem>>, %arg7: memref<3x128x256xbf16, #tpu.memory_space<vmem>>, %arg8: memref<1x256xf32, #tpu.memory_space<vmem>>, %arg9: memref<8x16xf32, #tpu.memory_space<vmem>>, %arg10: memref<16x256xf32, #tpu.memory_space<vmem>>, %arg11: memref<1x256xf32, #tpu.memory_space<vmem>>, %arg12: memref<1x256xf32, #tpu.memory_space<vmem>>, %arg13: memref<256x4xf32, #tpu.memory_space<vmem>>, %arg14: memref<4x256xf32, #tpu.memory_space<vmem>>, %arg15: memref<3x256x256xbf16, #tpu.memory_space<vmem>>, %arg16: memref<1x256xf32, #tpu.memory_space<vmem>>, %arg17: memref<128x256xbf16, #tpu.memory_space<vmem>>, %arg18: memref<1x256xf32, #tpu.memory_space<vmem>>, %arg19: memref<4x16x256xf32, #tpu.memory_space<vmem>>) attributes {dimension_semantics = [#tpu.dimension_semantics<parallel>], iteration_bounds = array<i64: 1>, scalar_prefetch = 0 : i64, scratch_operands = 0 : i64, tpu.core_type = #tpu.core_type<tc>, window_params = [{transform_indices = @transform_0, window_bounds = array<i64: 4, 16, 128>}, {transform_indices = @transform_1, window_bounds = array<i64: 4, 8>}, {pipeline_mode = #tpu.pipeline_mode<synchronous>, transform_indices = @transform_2, window_bounds = array<i64: 1, 128>}, {pipeline_mode = #tpu.pipeline_mode<synchronous>, transform_indices = @transform_3, window_bounds = array<i64: 1, 128>}, {pipeline_mode = #tpu.pipeline_mode<synchronous>, transform_indices = @transform_4, window_bounds = array<i64: 128, 4>}, {pipeline_mode = #tpu.pipeline_mode<synchronous>, transform_indices = @transform_5, window_bounds = array<i64: 4, 128>}, {pipeline_mode = #tpu.pipeline_mode<synchronous>, transform_indices = @transform_6, window_bounds = array<i64: 3, 128, 256>}, {pipeline_mode = #tpu.pipeline_mode<synchronous>, transform_indices = @transform_7, window_bounds = array<i64: 1, 256>}, {pipeline_mode = #tpu.pipeline_mode<synchronous>, transform_indices = @transform_8, window_bounds = array<i64: 8, 16>}, {pipeline_mode = #tpu.pipeline_mode<synchronous>, transform_indices = @transform_9, window_bounds = array<i64: 16, 256>}, {pipeline_mode = #tpu.pipeline_mode<synchronous>, transform_indices = @transform_10, window_bounds = array<i64: 1, 256>}, {pipeline_mode = #tpu.pipeline_mode<synchronous>, transform_indices = @transform_11, window_bounds = array<i64: 1, 256>}, {pipeline_mode = #tpu.pipeline_mode<synchronous>, transform_indices = @transform_12, window_bounds = array<i64: 256, 4>}, {pipeline_mode = #tpu.pipeline_mode<synchronous>, transform_indices = @transform_13, window_bounds = array<i64: 4, 256>}, {pipeline_mode = #tpu.pipeline_mode<synchronous>, transform_indices = @transform_14, window_bounds = array<i64: 3, 256, 256>}, {pipeline_mode = #tpu.pipeline_mode<synchronous>, transform_indices = @transform_15, window_bounds = array<i64: 1, 256>}, {pipeline_mode = #tpu.pipeline_mode<synchronous>, transform_indices = @transform_16, window_bounds = array<i64: 128, 256>}, {pipeline_mode = #tpu.pipeline_mode<synchronous>, transform_indices = @transform_17, window_bounds = array<i64: 1, 256>}, {transform_indices = @transform_18, window_bounds = array<i64: 4, 16, 256>}]} {
    %c0 = arith.constant 0 : index
    %c0_0 = arith.constant 0 : index
    %c0_1 = arith.constant 0 : index
    %0 = vector.load %arg1[%c0, %c0_0, %c0_1] : memref<4x16x128xf32, #tpu.memory_space<vmem>>, vector<4x16x128xf32>
    %c0_2 = arith.constant 0 : index
    %c0_3 = arith.constant 0 : index
    %1 = vector.load %arg3[%c0_2, %c0_3] : memref<1x128xf32, #tpu.memory_space<vmem>>, vector<1x128xf32>
    %c0_4 = arith.constant 0 : index
    %c0_5 = arith.constant 0 : index
    %2 = vector.load %arg4[%c0_4, %c0_5] : memref<1x128xf32, #tpu.memory_space<vmem>>, vector<1x128xf32>
    %c0_6 = arith.constant 0 : index
    %c0_7 = arith.constant 0 : index
    %3 = vector.load %arg5[%c0_6, %c0_7] : memref<128x4xf32, #tpu.memory_space<vmem>>, vector<128x4xf32>
    %c0_8 = arith.constant 0 : index
    %c0_9 = arith.constant 0 : index
    %4 = vector.load %arg6[%c0_8, %c0_9] : memref<4x128xf32, #tpu.memory_space<vmem>>, vector<4x128xf32>
    %cst = arith.constant dense<0.000000e+00> : vector<4x128xf32>
    %5 = vector.multi_reduction <add>, %0, %cst [1] : vector<4x16x128xf32> to vector<4x128xf32>
    %6 = arith.mulf %0, %0 : vector<4x16x128xf32>
    %cst_10 = arith.constant dense<0.000000e+00> : vector<4x128xf32>
    %7 = vector.multi_reduction <add>, %6, %cst_10 [1] : vector<4x16x128xf32> to vector<4x128xf32>
    %8 = tpu.concatenate %5, %7 in 0 : vector<4x128xf32>, vector<4x128xf32> -> vector<8x128xf32>
    %cst_11 = arith.constant dense<0.000000e+00> : vector<8x4xf32>
    %9 = tpu.matmul %8, %3, %cst_11 {dimension_numbers = #tpu.dot_dimension_numbers<[1], [0], [0], [1], [0, 0, 1, 1], [], []>} : vector<8x128xf32>, vector<128x4xf32>, vector<8x4xf32> -> vector<8x4xf32>
    %10 = vector.extract_strided_slice %9 {offsets = [0, 0], sizes = [4, 4], strides = [1, 1]} : vector<8x4xf32> to vector<4x4xf32>
    %cst_12 = arith.constant 0.001953125 : f32
    %11 = vector.broadcast %cst_12 : f32 to vector<4x4xf32>
    %12 = arith.mulf %10, %11 : vector<4x4xf32>
    %13 = vector.extract_strided_slice %9 {offsets = [4, 0], sizes = [4, 4], strides = [1, 1]} : vector<8x4xf32> to vector<4x4xf32>
    %cst_13 = arith.constant 0.001953125 : f32
    %14 = vector.broadcast %cst_13 : f32 to vector<4x4xf32>
    %15 = arith.mulf %13, %14 : vector<4x4xf32>
    %16 = arith.mulf %12, %12 : vector<4x4xf32>
    %17 = arith.subf %15, %16 : vector<4x4xf32>
    %cst_14 = arith.constant 0.000000e+00 : f32
    %18 = vector.broadcast %cst_14 : f32 to vector<4x4xf32>
    %19 = arith.maximumf %17, %18 : vector<4x4xf32>
    %cst_15 = arith.constant 9.99999974E-6 : f32
    %20 = vector.broadcast %cst_15 : f32 to vector<4x4xf32>
    %21 = arith.addf %19, %20 : vector<4x4xf32>
    %22 = math.rsqrt %21 : vector<4x4xf32>
    %23 = tpu.concatenate %12, %22 in 0 : vector<4x4xf32>, vector<4x4xf32> -> vector<8x4xf32>
    %cst_16 = arith.constant dense<0.000000e+00> : vector<8x128xf32>
    %24 = tpu.matmul %23, %4, %cst_16 {dimension_numbers = #tpu.dot_dimension_numbers<[1], [0], [0], [1], [0, 0, 1, 1], [], []>} : vector<8x4xf32>, vector<4x128xf32>, vector<8x128xf32> -> vector<8x128xf32>
    %25 = vector.extract_strided_slice %24 {offsets = [4, 0], sizes = [4, 128], strides = [1, 1]} : vector<8x128xf32> to vector<4x128xf32>
    %26 = vector.broadcast %1 : vector<1x128xf32> to vector<4x128xf32>
    %27 = arith.mulf %25, %26 : vector<4x128xf32>
    %28 = vector.extract_strided_slice %24 {offsets = [0, 0], sizes = [4, 128], strides = [1, 1]} : vector<8x128xf32> to vector<4x128xf32>
    %29 = arith.mulf %28, %27 : vector<4x128xf32>
    %30 = vector.broadcast %2 : vector<1x128xf32> to vector<4x128xf32>
    %31 = arith.subf %30, %29 : vector<4x128xf32>
    %32 = vector.shape_cast %27 : vector<4x128xf32> to vector<4x1x128xf32>
    %33 = vector.broadcast %32 : vector<4x1x128xf32> to vector<4x16x128xf32>
    %34 = arith.mulf %0, %33 : vector<4x16x128xf32>
    %35 = vector.shape_cast %31 : vector<4x128xf32> to vector<4x1x128xf32>
    %36 = vector.broadcast %35 : vector<4x1x128xf32> to vector<4x16x128xf32>
    %37 = arith.addf %34, %36 : vector<4x16x128xf32>
    %38 = arith.negf %37 : vector<4x16x128xf32>
    %39 = math.exp %38 : vector<4x16x128xf32>
    %cst_17 = arith.constant 1.000000e+00 : f32
    %40 = vector.broadcast %cst_17 : f32 to vector<4x16x128xf32>
    %41 = arith.addf %40, %39 : vector<4x16x128xf32>
    %42 = arith.divf %40, %41 : vector<4x16x128xf32>
    %43 = arith.mulf %37, %42 : vector<4x16x128xf32>
    %44 = arith.truncf %43 : vector<4x16x128xf32> to vector<4x16x128xbf16>
    %cst_18 = arith.constant 0.000000e+00 : bf16
    %45 = vector.broadcast %cst_18 : bf16 to vector<4x1x128xbf16>
    %46 = vector.extract_strided_slice %44 {offsets = [0, 0, 0], sizes = [4, 15, 128], strides = [1, 1, 1]} : vector<4x16x128xbf16> to vector<4x15x128xbf16>
    %47 = tpu.concatenate %45, %46 in 1 : vector<4x1x128xbf16>, vector<4x15x128xbf16> -> vector<4x16x128xbf16>
    %48 = vector.extract_strided_slice %44 {offsets = [0, 1, 0], sizes = [4, 15, 128], strides = [1, 1, 1]} : vector<4x16x128xbf16> to vector<4x15x128xbf16>
    %49 = tpu.concatenate %48, %45 in 1 : vector<4x15x128xbf16>, vector<4x1x128xbf16> -> vector<4x16x128xbf16>
    %50 = vector.shape_cast %47 : vector<4x16x128xbf16> to vector<64x128xbf16>
    %c0_19 = arith.constant 0 : index
    %c0_20 = arith.constant 0 : index
    %c0_21 = arith.constant 0 : index
    %51 = vector.load %arg7[%c0_19, %c0_20, %c0_21] : memref<3x128x256xbf16, #tpu.memory_space<vmem>>, vector<1x128x256xbf16>
    %52 = vector.shape_cast %51 : vector<1x128x256xbf16> to vector<128x256xbf16>
    %cst_22 = arith.constant dense<0.000000e+00> : vector<64x256xf32>
    %53 = tpu.matmul %50, %52, %cst_22 {dimension_numbers = #tpu.dot_dimension_numbers<[1], [0], [0], [1], [0, 0, 1, 1], [], []>} : vector<64x128xbf16>, vector<128x256xbf16>, vector<64x256xf32> -> vector<64x256xf32>
    %54 = vector.shape_cast %44 : vector<4x16x128xbf16> to vector<64x128xbf16>
    %c1 = arith.constant 1 : index
    %c0_23 = arith.constant 0 : index
    %c0_24 = arith.constant 0 : index
    %55 = vector.load %arg7[%c1, %c0_23, %c0_24] : memref<3x128x256xbf16, #tpu.memory_space<vmem>>, vector<1x128x256xbf16>
    %56 = vector.shape_cast %55 : vector<1x128x256xbf16> to vector<128x256xbf16>
    %cst_25 = arith.constant dense<0.000000e+00> : vector<64x256xf32>
    %57 = tpu.matmul %54, %56, %cst_25 {dimension_numbers = #tpu.dot_dimension_numbers<[1], [0], [0], [1], [0, 0, 1, 1], [], []>} : vector<64x128xbf16>, vector<128x256xbf16>, vector<64x256xf32> -> vector<64x256xf32>
    %58 = arith.addf %53, %57 : vector<64x256xf32>
    %59 = vector.shape_cast %49 : vector<4x16x128xbf16> to vector<64x128xbf16>
    %c2 = arith.constant 2 : index
    %c0_26 = arith.constant 0 : index
    %c0_27 = arith.constant 0 : index
    %60 = vector.load %arg7[%c2, %c0_26, %c0_27] : memref<3x128x256xbf16, #tpu.memory_space<vmem>>, vector<1x128x256xbf16>
    %61 = vector.shape_cast %60 : vector<1x128x256xbf16> to vector<128x256xbf16>
    %cst_28 = arith.constant dense<0.000000e+00> : vector<64x256xf32>
    %62 = tpu.matmul %59, %61, %cst_28 {dimension_numbers = #tpu.dot_dimension_numbers<[1], [0], [0], [1], [0, 0, 1, 1], [], []>} : vector<64x128xbf16>, vector<128x256xbf16>, vector<64x256xf32> -> vector<64x256xf32>
    %63 = arith.addf %58, %62 : vector<64x256xf32>
    %64 = vector.shape_cast %63 : vector<64x256xf32> to vector<4x16x256xf32>
    %c0_29 = arith.constant 0 : index
    %c0_30 = arith.constant 0 : index
    %65 = vector.load %arg8[%c0_29, %c0_30] : memref<1x256xf32, #tpu.memory_space<vmem>>, vector<1x256xf32>
    %66 = vector.shape_cast %65 : vector<1x256xf32> to vector<1x1x256xf32>
    %67 = vector.broadcast %66 : vector<1x1x256xf32> to vector<4x16x256xf32>
    %68 = arith.addf %64, %67 : vector<4x16x256xf32>
    %c0_31 = arith.constant 0 : index
    %c0_32 = arith.constant 0 : index
    %69 = vector.load %arg2[%c0_31, %c0_32] : memref<4x8xf32, #tpu.memory_space<vmem>>, vector<4x8xf32>
    %c0_33 = arith.constant 0 : index
    %c0_34 = arith.constant 0 : index
    %70 = vector.load %arg9[%c0_33, %c0_34] : memref<8x16xf32, #tpu.memory_space<vmem>>, vector<8x16xf32>
    %cst_35 = arith.constant dense<0.000000e+00> : vector<4x16xf32>
    %71 = tpu.matmul %69, %70, %cst_35 {dimension_numbers = #tpu.dot_dimension_numbers<[1], [0], [0], [1], [0, 0, 1, 1], [], []>} : vector<4x8xf32>, vector<8x16xf32>, vector<4x16xf32> -> vector<4x16xf32>
    %c0_36 = arith.constant 0 : index
    %c0_37 = arith.constant 0 : index
    %72 = vector.load %arg10[%c0_36, %c0_37] : memref<16x256xf32, #tpu.memory_space<vmem>>, vector<16x256xf32>
    %cst_38 = arith.constant dense<0.000000e+00> : vector<4x256xf32>
    %73 = tpu.matmul %71, %72, %cst_38 {dimension_numbers = #tpu.dot_dimension_numbers<[1], [0], [0], [1], [0, 0, 1, 1], [], []>} : vector<4x16xf32>, vector<16x256xf32>, vector<4x256xf32> -> vector<4x256xf32>
    %74 = vector.shape_cast %73 : vector<4x256xf32> to vector<4x1x256xf32>
    %75 = vector.broadcast %74 : vector<4x1x256xf32> to vector<4x16x256xf32>
    %76 = arith.addf %68, %75 : vector<4x16x256xf32>
    %c0_39 = arith.constant 0 : index
    %c0_40 = arith.constant 0 : index
    %77 = vector.load %arg11[%c0_39, %c0_40] : memref<1x256xf32, #tpu.memory_space<vmem>>, vector<1x256xf32>
    %c0_41 = arith.constant 0 : index
    %c0_42 = arith.constant 0 : index
    %78 = vector.load %arg12[%c0_41, %c0_42] : memref<1x256xf32, #tpu.memory_space<vmem>>, vector<1x256xf32>
    %c0_43 = arith.constant 0 : index
    %c0_44 = arith.constant 0 : index
    %79 = vector.load %arg13[%c0_43, %c0_44] : memref<256x4xf32, #tpu.memory_space<vmem>>, vector<256x4xf32>
    %c0_45 = arith.constant 0 : index
    %c0_46 = arith.constant 0 : index
    %80 = vector.load %arg14[%c0_45, %c0_46] : memref<4x256xf32, #tpu.memory_space<vmem>>, vector<4x256xf32>
    %cst_47 = arith.constant dense<0.000000e+00> : vector<4x256xf32>
    %81 = vector.multi_reduction <add>, %76, %cst_47 [1] : vector<4x16x256xf32> to vector<4x256xf32>
    %82 = arith.mulf %76, %76 : vector<4x16x256xf32>
    %cst_48 = arith.constant dense<0.000000e+00> : vector<4x256xf32>
    %83 = vector.multi_reduction <add>, %82, %cst_48 [1] : vector<4x16x256xf32> to vector<4x256xf32>
    %84 = tpu.concatenate %81, %83 in 0 : vector<4x256xf32>, vector<4x256xf32> -> vector<8x256xf32>
    %cst_49 = arith.constant dense<0.000000e+00> : vector<8x4xf32>
    %85 = tpu.matmul %84, %79, %cst_49 {dimension_numbers = #tpu.dot_dimension_numbers<[1], [0], [0], [1], [0, 0, 1, 1], [], []>} : vector<8x256xf32>, vector<256x4xf32>, vector<8x4xf32> -> vector<8x4xf32>
    %86 = vector.extract_strided_slice %85 {offsets = [0, 0], sizes = [4, 4], strides = [1, 1]} : vector<8x4xf32> to vector<4x4xf32>
    %cst_50 = arith.constant 9.765625E-4 : f32
    %87 = vector.broadcast %cst_50 : f32 to vector<4x4xf32>
    %88 = arith.mulf %86, %87 : vector<4x4xf32>
    %89 = vector.extract_strided_slice %85 {offsets = [4, 0], sizes = [4, 4], strides = [1, 1]} : vector<8x4xf32> to vector<4x4xf32>
    %cst_51 = arith.constant 9.765625E-4 : f32
    %90 = vector.broadcast %cst_51 : f32 to vector<4x4xf32>
    %91 = arith.mulf %89, %90 : vector<4x4xf32>
    %92 = arith.mulf %88, %88 : vector<4x4xf32>
    %93 = arith.subf %91, %92 : vector<4x4xf32>
    %cst_52 = arith.constant 0.000000e+00 : f32
    %94 = vector.broadcast %cst_52 : f32 to vector<4x4xf32>
    %95 = arith.maximumf %93, %94 : vector<4x4xf32>
    %cst_53 = arith.constant 9.99999974E-6 : f32
    %96 = vector.broadcast %cst_53 : f32 to vector<4x4xf32>
    %97 = arith.addf %95, %96 : vector<4x4xf32>
    %98 = math.rsqrt %97 : vector<4x4xf32>
    %99 = tpu.concatenate %88, %98 in 0 : vector<4x4xf32>, vector<4x4xf32> -> vector<8x4xf32>
    %cst_54 = arith.constant dense<0.000000e+00> : vector<8x256xf32>
    %100 = tpu.matmul %99, %80, %cst_54 {dimension_numbers = #tpu.dot_dimension_numbers<[1], [0], [0], [1], [0, 0, 1, 1], [], []>} : vector<8x4xf32>, vector<4x256xf32>, vector<8x256xf32> -> vector<8x256xf32>
    %101 = vector.extract_strided_slice %100 {offsets = [4, 0], sizes = [4, 256], strides = [1, 1]} : vector<8x256xf32> to vector<4x256xf32>
    %102 = vector.broadcast %77 : vector<1x256xf32> to vector<4x256xf32>
    %103 = arith.mulf %101, %102 : vector<4x256xf32>
    %104 = vector.extract_strided_slice %100 {offsets = [0, 0], sizes = [4, 256], strides = [1, 1]} : vector<8x256xf32> to vector<4x256xf32>
    %105 = arith.mulf %104, %103 : vector<4x256xf32>
    %106 = vector.broadcast %78 : vector<1x256xf32> to vector<4x256xf32>
    %107 = arith.subf %106, %105 : vector<4x256xf32>
    %108 = vector.shape_cast %103 : vector<4x256xf32> to vector<4x1x256xf32>
    %109 = vector.broadcast %108 : vector<4x1x256xf32> to vector<4x16x256xf32>
    %110 = arith.mulf %76, %109 : vector<4x16x256xf32>
    %111 = vector.shape_cast %107 : vector<4x256xf32> to vector<4x1x256xf32>
    %112 = vector.broadcast %111 : vector<4x1x256xf32> to vector<4x16x256xf32>
    %113 = arith.addf %110, %112 : vector<4x16x256xf32>
    %114 = arith.negf %113 : vector<4x16x256xf32>
    %115 = math.exp %114 : vector<4x16x256xf32>
    %cst_55 = arith.constant 1.000000e+00 : f32
    %116 = vector.broadcast %cst_55 : f32 to vector<4x16x256xf32>
    %117 = arith.addf %116, %115 : vector<4x16x256xf32>
    %118 = arith.divf %116, %117 : vector<4x16x256xf32>
    %119 = arith.mulf %113, %118 : vector<4x16x256xf32>
    %120 = arith.truncf %119 : vector<4x16x256xf32> to vector<4x16x256xbf16>
    %cst_56 = arith.constant 0.000000e+00 : bf16
    %121 = vector.broadcast %cst_56 : bf16 to vector<4x1x256xbf16>
    %122 = vector.extract_strided_slice %120 {offsets = [0, 0, 0], sizes = [4, 15, 256], strides = [1, 1, 1]} : vector<4x16x256xbf16> to vector<4x15x256xbf16>
    %123 = tpu.concatenate %121, %122 in 1 : vector<4x1x256xbf16>, vector<4x15x256xbf16> -> vector<4x16x256xbf16>
    %124 = vector.extract_strided_slice %120 {offsets = [0, 1, 0], sizes = [4, 15, 256], strides = [1, 1, 1]} : vector<4x16x256xbf16> to vector<4x15x256xbf16>
    %125 = tpu.concatenate %124, %121 in 1 : vector<4x15x256xbf16>, vector<4x1x256xbf16> -> vector<4x16x256xbf16>
    %126 = vector.shape_cast %123 : vector<4x16x256xbf16> to vector<64x256xbf16>
    %c0_57 = arith.constant 0 : index
    %c0_58 = arith.constant 0 : index
    %c0_59 = arith.constant 0 : index
    %127 = vector.load %arg15[%c0_57, %c0_58, %c0_59] : memref<3x256x256xbf16, #tpu.memory_space<vmem>>, vector<1x256x256xbf16>
    %128 = vector.shape_cast %127 : vector<1x256x256xbf16> to vector<256x256xbf16>
    %cst_60 = arith.constant dense<0.000000e+00> : vector<64x256xf32>
    %129 = tpu.matmul %126, %128, %cst_60 {dimension_numbers = #tpu.dot_dimension_numbers<[1], [0], [0], [1], [0, 0, 1, 1], [], []>} : vector<64x256xbf16>, vector<256x256xbf16>, vector<64x256xf32> -> vector<64x256xf32>
    %130 = vector.shape_cast %120 : vector<4x16x256xbf16> to vector<64x256xbf16>
    %c1_61 = arith.constant 1 : index
    %c0_62 = arith.constant 0 : index
    %c0_63 = arith.constant 0 : index
    %131 = vector.load %arg15[%c1_61, %c0_62, %c0_63] : memref<3x256x256xbf16, #tpu.memory_space<vmem>>, vector<1x256x256xbf16>
    %132 = vector.shape_cast %131 : vector<1x256x256xbf16> to vector<256x256xbf16>
    %cst_64 = arith.constant dense<0.000000e+00> : vector<64x256xf32>
    %133 = tpu.matmul %130, %132, %cst_64 {dimension_numbers = #tpu.dot_dimension_numbers<[1], [0], [0], [1], [0, 0, 1, 1], [], []>} : vector<64x256xbf16>, vector<256x256xbf16>, vector<64x256xf32> -> vector<64x256xf32>
    %134 = arith.addf %129, %133 : vector<64x256xf32>
    %135 = vector.shape_cast %125 : vector<4x16x256xbf16> to vector<64x256xbf16>
    %c2_65 = arith.constant 2 : index
    %c0_66 = arith.constant 0 : index
    %c0_67 = arith.constant 0 : index
    %136 = vector.load %arg15[%c2_65, %c0_66, %c0_67] : memref<3x256x256xbf16, #tpu.memory_space<vmem>>, vector<1x256x256xbf16>
    %137 = vector.shape_cast %136 : vector<1x256x256xbf16> to vector<256x256xbf16>
    %cst_68 = arith.constant dense<0.000000e+00> : vector<64x256xf32>
    %138 = tpu.matmul %135, %137, %cst_68 {dimension_numbers = #tpu.dot_dimension_numbers<[1], [0], [0], [1], [0, 0, 1, 1], [], []>} : vector<64x256xbf16>, vector<256x256xbf16>, vector<64x256xf32> -> vector<64x256xf32>
    %139 = arith.addf %134, %138 : vector<64x256xf32>
    %140 = vector.shape_cast %139 : vector<64x256xf32> to vector<4x16x256xf32>
    %c0_69 = arith.constant 0 : index
    %c0_70 = arith.constant 0 : index
    %141 = vector.load %arg16[%c0_69, %c0_70] : memref<1x256xf32, #tpu.memory_space<vmem>>, vector<1x256xf32>
    %142 = vector.shape_cast %141 : vector<1x256xf32> to vector<1x1x256xf32>
    %143 = vector.broadcast %142 : vector<1x1x256xf32> to vector<4x16x256xf32>
    %144 = arith.addf %140, %143 : vector<4x16x256xf32>
    %c0_71 = arith.constant 0 : index
    %c0_72 = arith.constant 0 : index
    %c0_73 = arith.constant 0 : index
    %145 = vector.load %arg1[%c0_71, %c0_72, %c0_73] : memref<4x16x128xf32, #tpu.memory_space<vmem>>, vector<4x16x128xf32>
    %146 = vector.shape_cast %145 : vector<4x16x128xf32> to vector<64x128xf32>
    %147 = arith.truncf %146 : vector<64x128xf32> to vector<64x128xbf16>
    %c0_74 = arith.constant 0 : index
    %c0_75 = arith.constant 0 : index
    %148 = vector.load %arg17[%c0_74, %c0_75] : memref<128x256xbf16, #tpu.memory_space<vmem>>, vector<128x256xbf16>
    %cst_76 = arith.constant dense<0.000000e+00> : vector<64x256xf32>
    %149 = tpu.matmul %147, %148, %cst_76 {dimension_numbers = #tpu.dot_dimension_numbers<[1], [0], [0], [1], [0, 0, 1, 1], [], []>} : vector<64x128xbf16>, vector<128x256xbf16>, vector<64x256xf32> -> vector<64x256xf32>
    %150 = vector.shape_cast %149 : vector<64x256xf32> to vector<4x16x256xf32>
    %c0_77 = arith.constant 0 : index
    %c0_78 = arith.constant 0 : index
    %151 = vector.load %arg18[%c0_77, %c0_78] : memref<1x256xf32, #tpu.memory_space<vmem>>, vector<1x256xf32>
    %152 = vector.shape_cast %151 : vector<1x256xf32> to vector<1x1x256xf32>
    %153 = vector.broadcast %152 : vector<1x1x256xf32> to vector<4x16x256xf32>
    %154 = arith.addf %150, %153 : vector<4x16x256xf32>
    %155 = arith.addf %144, %154 : vector<4x16x256xf32>
    %c0_79 = arith.constant 0 : index
    %c0_80 = arith.constant 0 : index
    %c0_81 = arith.constant 0 : index
    %156 = vector.load %arg19[%c0_79, %c0_80, %c0_81] : memref<4x16x256xf32, #tpu.memory_space<vmem>>, vector<4x16x256xf32>
    tpu.vector_store %arg19[%c0_79, %c0_80, %c0_81], %155 {strides = array<i32>} : memref<4x16x256xf32, #tpu.memory_space<vmem>>, vector<4x16x256xf32>,
    return
  }
  func.func @transform_0(%arg0: i32) -> (i32, i32, i32) {
    %c0_i32 = arith.constant 0 : i32
    %c0_i32_0 = arith.constant 0 : i32
    %c0_i32_1 = arith.constant 0 : i32
    return %arg0, %c0_i32, %c0_i32_0 : i32, i32, i32
  }
  func.func @transform_1(%arg0: i32) -> (i32, i32) {
    %c0_i32 = arith.constant 0 : i32
    %c0_i32_0 = arith.constant 0 : i32
    return %arg0, %c0_i32 : i32, i32
  }
  func.func @transform_2(%arg0: i32) -> (i32, i32) {
    %c0_i32 = arith.constant 0 : i32
    %c0_i32_0 = arith.constant 0 : i32
    %c0_i32_1 = arith.constant 0 : i32
    return %c0_i32, %c0_i32_0 : i32, i32
  }
  func.func @transform_3(%arg0: i32) -> (i32, i32) {
    %c0_i32 = arith.constant 0 : i32
    %c0_i32_0 = arith.constant 0 : i32
    %c0_i32_1 = arith.constant 0 : i32
    return %c0_i32, %c0_i32_0 : i32, i32
  }
  func.func @transform_4(%arg0: i32) -> (i32, i32) {
    %c0_i32 = arith.constant 0 : i32
    %c0_i32_0 = arith.constant 0 : i32
    %c0_i32_1 = arith.constant 0 : i32
    return %c0_i32, %c0_i32_0 : i32, i32
  }
  func.func @transform_5(%arg0: i32) -> (i32, i32) {
    %c0_i32 = arith.constant 0 : i32
    %c0_i32_0 = arith.constant 0 : i32
    %c0_i32_1 = arith.constant 0 : i32
    return %c0_i32, %c0_i32_0 : i32, i32
  }
  func.func @transform_6(%arg0: i32) -> (i32, i32, i32) {
    %c0_i32 = arith.constant 0 : i32
    %c0_i32_0 = arith.constant 0 : i32
    %c0_i32_1 = arith.constant 0 : i32
    %c0_i32_2 = arith.constant 0 : i32
    return %c0_i32, %c0_i32_0, %c0_i32_1 : i32, i32, i32
  }
  func.func @transform_7(%arg0: i32) -> (i32, i32) {
    %c0_i32 = arith.constant 0 : i32
    %c0_i32_0 = arith.constant 0 : i32
    %c0_i32_1 = arith.constant 0 : i32
    return %c0_i32, %c0_i32_0 : i32, i32
  }
  func.func @transform_8(%arg0: i32) -> (i32, i32) {
    %c0_i32 = arith.constant 0 : i32
    %c0_i32_0 = arith.constant 0 : i32
    %c0_i32_1 = arith.constant 0 : i32
    return %c0_i32, %c0_i32_0 : i32, i32
  }
  func.func @transform_9(%arg0: i32) -> (i32, i32) {
    %c0_i32 = arith.constant 0 : i32
    %c0_i32_0 = arith.constant 0 : i32
    %c0_i32_1 = arith.constant 0 : i32
    return %c0_i32, %c0_i32_0 : i32, i32
  }
  func.func @transform_10(%arg0: i32) -> (i32, i32) {
    %c0_i32 = arith.constant 0 : i32
    %c0_i32_0 = arith.constant 0 : i32
    %c0_i32_1 = arith.constant 0 : i32
    return %c0_i32, %c0_i32_0 : i32, i32
  }
  func.func @transform_11(%arg0: i32) -> (i32, i32) {
    %c0_i32 = arith.constant 0 : i32
    %c0_i32_0 = arith.constant 0 : i32
    %c0_i32_1 = arith.constant 0 : i32
    return %c0_i32, %c0_i32_0 : i32, i32
  }
  func.func @transform_12(%arg0: i32) -> (i32, i32) {
    %c0_i32 = arith.constant 0 : i32
    %c0_i32_0 = arith.constant 0 : i32
    %c0_i32_1 = arith.constant 0 : i32
    return %c0_i32, %c0_i32_0 : i32, i32
  }
  func.func @transform_13(%arg0: i32) -> (i32, i32) {
    %c0_i32 = arith.constant 0 : i32
    %c0_i32_0 = arith.constant 0 : i32
    %c0_i32_1 = arith.constant 0 : i32
    return %c0_i32, %c0_i32_0 : i32, i32
  }
  func.func @transform_14(%arg0: i32) -> (i32, i32, i32) {
    %c0_i32 = arith.constant 0 : i32
    %c0_i32_0 = arith.constant 0 : i32
    %c0_i32_1 = arith.constant 0 : i32
    %c0_i32_2 = arith.constant 0 : i32
    return %c0_i32, %c0_i32_0, %c0_i32_1 : i32, i32, i32
  }
  func.func @transform_15(%arg0: i32) -> (i32, i32) {
    %c0_i32 = arith.constant 0 : i32
    %c0_i32_0 = arith.constant 0 : i32
    %c0_i32_1 = arith.constant 0 : i32
    return %c0_i32, %c0_i32_0 : i32, i32
  }
  func.func @transform_16(%arg0: i32) -> (i32, i32) {
    %c0_i32 = arith.constant 0 : i32
    %c0_i32_0 = arith.constant 0 : i32
    %c0_i32_1 = arith.constant 0 : i32
    return %c0_i32, %c0_i32_0 : i32, i32
  }
  func.func @transform_17(%arg0: i32) -> (i32, i32) {
    %c0_i32 = arith.constant 0 : i32
    %c0_i32_0 = arith.constant 0 : i32
    %c0_i32_1 = arith.constant 0 : i32
    return %c0_i32, %c0_i32_0 : i32, i32
  }
  func.func @transform_18(%arg0: i32) -> (i32, i32, i32) {
    %c0_i32 = arith.constant 0 : i32
    %c0_i32_0 = arith.constant 0 : i32
    %c0_i32_1 = arith.constant 0 : i32
    return %arg0, %c0_i32, %c0_i32_0 : i32, i32, i32
  }
}

module attributes {stable_mosaic.version = 11 : i64} {
  func.func @kernel(%arg0: i32, %arg1: memref<4x16x128xf32, #tpu.memory_space<vmem>>, %arg2: memref<4x8xf32, #tpu.memory_space<vmem>>, %arg3: memref<1x128xf32, #tpu.memory_space<vmem>>, %arg4: memref<1x128xf32, #tpu.memory_space<vmem>>, %arg5: memref<128x4xf32, #tpu.memory_space<vmem>>, %arg6: memref<4x128xf32, #tpu.memory_space<vmem>>, %arg7: memref<3x128x256xbf16, #tpu.memory_space<vmem>>, %arg8: memref<1x256xf32, #tpu.memory_space<vmem>>, %arg9: memref<8x16xf32, #tpu.memory_space<vmem>>, %arg10: memref<16x256xf32, #tpu.memory_space<vmem>>, %arg11: memref<1x256xf32, #tpu.memory_space<vmem>>, %arg12: memref<1x256xf32, #tpu.memory_space<vmem>>, %arg13: memref<256x4xf32, #tpu.memory_space<vmem>>, %arg14: memref<4x256xf32, #tpu.memory_space<vmem>>, %arg15: memref<3x256x256xbf16, #tpu.memory_space<vmem>>, %arg16: memref<1x256xf32, #tpu.memory_space<vmem>>, %arg17: memref<128x256xbf16, #tpu.memory_space<vmem>>, %arg18: memref<1x256xf32, #tpu.memory_space<vmem>>, %arg19: memref<4x16x256xf32, #tpu.memory_space<vmem>>) attributes {dimension_semantics = [#tpu.dimension_semantics<parallel>], iteration_bounds = array<i64: 1>, scalar_prefetch = 0 : i64, scratch_operands = 0 : i64, tpu.core_type = #tpu.core_type<tc>, window_params = [{transform_indices = @transform_0, window_bounds = array<i64: 4, 16, 128>}, {transform_indices = @transform_1, window_bounds = array<i64: 4, 8>}, {pipeline_mode = #tpu.pipeline_mode<synchronous>, transform_indices = @transform_2, window_bounds = array<i64: 1, 128>}, {pipeline_mode = #tpu.pipeline_mode<synchronous>, transform_indices = @transform_3, window_bounds = array<i64: 1, 128>}, {pipeline_mode = #tpu.pipeline_mode<synchronous>, transform_indices = @transform_4, window_bounds = array<i64: 128, 4>}, {pipeline_mode = #tpu.pipeline_mode<synchronous>, transform_indices = @transform_5, window_bounds = array<i64: 4, 128>}, {pipeline_mode = #tpu.pipeline_mode<synchronous>, transform_indices = @transform_6, window_bounds = array<i64: 3, 128, 256>}, {pipeline_mode = #tpu.pipeline_mode<synchronous>, transform_indices = @transform_7, window_bounds = array<i64: 1, 256>}, {pipeline_mode = #tpu.pipeline_mode<synchronous>, transform_indices = @transform_8, window_bounds = array<i64: 8, 16>}, {pipeline_mode = #tpu.pipeline_mode<synchronous>, transform_indices = @transform_9, window_bounds = array<i64: 16, 256>}, {pipeline_mode = #tpu.pipeline_mode<synchronous>, transform_indices = @transform_10, window_bounds = array<i64: 1, 256>}, {pipeline_mode = #tpu.pipeline_mode<synchronous>, transform_indices = @transform_11, window_bounds = array<i64: 1, 256>}, {pipeline_mode = #tpu.pipeline_mode<synchronous>, transform_indices = @transform_12, window_bounds = array<i64: 256, 4>}, {pipeline_mode = #tpu.pipeline_mode<synchronous>, transform_indices = @transform_13, window_bounds = array<i64: 4, 256>}, {pipeline_mode = #tpu.pipeline_mode<synchronous>, transform_indices = @transform_14, window_bounds = array<i64: 3, 256, 256>}, {pipeline_mode = #tpu.pipeline_mode<synchronous>, transform_indices = @transform_15, window_bounds = array<i64: 1, 256>}, {pipeline_mode = #tpu.pipeline_mode<synchronous>, transform_indices = @transform_16, window_bounds = array<i64: 128, 256>}, {pipeline_mode = #tpu.pipeline_mode<synchronous>, transform_indices = @transform_17, window_bounds = array<i64: 1, 256>}, {transform_indices = @transform_18, window_bounds = array<i64: 4, 16, 256>}]} {
    %c0 = arith.constant 0 : index
    %c0_0 = arith.constant 0 : index
    %c0_1 = arith.constant 0 : index
    %0 = vector.load %arg1[%c0, %c0_0, %c0_1] : memref<4x16x128xf32, #tpu.memory_space<vmem>>, vector<4x16x128xf32>
    %c0_2 = arith.constant 0 : index
    %c0_3 = arith.constant 0 : index
    %1 = vector.load %arg3[%c0_2, %c0_3] : memref<1x128xf32, #tpu.memory_space<vmem>>, vector<1x128xf32>
    %c0_4 = arith.constant 0 : index
    %c0_5 = arith.constant 0 : index
    %2 = vector.load %arg4[%c0_4, %c0_5] : memref<1x128xf32, #tpu.memory_space<vmem>>, vector<1x128xf32>
    %c0_6 = arith.constant 0 : index
    %c0_7 = arith.constant 0 : index
    %3 = vector.load %arg5[%c0_6, %c0_7] : memref<128x4xf32, #tpu.memory_space<vmem>>, vector<128x4xf32>
    %c0_8 = arith.constant 0 : index
    %c0_9 = arith.constant 0 : index
    %4 = vector.load %arg6[%c0_8, %c0_9] : memref<4x128xf32, #tpu.memory_space<vmem>>, vector<4x128xf32>
    %cst = arith.constant dense<0.000000e+00> : vector<4x128xf32>
    %5 = vector.multi_reduction <add>, %0, %cst [1] : vector<4x16x128xf32> to vector<4x128xf32>
    %6 = arith.mulf %0, %0 : vector<4x16x128xf32>
    %cst_10 = arith.constant dense<0.000000e+00> : vector<4x128xf32>
    %7 = vector.multi_reduction <add>, %6, %cst_10 [1] : vector<4x16x128xf32> to vector<4x128xf32>
    %8 = tpu.concatenate %5, %7 in 0 : vector<4x128xf32>, vector<4x128xf32> -> vector<8x128xf32>
    %cst_11 = arith.constant dense<0.000000e+00> : vector<8x4xf32>
    %9 = tpu.matmul %8, %3, %cst_11 {dimension_numbers = #tpu.dot_dimension_numbers<[1], [0], [0], [1], [0, 0, 1, 1], [], []>} : vector<8x128xf32>, vector<128x4xf32>, vector<8x4xf32> -> vector<8x4xf32>
    %10 = vector.extract_strided_slice %9 {offsets = [0, 0], sizes = [4, 4], strides = [1, 1]} : vector<8x4xf32> to vector<4x4xf32>
    %cst_12 = arith.constant 0.001953125 : f32
    %11 = vector.broadcast %cst_12 : f32 to vector<4x4xf32>
    %12 = arith.mulf %10, %11 : vector<4x4xf32>
    %13 = vector.extract_strided_slice %9 {offsets = [4, 0], sizes = [4, 4], strides = [1, 1]} : vector<8x4xf32> to vector<4x4xf32>
    %cst_13 = arith.constant 0.001953125 : f32
    %14 = vector.broadcast %cst_13 : f32 to vector<4x4xf32>
    %15 = arith.mulf %13, %14 : vector<4x4xf32>
    %16 = arith.mulf %12, %12 : vector<4x4xf32>
    %17 = arith.subf %15, %16 : vector<4x4xf32>
    %cst_14 = arith.constant 0.000000e+00 : f32
    %18 = vector.broadcast %cst_14 : f32 to vector<4x4xf32>
    %19 = arith.maximumf %17, %18 : vector<4x4xf32>
    %cst_15 = arith.constant 9.99999974E-6 : f32
    %20 = vector.broadcast %cst_15 : f32 to vector<4x4xf32>
    %21 = arith.addf %19, %20 : vector<4x4xf32>
    %22 = math.rsqrt %21 : vector<4x4xf32>
    %23 = tpu.concatenate %12, %22 in 0 : vector<4x4xf32>, vector<4x4xf32> -> vector<8x4xf32>
    %cst_16 = arith.constant dense<0.000000e+00> : vector<8x128xf32>
    %24 = tpu.matmul %23, %4, %cst_16 {dimension_numbers = #tpu.dot_dimension_numbers<[1], [0], [0], [1], [0, 0, 1, 1], [], []>} : vector<8x4xf32>, vector<4x128xf32>, vector<8x128xf32> -> vector<8x128xf32>
    %25 = vector.extract_strided_slice %24 {offsets = [4, 0], sizes = [4, 128], strides = [1, 1]} : vector<8x128xf32> to vector<4x128xf32>
    %26 = vector.broadcast %1 : vector<1x128xf32> to vector<4x128xf32>
    %27 = arith.mulf %25, %26 : vector<4x128xf32>
    %28 = vector.extract_strided_slice %24 {offsets = [0, 0], sizes = [4, 128], strides = [1, 1]} : vector<8x128xf32> to vector<4x128xf32>
    %29 = arith.mulf %28, %27 : vector<4x128xf32>
    %30 = vector.broadcast %2 : vector<1x128xf32> to vector<4x128xf32>
    %31 = arith.subf %30, %29 : vector<4x128xf32>
    %32 = vector.shape_cast %27 : vector<4x128xf32> to vector<4x1x128xf32>
    %33 = vector.broadcast %32 : vector<4x1x128xf32> to vector<4x16x128xf32>
    %34 = arith.mulf %0, %33 : vector<4x16x128xf32>
    %35 = vector.shape_cast %31 : vector<4x128xf32> to vector<4x1x128xf32>
    %36 = vector.broadcast %35 : vector<4x1x128xf32> to vector<4x16x128xf32>
    %37 = arith.addf %34, %36 : vector<4x16x128xf32>
    %38 = arith.negf %37 : vector<4x16x128xf32>
    %39 = math.exp %38 : vector<4x16x128xf32>
    %cst_17 = arith.constant 1.000000e+00 : f32
    %40 = vector.broadcast %cst_17 : f32 to vector<4x16x128xf32>
    %41 = arith.addf %40, %39 : vector<4x16x128xf32>
    %42 = arith.divf %40, %41 : vector<4x16x128xf32>
    %43 = arith.mulf %37, %42 : vector<4x16x128xf32>
    %44 = arith.truncf %43 : vector<4x16x128xf32> to vector<4x16x128xbf16>
    %cst_18 = arith.constant 0.000000e+00 : bf16
    %45 = vector.broadcast %cst_18 : bf16 to vector<4x1x128xbf16>
    %46 = vector.extract_strided_slice %44 {offsets = [0, 0, 0], sizes = [4, 15, 128], strides = [1, 1, 1]} : vector<4x16x128xbf16> to vector<4x15x128xbf16>
    %47 = tpu.concatenate %45, %46 in 1 : vector<4x1x128xbf16>, vector<4x15x128xbf16> -> vector<4x16x128xbf16>
    %48 = vector.extract_strided_slice %44 {offsets = [0, 1, 0], sizes = [4, 15, 128], strides = [1, 1, 1]} : vector<4x16x128xbf16> to vector<4x15x128xbf16>
    %49 = tpu.concatenate %48, %45 in 1 : vector<4x15x128xbf16>, vector<4x1x128xbf16> -> vector<4x16x128xbf16>
    %50 = vector.shape_cast %47 : vector<4x16x128xbf16> to vector<64x128xbf16>
    %c0_19 = arith.constant 0 : index
    %c0_20 = arith.constant 0 : index
    %c0_21 = arith.constant 0 : index
    %51 = vector.load %arg7[%c0_19, %c0_20, %c0_21] : memref<3x128x256xbf16, #tpu.memory_space<vmem>>, vector<1x128x256xbf16>
    %52 = vector.shape_cast %51 : vector<1x128x256xbf16> to vector<128x256xbf16>
    %cst_22 = arith.constant dense<0.000000e+00> : vector<64x256xf32>
    %53 = tpu.matmul %50, %52, %cst_22 {dimension_numbers = #tpu.dot_dimension_numbers<[1], [0], [0], [1], [0, 0, 1, 1], [], []>} : vector<64x128xbf16>, vector<128x256xbf16>, vector<64x256xf32> -> vector<64x256xf32>
    %54 = vector.shape_cast %44 : vector<4x16x128xbf16> to vector<64x128xbf16>
    %c1 = arith.constant 1 : index
    %c0_23 = arith.constant 0 : index
    %c0_24 = arith.constant 0 : index
    %55 = vector.load %arg7[%c1, %c0_23, %c0_24] : memref<3x128x256xbf16, #tpu.memory_space<vmem>>, vector<1x128x256xbf16>
    %56 = vector.shape_cast %55 : vector<1x128x256xbf16> to vector<128x256xbf16>
    %cst_25 = arith.constant dense<0.000000e+00> : vector<64x256xf32>
    %57 = tpu.matmul %54, %56, %cst_25 {dimension_numbers = #tpu.dot_dimension_numbers<[1], [0], [0], [1], [0, 0, 1, 1], [], []>} : vector<64x128xbf16>, vector<128x256xbf16>, vector<64x256xf32> -> vector<64x256xf32>
    %58 = arith.addf %53, %57 : vector<64x256xf32>
    %59 = vector.shape_cast %49 : vector<4x16x128xbf16> to vector<64x128xbf16>
    %c2 = arith.constant 2 : index
    %c0_26 = arith.constant 0 : index
    %c0_27 = arith.constant 0 : index
    %60 = vector.load %arg7[%c2, %c0_26, %c0_27] : memref<3x128x256xbf16, #tpu.memory_space<vmem>>, vector<1x128x256xbf16>
    %61 = vector.shape_cast %60 : vector<1x128x256xbf16> to vector<128x256xbf16>
    %cst_28 = arith.constant dense<0.000000e+00> : vector<64x256xf32>
    %62 = tpu.matmul %59, %61, %cst_28 {dimension_numbers = #tpu.dot_dimension_numbers<[1], [0], [0], [1], [0, 0, 1, 1], [], []>} : vector<64x128xbf16>, vector<128x256xbf16>, vector<64x256xf32> -> vector<64x256xf32>
    %63 = arith.addf %58, %62 : vector<64x256xf32>
    %64 = vector.shape_cast %63 : vector<64x256xf32> to vector<4x16x256xf32>
    %c0_29 = arith.constant 0 : index
    %c0_30 = arith.constant 0 : index
    %65 = vector.load %arg8[%c0_29, %c0_30] : memref<1x256xf32, #tpu.memory_space<vmem>>, vector<1x256xf32>
    %66 = vector.shape_cast %65 : vector<1x256xf32> to vector<1x1x256xf32>
    %67 = vector.broadcast %66 : vector<1x1x256xf32> to vector<4x16x256xf32>
    %68 = arith.addf %64, %67 : vector<4x16x256xf32>
    %c0_31 = arith.constant 0 : index
    %c0_32 = arith.constant 0 : index
    %69 = vector.load %arg2[%c0_31, %c0_32] : memref<4x8xf32, #tpu.memory_space<vmem>>, vector<4x8xf32>
    %c0_33 = arith.constant 0 : index
    %c0_34 = arith.constant 0 : index
    %70 = vector.load %arg9[%c0_33, %c0_34] : memref<8x16xf32, #tpu.memory_space<vmem>>, vector<8x16xf32>
    %cst_35 = arith.constant dense<0.000000e+00> : vector<4x16xf32>
    %71 = tpu.matmul %69, %70, %cst_35 {dimension_numbers = #tpu.dot_dimension_numbers<[1], [0], [0], [1], [0, 0, 1, 1], [], []>} : vector<4x8xf32>, vector<8x16xf32>, vector<4x16xf32> -> vector<4x16xf32>
    %c0_36 = arith.constant 0 : index
    %c0_37 = arith.constant 0 : index
    %72 = vector.load %arg10[%c0_36, %c0_37] : memref<16x256xf32, #tpu.memory_space<vmem>>, vector<16x256xf32>
    %cst_38 = arith.constant dense<0.000000e+00> : vector<4x256xf32>
    %73 = tpu.matmul %71, %72, %cst_38 {dimension_numbers = #tpu.dot_dimension_numbers<[1], [0], [0], [1], [0, 0, 1, 1], [], []>} : vector<4x16xf32>, vector<16x256xf32>, vector<4x256xf32> -> vector<4x256xf32>
    %74 = vector.shape_cast %73 : vector<4x256xf32> to vector<4x1x256xf32>
    %75 = vector.broadcast %74 : vector<4x1x256xf32> to vector<4x16x256xf32>
    %76 = arith.addf %68, %75 : vector<4x16x256xf32>
    %c0_39 = arith.constant 0 : index
    %c0_40 = arith.constant 0 : index
    %77 = vector.load %arg11[%c0_39, %c0_40] : memref<1x256xf32, #tpu.memory_space<vmem>>, vector<1x256xf32>
    %c0_41 = arith.constant 0 : index
    %c0_42 = arith.constant 0 : index
    %78 = vector.load %arg12[%c0_41, %c0_42] : memref<1x256xf32, #tpu.memory_space<vmem>>, vector<1x256xf32>
    %c0_43 = arith.constant 0 : index
    %c0_44 = arith.constant 0 : index
    %79 = vector.load %arg13[%c0_43, %c0_44] : memref<256x4xf32, #tpu.memory_space<vmem>>, vector<256x4xf32>
    %c0_45 = arith.constant 0 : index
    %c0_46 = arith.constant 0 : index
    %80 = vector.load %arg14[%c0_45, %c0_46] : memref<4x256xf32, #tpu.memory_space<vmem>>, vector<4x256xf32>
    %cst_47 = arith.constant dense<0.000000e+00> : vector<4x256xf32>
    %81 = vector.multi_reduction <add>, %76, %cst_47 [1] : vector<4x16x256xf32> to vector<4x256xf32>
    %82 = arith.mulf %76, %76 : vector<4x16x256xf32>
    %cst_48 = arith.constant dense<0.000000e+00> : vector<4x256xf32>
    %83 = vector.multi_reduction <add>, %82, %cst_48 [1] : vector<4x16x256xf32> to vector<4x256xf32>
    %84 = tpu.concatenate %81, %83 in 0 : vector<4x256xf32>, vector<4x256xf32> -> vector<8x256xf32>
    %cst_49 = arith.constant dense<0.000000e+00> : vector<8x4xf32>
    %85 = tpu.matmul %84, %79, %cst_49 {dimension_numbers = #tpu.dot_dimension_numbers<[1], [0], [0], [1], [0, 0, 1, 1], [], []>} : vector<8x256xf32>, vector<256x4xf32>, vector<8x4xf32> -> vector<8x4xf32>
    %86 = vector.extract_strided_slice %85 {offsets = [0, 0], sizes = [4, 4], strides = [1, 1]} : vector<8x4xf32> to vector<4x4xf32>
    %cst_50 = arith.constant 9.765625E-4 : f32
    %87 = vector.broadcast %cst_50 : f32 to vector<4x4xf32>
    %88 = arith.mulf %86, %87 : vector<4x4xf32>
    %89 = vector.extract_strided_slice %85 {offsets = [4, 0], sizes = [4, 4], strides = [1, 1]} : vector<8x4xf32> to vector<4x4xf32>
    %cst_51 = arith.constant 9.765625E-4 : f32
    %90 = vector.broadcast %cst_51 : f32 to vector<4x4xf32>
    %91 = arith.mulf %89, %90 : vector<4x4xf32>
    %92 = arith.mulf %88, %88 : vector<4x4xf32>
    %93 = arith.subf %91, %92 : vector<4x4xf32>
    %cst_52 = arith.constant 0.000000e+00 : f32
    %94 = vector.broadcast %cst_52 : f32 to vector<4x4xf32>
    %95 = arith.maximumf %93, %94 : vector<4x4xf32>
    %cst_53 = arith.constant 9.99999974E-6 : f32
    %96 = vector.broadcast %cst_53 : f32 to vector<4x4xf32>
    %97 = arith.addf %95, %96 : vector<4x4xf32>
    %98 = math.rsqrt %97 : vector<4x4xf32>
    %99 = tpu.concatenate %88, %98 in 0 : vector<4x4xf32>, vector<4x4xf32> -> vector<8x4xf32>
    %cst_54 = arith.constant dense<0.000000e+00> : vector<8x256xf32>
    %100 = tpu.matmul %99, %80, %cst_54 {dimension_numbers = #tpu.dot_dimension_numbers<[1], [0], [0], [1], [0, 0, 1, 1], [], []>} : vector<8x4xf32>, vector<4x256xf32>, vector<8x256xf32> -> vector<8x256xf32>
    %101 = vector.extract_strided_slice %100 {offsets = [4, 0], sizes = [4, 256], strides = [1, 1]} : vector<8x256xf32> to vector<4x256xf32>
    %102 = vector.broadcast %77 : vector<1x256xf32> to vector<4x256xf32>
    %103 = arith.mulf %101, %102 : vector<4x256xf32>
    %104 = vector.extract_strided_slice %100 {offsets = [0, 0], sizes = [4, 256], strides = [1, 1]} : vector<8x256xf32> to vector<4x256xf32>
    %105 = arith.mulf %104, %103 : vector<4x256xf32>
    %106 = vector.broadcast %78 : vector<1x256xf32> to vector<4x256xf32>
    %107 = arith.subf %106, %105 : vector<4x256xf32>
    %108 = vector.shape_cast %103 : vector<4x256xf32> to vector<4x1x256xf32>
    %109 = vector.broadcast %108 : vector<4x1x256xf32> to vector<4x16x256xf32>
    %110 = arith.mulf %76, %109 : vector<4x16x256xf32>
    %111 = vector.shape_cast %107 : vector<4x256xf32> to vector<4x1x256xf32>
    %112 = vector.broadcast %111 : vector<4x1x256xf32> to vector<4x16x256xf32>
    %113 = arith.addf %110, %112 : vector<4x16x256xf32>
    %114 = arith.negf %113 : vector<4x16x256xf32>
    %115 = math.exp %114 : vector<4x16x256xf32>
    %cst_55 = arith.constant 1.000000e+00 : f32
    %116 = vector.broadcast %cst_55 : f32 to vector<4x16x256xf32>
    %117 = arith.addf %116, %115 : vector<4x16x256xf32>
    %118 = arith.divf %116, %117 : vector<4x16x256xf32>
    %119 = arith.mulf %113, %118 : vector<4x16x256xf32>
    %120 = arith.truncf %119 : vector<4x16x256xf32> to vector<4x16x256xbf16>
    %cst_56 = arith.constant 0.000000e+00 : bf16
    %121 = vector.broadcast %cst_56 : bf16 to vector<4x1x256xbf16>
    %122 = vector.extract_strided_slice %120 {offsets = [0, 0, 0], sizes = [4, 15, 256], strides = [1, 1, 1]} : vector<4x16x256xbf16> to vector<4x15x256xbf16>
    %123 = tpu.concatenate %121, %122 in 1 : vector<4x1x256xbf16>, vector<4x15x256xbf16> -> vector<4x16x256xbf16>
    %124 = vector.extract_strided_slice %120 {offsets = [0, 1, 0], sizes = [4, 15, 256], strides = [1, 1, 1]} : vector<4x16x256xbf16> to vector<4x15x256xbf16>
    %125 = tpu.concatenate %124, %121 in 1 : vector<4x15x256xbf16>, vector<4x1x256xbf16> -> vector<4x16x256xbf16>
    %126 = vector.shape_cast %123 : vector<4x16x256xbf16> to vector<64x256xbf16>
    %c0_57 = arith.constant 0 : index
    %c0_58 = arith.constant 0 : index
    %c0_59 = arith.constant 0 : index
    %127 = vector.load %arg15[%c0_57, %c0_58, %c0_59] : memref<3x256x256xbf16, #tpu.memory_space<vmem>>, vector<1x256x256xbf16>
    %128 = vector.shape_cast %127 : vector<1x256x256xbf16> to vector<256x256xbf16>
    %cst_60 = arith.constant dense<0.000000e+00> : vector<64x256xf32>
    %129 = tpu.matmul %126, %128, %cst_60 {dimension_numbers = #tpu.dot_dimension_numbers<[1], [0], [0], [1], [0, 0, 1, 1], [], []>} : vector<64x256xbf16>, vector<256x256xbf16>, vector<64x256xf32> -> vector<64x256xf32>
    %130 = vector.shape_cast %120 : vector<4x16x256xbf16> to vector<64x256xbf16>
    %c1_61 = arith.constant 1 : index
    %c0_62 = arith.constant 0 : index
    %c0_63 = arith.constant 0 : index
    %131 = vector.load %arg15[%c1_61, %c0_62, %c0_63] : memref<3x256x256xbf16, #tpu.memory_space<vmem>>, vector<1x256x256xbf16>
    %132 = vector.shape_cast %131 : vector<1x256x256xbf16> to vector<256x256xbf16>
    %cst_64 = arith.constant dense<0.000000e+00> : vector<64x256xf32>
    %133 = tpu.matmul %130, %132, %cst_64 {dimension_numbers = #tpu.dot_dimension_numbers<[1], [0], [0], [1], [0, 0, 1, 1], [], []>} : vector<64x256xbf16>, vector<256x256xbf16>, vector<64x256xf32> -> vector<64x256xf32>
    %134 = arith.addf %129, %133 : vector<64x256xf32>
    %135 = vector.shape_cast %125 : vector<4x16x256xbf16> to vector<64x256xbf16>
    %c2_65 = arith.constant 2 : index
    %c0_66 = arith.constant 0 : index
    %c0_67 = arith.constant 0 : index
    %136 = vector.load %arg15[%c2_65, %c0_66, %c0_67] : memref<3x256x256xbf16, #tpu.memory_space<vmem>>, vector<1x256x256xbf16>
    %137 = vector.shape_cast %136 : vector<1x256x256xbf16> to vector<256x256xbf16>
    %cst_68 = arith.constant dense<0.000000e+00> : vector<64x256xf32>
    %138 = tpu.matmul %135, %137, %cst_68 {dimension_numbers = #tpu.dot_dimension_numbers<[1], [0], [0], [1], [0, 0, 1, 1], [], []>} : vector<64x256xbf16>, vector<256x256xbf16>, vector<64x256xf32> -> vector<64x256xf32>
    %139 = arith.addf %134, %138 : vector<64x256xf32>
    %140 = vector.shape_cast %139 : vector<64x256xf32> to vector<4x16x256xf32>
    %c0_69 = arith.constant 0 : index
    %c0_70 = arith.constant 0 : index
    %141 = vector.load %arg16[%c0_69, %c0_70] : memref<1x256xf32, #tpu.memory_space<vmem>>, vector<1x256xf32>
    %142 = vector.shape_cast %141 : vector<1x256xf32> to vector<1x1x256xf32>
    %143 = vector.broadcast %142 : vector<1x1x256xf32> to vector<4x16x256xf32>
    %144 = arith.addf %140, %143 : vector<4x16x256xf32>
    %c0_71 = arith.constant 0 : index
    %c0_72 = arith.constant 0 : index
    %c0_73 = arith.constant 0 : index
    %145 = vector.load %arg1[%c0_71, %c0_72, %c0_73] : memref<4x16x128xf32, #tpu.memory_space<vmem>>, vector<4x16x128xf32>
    %146 = vector.shape_cast %145 : vector<4x16x128xf32> to vector<64x128xf32>
    %147 = arith.truncf %146 : vector<64x128xf32> to vector<64x128xbf16>
    %c0_74 = arith.constant 0 : index
    %c0_75 = arith.constant 0 : index
    %148 = vector.load %arg17[%c0_74, %c0_75] : memref<128x256xbf16, #tpu.memory_space<vmem>>, vector<128x256xbf16>
    %cst_76 = arith.constant dense<0.000000e+00> : vector<64x256xf32>
    %149 = tpu.matmul %147, %148, %cst_76 {dimension_numbers = #tpu.dot_dimension_numbers<[1], [0], [0], [1], [0, 0, 1, 1], [], []>} : vector<64x128xbf16>, vector<128x256xbf16>, vector<64x256xf32> -> vector<64x256xf32>
    %150 = vector.shape_cast %149 : vector<64x256xf32> to vector<4x16x256xf32>
    %c0_77 = arith.constant 0 : index
    %c0_78 = arith.constant 0 : index
    %151 = vector.load %arg18[%c0_77, %c0_78] : memref<1x256xf32, #tpu.memory_space<vmem>>, vector<1x256xf32>
    %152 = vector.shape_cast %151 : vector<1x256xf32> to vector<1x1x256xf32>
    %153 = vector.broadcast %152 : vector<1x1x256xf32> to vector<4x16x256xf32>
    %154 = arith.addf %150, %153 : vector<4x16x256xf32>
    %155 = arith.addf %144, %154 : vector<4x16x256xf32>
    %c0_79 = arith.constant 0 : index
    %c0_80 = arith.constant 0 : index
    %c0_81 = arith.constant 0 : index
    %156 = vector.load %arg19[%c0_79, %c0_80, %c0_81] : memref<4x16x256xf32, #tpu.memory_space<vmem>>, vector<4x16x256xf32>
    tpu.vector_store %arg19[%c0_79, %c0_80, %c0_81], %155 {strides = array<i32>} : memref<4x16x256xf32, #tpu.memory_space<vmem>>, vector<4x16x256xf32>,
    return
  }
  func.func @transform_0(%arg0: i32) -> (i32, i32, i32) {
    %c0_i32 = arith.constant 0 : i32
    %c0_i32_0 = arith.constant 0 : i32
    %c0_i32_1 = arith.constant 0 : i32
    return %arg0, %c0_i32, %c0_i32_0 : i32, i32, i32
  }
  func.func @transform_1(%arg0: i32) -> (i32, i32) {
    %c0_i32 = arith.constant 0 : i32
    %c0_i32_0 = arith.constant 0 : i32
    return %arg0, %c0_i32 : i32, i32
  }
  func.func @transform_2(%arg0: i32) -> (i32, i32) {
    %c0_i32 = arith.constant 0 : i32
    %c0_i32_0 = arith.constant 0 : i32
    %c0_i32_1 = arith.constant 0 : i32
    return %c0_i32, %c0_i32_0 : i32, i32
  }
  func.func @transform_3(%arg0: i32) -> (i32, i32) {
    %c0_i32 = arith.constant 0 : i32
    %c0_i32_0 = arith.constant 0 : i32
    %c0_i32_1 = arith.constant 0 : i32
    return %c0_i32, %c0_i32_0 : i32, i32
  }
  func.func @transform_4(%arg0: i32) -> (i32, i32) {
    %c0_i32 = arith.constant 0 : i32
    %c0_i32_0 = arith.constant 0 : i32
    %c0_i32_1 = arith.constant 0 : i32
    return %c0_i32, %c0_i32_0 : i32, i32
  }
  func.func @transform_5(%arg0: i32) -> (i32, i32) {
    %c0_i32 = arith.constant 0 : i32
    %c0_i32_0 = arith.constant 0 : i32
    %c0_i32_1 = arith.constant 0 : i32
    return %c0_i32, %c0_i32_0 : i32, i32
  }
  func.func @transform_6(%arg0: i32) -> (i32, i32, i32) {
    %c0_i32 = arith.constant 0 : i32
    %c0_i32_0 = arith.constant 0 : i32
    %c0_i32_1 = arith.constant 0 : i32
    %c0_i32_2 = arith.constant 0 : i32
    return %c0_i32, %c0_i32_0, %c0_i32_1 : i32, i32, i32
  }
  func.func @transform_7(%arg0: i32) -> (i32, i32) {
    %c0_i32 = arith.constant 0 : i32
    %c0_i32_0 = arith.constant 0 : i32
    %c0_i32_1 = arith.constant 0 : i32
    return %c0_i32, %c0_i32_0 : i32, i32
  }
  func.func @transform_8(%arg0: i32) -> (i32, i32) {
    %c0_i32 = arith.constant 0 : i32
    %c0_i32_0 = arith.constant 0 : i32
    %c0_i32_1 = arith.constant 0 : i32
    return %c0_i32, %c0_i32_0 : i32, i32
  }
  func.func @transform_9(%arg0: i32) -> (i32, i32) {
    %c0_i32 = arith.constant 0 : i32
    %c0_i32_0 = arith.constant 0 : i32
    %c0_i32_1 = arith.constant 0 : i32
    return %c0_i32, %c0_i32_0 : i32, i32
  }
  func.func @transform_10(%arg0: i32) -> (i32, i32) {
    %c0_i32 = arith.constant 0 : i32
    %c0_i32_0 = arith.constant 0 : i32
    %c0_i32_1 = arith.constant 0 : i32
    return %c0_i32, %c0_i32_0 : i32, i32
  }
  func.func @transform_11(%arg0: i32) -> (i32, i32) {
    %c0_i32 = arith.constant 0 : i32
    %c0_i32_0 = arith.constant 0 : i32
    %c0_i32_1 = arith.constant 0 : i32
    return %c0_i32, %c0_i32_0 : i32, i32
  }
  func.func @transform_12(%arg0: i32) -> (i32, i32) {
    %c0_i32 = arith.constant 0 : i32
    %c0_i32_0 = arith.constant 0 : i32
    %c0_i32_1 = arith.constant 0 : i32
    return %c0_i32, %c0_i32_0 : i32, i32
  }
  func.func @transform_13(%arg0: i32) -> (i32, i32) {
    %c0_i32 = arith.constant 0 : i32
    %c0_i32_0 = arith.constant 0 : i32
    %c0_i32_1 = arith.constant 0 : i32
    return %c0_i32, %c0_i32_0 : i32, i32
  }
  func.func @transform_14(%arg0: i32) -> (i32, i32, i32) {
    %c0_i32 = arith.constant 0 : i32
    %c0_i32_0 = arith.constant 0 : i32
    %c0_i32_1 = arith.constant 0 : i32
    %c0_i32_2 = arith.constant 0 : i32
    return %c0_i32, %c0_i32_0, %c0_i32_1 : i32, i32, i32
  }
  func.func @transform_15(%arg0: i32) -> (i32, i32) {
    %c0_i32 = arith.constant 0 : i32
    %c0_i32_0 = arith.constant 0 : i32
    %c0_i32_1 = arith.constant 0 : i32
    return %c0_i32, %c0_i32_0 : i32, i32
  }
  func.func @transform_16(%arg0: i32) -> (i32, i32) {
    %c0_i32 = arith.constant 0 : i32
    %c0_i32_0 = arith.constant 0 : i32
    %c0_i32_1 = arith.constant 0 : i32
    return %c0_i32, %c0_i32_0 : i32, i32
  }
  func.func @transform_17(%arg0: i32) -> (i32, i32) {
    %c0_i32 = arith.constant 0 : i32
    %c0_i32_0 = arith.constant 0 : i32
    %c0_i32_1 = arith.constant 0 : i32
    return %c0_i32, %c0_i32_0 : i32, i32
  }
  func.func @transform_18(%arg0: i32) -> (i32, i32, i32) {
    %c0_i32 = arith.constant 0 : i32
    %c0_i32_0 = arith.constant 0 : i32
    %c0_i32_1 = arith.constant 0 : i32
    return %arg0, %c0_i32, %c0_i32_0 : i32, i32, i32
  }
}

</mosaic_0001>

<llo_original>
// kernel: tpu_custom_call.1
$region0: #{tpu_custom_call.1}
  #allocation0 [shape = 'u32[]', space=smem, size = 0x4, offset = 0x4, fixed_abs, tag = 'smem constant byte address 0x4 - core index']
  #allocation1 [shape = 'u32[144,128]{1,0:T(1,128)}', space=vmem, size = 0x12000, scoped, tag = 'internal scratch']
  %s0 = inlined_call_operand.hbm [shape: f32[4,16,128], index: 0, kind: input, shape index: {}]
  %s1 = inlined_call_operand.hbm [shape: f32[4,8], index: 1, kind: input, shape index: {}]
  %s2 = inlined_call_operand.hbm [shape: f32[1,128], index: 2, kind: input, shape index: {}]
  %s3 = inlined_call_operand.hbm [shape: f32[1,128], index: 3, kind: input, shape index: {}]
  %s4 = inlined_call_operand.vmem [shape: f32[128,4], index: 4, kind: input, shape index: {}]
  %s5 = inlined_call_operand.hbm [shape: f32[4,128], index: 5, kind: input, shape index: {}]
  %s6 = inlined_call_operand.vmem [shape: bf16[3,128,256], index: 6, kind: input, shape index: {}]
  %s7 = inlined_call_operand.hbm [shape: f32[1,256], index: 7, kind: input, shape index: {}]
  %s8 = inlined_call_operand.vmem [shape: f32[8,16], index: 8, kind: input, shape index: {}]
  %s9 = inlined_call_operand.hbm [shape: f32[16,256], index: 9, kind: input, shape index: {}]
  %s10 = inlined_call_operand.vmem [shape: f32[1,256], index: 10, kind: input, shape index: {}]
  %s11 = inlined_call_operand.vmem [shape: f32[1,256], index: 11, kind: input, shape index: {}]
  %s12 = inlined_call_operand.vmem [shape: f32[256,4], index: 12, kind: input, shape index: {}]
  %s13 = inlined_call_operand.vmem [shape: f32[4,256], index: 13, kind: input, shape index: {}]
  %s14 = inlined_call_operand.hbm [shape: bf16[3,256,256], index: 14, kind: input, shape index: {}]
  %s15 = inlined_call_operand.vmem [shape: f32[1,256], index: 15, kind: input, shape index: {}]
  %s16 = inlined_call_operand.hbm [shape: bf16[128,256], index: 16, kind: input, shape index: {}]
  %s17 = inlined_call_operand.vmem [shape: f32[1,256], index: 17, kind: input, shape index: {}]
  %s18 = inlined_call_operand.hbm [shape: f32[4,16,256], index: 18, kind: output, shape index: {}]
  %s19 = sld [smem:[#allocation0]]
  $region118: #{tpu_custom_call.1} parent=0
    _
  %s21 = ssub.s32 1, %s19
  %s22 = scalar_select 0, %s21, %s19
  $region1: #{tpu_custom_call.1} parent=0
    #allocation2 [shape = 'u8[32768]{0}', space=vmem, size = 0x8000, scoped, tag = 'input window, operand 0, single buffered']
    #allocation3 [shape = 's32[1]{0}', space=sflag, size = 0x4, scoped, tag = 'scoped memory for tpu_custom_call.1']
    #allocation4 [shape = 's32[1]{0}', space=sflag, size = 0x4, scoped, tag = 'scoped memory for tpu_custom_call.1']
    #allocation5 [shape = 'u8[2048]{0}', space=vmem, size = 0x800, scoped, tag = 'input window, operand 1, single buffered']
    #allocation6 [shape = 's32[1]{0}', space=sflag, size = 0x4, scoped, tag = 'scoped memory for tpu_custom_call.1']
    #allocation7 [shape = 'u8[512]{0}', space=vmem, size = 0x400, scoped, tag = 'input window, operand 2, single buffered']
    #allocation8 [shape = 'u8[512]{0}', space=vmem, size = 0x400, scoped, tag = 'input window, operand 3, single buffered']
    #allocation9 [shape = 's32[1]{0}', space=sflag, size = 0x4, scoped, tag = 'scoped memory for tpu_custom_call.1']
    #allocation10 [shape = 'u8[2048]{0}', space=vmem, size = 0x800, scoped, tag = 'input window, operand 5, single buffered']
    #allocation11 [shape = 'u8[1024]{0}', space=vmem, size = 0x400, scoped, tag = 'input window, operand 7, single buffered']
    #allocation12 [shape = 's32[1]{0}', space=sflag, size = 0x4, scoped, tag = 'scoped memory for tpu_custom_call.1']
    #allocation13 [shape = 'u8[16384]{0}', space=vmem, size = 0x4000, scoped, tag = 'input window, operand 9, single buffered']
    #allocation14 [shape = 'u8[393216]{0}', space=vmem, size = 0x60000, scoped, tag = 'input window, operand 14, single buffered']
    #allocation15 [shape = 's32[1]{0}', space=sflag, size = 0x4, scoped, tag = 'scoped memory for tpu_custom_call.1']
    #allocation16 [shape = 'u8[65536]{0}', space=vmem, size = 0x10000, scoped, tag = 'input window, operand 16, single buffered']
    #allocation17 [shape = 'u8[65536]{0}', space=vmem, size = 0x10000, scoped, tag = 'output window, operand 0, single buffered']
    %23 = vsyncpa [#allocation3], 0
    %24 = vsyncpa [#allocation6], 0
    %25 = vsyncpa [#allocation9], 0
    %26 = vsyncpa [#allocation12], 0
    %27 = vsyncpa [#allocation15], 0
    %28 = vsyncpa [#allocation4], 0
    // Predicated region
    $region2: #{tpu_custom_call.1} parent=1 // pred_check
      _
    $region3: #{tpu_custom_call.1} parent=1 // pred_check_branch
      %30 = sbr.rel (0) target = $region5
    $region4: #{tpu_custom_call.1} parent=1 // pred_region
      %s32 = ssub.s32 1024, 1024
      %33 = vsyncadd [#allocation3], %s32
      %s34 = sshll.u32 [#allocation2], 4
      %s35 = int_to_ptr.vmem [resolvable:$true] %s34
      %40 = dma.hbm_to_vmem [thread:$0]  %s0, 1024, %s35, [#allocation3], 128, 128, 8
    $region5: #{tpu_custom_call.1} parent=1 // pred_fallthru
      _
    // Predicated region
    $region6: #{tpu_custom_call.1} parent=1 // pred_check
      _
    $region7: #{tpu_custom_call.1} parent=1 // pred_check_branch
      %42 = sbr.rel (0) target = $region9
    $region8: #{tpu_custom_call.1} parent=1 // pred_region
      %s44 = ssub.s32 64, 64
      %45 = vsyncadd [#allocation6], %s44
      %s47 = sshll.u32 [#allocation5], 4
      %s48 = int_to_ptr.vmem [resolvable:$true] %s47
      %50 = dma.hbm_to_vmem [thread:$0]  %s1, 64, %s48, [#allocation6]
    $region9: #{tpu_custom_call.1} parent=1 // pred_fallthru
      _
    // Predicated region
    $region10: #{tpu_custom_call.1} parent=1 // pred_check
      _
    $region11: #{tpu_custom_call.1} parent=1 // pred_check_branch
      %52 = sbr.rel (0) target = $region13
    $region12: #{tpu_custom_call.1} parent=1 // pred_region
      %s54 = ssub.s32 16, 16
      %55 = vsyncadd [#allocation6], %s54
      %s57 = sshll.u32 [#allocation7], 4
      %s58 = int_to_ptr.vmem [resolvable:$true] %s57
      %60 = dma.hbm_to_vmem [thread:$0]  %s2, 16, %s58, [#allocation6]
    $region13: #{tpu_custom_call.1} parent=1 // pred_fallthru
      _
    // Predicated region
    $region14: #{tpu_custom_call.1} parent=1 // pred_check
      _
    $region15: #{tpu_custom_call.1} parent=1 // pred_check_branch
      %62 = sbr.rel (0) target = $region17
    $region16: #{tpu_custom_call.1} parent=1 // pred_region
      %s64 = ssub.s32 16, 16
      %65 = vsyncadd [#allocation9], %s64
      %s67 = sshll.u32 [#allocation8], 4
      %s68 = int_to_ptr.vmem [resolvable:$true] %s67
      %70 = dma.hbm_to_vmem [thread:$0]  %s3, 16, %s68, [#allocation9]
    $region17: #{tpu_custom_call.1} parent=1 // pred_fallthru
      _
    // Predicated region
    $region18: #{tpu_custom_call.1} parent=1 // pred_check
      _
    $region19: #{tpu_custom_call.1} parent=1 // pred_check_branch
      %72 = sbr.rel (0) target = $region21
    $region20: #{tpu_custom_call.1} parent=1 // pred_region
      _
    $region21: #{tpu_custom_call.1} parent=1 // pred_fallthru
      _
    // Predicated region
    $region22: #{tpu_custom_call.1} parent=1 // pred_check
      _
    $region23: #{tpu_custom_call.1} parent=1 // pred_check_branch
      %74 = sbr.rel (0) target = $region25
    $region24: #{tpu_custom_call.1} parent=1 // pred_region
      %s76 = ssub.s32 64, 64
      %77 = vsyncadd [#allocation9], %s76
      %s79 = sshll.u32 [#allocation10], 4
      %s80 = int_to_ptr.vmem [resolvable:$true] %s79
      %82 = dma.hbm_to_vmem [thread:$0]  %s5, 64, %s80, [#allocation9]
    $region25: #{tpu_custom_call.1} parent=1 // pred_fallthru
      _
    // Predicated region
    $region26: #{tpu_custom_call.1} parent=1 // pred_check
      _
    $region27: #{tpu_custom_call.1} parent=1 // pred_check_branch
      %84 = sbr.rel (0) target = $region29
    $region28: #{tpu_custom_call.1} parent=1 // pred_region
      _
    $region29: #{tpu_custom_call.1} parent=1 // pred_fallthru
      _
    // Predicated region
    $region30: #{tpu_custom_call.1} parent=1 // pred_check
      _
    $region31: #{tpu_custom_call.1} parent=1 // pred_check_branch
      %86 = sbr.rel (0) target = $region33
    $region32: #{tpu_custom_call.1} parent=1 // pred_region
      %s88 = ssub.s32 32, 32
      %89 = vsyncadd [#allocation12], %s88
      %s91 = sshll.u32 [#allocation11], 4
      %s92 = int_to_ptr.vmem [resolvable:$true] %s91
      %94 = dma.hbm_to_vmem [thread:$0]  %s7, 32, %s92, [#allocation12]
    $region33: #{tpu_custom_call.1} parent=1 // pred_fallthru
      _
    // Predicated region
    $region34: #{tpu_custom_call.1} parent=1 // pred_check
      _
    $region35: #{tpu_custom_call.1} parent=1 // pred_check_branch
      %96 = sbr.rel (0) target = $region37
    $region36: #{tpu_custom_call.1} parent=1 // pred_region
      _
    $region37: #{tpu_custom_call.1} parent=1 // pred_fallthru
      _
    // Predicated region
    $region38: #{tpu_custom_call.1} parent=1 // pred_check
      _
    $region39: #{tpu_custom_call.1} parent=1 // pred_check_branch
      %98 = sbr.rel (0) target = $region41
    $region40: #{tpu_custom_call.1} parent=1 // pred_region
      %s100 = ssub.s32 512, 512
      %101 = vsyncadd [#allocation12], %s100
      %s102 = sshll.u32 [#allocation13], 4
      %s103 = int_to_ptr.vmem [resolvable:$true] %s102
      %108 = dma.hbm_to_vmem [thread:$0]  %s9, 512, %s103, [#allocation12], 256, 256, 16
    $region41: #{tpu_custom_call.1} parent=1 // pred_fallthru
      _
    // Predicated region
    $region42: #{tpu_custom_call.1} parent=1 // pred_check
      _
    $region43: #{tpu_custom_call.1} parent=1 // pred_check_branch
      %110 = sbr.rel (0) target = $region45
    $region44: #{tpu_custom_call.1} parent=1 // pred_region
      _
    $region45: #{tpu_custom_call.1} parent=1 // pred_fallthru
      _
    // Predicated region
    $region46: #{tpu_custom_call.1} parent=1 // pred_check
      _
    $region47: #{tpu_custom_call.1} parent=1 // pred_check_branch
      %112 = sbr.rel (0) target = $region49
    $region48: #{tpu_custom_call.1} parent=1 // pred_region
      _
    $region49: #{tpu_custom_call.1} parent=1 // pred_fallthru
      _
    // Predicated region
    $region50: #{tpu_custom_call.1} parent=1 // pred_check
      _
    $region51: #{tpu_custom_call.1} parent=1 // pred_check_branch
      %114 = sbr.rel (0) target = $region53
    $region52: #{tpu_custom_call.1} parent=1 // pred_region
      _
    $region53: #{tpu_custom_call.1} parent=1 // pred_fallthru
      _
    // Predicated region
    $region54: #{tpu_custom_call.1} parent=1 // pred_check
      _
    $region55: #{tpu_custom_call.1} parent=1 // pred_check_branch
      %116 = sbr.rel (0) target = $region57
    $region56: #{tpu_custom_call.1} parent=1 // pred_region
      _
    $region57: #{tpu_custom_call.1} parent=1 // pred_fallthru
      _
    // Predicated region
    $region58: #{tpu_custom_call.1} parent=1 // pred_check
      _
    $region59: #{tpu_custom_call.1} parent=1 // pred_check_branch
      %118 = sbr.rel (0) target = $region61
    $region60: #{tpu_custom_call.1} parent=1 // pred_region
      %s120 = ssub.s32 12288, 12288
      %121 = vsyncadd [#allocation15], %s120
      %s122 = sshll.u32 [#allocation14], 4
      %s123 = int_to_ptr.vmem [resolvable:$true] %s122
      %128 = dma.hbm_to_vmem [thread:$0]  %s14, 12288, %s123, [#allocation15], 128, 128, 8
    $region61: #{tpu_custom_call.1} parent=1 // pred_fallthru
      _
    // Predicated region
    $region62: #{tpu_custom_call.1} parent=1 // pred_check
      _
    $region63: #{tpu_custom_call.1} parent=1 // pred_check_branch
      %130 = sbr.rel (0) target = $region65
    $region64: #{tpu_custom_call.1} parent=1 // pred_region
      _
    $region65: #{tpu_custom_call.1} parent=1 // pred_fallthru
      _
    // Predicated region
    $region66: #{tpu_custom_call.1} parent=1 // pred_check
      _
    $region67: #{tpu_custom_call.1} parent=1 // pred_check_branch
      %132 = sbr.rel (0) target = $region69
    $region68: #{tpu_custom_call.1} parent=1 // pred_region
      %s134 = ssub.s32 2048, 2048
      %135 = vsyncadd [#allocation15], %s134
      %s136 = sshll.u32 [#allocation16], 4
      %s137 = int_to_ptr.vmem [resolvable:$true] %s136
      %142 = dma.hbm_to_vmem [thread:$0]  %s16, 2048, %s137, [#allocation15], 128, 128, 8
    $region69: #{tpu_custom_call.1} parent=1 // pred_fallthru
      _
    // Predicated region
    $region70: #{tpu_custom_call.1} parent=1 // pred_check
      _
    $region71: #{tpu_custom_call.1} parent=1 // pred_check_branch
      %144 = sbr.rel (0) target = $region73
    $region72: #{tpu_custom_call.1} parent=1 // pred_region
      _
    $region73: #{tpu_custom_call.1} parent=1 // pred_fallthru
      _
    // Predicated region
    $region74: #{tpu_custom_call.1} parent=1 // pred_check
      _
    $region75: #{tpu_custom_call.1} parent=1 // pred_check_branch
      %146 = sbr.rel (0) target = $region77
    $region76: #{tpu_custom_call.1} parent=1 // pred_region
      %147 = dma.done [#allocation3], 1024
    $region77: #{tpu_custom_call.1} parent=1 // pred_fallthru
      _
    // Predicated region
    $region78: #{tpu_custom_call.1} parent=1 // pred_check
      _
    $region79: #{tpu_custom_call.1} parent=1 // pred_check_branch
      %149 = sbr.rel (0) target = $region81
    $region80: #{tpu_custom_call.1} parent=1 // pred_region
      %150 = dma.done [#allocation6], 64
    $region81: #{tpu_custom_call.1} parent=1 // pred_fallthru
      _
    // Predicated region
    $region82: #{tpu_custom_call.1} parent=1 // pred_check
      _
    $region83: #{tpu_custom_call.1} parent=1 // pred_check_branch
      %152 = sbr.rel (0) target = $region85
    $region84: #{tpu_custom_call.1} parent=1 // pred_region
      %153 = dma.done [#allocation6], 16
    $region85: #{tpu_custom_call.1} parent=1 // pred_fallthru
      _
    // Predicated region
    $region86: #{tpu_custom_call.1} parent=1 // pred_check
      _
    $region87: #{tpu_custom_call.1} parent=1 // pred_check_branch
      %155 = sbr.rel (0) target = $region89
    $region88: #{tpu_custom_call.1} parent=1 // pred_region
      %156 = dma.done [#allocation9], 16
    $region89: #{tpu_custom_call.1} parent=1 // pred_fallthru
      _
    // Predicated region
    $region90: #{tpu_custom_call.1} parent=1 // pred_check
      _
    $region91: #{tpu_custom_call.1} parent=1 // pred_check_branch
      %158 = sbr.rel (0) target = $region93
    $region92: #{tpu_custom_call.1} parent=1 // pred_region
      %159 = dma.done [#allocation9], 64
    $region93: #{tpu_custom_call.1} parent=1 // pred_fallthru
      _
    // Predicated region
    $region94: #{tpu_custom_call.1} parent=1 // pred_check
      _
    $region95: #{tpu_custom_call.1} parent=1 // pred_check_branch
      %161 = sbr.rel (0) target = $region97
    $region96: #{tpu_custom_call.1} parent=1 // pred_region
      %162 = dma.done [#allocation12], 32
    $region97: #{tpu_custom_call.1} parent=1 // pred_fallthru
      _
    // Predicated region
    $region98: #{tpu_custom_call.1} parent=1 // pred_check
      _
    $region99: #{tpu_custom_call.1} parent=1 // pred_check_branch
      %164 = sbr.rel (0) target = $region101
    $region100: #{tpu_custom_call.1} parent=1 // pred_region
      %165 = dma.done [#allocation12], 512
    $region101: #{tpu_custom_call.1} parent=1 // pred_fallthru
      _
    // Predicated region
    $region102: #{tpu_custom_call.1} parent=1 // pred_check
      _
    $region103: #{tpu_custom_call.1} parent=1 // pred_check_branch
      %167 = sbr.rel (0) target = $region105
    $region104: #{tpu_custom_call.1} parent=1 // pred_region
      %168 = dma.done [#allocation15], 12288
    $region105: #{tpu_custom_call.1} parent=1 // pred_fallthru
      _
    // Predicated region
    $region106: #{tpu_custom_call.1} parent=1 // pred_check
      _
    $region107: #{tpu_custom_call.1} parent=1 // pred_check_branch
      %170 = sbr.rel (0) target = $region109
    $region108: #{tpu_custom_call.1} parent=1 // pred_region
      %171 = dma.done [#allocation15], 2048
    $region109: #{tpu_custom_call.1} parent=1 // pred_fallthru
      _
    %v173 = vld [vmem:[#allocation2] sm:$0xff]
    %v174 = vld [vmem:[#allocation2 + $0x8] sm:$0xff]
    %v175 = vld [vmem:[#allocation2 + $0x10] sm:$0xff]
    %v176 = vld [vmem:[#allocation2 + $0x18] sm:$0xff]
    %v177 = vld [vmem:[#allocation2 + $0x20] sm:$0xff]
    %v178 = vld [vmem:[#allocation2 + $0x28] sm:$0xff]
    %v179 = vld [vmem:[#allocation2 + $0x30] sm:$0xff]
    %v180 = vld [vmem:[#allocation2 + $0x38] sm:$0xff]
    %v181 = vld [vmem:[#allocation7] sm:$0x1]
    %v182 = vld [vmem:[#allocation8] sm:$0x1]
    %v183 = vld [vmem:[%s4] sm:$0xff]
    %v184 = vld [vmem:[%s4 + $0x8] sm:$0xff]
    %v185 = vld [vmem:[%s4 + $0x10] sm:$0xff]
    %v186 = vld [vmem:[%s4 + $0x18] sm:$0xff]
    %v187 = vld [vmem:[%s4 + $0x20] sm:$0xff]
    %v188 = vld [vmem:[%s4 + $0x28] sm:$0xff]
    %v189 = vld [vmem:[%s4 + $0x30] sm:$0xff]
    %v190 = vld [vmem:[%s4 + $0x38] sm:$0xff]
    %v191 = vld [vmem:[%s4 + $0x40] sm:$0xff]
    %v192 = vld [vmem:[%s4 + $0x48] sm:$0xff]
    %v193 = vld [vmem:[%s4 + $0x50] sm:$0xff]
    %v194 = vld [vmem:[%s4 + $0x58] sm:$0xff]
    %v195 = vld [vmem:[%s4 + $0x60] sm:$0xff]
    %v196 = vld [vmem:[%s4 + $0x68] sm:$0xff]
    %v197 = vld [vmem:[%s4 + $0x70] sm:$0xff]
    %v198 = vld [vmem:[%s4 + $0x78] sm:$0xff]
    %v199 = vld [vmem:[#allocation10] sm:$0xf]
    %v200 = vadd.f32 %v173, %v174
    %v201 = vrot.slane %v200, 4
    %v202 = vadd.f32 %v200, %v201
    %v203 = vrot.slane %v202, 2
    %v204 = vadd.f32 %v202, %v203
    %v205 = vrot.slane %v204, 1
    %v206 = vadd.f32 %v204, %v205
    %v207 = vadd.f32 %v175, %v176
    %v208 = vrot.slane %v207, 4
    %v209 = vadd.f32 %v207, %v208
    %v210 = vrot.slane %v209, 2
    %v211 = vadd.f32 %v209, %v210
    %v212 = vrot.slane %v211, 1
    %v213 = vadd.f32 %v211, %v212
    %v214 = vadd.f32 %v177, %v178
    %v215 = vrot.slane %v214, 4
    %v216 = vadd.f32 %v214, %v215
    %v217 = vrot.slane %v216, 2
    %v218 = vadd.f32 %v216, %v217
    %v219 = vrot.slane %v218, 1
    %v220 = vadd.f32 %v218, %v219
    %v221 = vadd.f32 %v179, %v180
    %v222 = vrot.slane %v221, 4
    %v223 = vadd.f32 %v221, %v222
    %v224 = vrot.slane %v223, 2
    %v225 = vadd.f32 %v223, %v224
    %v226 = vrot.slane %v225, 1
    %v227 = vadd.f32 %v225, %v226
    %v228 = vmul.f32 %v173, %v173
    %v229 = vmul.f32 %v174, %v174
    %v230 = vmul.f32 %v175, %v175
    %v231 = vmul.f32 %v176, %v176
    %v232 = vmul.f32 %v177, %v177
    %v233 = vmul.f32 %v178, %v178
    %v234 = vmul.f32 %v179, %v179
    %v235 = vmul.f32 %v180, %v180
    %v236 = vadd.f32 %v228, %v229
    %v237 = vrot.slane %v236, 4
    %v238 = vadd.f32 %v236, %v237
    %v239 = vrot.slane %v238, 2
    %v240 = vadd.f32 %v238, %v239
    %v241 = vrot.slane %v240, 1
    %v242 = vadd.f32 %v240, %v241
    %v243 = vadd.f32 %v230, %v231
    %v244 = vrot.slane %v243, 4
    %v245 = vadd.f32 %v243, %v244
    %v246 = vrot.slane %v245, 2
    %v247 = vadd.f32 %v245, %v246
    %v248 = vrot.slane %v247, 1
    %v249 = vadd.f32 %v247, %v248
    %v250 = vadd.f32 %v232, %v233
    %v251 = vrot.slane %v250, 4
    %v252 = vadd.f32 %v250, %v251
    %v253 = vrot.slane %v252, 2
    %v254 = vadd.f32 %v252, %v253
    %v255 = vrot.slane %v254, 1
    %v256 = vadd.f32 %v254, %v255
    %v257 = vadd.f32 %v234, %v235
    %v258 = vrot.slane %v257, 4
    %v259 = vadd.f32 %v257, %v258
    %v260 = vrot.slane %v259, 2
    %v261 = vadd.f32 %v259, %v260
    %v262 = vrot.slane %v261, 1
    %v263 = vadd.f32 %v261, %v262
    %vm268 = vcmask 1041409
    %v269 = vsel %vm268, %v213, %v206
    %vm270 = vcmask 1042434
    %v271 = vsel %vm270, %v220, %v269
    %vm272 = vcmask 1043459
    %v273 = vsel %vm272, %v227, %v271
    %vm279 = vcmask 1045509
    %v280 = vsel %vm279, %v249, %v242
    %vm281 = vcmask 1046534
    %v282 = vsel %vm281, %v256, %v280
    %vm283 = vcmask 1047559
    %v284 = vsel %vm283, %v263, %v282
    %vm286 = vcmask 1043456
    %v287 = vsel %vm286, %v273, %v284
    %288 = vmatprep.subr.mxu0 0.0
    %289 = vmatpush1.msra.mxu0 %v198
    %290 = vmatprep.subr.mxu0 0.0
    %291 = vmatpush1.msra.mxu0 %v197
    %292 = vmatprep.subr.mxu0 0.0
    %293 = vmatpush1.msra.mxu0 %v196
    %294 = vmatprep.subr.mxu0 0.0
    %295 = vmatpush1.msra.mxu0 %v195
    %296 = vmatprep.subr.mxu0 0.0
    %297 = vmatpush1.msra.mxu0 %v194
    %298 = vmatprep.subr.mxu0 0.0
    %299 = vmatpush1.msra.mxu0 %v193
    %300 = vmatprep.subr.mxu0 0.0
    %301 = vmatpush1.msra.mxu0 %v192
    %302 = vmatprep.subr.mxu0 0.0
    %303 = vmatpush1.msra.mxu0 %v191
    %304 = vmatprep.subr.mxu0 0.0
    %305 = vmatpush1.msra.mxu0 %v190
    %306 = vmatprep.subr.mxu0 0.0
    %307 = vmatpush1.msra.mxu0 %v189
    %308 = vmatprep.subr.mxu0 0.0
    %309 = vmatpush1.msra.mxu0 %v188
    %310 = vmatprep.subr.mxu0 0.0
    %311 = vmatpush1.msra.mxu0 %v187
    %312 = vmatprep.subr.mxu0 0.0
    %313 = vmatpush1.msra.mxu0 %v186
    %314 = vmatprep.subr.mxu0 0.0
    %315 = vmatpush1.msra.mxu0 %v185
    %316 = vmatprep.subr.mxu0 0.0
    %317 = vmatpush1.msra.mxu0 %v184
    %318 = vmatprep.subr.mxu0 0.0
    %319 = vmatpush1.msra.mxu0 %v183
    %320 = vmatprep.subr.mxu0 0.0
    %321 = vmatpush2.msra.mxu0 0.0
    %322 = vmatprep.subr.mxu0 0.0
    %323 = vmatpush2.msra.mxu0 0.0
    %324 = vmatprep.subr.mxu0 0.0
    %325 = vmatpush2.msra.mxu0 0.0
    %326 = vmatprep.subr.mxu0 0.0
    %327 = vmatpush2.msra.mxu0 0.0
    %328 = vmatprep.subr.mxu0 0.0
    %329 = vmatpush2.msra.mxu0 0.0
    %330 = vmatprep.subr.mxu0 0.0
    %331 = vmatpush2.msra.mxu0 0.0
    %332 = vmatprep.subr.mxu0 0.0
    %333 = vmatpush2.msra.mxu0 0.0
    %334 = vmatprep.subr.mxu0 0.0
    %335 = vmatpush2.msra.mxu0 0.0
    %336 = vmatprep.subr.mxu0 0.0
    %337 = vmatpush2.msra.mxu0 0.0
    %338 = vmatprep.subr.mxu0 0.0
    %339 = vmatpush2.msra.mxu0 0.0
    %340 = vmatprep.subr.mxu0 0.0
    %341 = vmatpush2.msra.mxu0 0.0
    %342 = vmatprep.subr.mxu0 0.0
    %343 = vmatpush2.msra.mxu0 0.0
    %344 = vmatprep.subr.mxu0 0.0
    %345 = vmatpush2.msra.mxu0 0.0
    %346 = vmatprep.subr.mxu0 0.0
    %347 = vmatpush2.msra.mxu0 0.0
    %348 = vmatprep.subr.mxu0 0.0
    %349 = vmatpush2.msra.mxu0 0.0
    %350 = vmatprep.subr.mxu0 0.0
    %351 = vmatpush2.msra.mxu0 0.0
    %352 = vmatprep.mubr.f32.mxu0 0.0
    %353 = vmatmul.mubr.f32.gmra.mxu0 %v287
    %v354 = vpop.f32.mrf.mxu0
    %v355 = vadd.f32 0.0, %v354
    %v356 = vpop.f32.mrf.mxu0
    %357 = vdwg.mxu0
    %v358 = vmul.f32 %v355, 0.001953125
    %v359 = vmul.f32 %v358, %v358
    %v361 = vrot.slane %v359, 4
    %v363 = vsub.f32 %v358, %v361
    %v364 = vmax.f32 %v363, 0.0
    %v365 = vadd.f32 %v364, 1e-05
    %v366 = vrsqrt.pop %v365
    %v367 = vsel %vm286, %v358, %v366
    %vm368 = vcmask 31744
    %v370 = vsel %vm368, %v367, 0
    %v373 = vsel %vm286, %v199, 0
    %375 = vmatprep.subr.mxu0 0.0
    %376 = vmatpush1.msra.mxu0 0.0
    %377 = vmatprep.subr.mxu0 0.0
    %378 = vmatpush1.msra.mxu0 0.0
    %379 = vmatprep.subr.mxu0 0.0
    %380 = vmatpush1.msra.mxu0 0.0
    %381 = vmatprep.subr.mxu0 0.0
    %382 = vmatpush1.msra.mxu0 0.0
    %383 = vmatprep.subr.mxu0 0.0
    %384 = vmatpush1.msra.mxu0 0.0
    %385 = vmatprep.subr.mxu0 0.0
    %386 = vmatpush1.msra.mxu0 0.0
    %387 = vmatprep.subr.mxu0 0.0
    %388 = vmatpush1.msra.mxu0 0.0
    %389 = vmatprep.subr.mxu0 0.0
    %390 = vmatpush1.msra.mxu0 0.0
    %391 = vmatprep.subr.mxu0 0.0
    %392 = vmatpush1.msra.mxu0 0.0
    %393 = vmatprep.subr.mxu0 0.0
    %394 = vmatpush1.msra.mxu0 0.0
    %395 = vmatprep.subr.mxu0 0.0
    %396 = vmatpush1.msra.mxu0 0.0
    %397 = vmatprep.subr.mxu0 0.0
    %398 = vmatpush1.msra.mxu0 0.0
    %399 = vmatprep.subr.mxu0 0.0
    %400 = vmatpush1.msra.mxu0 0.0
    %401 = vmatprep.subr.mxu0 0.0
    %402 = vmatpush1.msra.mxu0 0.0
    %403 = vmatprep.subr.mxu0 0.0
    %404 = vmatpush1.msra.mxu0 0.0
    %405 = vmatprep.subr.mxu0 0.0
    %406 = vmatpush1.msra.mxu0 %v373
    %407 = vmatprep.subr.mxu0 0.0
    %408 = vmatpush2.msra.mxu0 0.0
    %409 = vmatprep.subr.mxu0 0.0
    %410 = vmatpush2.msra.mxu0 0.0
    %411 = vmatprep.subr.mxu0 0.0
    %412 = vmatpush2.msra.mxu0 0.0
    %413 = vmatprep.subr.mxu0 0.0
    %414 = vmatpush2.msra.mxu0 0.0
    %415 = vmatprep.subr.mxu0 0.0
    %416 = vmatpush2.msra.mxu0 0.0
    %417 = vmatprep.subr.mxu0 0.0
    %418 = vmatpush2.msra.mxu0 0.0
    %419 = vmatprep.subr.mxu0 0.0
    %420 = vmatpush2.msra.mxu0 0.0
    %421 = vmatprep.subr.mxu0 0.0
    %422 = vmatpush2.msra.mxu0 0.0
    %423 = vmatprep.subr.mxu0 0.0
    %424 = vmatpush2.msra.mxu0 0.0
    %425 = vmatprep.subr.mxu0 0.0
    %426 = vmatpush2.msra.mxu0 0.0
    %427 = vmatprep.subr.mxu0 0.0
    %428 = vmatpush2.msra.mxu0 0.0
    %429 = vmatprep.subr.mxu0 0.0
    %430 = vmatpush2.msra.mxu0 0.0
    %431 = vmatprep.subr.mxu0 0.0
    %432 = vmatpush2.msra.mxu0 0.0
    %433 = vmatprep.subr.mxu0 0.0
    %434 = vmatpush2.msra.mxu0 0.0
    %435 = vmatprep.subr.mxu0 0.0
    %436 = vmatpush2.msra.mxu0 0.0
    %437 = vmatprep.subr.mxu0 0.0
    %438 = vmatpush2.msra.mxu0 0.0
    %439 = vmatprep.mubr.f32.mxu0 0.0
    %440 = vmatmul.mubr.f32.gmra.mxu0 %v370
    %v441 = vpop.f32.mrf.mxu0
    %v442 = vadd.f32 0.0, %v441
    %v443 = vpop.f32.mrf.mxu0
    %444 = vdwg.mxu0
    %v446 = vlaneseq
    %v447 = vshrl.u32 %v446, 7
    %v448 = vsub.s32 0, %v447
    %v449 = vrot.slane %v181, %v448
    %v451 = vmul.f32 %v442, %v449
    %v453 = vrot.slane %v451, 4
    %v455 = vmul.f32 %v442, %v453
    %v457 = vlaneseq
    %v458 = vshrl.u32 %v457, 7
    %v459 = vsub.s32 0, %v458
    %v460 = vrot.slane %v182, %v459
    %v462 = vsub.f32 %v460, %v455
    %v463 = vcombine.high %v451, %v451
    %v465 = vunpack.c.l.s4 1966171168
    %v466 = vunpack.c.0.s8 %v465
    %v467 = vlaneseq
    %v468 = vshrl.u32 %v467, 7
    %v469 = vsub.s32 %v466, %v468
    %v470 = vrot.slane %v463, %v469
    %v471 = vcombine.high %v470, %v470
    %v473 = vunpack.c.l.s4 1966171168
    %v474 = vunpack.c.0.s8 %v473
    %v475 = vlaneseq
    %v476 = vshrl.u32 %v475, 7
    %v477 = vsub.s32 %v474, %v476
    %v478 = vrot.slane %v470, %v477
    %v480 = vunpack.c.l.s4 1966171168
    %v481 = vunpack.c.0.s8 %v480
    %v482 = vlaneseq
    %v483 = vshrl.u32 %v482, 7
    %v484 = vsub.s32 %v481, %v483
    %v485 = vrot.slane %v471, %v484
    %v486 = vcombine.high %v478, %v478
    %v487 = vcombine.high %v485, %v485
    %v488 = vlaneseq
    %v489 = vshrl.u32 %v488, 7
    %v490 = vsub.s32 0, %v489
    %v491 = vrot.slane %v478, %v490
    %v492 = vlaneseq
    %v493 = vshrl.u32 %v492, 7
    %v494 = vsub.s32 0, %v493
    %v495 = vrot.slane %v485, %v494
    %v496 = vlaneseq
    %v497 = vshrl.u32 %v496, 7
    %v498 = vsub.s32 0, %v497
    %v499 = vrot.slane %v486, %v498
    %v500 = vlaneseq
    %v501 = vshrl.u32 %v500, 7
    %v502 = vsub.s32 0, %v501
    %v503 = vrot.slane %v487, %v502
    %v508 = vmul.f32 %v173, %v491
    %v509 = vmul.f32 %v174, %v491
    %v510 = vmul.f32 %v175, %v495
    %v511 = vmul.f32 %v176, %v495
    %v512 = vmul.f32 %v177, %v499
    %v513 = vmul.f32 %v178, %v499
    %v514 = vmul.f32 %v179, %v503
    %v515 = vmul.f32 %v180, %v503
    %v518 = vunpack.c.l.s4 1966171168
    %v519 = vunpack.c.0.s8 %v518
    %v520 = vlaneseq
    %v521 = vshrl.u32 %v520, 7
    %v522 = vsub.s32 %v519, %v521
    %v523 = vrot.slane %v462, %v522
    %v524 = vcombine.high %v523, %v523
    %v526 = vunpack.c.l.s4 1966171168
    %v527 = vunpack.c.0.s8 %v526
    %v528 = vlaneseq
    %v529 = vshrl.u32 %v528, 7
    %v530 = vsub.s32 %v527, %v529
    %v531 = vrot.slane %v523, %v530
    %v533 = vunpack.c.l.s4 1966171168
    %v534 = vunpack.c.0.s8 %v533
    %v535 = vlaneseq
    %v536 = vshrl.u32 %v535, 7
    %v537 = vsub.s32 %v534, %v536
    %v538 = vrot.slane %v524, %v537
    %v539 = vcombine.high %v531, %v531
    %v540 = vcombine.high %v538, %v538
    %v541 = vlaneseq
    %v542 = vshrl.u32 %v541, 7
    %v543 = vsub.s32 0, %v542
    %v544 = vrot.slane %v531, %v543
    %v545 = vlaneseq
    %v546 = vshrl.u32 %v545, 7
    %v547 = vsub.s32 0, %v546
    %v548 = vrot.slane %v538, %v547
    %v549 = vlaneseq
    %v550 = vshrl.u32 %v549, 7
    %v551 = vsub.s32 0, %v550
    %v552 = vrot.slane %v539, %v551
    %v553 = vlaneseq
    %v554 = vshrl.u32 %v553, 7
    %v555 = vsub.s32 0, %v554
    %v556 = vrot.slane %v540, %v555
    %v561 = vadd.f32 %v508, %v544
    %v562 = vadd.f32 %v509, %v544
    %v563 = vadd.f32 %v510, %v548
    %v564 = vadd.f32 %v511, %v548
    %v565 = vadd.f32 %v512, %v552
    %v566 = vadd.f32 %v513, %v552
    %v567 = vadd.f32 %v514, %v556
    %v568 = vadd.f32 %v515, %v556
    %v569 = vxor.u32 %v561, 2147483648
    %v570 = vxor.u32 %v562, 2147483648
    %v571 = vxor.u32 %v563, 2147483648
    %v572 = vxor.u32 %v564, 2147483648
    %v573 = vxor.u32 %v565, 2147483648
    %v574 = vxor.u32 %v566, 2147483648
    %v575 = vxor.u32 %v567, 2147483648
    %v576 = vxor.u32 %v568, 2147483648
    %v577 = vmul.f32 %v569, 1.442695
    %v578 = vpow.pop %v577
    %v579 = vmul.f32 %v570, 1.442695
    %v580 = vpow.pop %v579
    %v581 = vmul.f32 %v571, 1.442695
    %v582 = vpow.pop %v581
    %v583 = vmul.f32 %v572, 1.442695
    %v584 = vpow.pop %v583
    %v585 = vmul.f32 %v573, 1.442695
    %v586 = vpow.pop %v585
    %v587 = vmul.f32 %v574, 1.442695
    %v588 = vpow.pop %v587
    %v589 = vmul.f32 %v575, 1.442695
    %v590 = vpow.pop %v589
    %v591 = vmul.f32 %v576, 1.442695
    %v592 = vpow.pop %v591
    %v593 = vadd.f32 %v578, 1.0
    %v594 = vadd.f32 %v580, 1.0
    %v595 = vadd.f32 %v582, 1.0
    %v596 = vadd.f32 %v584, 1.0
    %v597 = vadd.f32 %v586, 1.0
    %v598 = vadd.f32 %v588, 1.0
    %v599 = vadd.f32 %v590, 1.0
    %v600 = vadd.f32 %v592, 1.0
    %v601 = vrcp.pop %v593
    %v602 = vmul.f32 1.0, %v601
    %v603 = vrcp.pop %v594
    %v604 = vmul.f32 1.0, %v603
    %v605 = vrcp.pop %v595
    %v606 = vmul.f32 1.0, %v605
    %v607 = vrcp.pop %v596
    %v608 = vmul.f32 1.0, %v607
    %v609 = vrcp.pop %v597
    %v610 = vmul.f32 1.0, %v609
    %v611 = vrcp.pop %v598
    %v612 = vmul.f32 1.0, %v611
    %v613 = vrcp.pop %v599
    %v614 = vmul.f32 1.0, %v613
    %v615 = vrcp.pop %v600
    %v616 = vmul.f32 1.0, %v615
    %v617 = vmul.f32 %v561, %v602
    %v618 = vmul.f32 %v562, %v604
    %v619 = vmul.f32 %v563, %v606
    %v620 = vmul.f32 %v564, %v608
    %v621 = vmul.f32 %v565, %v610
    %v622 = vmul.f32 %v566, %v612
    %v623 = vmul.f32 %v567, %v614
    %v624 = vmul.f32 %v568, %v616
    %v625 = vpack.c.bf16 %v618, %v617
    %v626 = vpack.c.bf16 %v620, %v619
    %v627 = vpack.c.bf16 %v622, %v621
    %v628 = vpack.c.bf16 %v624, %v623
    %v630 = vshrl.u32 %v625, 16
    %v632 = vrot.slane %v630, 7
    %v633 = vshll.u32 %v625, 16
    %v635 = vor.u32 %v632, %v633
    %v637 = vshrl.u32 %v626, 16
    %v639 = vrot.slane %v637, 7
    %v640 = vshll.u32 %v626, 16
    %v642 = vor.u32 %v639, %v640
    %v644 = vshrl.u32 %v627, 16
    %v646 = vrot.slane %v644, 7
    %v647 = vshll.u32 %v627, 16
    %v649 = vor.u32 %v646, %v647
    %v651 = vshrl.u32 %v628, 16
    %v653 = vrot.slane %v651, 7
    %v654 = vshll.u32 %v628, 16
    %v656 = vor.u32 %v653, %v654
    %vm661 = vcmask 1040384
    %vm662 = vsmask.f32 256
    %vm663 = vmand %vm661, %vm662
    %v664 = vsel %vm663, 0, %v635
    %v665 = vsel %vm663, 0, %v642
    %v666 = vsel %vm663, 0, %v649
    %v667 = vsel %vm663, 0, %v656
    %v668 = vrot.slane %v633, 1
    %v669 = vor.u32 %v630, %v668
    %v670 = vrot.slane %v640, 1
    %v671 = vor.u32 %v637, %v670
    %v672 = vrot.slane %v647, 1
    %v673 = vor.u32 %v644, %v672
    %v674 = vrot.slane %v654, 1
    %v675 = vor.u32 %v651, %v674
    %vm680 = vcmask 1047552
    %vm681 = vsmask.f32 7424
    %vm682 = vmand %vm680, %vm681
    %v683 = vsel %vm682, %v669, 0
    %v684 = vsel %vm682, %v671, 0
    %v685 = vsel %vm682, %v673, 0
    %v686 = vsel %vm682, %v675, 0
    %v687 = vld [vmem:[%s6] sm:$0xff]
    %v688 = vld [vmem:[%s6 + $0x8] sm:$0xff]
    %v689 = vld [vmem:[%s6 + $0x10] sm:$0xff]
    %v690 = vld [vmem:[%s6 + $0x18] sm:$0xff]
    %v691 = vld [vmem:[%s6 + $0x20] sm:$0xff]
    %v692 = vld [vmem:[%s6 + $0x28] sm:$0xff]
    %v693 = vld [vmem:[%s6 + $0x30] sm:$0xff]
    %v694 = vld [vmem:[%s6 + $0x38] sm:$0xff]
    %v695 = vld [vmem:[%s6 + $0x40] sm:$0xff]
    %v696 = vld [vmem:[%s6 + $0x48] sm:$0xff]
    %v697 = vld [vmem:[%s6 + $0x50] sm:$0xff]
    %v698 = vld [vmem:[%s6 + $0x58] sm:$0xff]
    %v699 = vld [vmem:[%s6 + $0x60] sm:$0xff]
    %v700 = vld [vmem:[%s6 + $0x68] sm:$0xff]
    %v701 = vld [vmem:[%s6 + $0x70] sm:$0xff]
    %v702 = vld [vmem:[%s6 + $0x78] sm:$0xff]
    %s703 = scalar_lea.vmem %s6, 128
    %v704 = vld [vmem:[%s703] sm:$0xff]
    %v705 = vld [vmem:[%s703 + $0x8] sm:$0xff]
    %v706 = vld [vmem:[%s703 + $0x10] sm:$0xff]
    %v707 = vld [vmem:[%s703 + $0x18] sm:$0xff]
    %v708 = vld [vmem:[%s703 + $0x20] sm:$0xff]
    %v709 = vld [vmem:[%s703 + $0x28] sm:$0xff]
    %v710 = vld [vmem:[%s703 + $0x30] sm:$0xff]
    %v711 = vld [vmem:[%s703 + $0x38] sm:$0xff]
    %v712 = vld [vmem:[%s703 + $0x40] sm:$0xff]
    %v713 = vld [vmem:[%s703 + $0x48] sm:$0xff]
    %v714 = vld [vmem:[%s703 + $0x50] sm:$0xff]
    %v715 = vld [vmem:[%s703 + $0x58] sm:$0xff]
    %v716 = vld [vmem:[%s703 + $0x60] sm:$0xff]
    %v717 = vld [vmem:[%s703 + $0x68] sm:$0xff]
    %v718 = vld [vmem:[%s703 + $0x70] sm:$0xff]
    %v719 = vld [vmem:[%s703 + $0x78] sm:$0xff]
    %v736 = vunpack.c.l.b16 %v704
    %v737 = vunpack.c.h.b16 %v704
    %v738 = vunpack.c.l.b16 %v705
    %v739 = vunpack.c.h.b16 %v705
    %v740 = vunpack.c.l.b16 %v706
    %v741 = vunpack.c.h.b16 %v706
    %v742 = vunpack.c.l.b16 %v707
    %v743 = vunpack.c.h.b16 %v707
    %v744 = vunpack.c.l.b16 %v708
    %v745 = vunpack.c.h.b16 %v708
    %v746 = vunpack.c.l.b16 %v709
    %v747 = vunpack.c.h.b16 %v709
    %v748 = vunpack.c.l.b16 %v710
    %v749 = vunpack.c.h.b16 %v710
    %v750 = vunpack.c.l.b16 %v711
    %v751 = vunpack.c.h.b16 %v711
    %v752 = vunpack.c.l.b16 %v712
    %v753 = vunpack.c.h.b16 %v712
    %v754 = vunpack.c.l.b16 %v713
    %v755 = vunpack.c.h.b16 %v713
    %v756 = vunpack.c.l.b16 %v714
    %v757 = vunpack.c.h.b16 %v714
    %v758 = vunpack.c.l.b16 %v715
    %v759 = vunpack.c.h.b16 %v715
    %v760 = vunpack.c.l.b16 %v716
    %v761 = vunpack.c.h.b16 %v716
    %v762 = vunpack.c.l.b16 %v717
    %v763 = vunpack.c.h.b16 %v717
    %v764 = vunpack.c.l.b16 %v718
    %v765 = vunpack.c.h.b16 %v718
    %v766 = vunpack.c.l.b16 %v719
    %v767 = vunpack.c.h.b16 %v719
    %v768 = vpack.c.b16 %v738, %v736
    %v769 = vpack.c.b16 %v739, %v737
    %v770 = vpack.c.b16 %v742, %v740
    %v771 = vpack.c.b16 %v743, %v741
    %v772 = vpack.c.b16 %v746, %v744
    %v773 = vpack.c.b16 %v747, %v745
    %v774 = vpack.c.b16 %v750, %v748
    %v775 = vpack.c.b16 %v751, %v749
    %v776 = vpack.c.b16 %v754, %v752
    %v777 = vpack.c.b16 %v755, %v753
    %v778 = vpack.c.b16 %v758, %v756
    %v779 = vpack.c.b16 %v759, %v757
    %v780 = vpack.c.b16 %v762, %v760
    %v781 = vpack.c.b16 %v763, %v761
    %v782 = vpack.c.b16 %v766, %v764
    %v783 = vpack.c.b16 %v767, %v765
    %800 = vmatprep.subr.bf16.mxu0 %v783
    %801 = vmatpush1.bf16.msra.mxu0 %v782
    %802 = vmatprep.subr.bf16.mxu0 %v781
    %803 = vmatpush1.bf16.msra.mxu0 %v780
    %804 = vmatprep.subr.bf16.mxu0 %v779
    %805 = vmatpush1.bf16.msra.mxu0 %v778
    %806 = vmatprep.subr.bf16.mxu0 %v777
    %807 = vmatpush1.bf16.msra.mxu0 %v776
    %808 = vmatprep.subr.bf16.mxu0 %v775
    %809 = vmatpush1.bf16.msra.mxu0 %v774
    %810 = vmatprep.subr.bf16.mxu0 %v773
    %811 = vmatpush1.bf16.msra.mxu0 %v772
    %812 = vmatprep.subr.bf16.mxu0 %v771
    %813 = vmatpush1.bf16.msra.mxu0 %v770
    %814 = vmatprep.subr.bf16.mxu0 %v769
    %815 = vmatpush1.bf16.msra.mxu0 %v768
    %816 = vmatprep.subr.bf16.mxu0 0
    %817 = vmatpush2.bf16.msra.mxu0 0
    %818 = vmatprep.subr.bf16.mxu0 0
    %819 = vmatpush2.bf16.msra.mxu0 0
    %820 = vmatprep.subr.bf16.mxu0 0
    %821 = vmatpush2.bf16.msra.mxu0 0
    %822 = vmatprep.subr.bf16.mxu0 0
    %823 = vmatpush2.bf16.msra.mxu0 0
    %824 = vmatprep.subr.bf16.mxu0 0
    %825 = vmatpush2.bf16.msra.mxu0 0
    %826 = vmatprep.subr.bf16.mxu0 0
    %827 = vmatpush2.bf16.msra.mxu0 0
    %828 = vmatprep.subr.bf16.mxu0 0
    %829 = vmatpush2.bf16.msra.mxu0 0
    %830 = vmatprep.subr.bf16.mxu0 0
    %831 = vmatpush2.bf16.msra.mxu0 0
    %832 = vmatprep.mubr.bf16.mxu0 0
    %833 = vmatmul.mubr.bf16.gmra.mxu0 %v625
    %v834 = vpop.f32.mrf.mxu0
    %v835 = vadd.f32 0.0, %v834
    %v836 = vpop.f32.mrf.mxu0
    %v837 = vadd.f32 0.0, %v836
    %v838 = vpop.f32.mrf.mxu0
    %v839 = vadd.f32 0.0, %v838
    %v840 = vpop.f32.mrf.mxu0
    %v841 = vadd.f32 0.0, %v840
    %842 = vmatprep.mubr.bf16.mxu0 0
    %843 = vmatmul.mubr.bf16.gmra.mxu0 %v626
    %v844 = vpop.f32.mrf.mxu0
    %v845 = vadd.f32 0.0, %v844
    %v846 = vpop.f32.mrf.mxu0
    %v847 = vadd.f32 0.0, %v846
    %v848 = vpop.f32.mrf.mxu0
    %v849 = vadd.f32 0.0, %v848
    %v850 = vpop.f32.mrf.mxu0
    %v851 = vadd.f32 0.0, %v850
    %852 = vmatprep.mubr.bf16.mxu0 0
    %853 = vmatmul.mubr.bf16.gmra.mxu0 %v627
    %v854 = vpop.f32.mrf.mxu0
    %v855 = vadd.f32 0.0, %v854
    %v856 = vpop.f32.mrf.mxu0
    %v857 = vadd.f32 0.0, %v856
    %v858 = vpop.f32.mrf.mxu0
    %v859 = vadd.f32 0.0, %v858
    %v860 = vpop.f32.mrf.mxu0
    %v861 = vadd.f32 0.0, %v860
    %862 = vmatprep.mubr.bf16.mxu0 0
    %863 = vmatmul.mubr.bf16.gmra.mxu0 %v628
    %v864 = vpop.f32.mrf.mxu0
    %v865 = vadd.f32 0.0, %v864
    %v866 = vpop.f32.mrf.mxu0
    %v867 = vadd.f32 0.0, %v866
    %v868 = vpop.f32.mrf.mxu0
    %v869 = vadd.f32 0.0, %v868
    %v870 = vpop.f32.mrf.mxu0
    %v871 = vadd.f32 0.0, %v870
    %872 = vdwg.mxu0
    %v889 = vunpack.c.l.b16 %v687
    %v890 = vunpack.c.h.b16 %v687
    %v891 = vunpack.c.l.b16 %v688
    %v892 = vunpack.c.h.b16 %v688
    %v893 = vunpack.c.l.b16 %v689
    %v894 = vunpack.c.h.b16 %v689
    %v895 = vunpack.c.l.b16 %v690
    %v896 = vunpack.c.h.b16 %v690
    %v897 = vunpack.c.l.b16 %v691
    %v898 = vunpack.c.h.b16 %v691
    %v899 = vunpack.c.l.b16 %v692
    %v900 = vunpack.c.h.b16 %v692
    %v901 = vunpack.c.l.b16 %v693
    %v902 = vunpack.c.h.b16 %v693
    %v903 = vunpack.c.l.b16 %v694
    %v904 = vunpack.c.h.b16 %v694
    %v905 = vunpack.c.l.b16 %v695
    %v906 = vunpack.c.h.b16 %v695
    %v907 = vunpack.c.l.b16 %v696
    %v908 = vunpack.c.h.b16 %v696
    %v909 = vunpack.c.l.b16 %v697
    %v910 = vunpack.c.h.b16 %v697
    %v911 = vunpack.c.l.b16 %v698
    %v912 = vunpack.c.h.b16 %v698
    %v913 = vunpack.c.l.b16 %v699
    %v914 = vunpack.c.h.b16 %v699
    %v915 = vunpack.c.l.b16 %v700
    %v916 = vunpack.c.h.b16 %v700
    %v917 = vunpack.c.l.b16 %v701
    %v918 = vunpack.c.h.b16 %v701
    %v919 = vunpack.c.l.b16 %v702
    %v920 = vunpack.c.h.b16 %v702
    %v921 = vpack.c.b16 %v891, %v889
    %v922 = vpack.c.b16 %v892, %v890
    %v923 = vpack.c.b16 %v895, %v893
    %v924 = vpack.c.b16 %v896, %v894
    %v925 = vpack.c.b16 %v899, %v897
    %v926 = vpack.c.b16 %v900, %v898
    %v927 = vpack.c.b16 %v903, %v901
    %v928 = vpack.c.b16 %v904, %v902
    %v929 = vpack.c.b16 %v907, %v905
    %v930 = vpack.c.b16 %v908, %v906
    %v931 = vpack.c.b16 %v911, %v909
    %v932 = vpack.c.b16 %v912, %v910
    %v933 = vpack.c.b16 %v915, %v913
    %v934 = vpack.c.b16 %v916, %v914
    %v935 = vpack.c.b16 %v919, %v917
    %v936 = vpack.c.b16 %v920, %v918
    %953 = vmatprep.subr.bf16.mxu0 %v936
    %954 = vmatpush1.bf16.msra.mxu0 %v935
    %955 = vmatprep.subr.bf16.mxu0 %v934
    %956 = vmatpush1.bf16.msra.mxu0 %v933
    %957 = vmatprep.subr.bf16.mxu0 %v932
    %958 = vmatpush1.bf16.msra.mxu0 %v931
    %959 = vmatprep.subr.bf16.mxu0 %v930
    %960 = vmatpush1.bf16.msra.mxu0 %v929
    %961 = vmatprep.subr.bf16.mxu0 %v928
    %962 = vmatpush1.bf16.msra.mxu0 %v927
    %963 = vmatprep.subr.bf16.mxu0 %v926
    %964 = vmatpush1.bf16.msra.mxu0 %v925
    %965 = vmatprep.subr.bf16.mxu0 %v924
    %966 = vmatpush1.bf16.msra.mxu0 %v923
    %967 = vmatprep.subr.bf16.mxu0 %v922
    %968 = vmatpush1.bf16.msra.mxu0 %v921
    %969 = vmatprep.subr.bf16.mxu0 0
    %970 = vmatpush2.bf16.msra.mxu0 0
    %971 = vmatprep.subr.bf16.mxu0 0
    %972 = vmatpush2.bf16.msra.mxu0 0
    %973 = vmatprep.subr.bf16.mxu0 0
    %974 = vmatpush2.bf16.msra.mxu0 0
    %975 = vmatprep.subr.bf16.mxu0 0
    %976 = vmatpush2.bf16.msra.mxu0 0
    %977 = vmatprep.subr.bf16.mxu0 0
    %978 = vmatpush2.bf16.msra.mxu0 0
    %979 = vmatprep.subr.bf16.mxu0 0
    %980 = vmatpush2.bf16.msra.mxu0 0
    %981 = vmatprep.subr.bf16.mxu0 0
    %982 = vmatpush2.bf16.msra.mxu0 0
    %983 = vmatprep.subr.bf16.mxu0 0
    %984 = vmatpush2.bf16.msra.mxu0 0
    %985 = vmatprep.mubr.bf16.mxu0 0
    %986 = vmatmul.mubr.bf16.gmra.mxu0 %v664
    %v987 = vpop.f32.mrf.mxu0
    %v988 = vadd.f32 %v835, %v987
    %v989 = vpop.f32.mrf.mxu0
    %v990 = vadd.f32 %v837, %v989
    %v991 = vpop.f32.mrf.mxu0
    %v992 = vadd.f32 %v839, %v991
    %v993 = vpop.f32.mrf.mxu0
    %v994 = vadd.f32 %v841, %v993
    %995 = vmatprep.mubr.bf16.mxu0 0
    %996 = vmatmul.mubr.bf16.gmra.mxu0 %v665
    %v997 = vpop.f32.mrf.mxu0
    %v998 = vadd.f32 %v845, %v997
    %v999 = vpop.f32.mrf.mxu0
    %v1000 = vadd.f32 %v847, %v999
    %v1001 = vpop.f32.mrf.mxu0
    %v1002 = vadd.f32 %v849, %v1001
    %v1003 = vpop.f32.mrf.mxu0
    %v1004 = vadd.f32 %v851, %v1003
    %1005 = vmatprep.mubr.bf16.mxu0 0
    %1006 = vmatmul.mubr.bf16.gmra.mxu0 %v666
    %v1007 = vpop.f32.mrf.mxu0
    %v1008 = vadd.f32 %v855, %v1007
    %v1009 = vpop.f32.mrf.mxu0
    %v1010 = vadd.f32 %v857, %v1009
    %v1011 = vpop.f32.mrf.mxu0
    %v1012 = vadd.f32 %v859, %v1011
    %v1013 = vpop.f32.mrf.mxu0
    %v1014 = vadd.f32 %v861, %v1013
    %1015 = vmatprep.mubr.bf16.mxu0 0
    %1016 = vmatmul.mubr.bf16.gmra.mxu0 %v667
    %v1017 = vpop.f32.mrf.mxu0
    %v1018 = vadd.f32 %v865, %v1017
    %v1019 = vpop.f32.mrf.mxu0
    %v1020 = vadd.f32 %v867, %v1019
    %v1021 = vpop.f32.mrf.mxu0
    %v1022 = vadd.f32 %v869, %v1021
    %v1023 = vpop.f32.mrf.mxu0
    %v1024 = vadd.f32 %v871, %v1023
    %1025 = vdwg.mxu0
    %s1026 = scalar_lea.vmem %s6, 256
    %v1027 = vld [vmem:[%s1026] sm:$0xff]
    %v1028 = vld [vmem:[%s1026 + $0x8] sm:$0xff]
    %v1029 = vld [vmem:[%s1026 + $0x10] sm:$0xff]
    %v1030 = vld [vmem:[%s1026 + $0x18] sm:$0xff]
    %v1031 = vld [vmem:[%s1026 + $0x20] sm:$0xff]
    %v1032 = vld [vmem:[%s1026 + $0x28] sm:$0xff]
    %v1033 = vld [vmem:[%s1026 + $0x30] sm:$0xff]
    %v1034 = vld [vmem:[%s1026 + $0x38] sm:$0xff]
    %v1035 = vld [vmem:[%s1026 + $0x40] sm:$0xff]
    %v1036 = vld [vmem:[%s1026 + $0x48] sm:$0xff]
    %v1037 = vld [vmem:[%s1026 + $0x50] sm:$0xff]
    %v1038 = vld [vmem:[%s1026 + $0x58] sm:$0xff]
    %v1039 = vld [vmem:[%s1026 + $0x60] sm:$0xff]
    %v1040 = vld [vmem:[%s1026 + $0x68] sm:$0xff]
    %v1041 = vld [vmem:[%s1026 + $0x70] sm:$0xff]
    %v1042 = vld [vmem:[%s1026 + $0x78] sm:$0xff]
    %v1059 = vunpack.c.l.b16 %v1027
    %v1060 = vunpack.c.h.b16 %v1027
    %v1061 = vunpack.c.l.b16 %v1028
    %v1062 = vunpack.c.h.b16 %v1028
    %v1063 = vunpack.c.l.b16 %v1029
    %v1064 = vunpack.c.h.b16 %v1029
    %v1065 = vunpack.c.l.b16 %v1030
    %v1066 = vunpack.c.h.b16 %v1030
    %v1067 = vunpack.c.l.b16 %v1031
    %v1068 = vunpack.c.h.b16 %v1031
    %v1069 = vunpack.c.l.b16 %v1032
    %v1070 = vunpack.c.h.b16 %v1032
    %v1071 = vunpack.c.l.b16 %v1033
    %v1072 = vunpack.c.h.b16 %v1033
    %v1073 = vunpack.c.l.b16 %v1034
    %v1074 = vunpack.c.h.b16 %v1034
    %v1075 = vunpack.c.l.b16 %v1035
    %v1076 = vunpack.c.h.b16 %v1035
    %v1077 = vunpack.c.l.b16 %v1036
    %v1078 = vunpack.c.h.b16 %v1036
    %v1079 = vunpack.c.l.b16 %v1037
    %v1080 = vunpack.c.h.b16 %v1037
    %v1081 = vunpack.c.l.b16 %v1038
    %v1082 = vunpack.c.h.b16 %v1038
    %v1083 = vunpack.c.l.b16 %v1039
    %v1084 = vunpack.c.h.b16 %v1039
    %v1085 = vunpack.c.l.b16 %v1040
    %v1086 = vunpack.c.h.b16 %v1040
    %v1087 = vunpack.c.l.b16 %v1041
    %v1088 = vunpack.c.h.b16 %v1041
    %v1089 = vunpack.c.l.b16 %v1042
    %v1090 = vunpack.c.h.b16 %v1042
    %v1091 = vpack.c.b16 %v1061, %v1059
    %v1092 = vpack.c.b16 %v1062, %v1060
    %v1093 = vpack.c.b16 %v1065, %v1063
    %v1094 = vpack.c.b16 %v1066, %v1064
    %v1095 = vpack.c.b16 %v1069, %v1067
    %v1096 = vpack.c.b16 %v1070, %v1068
    %v1097 = vpack.c.b16 %v1073, %v1071
    %v1098 = vpack.c.b16 %v1074, %v1072
    %v1099 = vpack.c.b16 %v1077, %v1075
    %v1100 = vpack.c.b16 %v1078, %v1076
    %v1101 = vpack.c.b16 %v1081, %v1079
    %v1102 = vpack.c.b16 %v1082, %v1080
    %v1103 = vpack.c.b16 %v1085, %v1083
    %v1104 = vpack.c.b16 %v1086, %v1084
    %v1105 = vpack.c.b16 %v1089, %v1087
    %v1106 = vpack.c.b16 %v1090, %v1088
    %1123 = vmatprep.subr.bf16.mxu0 %v1106
    %1124 = vmatpush1.bf16.msra.mxu0 %v1105
    %1125 = vmatprep.subr.bf16.mxu0 %v1104
    %1126 = vmatpush1.bf16.msra.mxu0 %v1103
    %1127 = vmatprep.subr.bf16.mxu0 %v1102
    %1128 = vmatpush1.bf16.msra.mxu0 %v1101
    %1129 = vmatprep.subr.bf16.mxu0 %v1100
    %1130 = vmatpush1.bf16.msra.mxu0 %v1099
    %1131 = vmatprep.subr.bf16.mxu0 %v1098
    %1132 = vmatpush1.bf16.msra.mxu0 %v1097
    %1133 = vmatprep.subr.bf16.mxu0 %v1096
    %1134 = vmatpush1.bf16.msra.mxu0 %v1095
    %1135 = vmatprep.subr.bf16.mxu0 %v1094
    %1136 = vmatpush1.bf16.msra.mxu0 %v1093
    %1137 = vmatprep.subr.bf16.mxu0 %v1092
    %1138 = vmatpush1.bf16.msra.mxu0 %v1091
    %1139 = vmatprep.subr.bf16.mxu0 0
    %1140 = vmatpush2.bf16.msra.mxu0 0
    %1141 = vmatprep.subr.bf16.mxu0 0
    %1142 = vmatpush2.bf16.msra.mxu0 0
    %1143 = vmatprep.subr.bf16.mxu0 0
    %1144 = vmatpush2.bf16.msra.mxu0 0
    %1145 = vmatprep.subr.bf16.mxu0 0
    %1146 = vmatpush2.bf16.msra.mxu0 0
    %1147 = vmatprep.subr.bf16.mxu0 0
    %1148 = vmatpush2.bf16.msra.mxu0 0
    %1149 = vmatprep.subr.bf16.mxu0 0
    %1150 = vmatpush2.bf16.msra.mxu0 0
    %1151 = vmatprep.subr.bf16.mxu0 0
    %1152 = vmatpush2.bf16.msra.mxu0 0
    %1153 = vmatprep.subr.bf16.mxu0 0
    %1154 = vmatpush2.bf16.msra.mxu0 0
    %1155 = vmatprep.mubr.bf16.mxu0 0
    %1156 = vmatmul.mubr.bf16.gmra.mxu0 %v683
    %v1157 = vpop.f32.mrf.mxu0
    %v1158 = vadd.f32 0.0, %v1157
    %v1159 = vpop.f32.mrf.mxu0
    %v1160 = vadd.f32 0.0, %v1159
    %v1161 = vpop.f32.mrf.mxu0
    %v1162 = vadd.f32 0.0, %v1161
    %v1163 = vpop.f32.mrf.mxu0
    %v1164 = vadd.f32 0.0, %v1163
    %1165 = vmatprep.mubr.bf16.mxu0 0
    %1166 = vmatmul.mubr.bf16.gmra.mxu0 %v684
    %v1167 = vpop.f32.mrf.mxu0
    %v1168 = vadd.f32 0.0, %v1167
    %v1169 = vpop.f32.mrf.mxu0
    %v1170 = vadd.f32 0.0, %v1169
    %v1171 = vpop.f32.mrf.mxu0
    %v1172 = vadd.f32 0.0, %v1171
    %v1173 = vpop.f32.mrf.mxu0
    %v1174 = vadd.f32 0.0, %v1173
    %1175 = vmatprep.mubr.bf16.mxu0 0
    %1176 = vmatmul.mubr.bf16.gmra.mxu0 %v685
    %v1177 = vpop.f32.mrf.mxu0
    %v1178 = vadd.f32 0.0, %v1177
    %v1179 = vpop.f32.mrf.mxu0
    %v1180 = vadd.f32 0.0, %v1179
    %v1181 = vpop.f32.mrf.mxu0
    %v1182 = vadd.f32 0.0, %v1181
    %v1183 = vpop.f32.mrf.mxu0
    %v1184 = vadd.f32 0.0, %v1183
    %1185 = vmatprep.mubr.bf16.mxu0 0
    %1186 = vmatmul.mubr.bf16.gmra.mxu0 %v686
    %v1187 = vpop.f32.mrf.mxu0
    %v1188 = vadd.f32 0.0, %v1187
    %v1189 = vpop.f32.mrf.mxu0
    %v1190 = vadd.f32 0.0, %v1189
    %v1191 = vpop.f32.mrf.mxu0
    %v1192 = vadd.f32 0.0, %v1191
    %v1193 = vpop.f32.mrf.mxu0
    %v1194 = vadd.f32 0.0, %v1193
    %1195 = vdwg.mxu0
    %v1196 = vadd.f32 %v988, %v1158
    %v1197 = vadd.f32 %v990, %v1160
    %v1198 = vadd.f32 %v992, %v1162
    %v1199 = vadd.f32 %v994, %v1164
    %v1200 = vadd.f32 %v998, %v1168
    %v1201 = vadd.f32 %v1000, %v1170
    %v1202 = vadd.f32 %v1002, %v1172
    %v1203 = vadd.f32 %v1004, %v1174
    %v1204 = vadd.f32 %v1008, %v1178
    %v1205 = vadd.f32 %v1010, %v1180
    %v1206 = vadd.f32 %v1012, %v1182
    %v1207 = vadd.f32 %v1014, %v1184
    %v1208 = vadd.f32 %v1018, %v1188
    %v1209 = vadd.f32 %v1020, %v1190
    %v1210 = vadd.f32 %v1022, %v1192
    %v1211 = vadd.f32 %v1024, %v1194
    %v1212 = vld [vmem:[#allocation11] sm:$0x3]
    %v1214 = vlaneseq
    %v1215 = vshrl.u32 %v1214, 7
    %v1216 = vsub.s32 0, %v1215
    %v1217 = vrot.slane %v1212, %v1216
    %v1218 = vlaneseq
    %v1219 = vshrl.u32 %v1218, 7
    %v1220 = vsub.s32 1, %v1219
    %v1221 = vrot.slane %v1212, %v1220
    %v1224 = vadd.f32 %v1196, %v1217
    %v1225 = vadd.f32 %v1197, %v1221
    %v1226 = vadd.f32 %v1198, %v1217
    %v1227 = vadd.f32 %v1199, %v1221
    %v1228 = vadd.f32 %v1200, %v1217
    %v1229 = vadd.f32 %v1201, %v1221
    %v1230 = vadd.f32 %v1202, %v1217
    %v1231 = vadd.f32 %v1203, %v1221
    %v1232 = vadd.f32 %v1204, %v1217
    %v1233 = vadd.f32 %v1205, %v1221
    %v1234 = vadd.f32 %v1206, %v1217
    %v1235 = vadd.f32 %v1207, %v1221
    %v1236 = vadd.f32 %v1208, %v1217
    %v1237 = vadd.f32 %v1209, %v1221
    %v1238 = vadd.f32 %v1210, %v1217
    %v1239 = vadd.f32 %v1211, %v1221
    %v1240 = vld [vmem:[#allocation5] sm:$0xf]
    %v1241 = vld [vmem:[%s8] sm:$0xff]
    %vm1242 = vcmask 64512
    %v1244 = vsel %vm1242, %v1240, 0
    %1246 = vmatprep.subr.mxu0 0.0
    %1247 = vmatpush1.msra.mxu0 0.0
    %1248 = vmatprep.subr.mxu0 0.0
    %1249 = vmatpush1.msra.mxu0 0.0
    %1250 = vmatprep.subr.mxu0 0.0
    %1251 = vmatpush1.msra.mxu0 0.0
    %1252 = vmatprep.subr.mxu0 0.0
    %1253 = vmatpush1.msra.mxu0 0.0
    %1254 = vmatprep.subr.mxu0 0.0
    %1255 = vmatpush1.msra.mxu0 0.0
    %1256 = vmatprep.subr.mxu0 0.0
    %1257 = vmatpush1.msra.mxu0 0.0
    %1258 = vmatprep.subr.mxu0 0.0
    %1259 = vmatpush1.msra.mxu0 0.0
    %1260 = vmatprep.subr.mxu0 0.0
    %1261 = vmatpush1.msra.mxu0 0.0
    %1262 = vmatprep.subr.mxu0 0.0
    %1263 = vmatpush1.msra.mxu0 0.0
    %1264 = vmatprep.subr.mxu0 0.0
    %1265 = vmatpush1.msra.mxu0 0.0
    %1266 = vmatprep.subr.mxu0 0.0
    %1267 = vmatpush1.msra.mxu0 0.0
    %1268 = vmatprep.subr.mxu0 0.0
    %1269 = vmatpush1.msra.mxu0 0.0
    %1270 = vmatprep.subr.mxu0 0.0
    %1271 = vmatpush1.msra.mxu0 0.0
    %1272 = vmatprep.subr.mxu0 0.0
    %1273 = vmatpush1.msra.mxu0 0.0
    %1274 = vmatprep.subr.mxu0 0.0
    %1275 = vmatpush1.msra.mxu0 0.0
    %1276 = vmatprep.subr.mxu0 0.0
    %1277 = vmatpush1.msra.mxu0 %v1241
    %1278 = vmatprep.subr.mxu0 0.0
    %1279 = vmatpush2.msra.mxu0 0.0
    %1280 = vmatprep.subr.mxu0 0.0
    %1281 = vmatpush2.msra.mxu0 0.0
    %1282 = vmatprep.subr.mxu0 0.0
    %1283 = vmatpush2.msra.mxu0 0.0
    %1284 = vmatprep.subr.mxu0 0.0
    %1285 = vmatpush2.msra.mxu0 0.0
    %1286 = vmatprep.subr.mxu0 0.0
    %1287 = vmatpush2.msra.mxu0 0.0
    %1288 = vmatprep.subr.mxu0 0.0
    %1289 = vmatpush2.msra.mxu0 0.0
    %1290 = vmatprep.subr.mxu0 0.0
    %1291 = vmatpush2.msra.mxu0 0.0
    %1292 = vmatprep.subr.mxu0 0.0
    %1293 = vmatpush2.msra.mxu0 0.0
    %1294 = vmatprep.subr.mxu0 0.0
    %1295 = vmatpush2.msra.mxu0 0.0
    %1296 = vmatprep.subr.mxu0 0.0
    %1297 = vmatpush2.msra.mxu0 0.0
    %1298 = vmatprep.subr.mxu0 0.0
    %1299 = vmatpush2.msra.mxu0 0.0
    %1300 = vmatprep.subr.mxu0 0.0
    %1301 = vmatpush2.msra.mxu0 0.0
    %1302 = vmatprep.subr.mxu0 0.0
    %1303 = vmatpush2.msra.mxu0 0.0
    %1304 = vmatprep.subr.mxu0 0.0
    %1305 = vmatpush2.msra.mxu0 0.0
    %1306 = vmatprep.subr.mxu0 0.0
    %1307 = vmatpush2.msra.mxu0 0.0
    %1308 = vmatprep.subr.mxu0 0.0
    %1309 = vmatpush2.msra.mxu0 0.0
    %1310 = vmatprep.mubr.f32.mxu0 0.0
    %1311 = vmatmul.mubr.f32.gmra.mxu0 %v1244
    %v1312 = vpop.f32.mrf.mxu0
    %v1313 = vadd.f32 0.0, %v1312
    %v1314 = vpop.f32.mrf.mxu0
    %1315 = vdwg.mxu0
    %v1316 = vld [vmem:[#allocation13] sm:$0xff]
    %v1317 = vld [vmem:[#allocation13 + $0x8] sm:$0xff]
    %v1318 = vld [vmem:[#allocation13 + $0x10] sm:$0xff]
    %v1319 = vld [vmem:[#allocation13 + $0x18] sm:$0xff]
    %vm1320 = vcmask 130048
    %v1322 = vsel %vm1320, %v1313, 0
    %1324 = vmatprep.subr.mxu0 0.0
    %1325 = vmatpush1.msra.mxu0 0.0
    %1326 = vmatprep.subr.mxu0 0.0
    %1327 = vmatpush1.msra.mxu0 0.0
    %1328 = vmatprep.subr.mxu0 0.0
    %1329 = vmatpush1.msra.mxu0 0.0
    %1330 = vmatprep.subr.mxu0 0.0
    %1331 = vmatpush1.msra.mxu0 0.0
    %1332 = vmatprep.subr.mxu0 0.0
    %1333 = vmatpush1.msra.mxu0 0.0
    %1334 = vmatprep.subr.mxu0 0.0
    %1335 = vmatpush1.msra.mxu0 0.0
    %1336 = vmatprep.subr.mxu0 0.0
    %1337 = vmatpush1.msra.mxu0 0.0
    %1338 = vmatprep.subr.mxu0 0.0
    %1339 = vmatpush1.msra.mxu0 0.0
    %1340 = vmatprep.subr.mxu0 0.0
    %1341 = vmatpush1.msra.mxu0 0.0
    %1342 = vmatprep.subr.mxu0 0.0
    %1343 = vmatpush1.msra.mxu0 0.0
    %1344 = vmatprep.subr.mxu0 0.0
    %1345 = vmatpush1.msra.mxu0 0.0
    %1346 = vmatprep.subr.mxu0 0.0
    %1347 = vmatpush1.msra.mxu0 0.0
    %1348 = vmatprep.subr.mxu0 0.0
    %1349 = vmatpush1.msra.mxu0 0.0
    %1350 = vmatprep.subr.mxu0 0.0
    %1351 = vmatpush1.msra.mxu0 0.0
    %1352 = vmatprep.subr.mxu0 %v1319
    %1353 = vmatpush1.msra.mxu0 %v1318
    %1354 = vmatprep.subr.mxu0 %v1317
    %1355 = vmatpush1.msra.mxu0 %v1316
    %1356 = vmatprep.subr.mxu0 0.0
    %1357 = vmatpush2.msra.mxu0 0.0
    %1358 = vmatprep.subr.mxu0 0.0
    %1359 = vmatpush2.msra.mxu0 0.0
    %1360 = vmatprep.subr.mxu0 0.0
    %1361 = vmatpush2.msra.mxu0 0.0
    %1362 = vmatprep.subr.mxu0 0.0
    %1363 = vmatpush2.msra.mxu0 0.0
    %1364 = vmatprep.subr.mxu0 0.0
    %1365 = vmatpush2.msra.mxu0 0.0
    %1366 = vmatprep.subr.mxu0 0.0
    %1367 = vmatpush2.msra.mxu0 0.0
    %1368 = vmatprep.subr.mxu0 0.0
    %1369 = vmatpush2.msra.mxu0 0.0
    %1370 = vmatprep.subr.mxu0 0.0
    %1371 = vmatpush2.msra.mxu0 0.0
    %1372 = vmatprep.subr.mxu0 0.0
    %1373 = vmatpush2.msra.mxu0 0.0
    %1374 = vmatprep.subr.mxu0 0.0
    %1375 = vmatpush2.msra.mxu0 0.0
    %1376 = vmatprep.subr.mxu0 0.0
    %1377 = vmatpush2.msra.mxu0 0.0
    %1378 = vmatprep.subr.mxu0 0.0
    %1379 = vmatpush2.msra.mxu0 0.0
    %1380 = vmatprep.subr.mxu0 0.0
    %1381 = vmatpush2.msra.mxu0 0.0
    %1382 = vmatprep.subr.mxu0 0.0
    %1383 = vmatpush2.msra.mxu0 0.0
    %1384 = vmatprep.subr.mxu0 0.0
    %1385 = vmatpush2.msra.mxu0 0.0
    %1386 = vmatprep.subr.mxu0 0.0
    %1387 = vmatpush2.msra.mxu0 0.0
    %1388 = vmatprep.mubr.f32.mxu0 0.0
    %1389 = vmatmul.mubr.f32.gmra.mxu0 %v1322
    %v1390 = vpop.f32.mrf.mxu0
    %v1391 = vadd.f32 0.0, %v1390
    %v1392 = vpop.f32.mrf.mxu0
    %v1393 = vadd.f32 0.0, %v1392
    %1394 = vdwg.mxu0
    %v1397 = vcombine.low %v1391, %v1393
    %v1399 = vunpack.c.l.s4 1966171168
    %v1400 = vunpack.c.0.s8 %v1399
    %v1401 = vlaneseq
    %v1402 = vshrl.u32 %v1401, 7
    %v1403 = vsub.s32 %v1400, %v1402
    %v1404 = vrot.slane %v1397, %v1403
    %v1405 = vcombine.high %v1404, %v1404
    %v1407 = vunpack.c.l.s4 1966171168
    %v1408 = vunpack.c.0.s8 %v1407
    %v1409 = vlaneseq
    %v1410 = vshrl.u32 %v1409, 7
    %v1411 = vsub.s32 %v1408, %v1410
    %v1412 = vrot.slane %v1404, %v1411
    %v1414 = vunpack.c.l.s4 1966171168
    %v1415 = vunpack.c.0.s8 %v1414
    %v1416 = vlaneseq
    %v1417 = vshrl.u32 %v1416, 7
    %v1418 = vsub.s32 %v1415, %v1417
    %v1419 = vrot.slane %v1405, %v1418
    %v1420 = vcombine.high %v1412, %v1412
    %v1421 = vcombine.high %v1419, %v1419
    %v1422 = vlaneseq
    %v1423 = vshrl.u32 %v1422, 7
    %v1424 = vsub.s32 0, %v1423
    %v1425 = vrot.slane %v1412, %v1424
    %v1426 = vlaneseq
    %v1427 = vshrl.u32 %v1426, 7
    %v1428 = vsub.s32 1, %v1427
    %v1429 = vrot.slane %v1412, %v1428
    %v1430 = vlaneseq
    %v1431 = vshrl.u32 %v1430, 7
    %v1432 = vsub.s32 0, %v1431
    %v1433 = vrot.slane %v1419, %v1432
    %v1434 = vlaneseq
    %v1435 = vshrl.u32 %v1434, 7
    %v1436 = vsub.s32 1, %v1435
    %v1437 = vrot.slane %v1419, %v1436
    %v1438 = vlaneseq
    %v1439 = vshrl.u32 %v1438, 7
    %v1440 = vsub.s32 0, %v1439
    %v1441 = vrot.slane %v1420, %v1440
    %v1442 = vlaneseq
    %v1443 = vshrl.u32 %v1442, 7
    %v1444 = vsub.s32 1, %v1443
    %v1445 = vrot.slane %v1420, %v1444
    %v1446 = vlaneseq
    %v1447 = vshrl.u32 %v1446, 7
    %v1448 = vsub.s32 0, %v1447
    %v1449 = vrot.slane %v1421, %v1448
    %v1450 = vlaneseq
    %v1451 = vshrl.u32 %v1450, 7
    %v1452 = vsub.s32 1, %v1451
    %v1453 = vrot.slane %v1421, %v1452
    %v1462 = vadd.f32 %v1224, %v1425
    %v1463 = vadd.f32 %v1225, %v1429
    %v1464 = vadd.f32 %v1226, %v1425
    %v1465 = vadd.f32 %v1227, %v1429
    %v1466 = vadd.f32 %v1228, %v1433
    %v1467 = vadd.f32 %v1229, %v1437
    %v1468 = vadd.f32 %v1230, %v1433
    %v1469 = vadd.f32 %v1231, %v1437
    %v1470 = vadd.f32 %v1232, %v1441
    %v1471 = vadd.f32 %v1233, %v1445
    %v1472 = vadd.f32 %v1234, %v1441
    %v1473 = vadd.f32 %v1235, %v1445
    %v1474 = vadd.f32 %v1236, %v1449
    %v1475 = vadd.f32 %v1237, %v1453
    %v1476 = vadd.f32 %v1238, %v1449
    %v1477 = vadd.f32 %v1239, %v1453
    %v1478 = vld [vmem:[%s10] sm:$0x3]
    %v1479 = vld [vmem:[%s11] sm:$0x3]
    %v1480 = vld [vmem:[%s12] sm:$0xff]
    %v1481 = vld [vmem:[%s12 + $0x8] sm:$0xff]
    %v1482 = vld [vmem:[%s12 + $0x10] sm:$0xff]
    %v1483 = vld [vmem:[%s12 + $0x18] sm:$0xff]
    %v1484 = vld [vmem:[%s12 + $0x20] sm:$0xff]
    %v1485 = vld [vmem:[%s12 + $0x28] sm:$0xff]
    %v1486 = vld [vmem:[%s12 + $0x30] sm:$0xff]
    %v1487 = vld [vmem:[%s12 + $0x38] sm:$0xff]
    %v1488 = vld [vmem:[%s12 + $0x40] sm:$0xff]
    %v1489 = vld [vmem:[%s12 + $0x48] sm:$0xff]
    %v1490 = vld [vmem:[%s12 + $0x50] sm:$0xff]
    %v1491 = vld [vmem:[%s12 + $0x58] sm:$0xff]
    %v1492 = vld [vmem:[%s12 + $0x60] sm:$0xff]
    %v1493 = vld [vmem:[%s12 + $0x68] sm:$0xff]
    %v1494 = vld [vmem:[%s12 + $0x70] sm:$0xff]
    %v1495 = vld [vmem:[%s12 + $0x78] sm:$0xff]
    %v1496 = vld [vmem:[%s12 + $0x80] sm:$0xff]
    %v1497 = vld [vmem:[%s12 + $0x88] sm:$0xff]
    %v1498 = vld [vmem:[%s12 + $0x90] sm:$0xff]
    %v1499 = vld [vmem:[%s12 + $0x98] sm:$0xff]
    %v1500 = vld [vmem:[%s12 + $0xa0] sm:$0xff]
    %v1501 = vld [vmem:[%s12 + $0xa8] sm:$0xff]
    %v1502 = vld [vmem:[%s12 + $0xb0] sm:$0xff]
    %v1503 = vld [vmem:[%s12 + $0xb8] sm:$0xff]
    %v1504 = vld [vmem:[%s12 + $0xc0] sm:$0xff]
    %v1505 = vld [vmem:[%s12 + $0xc8] sm:$0xff]
    %v1506 = vld [vmem:[%s12 + $0xd0] sm:$0xff]
    %v1507 = vld [vmem:[%s12 + $0xd8] sm:$0xff]
    %v1508 = vld [vmem:[%s12 + $0xe0] sm:$0xff]
    %v1509 = vld [vmem:[%s12 + $0xe8] sm:$0xff]
    %v1510 = vld [vmem:[%s12 + $0xf0] sm:$0xff]
    %v1511 = vld [vmem:[%s12 + $0xf8] sm:$0xff]
    %v1512 = vld [vmem:[%s13] sm:$0xff]
    %v1513 = vadd.f32 %v1462, %v1464
    %v1514 = vrot.slane %v1513, 4
    %v1515 = vadd.f32 %v1513, %v1514
    %v1516 = vrot.slane %v1515, 2
    %v1517 = vadd.f32 %v1515, %v1516
    %v1518 = vrot.slane %v1517, 1
    %v1519 = vadd.f32 %v1517, %v1518
    %v1520 = vadd.f32 %v1463, %v1465
    %v1521 = vrot.slane %v1520, 4
    %v1522 = vadd.f32 %v1520, %v1521
    %v1523 = vrot.slane %v1522, 2
    %v1524 = vadd.f32 %v1522, %v1523
    %v1525 = vrot.slane %v1524, 1
    %v1526 = vadd.f32 %v1524, %v1525
    %v1527 = vadd.f32 %v1466, %v1468
    %v1528 = vrot.slane %v1527, 4
    %v1529 = vadd.f32 %v1527, %v1528
    %v1530 = vrot.slane %v1529, 2
    %v1531 = vadd.f32 %v1529, %v1530
    %v1532 = vrot.slane %v1531, 1
    %v1533 = vadd.f32 %v1531, %v1532
    %v1534 = vadd.f32 %v1467, %v1469
    %v1535 = vrot.slane %v1534, 4
    %v1536 = vadd.f32 %v1534, %v1535
    %v1537 = vrot.slane %v1536, 2
    %v1538 = vadd.f32 %v1536, %v1537
    %v1539 = vrot.slane %v1538, 1
    %v1540 = vadd.f32 %v1538, %v1539
    %v1541 = vadd.f32 %v1470, %v1472
    %v1542 = vrot.slane %v1541, 4
    %v1543 = vadd.f32 %v1541, %v1542
    %v1544 = vrot.slane %v1543, 2
    %v1545 = vadd.f32 %v1543, %v1544
    %v1546 = vrot.slane %v1545, 1
    %v1547 = vadd.f32 %v1545, %v1546
    %v1548 = vadd.f32 %v1471, %v1473
    %v1549 = vrot.slane %v1548, 4
    %v1550 = vadd.f32 %v1548, %v1549
    %v1551 = vrot.slane %v1550, 2
    %v1552 = vadd.f32 %v1550, %v1551
    %v1553 = vrot.slane %v1552, 1
    %v1554 = vadd.f32 %v1552, %v1553
    %v1555 = vadd.f32 %v1474, %v1476
    %v1556 = vrot.slane %v1555, 4
    %v1557 = vadd.f32 %v1555, %v1556
    %v1558 = vrot.slane %v1557, 2
    %v1559 = vadd.f32 %v1557, %v1558
    %v1560 = vrot.slane %v1559, 1
    %v1561 = vadd.f32 %v1559, %v1560
    %v1562 = vadd.f32 %v1475, %v1477
    %v1563 = vrot.slane %v1562, 4
    %v1564 = vadd.f32 %v1562, %v1563
    %v1565 = vrot.slane %v1564, 2
    %v1566 = vadd.f32 %v1564, %v1565
    %v1567 = vrot.slane %v1566, 1
    %v1568 = vadd.f32 %v1566, %v1567
    %v1569 = vmul.f32 %v1462, %v1462
    %v1570 = vmul.f32 %v1463, %v1463
    %v1571 = vmul.f32 %v1464, %v1464
    %v1572 = vmul.f32 %v1465, %v1465
    %v1573 = vmul.f32 %v1466, %v1466
    %v1574 = vmul.f32 %v1467, %v1467
    %v1575 = vmul.f32 %v1468, %v1468
    %v1576 = vmul.f32 %v1469, %v1469
    %v1577 = vmul.f32 %v1470, %v1470
    %v1578 = vmul.f32 %v1471, %v1471
    %v1579 = vmul.f32 %v1472, %v1472
    %v1580 = vmul.f32 %v1473, %v1473
    %v1581 = vmul.f32 %v1474, %v1474
    %v1582 = vmul.f32 %v1475, %v1475
    %v1583 = vmul.f32 %v1476, %v1476
    %v1584 = vmul.f32 %v1477, %v1477
    %v1585 = vadd.f32 %v1569, %v1571
    %v1586 = vrot.slane %v1585, 4
    %v1587 = vadd.f32 %v1585, %v1586
    %v1588 = vrot.slane %v1587, 2
    %v1589 = vadd.f32 %v1587, %v1588
    %v1590 = vrot.slane %v1589, 1
    %v1591 = vadd.f32 %v1589, %v1590
    %v1592 = vadd.f32 %v1570, %v1572
    %v1593 = vrot.slane %v1592, 4
    %v1594 = vadd.f32 %v1592, %v1593
    %v1595 = vrot.slane %v1594, 2
    %v1596 = vadd.f32 %v1594, %v1595
    %v1597 = vrot.slane %v1596, 1
    %v1598 = vadd.f32 %v1596, %v1597
    %v1599 = vadd.f32 %v1573, %v1575
    %v1600 = vrot.slane %v1599, 4
    %v1601 = vadd.f32 %v1599, %v1600
    %v1602 = vrot.slane %v1601, 2
    %v1603 = vadd.f32 %v1601, %v1602
    %v1604 = vrot.slane %v1603, 1
    %v1605 = vadd.f32 %v1603, %v1604
    %v1606 = vadd.f32 %v1574, %v1576
    %v1607 = vrot.slane %v1606, 4
    %v1608 = vadd.f32 %v1606, %v1607
    %v1609 = vrot.slane %v1608, 2
    %v1610 = vadd.f32 %v1608, %v1609
    %v1611 = vrot.slane %v1610, 1
    %v1612 = vadd.f32 %v1610, %v1611
    %v1613 = vadd.f32 %v1577, %v1579
    %v1614 = vrot.slane %v1613, 4
    %v1615 = vadd.f32 %v1613, %v1614
    %v1616 = vrot.slane %v1615, 2
    %v1617 = vadd.f32 %v1615, %v1616
    %v1618 = vrot.slane %v1617, 1
    %v1619 = vadd.f32 %v1617, %v1618
    %v1620 = vadd.f32 %v1578, %v1580
    %v1621 = vrot.slane %v1620, 4
    %v1622 = vadd.f32 %v1620, %v1621
    %v1623 = vrot.slane %v1622, 2
    %v1624 = vadd.f32 %v1622, %v1623
    %v1625 = vrot.slane %v1624, 1
    %v1626 = vadd.f32 %v1624, %v1625
    %v1627 = vadd.f32 %v1581, %v1583
    %v1628 = vrot.slane %v1627, 4
    %v1629 = vadd.f32 %v1627, %v1628
    %v1630 = vrot.slane %v1629, 2
    %v1631 = vadd.f32 %v1629, %v1630
    %v1632 = vrot.slane %v1631, 1
    %v1633 = vadd.f32 %v1631, %v1632
    %v1634 = vadd.f32 %v1582, %v1584
    %v1635 = vrot.slane %v1634, 4
    %v1636 = vadd.f32 %v1634, %v1635
    %v1637 = vrot.slane %v1636, 2
    %v1638 = vadd.f32 %v1636, %v1637
    %v1639 = vrot.slane %v1638, 1
    %v1640 = vadd.f32 %v1638, %v1639
    %v1649 = vsel %vm268, %v1533, %v1519
    %v1650 = vsel %vm270, %v1547, %v1649
    %v1651 = vsel %vm272, %v1561, %v1650
    %v1652 = vsel %vm268, %v1540, %v1526
    %v1653 = vsel %vm270, %v1554, %v1652
    %v1654 = vsel %vm272, %v1568, %v1653
    %v1665 = vsel %vm279, %v1605, %v1591
    %v1666 = vsel %vm281, %v1619, %v1665
    %v1667 = vsel %vm283, %v1633, %v1666
    %v1668 = vsel %vm279, %v1612, %v1598
    %v1669 = vsel %vm281, %v1626, %v1668
    %v1670 = vsel %vm283, %v1640, %v1669
    %v1673 = vsel %vm286, %v1651, %v1667
    %v1674 = vsel %vm286, %v1654, %v1670
    %1675 = vmatprep.subr.mxu0 0.0
    %1676 = vmatpush1.msra.mxu0 %v1495
    %1677 = vmatprep.subr.mxu0 0.0
    %1678 = vmatpush1.msra.mxu0 %v1494
    %1679 = vmatprep.subr.mxu0 0.0
    %1680 = vmatpush1.msra.mxu0 %v1493
    %1681 = vmatprep.subr.mxu0 0.0
    %1682 = vmatpush1.msra.mxu0 %v1492
    %1683 = vmatprep.subr.mxu0 0.0
    %1684 = vmatpush1.msra.mxu0 %v1491
    %1685 = vmatprep.subr.mxu0 0.0
    %1686 = vmatpush1.msra.mxu0 %v1490
    %1687 = vmatprep.subr.mxu0 0.0
    %1688 = vmatpush1.msra.mxu0 %v1489
    %1689 = vmatprep.subr.mxu0 0.0
    %1690 = vmatpush1.msra.mxu0 %v1488
    %1691 = vmatprep.subr.mxu0 0.0
    %1692 = vmatpush1.msra.mxu0 %v1487
    %1693 = vmatprep.subr.mxu0 0.0
    %1694 = vmatpush1.msra.mxu0 %v1486
    %1695 = vmatprep.subr.mxu0 0.0
    %1696 = vmatpush1.msra.mxu0 %v1485
    %1697 = vmatprep.subr.mxu0 0.0
    %1698 = vmatpush1.msra.mxu0 %v1484
    %1699 = vmatprep.subr.mxu0 0.0
    %1700 = vmatpush1.msra.mxu0 %v1483
    %1701 = vmatprep.subr.mxu0 0.0
    %1702 = vmatpush1.msra.mxu0 %v1482
    %1703 = vmatprep.subr.mxu0 0.0
    %1704 = vmatpush1.msra.mxu0 %v1481
    %1705 = vmatprep.subr.mxu0 0.0
    %1706 = vmatpush1.msra.mxu0 %v1480
    %1707 = vmatprep.subr.mxu0 0.0
    %1708 = vmatpush2.msra.mxu0 %v1511
    %1709 = vmatprep.subr.mxu0 0.0
    %1710 = vmatpush2.msra.mxu0 %v1510
    %1711 = vmatprep.subr.mxu0 0.0
    %1712 = vmatpush2.msra.mxu0 %v1509
    %1713 = vmatprep.subr.mxu0 0.0
    %1714 = vmatpush2.msra.mxu0 %v1508
    %1715 = vmatprep.subr.mxu0 0.0
    %1716 = vmatpush2.msra.mxu0 %v1507
    %1717 = vmatprep.subr.mxu0 0.0
    %1718 = vmatpush2.msra.mxu0 %v1506
    %1719 = vmatprep.subr.mxu0 0.0
    %1720 = vmatpush2.msra.mxu0 %v1505
    %1721 = vmatprep.subr.mxu0 0.0
    %1722 = vmatpush2.msra.mxu0 %v1504
    %1723 = vmatprep.subr.mxu0 0.0
    %1724 = vmatpush2.msra.mxu0 %v1503
    %1725 = vmatprep.subr.mxu0 0.0
    %1726 = vmatpush2.msra.mxu0 %v1502
    %1727 = vmatprep.subr.mxu0 0.0
    %1728 = vmatpush2.msra.mxu0 %v1501
    %1729 = vmatprep.subr.mxu0 0.0
    %1730 = vmatpush2.msra.mxu0 %v1500
    %1731 = vmatprep.subr.mxu0 0.0
    %1732 = vmatpush2.msra.mxu0 %v1499
    %1733 = vmatprep.subr.mxu0 0.0
    %1734 = vmatpush2.msra.mxu0 %v1498
    %1735 = vmatprep.subr.mxu0 0.0
    %1736 = vmatpush2.msra.mxu0 %v1497
    %1737 = vmatprep.subr.mxu0 0.0
    %1738 = vmatpush2.msra.mxu0 %v1496
    %1739 = vmatprep.mubr.f32.mxu0 %v1674
    %1740 = vmatmul.mubr.f32.gmra.mxu0 %v1673
    %v1741 = vpop.f32.mrf.mxu0
    %v1742 = vadd.f32 0.0, %v1741
    %v1743 = vpop.f32.mrf.mxu0
    %1744 = vdwg.mxu0
    %v1745 = vmul.f32 %v1742, 0.0009765625
    %v1746 = vmul.f32 %v1745, %v1745
    %v1748 = vrot.slane %v1746, 4
    %v1750 = vsub.f32 %v1745, %v1748
    %v1751 = vmax.f32 %v1750, 0.0
    %v1752 = vadd.f32 %v1751, 1e-05
    %v1753 = vrsqrt.pop %v1752
    %v1754 = vsel %vm286, %v1745, %v1753
    %v1756 = vcombine.high %v1512, %v1512
    %v1758 = vsel %vm368, %v1754, 0
    %v1760 = vsel %vm286, %v1512, 0
    %v1762 = vsel %vm286, %v1756, 0
    %1764 = vmatprep.subr.mxu0 0.0
    %1765 = vmatpush1.msra.mxu0 0.0
    %1766 = vmatprep.subr.mxu0 0.0
    %1767 = vmatpush1.msra.mxu0 0.0
    %1768 = vmatprep.subr.mxu0 0.0
    %1769 = vmatpush1.msra.mxu0 0.0
    %1770 = vmatprep.subr.mxu0 0.0
    %1771 = vmatpush1.msra.mxu0 0.0
    %1772 = vmatprep.subr.mxu0 0.0
    %1773 = vmatpush1.msra.mxu0 0.0
    %1774 = vmatprep.subr.mxu0 0.0
    %1775 = vmatpush1.msra.mxu0 0.0
    %1776 = vmatprep.subr.mxu0 0.0
    %1777 = vmatpush1.msra.mxu0 0.0
    %1778 = vmatprep.subr.mxu0 0.0
    %1779 = vmatpush1.msra.mxu0 0.0
    %1780 = vmatprep.subr.mxu0 0.0
    %1781 = vmatpush1.msra.mxu0 0.0
    %1782 = vmatprep.subr.mxu0 0.0
    %1783 = vmatpush1.msra.mxu0 0.0
    %1784 = vmatprep.subr.mxu0 0.0
    %1785 = vmatpush1.msra.mxu0 0.0
    %1786 = vmatprep.subr.mxu0 0.0
    %1787 = vmatpush1.msra.mxu0 0.0
    %1788 = vmatprep.subr.mxu0 0.0
    %1789 = vmatpush1.msra.mxu0 0.0
    %1790 = vmatprep.subr.mxu0 0.0
    %1791 = vmatpush1.msra.mxu0 0.0
    %1792 = vmatprep.subr.mxu0 0.0
    %1793 = vmatpush1.msra.mxu0 0.0
    %1794 = vmatprep.subr.mxu0 %v1762
    %1795 = vmatpush1.msra.mxu0 %v1760
    %1796 = vmatprep.subr.mxu0 0.0
    %1797 = vmatpush2.msra.mxu0 0.0
    %1798 = vmatprep.subr.mxu0 0.0
    %1799 = vmatpush2.msra.mxu0 0.0
    %1800 = vmatprep.subr.mxu0 0.0
    %1801 = vmatpush2.msra.mxu0 0.0
    %1802 = vmatprep.subr.mxu0 0.0
    %1803 = vmatpush2.msra.mxu0 0.0
    %1804 = vmatprep.subr.mxu0 0.0
    %1805 = vmatpush2.msra.mxu0 0.0
    %1806 = vmatprep.subr.mxu0 0.0
    %1807 = vmatpush2.msra.mxu0 0.0
    %1808 = vmatprep.subr.mxu0 0.0
    %1809 = vmatpush2.msra.mxu0 0.0
    %1810 = vmatprep.subr.mxu0 0.0
    %1811 = vmatpush2.msra.mxu0 0.0
    %1812 = vmatprep.subr.mxu0 0.0
    %1813 = vmatpush2.msra.mxu0 0.0
    %1814 = vmatprep.subr.mxu0 0.0
    %1815 = vmatpush2.msra.mxu0 0.0
    %1816 = vmatprep.subr.mxu0 0.0
    %1817 = vmatpush2.msra.mxu0 0.0
    %1818 = vmatprep.subr.mxu0 0.0
    %1819 = vmatpush2.msra.mxu0 0.0
    %1820 = vmatprep.subr.mxu0 0.0
    %1821 = vmatpush2.msra.mxu0 0.0
    %1822 = vmatprep.subr.mxu0 0.0
    %1823 = vmatpush2.msra.mxu0 0.0
    %1824 = vmatprep.subr.mxu0 0.0
    %1825 = vmatpush2.msra.mxu0 0.0
    %1826 = vmatprep.subr.mxu0 0.0
    %1827 = vmatpush2.msra.mxu0 0.0
    %1828 = vmatprep.mubr.f32.mxu0 0.0
    %1829 = vmatmul.mubr.f32.gmra.mxu0 %v1758
    %v1830 = vpop.f32.mrf.mxu0
    %v1831 = vadd.f32 0.0, %v1830
    %v1832 = vpop.f32.mrf.mxu0
    %v1833 = vadd.f32 0.0, %v1832
    %1834 = vdwg.mxu0
    %v1836 = vlaneseq
    %v1837 = vshrl.u32 %v1836, 7
    %v1838 = vsub.s32 0, %v1837
    %v1839 = vrot.slane %v1478, %v1838
    %v1840 = vlaneseq
    %v1841 = vshrl.u32 %v1840, 7
    %v1842 = vsub.s32 1, %v1841
    %v1843 = vrot.slane %v1478, %v1842
    %v1846 = vmul.f32 %v1831, %v1839
    %v1847 = vmul.f32 %v1833, %v1843
    %v1850 = vrot.slane %v1846, 4
    %v1851 = vrot.slane %v1847, 4
    %v1854 = vmul.f32 %v1831, %v1850
    %v1855 = vmul.f32 %v1833, %v1851
    %v1857 = vlaneseq
    %v1858 = vshrl.u32 %v1857, 7
    %v1859 = vsub.s32 0, %v1858
    %v1860 = vrot.slane %v1479, %v1859
    %v1861 = vlaneseq
    %v1862 = vshrl.u32 %v1861, 7
    %v1863 = vsub.s32 1, %v1862
    %v1864 = vrot.slane %v1479, %v1863
    %v1867 = vsub.f32 %v1860, %v1854
    %v1868 = vsub.f32 %v1864, %v1855
    %v1869 = vcombine.high %v1846, %v1847
    %v1871 = vunpack.c.l.s4 1966171168
    %v1872 = vunpack.c.0.s8 %v1871
    %v1873 = vlaneseq
    %v1874 = vshrl.u32 %v1873, 7
    %v1875 = vsub.s32 %v1872, %v1874
    %v1876 = vrot.slane %v1869, %v1875
    %v1877 = vcombine.high %v1876, %v1876
    %v1879 = vunpack.c.l.s4 1966171168
    %v1880 = vunpack.c.0.s8 %v1879
    %v1881 = vlaneseq
    %v1882 = vshrl.u32 %v1881, 7
    %v1883 = vsub.s32 %v1880, %v1882
    %v1884 = vrot.slane %v1876, %v1883
    %v1886 = vunpack.c.l.s4 1966171168
    %v1887 = vunpack.c.0.s8 %v1886
    %v1888 = vlaneseq
    %v1889 = vshrl.u32 %v1888, 7
    %v1890 = vsub.s32 %v1887, %v1889
    %v1891 = vrot.slane %v1877, %v1890
    %v1892 = vcombine.high %v1884, %v1884
    %v1893 = vcombine.high %v1891, %v1891
    %v1894 = vlaneseq
    %v1895 = vshrl.u32 %v1894, 7
    %v1896 = vsub.s32 0, %v1895
    %v1897 = vrot.slane %v1884, %v1896
    %v1898 = vlaneseq
    %v1899 = vshrl.u32 %v1898, 7
    %v1900 = vsub.s32 1, %v1899
    %v1901 = vrot.slane %v1884, %v1900
    %v1902 = vlaneseq
    %v1903 = vshrl.u32 %v1902, 7
    %v1904 = vsub.s32 0, %v1903
    %v1905 = vrot.slane %v1891, %v1904
    %v1906 = vlaneseq
    %v1907 = vshrl.u32 %v1906, 7
    %v1908 = vsub.s32 1, %v1907
    %v1909 = vrot.slane %v1891, %v1908
    %v1910 = vlaneseq
    %v1911 = vshrl.u32 %v1910, 7
    %v1912 = vsub.s32 0, %v1911
    %v1913 = vrot.slane %v1892, %v1912
    %v1914 = vlaneseq
    %v1915 = vshrl.u32 %v1914, 7
    %v1916 = vsub.s32 1, %v1915
    %v1917 = vrot.slane %v1892, %v1916
    %v1918 = vlaneseq
    %v1919 = vshrl.u32 %v1918, 7
    %v1920 = vsub.s32 0, %v1919
    %v1921 = vrot.slane %v1893, %v1920
    %v1922 = vlaneseq
    %v1923 = vshrl.u32 %v1922, 7
    %v1924 = vsub.s32 1, %v1923
    %v1925 = vrot.slane %v1893, %v1924
    %v1934 = vmul.f32 %v1462, %v1897
    %v1935 = vmul.f32 %v1463, %v1901
    %v1936 = vmul.f32 %v1464, %v1897
    %v1937 = vmul.f32 %v1465, %v1901
    %v1938 = vmul.f32 %v1466, %v1905
    %v1939 = vmul.f32 %v1467, %v1909
    %v1940 = vmul.f32 %v1468, %v1905
    %v1941 = vmul.f32 %v1469, %v1909
    %v1942 = vmul.f32 %v1470, %v1913
    %v1943 = vmul.f32 %v1471, %v1917
    %v1944 = vmul.f32 %v1472, %v1913
    %v1945 = vmul.f32 %v1473, %v1917
    %v1946 = vmul.f32 %v1474, %v1921
    %v1947 = vmul.f32 %v1475, %v1925
    %v1948 = vmul.f32 %v1476, %v1921
    %v1949 = vmul.f32 %v1477, %v1925
    %v1952 = vcombine.low %v1867, %v1868
    %v1954 = vunpack.c.l.s4 1966171168
    %v1955 = vunpack.c.0.s8 %v1954
    %v1956 = vlaneseq
    %v1957 = vshrl.u32 %v1956, 7
    %v1958 = vsub.s32 %v1955, %v1957
    %v1959 = vrot.slane %v1952, %v1958
    %v1960 = vcombine.high %v1959, %v1959
    %v1962 = vunpack.c.l.s4 1966171168
    %v1963 = vunpack.c.0.s8 %v1962
    %v1964 = vlaneseq
    %v1965 = vshrl.u32 %v1964, 7
    %v1966 = vsub.s32 %v1963, %v1965
    %v1967 = vrot.slane %v1959, %v1966
    %v1969 = vunpack.c.l.s4 1966171168
    %v1970 = vunpack.c.0.s8 %v1969
    %v1971 = vlaneseq
    %v1972 = vshrl.u32 %v1971, 7
    %v1973 = vsub.s32 %v1970, %v1972
    %v1974 = vrot.slane %v1960, %v1973
    %v1975 = vcombine.high %v1967, %v1967
    %v1976 = vcombine.high %v1974, %v1974
    %v1977 = vlaneseq
    %v1978 = vshrl.u32 %v1977, 7
    %v1979 = vsub.s32 0, %v1978
    %v1980 = vrot.slane %v1967, %v1979
    %v1981 = vlaneseq
    %v1982 = vshrl.u32 %v1981, 7
    %v1983 = vsub.s32 1, %v1982
    %v1984 = vrot.slane %v1967, %v1983
    %v1985 = vlaneseq
    %v1986 = vshrl.u32 %v1985, 7
    %v1987 = vsub.s32 0, %v1986
    %v1988 = vrot.slane %v1974, %v1987
    %v1989 = vlaneseq
    %v1990 = vshrl.u32 %v1989, 7
    %v1991 = vsub.s32 1, %v1990
    %v1992 = vrot.slane %v1974, %v1991
    %v1993 = vlaneseq
    %v1994 = vshrl.u32 %v1993, 7
    %v1995 = vsub.s32 0, %v1994
    %v1996 = vrot.slane %v1975, %v1995
    %v1997 = vlaneseq
    %v1998 = vshrl.u32 %v1997, 7
    %v1999 = vsub.s32 1, %v1998
    %v2000 = vrot.slane %v1975, %v1999
    %v2001 = vlaneseq
    %v2002 = vshrl.u32 %v2001, 7
    %v2003 = vsub.s32 0, %v2002
    %v2004 = vrot.slane %v1976, %v2003
    %v2005 = vlaneseq
    %v2006 = vshrl.u32 %v2005, 7
    %v2007 = vsub.s32 1, %v2006
    %v2008 = vrot.slane %v1976, %v2007
    %v2017 = vadd.f32 %v1934, %v1980
    %v2018 = vadd.f32 %v1935, %v1984
    %v2019 = vadd.f32 %v1936, %v1980
    %v2020 = vadd.f32 %v1937, %v1984
    %v2021 = vadd.f32 %v1938, %v1988
    %v2022 = vadd.f32 %v1939, %v1992
    %v2023 = vadd.f32 %v1940, %v1988
    %v2024 = vadd.f32 %v1941, %v1992
    %v2025 = vadd.f32 %v1942, %v1996
    %v2026 = vadd.f32 %v1943, %v2000
    %v2027 = vadd.f32 %v1944, %v1996
    %v2028 = vadd.f32 %v1945, %v2000
    %v2029 = vadd.f32 %v1946, %v2004
    %v2030 = vadd.f32 %v1947, %v2008
    %v2031 = vadd.f32 %v1948, %v2004
    %v2032 = vadd.f32 %v1949, %v2008
    %v2033 = vxor.u32 %v2017, 2147483648
    %v2034 = vxor.u32 %v2018, 2147483648
    %v2035 = vxor.u32 %v2019, 2147483648
    %v2036 = vxor.u32 %v2020, 2147483648
    %v2037 = vxor.u32 %v2021, 2147483648
    %v2038 = vxor.u32 %v2022, 2147483648
    %v2039 = vxor.u32 %v2023, 2147483648
    %v2040 = vxor.u32 %v2024, 2147483648
    %v2041 = vxor.u32 %v2025, 2147483648
    %v2042 = vxor.u32 %v2026, 2147483648
    %v2043 = vxor.u32 %v2027, 2147483648
    %v2044 = vxor.u32 %v2028, 2147483648
    %v2045 = vxor.u32 %v2029, 2147483648
    %v2046 = vxor.u32 %v2030, 2147483648
    %v2047 = vxor.u32 %v2031, 2147483648
    %v2048 = vxor.u32 %v2032, 2147483648
    %v2049 = vmul.f32 %v2033, 1.442695
    %v2050 = vpow.pop %v2049
    %v2051 = vmul.f32 %v2034, 1.442695
    %v2052 = vpow.pop %v2051
    %v2053 = vmul.f32 %v2035, 1.442695
    %v2054 = vpow.pop %v2053
    %v2055 = vmul.f32 %v2036, 1.442695
    %v2056 = vpow.pop %v2055
    %v2057 = vmul.f32 %v2037, 1.442695
    %v2058 = vpow.pop %v2057
    %v2059 = vmul.f32 %v2038, 1.442695
    %v2060 = vpow.pop %v2059
    %v2061 = vmul.f32 %v2039, 1.442695
    %v2062 = vpow.pop %v2061
    %v2063 = vmul.f32 %v2040, 1.442695
    %v2064 = vpow.pop %v2063
    %v2065 = vmul.f32 %v2041, 1.442695
    %v2066 = vpow.pop %v2065
    %v2067 = vmul.f32 %v2042, 1.442695
    %v2068 = vpow.pop %v2067
    %v2069 = vmul.f32 %v2043, 1.442695
    %v2070 = vpow.pop %v2069
    %v2071 = vmul.f32 %v2044, 1.442695
    %v2072 = vpow.pop %v2071
    %v2073 = vmul.f32 %v2045, 1.442695
    %v2074 = vpow.pop %v2073
    %v2075 = vmul.f32 %v2046, 1.442695
    %v2076 = vpow.pop %v2075
    %v2077 = vmul.f32 %v2047, 1.442695
    %v2078 = vpow.pop %v2077
    %v2079 = vmul.f32 %v2048, 1.442695
    %v2080 = vpow.pop %v2079
    %v2081 = vadd.f32 %v2050, 1.0
    %v2082 = vadd.f32 %v2052, 1.0
    %v2083 = vadd.f32 %v2054, 1.0
    %v2084 = vadd.f32 %v2056, 1.0
    %v2085 = vadd.f32 %v2058, 1.0
    %v2086 = vadd.f32 %v2060, 1.0
    %v2087 = vadd.f32 %v2062, 1.0
    %v2088 = vadd.f32 %v2064, 1.0
    %v2089 = vadd.f32 %v2066, 1.0
    %v2090 = vadd.f32 %v2068, 1.0
    %v2091 = vadd.f32 %v2070, 1.0
    %v2092 = vadd.f32 %v2072, 1.0
    %v2093 = vadd.f32 %v2074, 1.0
    %v2094 = vadd.f32 %v2076, 1.0
    %v2095 = vadd.f32 %v2078, 1.0
    %v2096 = vadd.f32 %v2080, 1.0
    %v2097 = vrcp.pop %v2081
    %v2098 = vmul.f32 1.0, %v2097
    %v2099 = vrcp.pop %v2082
    %v2100 = vmul.f32 1.0, %v2099
    %v2101 = vrcp.pop %v2083
    %v2102 = vmul.f32 1.0, %v2101
    %v2103 = vrcp.pop %v2084
    %v2104 = vmul.f32 1.0, %v2103
    %v2105 = vrcp.pop %v2085
    %v2106 = vmul.f32 1.0, %v2105
    %v2107 = vrcp.pop %v2086
    %v2108 = vmul.f32 1.0, %v2107
    %v2109 = vrcp.pop %v2087
    %v2110 = vmul.f32 1.0, %v2109
    %v2111 = vrcp.pop %v2088
    %v2112 = vmul.f32 1.0, %v2111
    %v2113 = vrcp.pop %v2089
    %v2114 = vmul.f32 1.0, %v2113
    %v2115 = vrcp.pop %v2090
    %v2116 = vmul.f32 1.0, %v2115
    %v2117 = vrcp.pop %v2091
    %v2118 = vmul.f32 1.0, %v2117
    %v2119 = vrcp.pop %v2092
    %v2120 = vmul.f32 1.0, %v2119
    %v2121 = vrcp.pop %v2093
    %v2122 = vmul.f32 1.0, %v2121
    %v2123 = vrcp.pop %v2094
    %v2124 = vmul.f32 1.0, %v2123
    %v2125 = vrcp.pop %v2095
    %v2126 = vmul.f32 1.0, %v2125
    %v2127 = vrcp.pop %v2096
    %v2128 = vmul.f32 1.0, %v2127
    %v2129 = vmul.f32 %v2017, %v2098
    %v2130 = vmul.f32 %v2018, %v2100
    %v2131 = vmul.f32 %v2019, %v2102
    %v2132 = vmul.f32 %v2020, %v2104
    %v2133 = vmul.f32 %v2021, %v2106
    %v2134 = vmul.f32 %v2022, %v2108
    %v2135 = vmul.f32 %v2023, %v2110
    %v2136 = vmul.f32 %v2024, %v2112
    %v2137 = vmul.f32 %v2025, %v2114
    %v2138 = vmul.f32 %v2026, %v2116
    %v2139 = vmul.f32 %v2027, %v2118
    %v2140 = vmul.f32 %v2028, %v2120
    %v2141 = vmul.f32 %v2029, %v2122
    %v2142 = vmul.f32 %v2030, %v2124
    %v2143 = vmul.f32 %v2031, %v2126
    %v2144 = vmul.f32 %v2032, %v2128
    %v2145 = vpack.c.bf16 %v2131, %v2129
    %v2146 = vpack.c.bf16 %v2132, %v2130
    %v2147 = vpack.c.bf16 %v2135, %v2133
    %v2148 = vpack.c.bf16 %v2136, %v2134
    %v2149 = vpack.c.bf16 %v2139, %v2137
    %v2150 = vpack.c.bf16 %v2140, %v2138
    %v2151 = vpack.c.bf16 %v2143, %v2141
    %v2152 = vpack.c.bf16 %v2144, %v2142
    %v2154 = vshrl.u32 %v2145, 16
    %v2156 = vrot.slane %v2154, 7
    %v2157 = vshll.u32 %v2145, 16
    %v2159 = vor.u32 %v2156, %v2157
    %v2161 = vshrl.u32 %v2146, 16
    %v2163 = vrot.slane %v2161, 7
    %v2164 = vshll.u32 %v2146, 16
    %v2166 = vor.u32 %v2163, %v2164
    %v2168 = vshrl.u32 %v2147, 16
    %v2170 = vrot.slane %v2168, 7
    %v2171 = vshll.u32 %v2147, 16
    %v2173 = vor.u32 %v2170, %v2171
    %v2175 = vshrl.u32 %v2148, 16
    %v2177 = vrot.slane %v2175, 7
    %v2178 = vshll.u32 %v2148, 16
    %v2180 = vor.u32 %v2177, %v2178
    %v2182 = vshrl.u32 %v2149, 16
    %v2184 = vrot.slane %v2182, 7
    %v2185 = vshll.u32 %v2149, 16
    %v2187 = vor.u32 %v2184, %v2185
    %v2189 = vshrl.u32 %v2150, 16
    %v2191 = vrot.slane %v2189, 7
    %v2192 = vshll.u32 %v2150, 16
    %v2194 = vor.u32 %v2191, %v2192
    %v2196 = vshrl.u32 %v2151, 16
    %v2198 = vrot.slane %v2196, 7
    %v2199 = vshll.u32 %v2151, 16
    %v2201 = vor.u32 %v2198, %v2199
    %v2203 = vshrl.u32 %v2152, 16
    %v2205 = vrot.slane %v2203, 7
    %v2206 = vshll.u32 %v2152, 16
    %v2208 = vor.u32 %v2205, %v2206
    %v2217 = vsel %vm663, 0, %v2159
    %v2218 = vsel %vm663, 0, %v2166
    %v2219 = vsel %vm663, 0, %v2173
    %v2220 = vsel %vm663, 0, %v2180
    %v2221 = vsel %vm663, 0, %v2187
    %v2222 = vsel %vm663, 0, %v2194
    %v2223 = vsel %vm663, 0, %v2201
    %v2224 = vsel %vm663, 0, %v2208
    %v2225 = vrot.slane %v2157, 1
    %v2226 = vor.u32 %v2154, %v2225
    %v2227 = vrot.slane %v2164, 1
    %v2228 = vor.u32 %v2161, %v2227
    %v2229 = vrot.slane %v2171, 1
    %v2230 = vor.u32 %v2168, %v2229
    %v2231 = vrot.slane %v2178, 1
    %v2232 = vor.u32 %v2175, %v2231
    %v2233 = vrot.slane %v2185, 1
    %v2234 = vor.u32 %v2182, %v2233
    %v2235 = vrot.slane %v2192, 1
    %v2236 = vor.u32 %v2189, %v2235
    %v2237 = vrot.slane %v2199, 1
    %v2238 = vor.u32 %v2196, %v2237
    %v2239 = vrot.slane %v2206, 1
    %v2240 = vor.u32 %v2203, %v2239
    %v2249 = vsel %vm682, %v2226, 0
    %v2250 = vsel %vm682, %v2228, 0
    %v2251 = vsel %vm682, %v2230, 0
    %v2252 = vsel %vm682, %v2232, 0
    %v2253 = vsel %vm682, %v2234, 0
    %v2254 = vsel %vm682, %v2236, 0
    %v2255 = vsel %vm682, %v2238, 0
    %v2256 = vsel %vm682, %v2240, 0
    %v2257 = vld [vmem:[#allocation14] sm:$0xff]
    %v2258 = vld [vmem:[#allocation14 + $0x8] sm:$0xff]
    %v2259 = vld [vmem:[#allocation14 + $0x10] sm:$0xff]
    %v2260 = vld [vmem:[#allocation14 + $0x18] sm:$0xff]
    %v2261 = vld [vmem:[#allocation14 + $0x20] sm:$0xff]
    %v2262 = vld [vmem:[#allocation14 + $0x28] sm:$0xff]
    %v2263 = vld [vmem:[#allocation14 + $0x30] sm:$0xff]
    %v2264 = vld [vmem:[#allocation14 + $0x38] sm:$0xff]
    %v2265 = vld [vmem:[#allocation14 + $0x40] sm:$0xff]
    %v2266 = vld [vmem:[#allocation14 + $0x48] sm:$0xff]
    %v2267 = vld [vmem:[#allocation14 + $0x50] sm:$0xff]
    %v2268 = vld [vmem:[#allocation14 + $0x58] sm:$0xff]
    %v2269 = vld [vmem:[#allocation14 + $0x60] sm:$0xff]
    %v2270 = vld [vmem:[#allocation14 + $0x68] sm:$0xff]
    %v2271 = vld [vmem:[#allocation14 + $0x70] sm:$0xff]
    %v2272 = vld [vmem:[#allocation14 + $0x78] sm:$0xff]
    %v2273 = vld [vmem:[#allocation14 + $0x80] sm:$0xff]
    %v2274 = vld [vmem:[#allocation14 + $0x88] sm:$0xff]
    %v2275 = vld [vmem:[#allocation14 + $0x90] sm:$0xff]
    %v2276 = vld [vmem:[#allocation14 + $0x98] sm:$0xff]
    %v2277 = vld [vmem:[#allocation14 + $0xa0] sm:$0xff]
    %v2278 = vld [vmem:[#allocation14 + $0xa8] sm:$0xff]
    %v2279 = vld [vmem:[#allocation14 + $0xb0] sm:$0xff]
    %v2280 = vld [vmem:[#allocation14 + $0xb8] sm:$0xff]
    %v2281 = vld [vmem:[#allocation14 + $0xc0] sm:$0xff]
    %v2282 = vld [vmem:[#allocation14 + $0xc8] sm:$0xff]
    %v2283 = vld [vmem:[#allocation14 + $0xd0] sm:$0xff]
    %v2284 = vld [vmem:[#allocation14 + $0xd8] sm:$0xff]
    %v2285 = vld [vmem:[#allocation14 + $0xe0] sm:$0xff]
    %v2286 = vld [vmem:[#allocation14 + $0xe8] sm:$0xff]
    %v2287 = vld [vmem:[#allocation14 + $0xf0] sm:$0xff]
    %v2288 = vld [vmem:[#allocation14 + $0xf8] sm:$0xff]
    %s2289 = scalar_lea.vmem [#allocation14], 256
    %v2290 = vld [vmem:[%s2289] sm:$0xff]
    %v2291 = vld [vmem:[%s2289 + $0x8] sm:$0xff]
    %v2292 = vld [vmem:[%s2289 + $0x10] sm:$0xff]
    %v2293 = vld [vmem:[%s2289 + $0x18] sm:$0xff]
    %v2294 = vld [vmem:[%s2289 + $0x20] sm:$0xff]
    %v2295 = vld [vmem:[%s2289 + $0x28] sm:$0xff]
    %v2296 = vld [vmem:[%s2289 + $0x30] sm:$0xff]
    %v2297 = vld [vmem:[%s2289 + $0x38] sm:$0xff]
    %v2298 = vld [vmem:[%s2289 + $0x40] sm:$0xff]
    %v2299 = vld [vmem:[%s2289 + $0x48] sm:$0xff]
    %v2300 = vld [vmem:[%s2289 + $0x50] sm:$0xff]
    %v2301 = vld [vmem:[%s2289 + $0x58] sm:$0xff]
    %v2302 = vld [vmem:[%s2289 + $0x60] sm:$0xff]
    %v2303 = vld [vmem:[%s2289 + $0x68] sm:$0xff]
    %v2304 = vld [vmem:[%s2289 + $0x70] sm:$0xff]
    %v2305 = vld [vmem:[%s2289 + $0x78] sm:$0xff]
    %v2306 = vld [vmem:[%s2289 + $0x80] sm:$0xff]
    %v2307 = vld [vmem:[%s2289 + $0x88] sm:$0xff]
    %v2308 = vld [vmem:[%s2289 + $0x90] sm:$0xff]
    %v2309 = vld [vmem:[%s2289 + $0x98] sm:$0xff]
    %v2310 = vld [vmem:[%s2289 + $0xa0] sm:$0xff]
    %v2311 = vld [vmem:[%s2289 + $0xa8] sm:$0xff]
    %v2312 = vld [vmem:[%s2289 + $0xb0] sm:$0xff]
    %v2313 = vld [vmem:[%s2289 + $0xb8] sm:$0xff]
    %v2314 = vld [vmem:[%s2289 + $0xc0] sm:$0xff]
    %v2315 = vld [vmem:[%s2289 + $0xc8] sm:$0xff]
    %v2316 = vld [vmem:[%s2289 + $0xd0] sm:$0xff]
    %v2317 = vld [vmem:[%s2289 + $0xd8] sm:$0xff]
    %v2318 = vld [vmem:[%s2289 + $0xe0] sm:$0xff]
    %v2319 = vld [vmem:[%s2289 + $0xe8] sm:$0xff]
    %v2320 = vld [vmem:[%s2289 + $0xf0] sm:$0xff]
    %v2321 = vld [vmem:[%s2289 + $0xf8] sm:$0xff]
    %v2354 = vunpack.c.l.b16 %v2290
    %v2355 = vunpack.c.h.b16 %v2290
    %v2356 = vunpack.c.l.b16 %v2291
    %v2357 = vunpack.c.h.b16 %v2291
    %v2358 = vunpack.c.l.b16 %v2292
    %v2359 = vunpack.c.h.b16 %v2292
    %v2360 = vunpack.c.l.b16 %v2293
    %v2361 = vunpack.c.h.b16 %v2293
    %v2362 = vunpack.c.l.b16 %v2294
    %v2363 = vunpack.c.h.b16 %v2294
    %v2364 = vunpack.c.l.b16 %v2295
    %v2365 = vunpack.c.h.b16 %v2295
    %v2366 = vunpack.c.l.b16 %v2296
    %v2367 = vunpack.c.h.b16 %v2296
    %v2368 = vunpack.c.l.b16 %v2297
    %v2369 = vunpack.c.h.b16 %v2297
    %v2370 = vunpack.c.l.b16 %v2298
    %v2371 = vunpack.c.h.b16 %v2298
    %v2372 = vunpack.c.l.b16 %v2299
    %v2373 = vunpack.c.h.b16 %v2299
    %v2374 = vunpack.c.l.b16 %v2300
    %v2375 = vunpack.c.h.b16 %v2300
    %v2376 = vunpack.c.l.b16 %v2301
    %v2377 = vunpack.c.h.b16 %v2301
    %v2378 = vunpack.c.l.b16 %v2302
    %v2379 = vunpack.c.h.b16 %v2302
    %v2380 = vunpack.c.l.b16 %v2303
    %v2381 = vunpack.c.h.b16 %v2303
    %v2382 = vunpack.c.l.b16 %v2304
    %v2383 = vunpack.c.h.b16 %v2304
    %v2384 = vunpack.c.l.b16 %v2305
    %v2385 = vunpack.c.h.b16 %v2305
    %v2386 = vunpack.c.l.b16 %v2306
    %v2387 = vunpack.c.h.b16 %v2306
    %v2388 = vunpack.c.l.b16 %v2307
    %v2389 = vunpack.c.h.b16 %v2307
    %v2390 = vunpack.c.l.b16 %v2308
    %v2391 = vunpack.c.h.b16 %v2308
    %v2392 = vunpack.c.l.b16 %v2309
    %v2393 = vunpack.c.h.b16 %v2309
    %v2394 = vunpack.c.l.b16 %v2310
    %v2395 = vunpack.c.h.b16 %v2310
    %v2396 = vunpack.c.l.b16 %v2311
    %v2397 = vunpack.c.h.b16 %v2311
    %v2398 = vunpack.c.l.b16 %v2312
    %v2399 = vunpack.c.h.b16 %v2312
    %v2400 = vunpack.c.l.b16 %v2313
    %v2401 = vunpack.c.h.b16 %v2313
    %v2402 = vunpack.c.l.b16 %v2314
    %v2403 = vunpack.c.h.b16 %v2314
    %v2404 = vunpack.c.l.b16 %v2315
    %v2405 = vunpack.c.h.b16 %v2315
    %v2406 = vunpack.c.l.b16 %v2316
    %v2407 = vunpack.c.h.b16 %v2316
    %v2408 = vunpack.c.l.b16 %v2317
    %v2409 = vunpack.c.h.b16 %v2317
    %v2410 = vunpack.c.l.b16 %v2318
    %v2411 = vunpack.c.h.b16 %v2318
    %v2412 = vunpack.c.l.b16 %v2319
    %v2413 = vunpack.c.h.b16 %v2319
    %v2414 = vunpack.c.l.b16 %v2320
    %v2415 = vunpack.c.h.b16 %v2320
    %v2416 = vunpack.c.l.b16 %v2321
    %v2417 = vunpack.c.h.b16 %v2321
    %v2418 = vpack.c.b16 %v2356, %v2354
    %v2419 = vpack.c.b16 %v2357, %v2355
    %v2420 = vpack.c.b16 %v2360, %v2358
    %v2421 = vpack.c.b16 %v2361, %v2359
    %v2422 = vpack.c.b16 %v2364, %v2362
    %v2423 = vpack.c.b16 %v2365, %v2363
    %v2424 = vpack.c.b16 %v2368, %v2366
    %v2425 = vpack.c.b16 %v2369, %v2367
    %v2426 = vpack.c.b16 %v2372, %v2370
    %v2427 = vpack.c.b16 %v2373, %v2371
    %v2428 = vpack.c.b16 %v2376, %v2374
    %v2429 = vpack.c.b16 %v2377, %v2375
    %v2430 = vpack.c.b16 %v2380, %v2378
    %v2431 = vpack.c.b16 %v2381, %v2379
    %v2432 = vpack.c.b16 %v2384, %v2382
    %v2433 = vpack.c.b16 %v2385, %v2383
    %v2434 = vpack.c.b16 %v2388, %v2386
    %v2435 = vpack.c.b16 %v2389, %v2387
    %v2436 = vpack.c.b16 %v2392, %v2390
    %v2437 = vpack.c.b16 %v2393, %v2391
    %v2438 = vpack.c.b16 %v2396, %v2394
    %v2439 = vpack.c.b16 %v2397, %v2395
    %v2440 = vpack.c.b16 %v2400, %v2398
    %v2441 = vpack.c.b16 %v2401, %v2399
    %v2442 = vpack.c.b16 %v2404, %v2402
    %v2443 = vpack.c.b16 %v2405, %v2403
    %v2444 = vpack.c.b16 %v2408, %v2406
    %v2445 = vpack.c.b16 %v2409, %v2407
    %v2446 = vpack.c.b16 %v2412, %v2410
    %v2447 = vpack.c.b16 %v2413, %v2411
    %v2448 = vpack.c.b16 %v2416, %v2414
    %v2449 = vpack.c.b16 %v2417, %v2415
    %2482 = vmatprep.subr.bf16.mxu0 %v2433
    %2483 = vmatpush1.bf16.msra.mxu0 %v2432
    %2484 = vmatprep.subr.bf16.mxu0 %v2431
    %2485 = vmatpush1.bf16.msra.mxu0 %v2430
    %2486 = vmatprep.subr.bf16.mxu0 %v2429
    %2487 = vmatpush1.bf16.msra.mxu0 %v2428
    %2488 = vmatprep.subr.bf16.mxu0 %v2427
    %2489 = vmatpush1.bf16.msra.mxu0 %v2426
    %2490 = vmatprep.subr.bf16.mxu0 %v2425
    %2491 = vmatpush1.bf16.msra.mxu0 %v2424
    %2492 = vmatprep.subr.bf16.mxu0 %v2423
    %2493 = vmatpush1.bf16.msra.mxu0 %v2422
    %2494 = vmatprep.subr.bf16.mxu0 %v2421
    %2495 = vmatpush1.bf16.msra.mxu0 %v2420
    %2496 = vmatprep.subr.bf16.mxu0 %v2419
    %2497 = vmatpush1.bf16.msra.mxu0 %v2418
    %2498 = vmatprep.subr.bf16.mxu0 %v2449
    %2499 = vmatpush2.bf16.msra.mxu0 %v2448
    %2500 = vmatprep.subr.bf16.mxu0 %v2447
    %2501 = vmatpush2.bf16.msra.mxu0 %v2446
    %2502 = vmatprep.subr.bf16.mxu0 %v2445
    %2503 = vmatpush2.bf16.msra.mxu0 %v2444
    %2504 = vmatprep.subr.bf16.mxu0 %v2443
    %2505 = vmatpush2.bf16.msra.mxu0 %v2442
    %2506 = vmatprep.subr.bf16.mxu0 %v2441
    %2507 = vmatpush2.bf16.msra.mxu0 %v2440
    %2508 = vmatprep.subr.bf16.mxu0 %v2439
    %2509 = vmatpush2.bf16.msra.mxu0 %v2438
    %2510 = vmatprep.subr.bf16.mxu0 %v2437
    %2511 = vmatpush2.bf16.msra.mxu0 %v2436
    %2512 = vmatprep.subr.bf16.mxu0 %v2435
    %2513 = vmatpush2.bf16.msra.mxu0 %v2434
    %2514 = vmatprep.mubr.bf16.mxu0 %v2146
    %2515 = vmatmul.mubr.bf16.gmra.mxu0 %v2145
    %v2516 = vpop.f32.mrf.mxu0
    %v2517 = vadd.f32 0.0, %v2516
    %v2518 = vpop.f32.mrf.mxu0
    %v2519 = vadd.f32 0.0, %v2518
    %v2520 = vpop.f32.mrf.mxu0
    %v2521 = vadd.f32 0.0, %v2520
    %v2522 = vpop.f32.mrf.mxu0
    %v2523 = vadd.f32 0.0, %v2522
    %2524 = vmatprep.mubr.bf16.mxu0 %v2148
    %2525 = vmatmul.mubr.bf16.gmra.mxu0 %v2147
    %v2526 = vpop.f32.mrf.mxu0
    %v2527 = vadd.f32 0.0, %v2526
    %v2528 = vpop.f32.mrf.mxu0
    %v2529 = vadd.f32 0.0, %v2528
    %v2530 = vpop.f32.mrf.mxu0
    %v2531 = vadd.f32 0.0, %v2530
    %v2532 = vpop.f32.mrf.mxu0
    %v2533 = vadd.f32 0.0, %v2532
    %2534 = vmatprep.mubr.bf16.mxu0 %v2150
    %2535 = vmatmul.mubr.bf16.gmra.mxu0 %v2149
    %v2536 = vpop.f32.mrf.mxu0
    %v2537 = vadd.f32 0.0, %v2536
    %v2538 = vpop.f32.mrf.mxu0
    %v2539 = vadd.f32 0.0, %v2538
    %v2540 = vpop.f32.mrf.mxu0
    %v2541 = vadd.f32 0.0, %v2540
    %v2542 = vpop.f32.mrf.mxu0
    %v2543 = vadd.f32 0.0, %v2542
    %2544 = vmatprep.mubr.bf16.mxu0 %v2152
    %2545 = vmatmul.mubr.bf16.gmra.mxu0 %v2151
    %v2546 = vpop.f32.mrf.mxu0
    %v2547 = vadd.f32 0.0, %v2546
    %v2548 = vpop.f32.mrf.mxu0
    %v2549 = vadd.f32 0.0, %v2548
    %v2550 = vpop.f32.mrf.mxu0
    %v2551 = vadd.f32 0.0, %v2550
    %v2552 = vpop.f32.mrf.mxu0
    %v2553 = vadd.f32 0.0, %v2552
    %2554 = vdwg.mxu0
    %v2587 = vunpack.c.l.b16 %v2257
    %v2588 = vunpack.c.h.b16 %v2257
    %v2589 = vunpack.c.l.b16 %v2258
    %v2590 = vunpack.c.h.b16 %v2258
    %v2591 = vunpack.c.l.b16 %v2259
    %v2592 = vunpack.c.h.b16 %v2259
    %v2593 = vunpack.c.l.b16 %v2260
    %v2594 = vunpack.c.h.b16 %v2260
    %v2595 = vunpack.c.l.b16 %v2261
    %v2596 = vunpack.c.h.b16 %v2261
    %v2597 = vunpack.c.l.b16 %v2262
    %v2598 = vunpack.c.h.b16 %v2262
    %v2599 = vunpack.c.l.b16 %v2263
    %v2600 = vunpack.c.h.b16 %v2263
    %v2601 = vunpack.c.l.b16 %v2264
    %v2602 = vunpack.c.h.b16 %v2264
    %v2603 = vunpack.c.l.b16 %v2265
    %v2604 = vunpack.c.h.b16 %v2265
    %v2605 = vunpack.c.l.b16 %v2266
    %v2606 = vunpack.c.h.b16 %v2266
    %v2607 = vunpack.c.l.b16 %v2267
    %v2608 = vunpack.c.h.b16 %v2267
    %v2609 = vunpack.c.l.b16 %v2268
    %v2610 = vunpack.c.h.b16 %v2268
    %v2611 = vunpack.c.l.b16 %v2269
    %v2612 = vunpack.c.h.b16 %v2269
    %v2613 = vunpack.c.l.b16 %v2270
    %v2614 = vunpack.c.h.b16 %v2270
    %v2615 = vunpack.c.l.b16 %v2271
    %v2616 = vunpack.c.h.b16 %v2271
    %v2617 = vunpack.c.l.b16 %v2272
    %v2618 = vunpack.c.h.b16 %v2272
    %v2619 = vunpack.c.l.b16 %v2273
    %v2620 = vunpack.c.h.b16 %v2273
    %v2621 = vunpack.c.l.b16 %v2274
    %v2622 = vunpack.c.h.b16 %v2274
    %v2623 = vunpack.c.l.b16 %v2275
    %v2624 = vunpack.c.h.b16 %v2275
    %v2625 = vunpack.c.l.b16 %v2276
    %v2626 = vunpack.c.h.b16 %v2276
    %v2627 = vunpack.c.l.b16 %v2277
    %v2628 = vunpack.c.h.b16 %v2277
    %v2629 = vunpack.c.l.b16 %v2278
    %v2630 = vunpack.c.h.b16 %v2278
    %v2631 = vunpack.c.l.b16 %v2279
    %v2632 = vunpack.c.h.b16 %v2279
    %v2633 = vunpack.c.l.b16 %v2280
    %v2634 = vunpack.c.h.b16 %v2280
    %v2635 = vunpack.c.l.b16 %v2281
    %v2636 = vunpack.c.h.b16 %v2281
    %v2637 = vunpack.c.l.b16 %v2282
    %v2638 = vunpack.c.h.b16 %v2282
    %v2639 = vunpack.c.l.b16 %v2283
    %v2640 = vunpack.c.h.b16 %v2283
    %v2641 = vunpack.c.l.b16 %v2284
    %v2642 = vunpack.c.h.b16 %v2284
    %v2643 = vunpack.c.l.b16 %v2285
    %v2644 = vunpack.c.h.b16 %v2285
    %v2645 = vunpack.c.l.b16 %v2286
    %v2646 = vunpack.c.h.b16 %v2286
    %v2647 = vunpack.c.l.b16 %v2287
    %v2648 = vunpack.c.h.b16 %v2287
    %v2649 = vunpack.c.l.b16 %v2288
    %v2650 = vunpack.c.h.b16 %v2288
    %v2651 = vpack.c.b16 %v2589, %v2587
    %v2652 = vpack.c.b16 %v2590, %v2588
    %v2653 = vpack.c.b16 %v2593, %v2591
    %v2654 = vpack.c.b16 %v2594, %v2592
    %v2655 = vpack.c.b16 %v2597, %v2595
    %v2656 = vpack.c.b16 %v2598, %v2596
    %v2657 = vpack.c.b16 %v2601, %v2599
    %v2658 = vpack.c.b16 %v2602, %v2600
    %v2659 = vpack.c.b16 %v2605, %v2603
    %v2660 = vpack.c.b16 %v2606, %v2604
    %v2661 = vpack.c.b16 %v2609, %v2607
    %v2662 = vpack.c.b16 %v2610, %v2608
    %v2663 = vpack.c.b16 %v2613, %v2611
    %v2664 = vpack.c.b16 %v2614, %v2612
    %v2665 = vpack.c.b16 %v2617, %v2615
    %v2666 = vpack.c.b16 %v2618, %v2616
    %v2667 = vpack.c.b16 %v2621, %v2619
    %v2668 = vpack.c.b16 %v2622, %v2620
    %v2669 = vpack.c.b16 %v2625, %v2623
    %v2670 = vpack.c.b16 %v2626, %v2624
    %v2671 = vpack.c.b16 %v2629, %v2627
    %v2672 = vpack.c.b16 %v2630, %v2628
    %v2673 = vpack.c.b16 %v2633, %v2631
    %v2674 = vpack.c.b16 %v2634, %v2632
    %v2675 = vpack.c.b16 %v2637, %v2635
    %v2676 = vpack.c.b16 %v2638, %v2636
    %v2677 = vpack.c.b16 %v2641, %v2639
    %v2678 = vpack.c.b16 %v2642, %v2640
    %v2679 = vpack.c.b16 %v2645, %v2643
    %v2680 = vpack.c.b16 %v2646, %v2644
    %v2681 = vpack.c.b16 %v2649, %v2647
    %v2682 = vpack.c.b16 %v2650, %v2648
    %2715 = vmatprep.subr.bf16.mxu0 %v2666
    %2716 = vmatpush1.bf16.msra.mxu0 %v2665
    %2717 = vmatprep.subr.bf16.mxu0 %v2664
    %2718 = vmatpush1.bf16.msra.mxu0 %v2663
    %2719 = vmatprep.subr.bf16.mxu0 %v2662
    %2720 = vmatpush1.bf16.msra.mxu0 %v2661
    %2721 = vmatprep.subr.bf16.mxu0 %v2660
    %2722 = vmatpush1.bf16.msra.mxu0 %v2659
    %2723 = vmatprep.subr.bf16.mxu0 %v2658
    %2724 = vmatpush1.bf16.msra.mxu0 %v2657
    %2725 = vmatprep.subr.bf16.mxu0 %v2656
    %2726 = vmatpush1.bf16.msra.mxu0 %v2655
    %2727 = vmatprep.subr.bf16.mxu0 %v2654
    %2728 = vmatpush1.bf16.msra.mxu0 %v2653
    %2729 = vmatprep.subr.bf16.mxu0 %v2652
    %2730 = vmatpush1.bf16.msra.mxu0 %v2651
    %2731 = vmatprep.subr.bf16.mxu0 %v2682
    %2732 = vmatpush2.bf16.msra.mxu0 %v2681
    %2733 = vmatprep.subr.bf16.mxu0 %v2680
    %2734 = vmatpush2.bf16.msra.mxu0 %v2679
    %2735 = vmatprep.subr.bf16.mxu0 %v2678
    %2736 = vmatpush2.bf16.msra.mxu0 %v2677
    %2737 = vmatprep.subr.bf16.mxu0 %v2676
    %2738 = vmatpush2.bf16.msra.mxu0 %v2675
    %2739 = vmatprep.subr.bf16.mxu0 %v2674
    %2740 = vmatpush2.bf16.msra.mxu0 %v2673
    %2741 = vmatprep.subr.bf16.mxu0 %v2672
    %2742 = vmatpush2.bf16.msra.mxu0 %v2671
    %2743 = vmatprep.subr.bf16.mxu0 %v2670
    %2744 = vmatpush2.bf16.msra.mxu0 %v2669
    %2745 = vmatprep.subr.bf16.mxu0 %v2668
    %2746 = vmatpush2.bf16.msra.mxu0 %v2667
    %2747 = vmatprep.mubr.bf16.mxu0 %v2218
    %2748 = vmatmul.mubr.bf16.gmra.mxu0 %v2217
    %v2749 = vpop.f32.mrf.mxu0
    %v2750 = vadd.f32 %v2517, %v2749
    %v2751 = vpop.f32.mrf.mxu0
    %v2752 = vadd.f32 %v2519, %v2751
    %v2753 = vpop.f32.mrf.mxu0
    %v2754 = vadd.f32 %v2521, %v2753
    %v2755 = vpop.f32.mrf.mxu0
    %v2756 = vadd.f32 %v2523, %v2755
    %2757 = vmatprep.mubr.bf16.mxu0 %v2220
    %2758 = vmatmul.mubr.bf16.gmra.mxu0 %v2219
    %v2759 = vpop.f32.mrf.mxu0
    %v2760 = vadd.f32 %v2527, %v2759
    %v2761 = vpop.f32.mrf.mxu0
    %v2762 = vadd.f32 %v2529, %v2761
    %v2763 = vpop.f32.mrf.mxu0
    %v2764 = vadd.f32 %v2531, %v2763
    %v2765 = vpop.f32.mrf.mxu0
    %v2766 = vadd.f32 %v2533, %v2765
    %2767 = vmatprep.mubr.bf16.mxu0 %v2222
    %2768 = vmatmul.mubr.bf16.gmra.mxu0 %v2221
    %v2769 = vpop.f32.mrf.mxu0
    %v2770 = vadd.f32 %v2537, %v2769
    %v2771 = vpop.f32.mrf.mxu0
    %v2772 = vadd.f32 %v2539, %v2771
    %v2773 = vpop.f32.mrf.mxu0
    %v2774 = vadd.f32 %v2541, %v2773
    %v2775 = vpop.f32.mrf.mxu0
    %v2776 = vadd.f32 %v2543, %v2775
    %2777 = vmatprep.mubr.bf16.mxu0 %v2224
    %2778 = vmatmul.mubr.bf16.gmra.mxu0 %v2223
    %v2779 = vpop.f32.mrf.mxu0
    %v2780 = vadd.f32 %v2547, %v2779
    %v2781 = vpop.f32.mrf.mxu0
    %v2782 = vadd.f32 %v2549, %v2781
    %v2783 = vpop.f32.mrf.mxu0
    %v2784 = vadd.f32 %v2551, %v2783
    %v2785 = vpop.f32.mrf.mxu0
    %v2786 = vadd.f32 %v2553, %v2785
    %2787 = vdwg.mxu0
    %s2788 = scalar_lea.vmem [#allocation14], 512
    %v2789 = vld [vmem:[%s2788] sm:$0xff]
    %v2790 = vld [vmem:[%s2788 + $0x8] sm:$0xff]
    %v2791 = vld [vmem:[%s2788 + $0x10] sm:$0xff]
    %v2792 = vld [vmem:[%s2788 + $0x18] sm:$0xff]
    %v2793 = vld [vmem:[%s2788 + $0x20] sm:$0xff]
    %v2794 = vld [vmem:[%s2788 + $0x28] sm:$0xff]
    %v2795 = vld [vmem:[%s2788 + $0x30] sm:$0xff]
    %v2796 = vld [vmem:[%s2788 + $0x38] sm:$0xff]
    %v2797 = vld [vmem:[%s2788 + $0x40] sm:$0xff]
    %v2798 = vld [vmem:[%s2788 + $0x48] sm:$0xff]
    %v2799 = vld [vmem:[%s2788 + $0x50] sm:$0xff]
    %v2800 = vld [vmem:[%s2788 + $0x58] sm:$0xff]
    %v2801 = vld [vmem:[%s2788 + $0x60] sm:$0xff]
    %v2802 = vld [vmem:[%s2788 + $0x68] sm:$0xff]
    %v2803 = vld [vmem:[%s2788 + $0x70] sm:$0xff]
    %v2804 = vld [vmem:[%s2788 + $0x78] sm:$0xff]
    %v2805 = vld [vmem:[%s2788 + $0x80] sm:$0xff]
    %v2806 = vld [vmem:[%s2788 + $0x88] sm:$0xff]
    %v2807 = vld [vmem:[%s2788 + $0x90] sm:$0xff]
    %v2808 = vld [vmem:[%s2788 + $0x98] sm:$0xff]
    %v2809 = vld [vmem:[%s2788 + $0xa0] sm:$0xff]
    %v2810 = vld [vmem:[%s2788 + $0xa8] sm:$0xff]
    %v2811 = vld [vmem:[%s2788 + $0xb0] sm:$0xff]
    %v2812 = vld [vmem:[%s2788 + $0xb8] sm:$0xff]
    %v2813 = vld [vmem:[%s2788 + $0xc0] sm:$0xff]
    %v2814 = vld [vmem:[%s2788 + $0xc8] sm:$0xff]
    %v2815 = vld [vmem:[%s2788 + $0xd0] sm:$0xff]
    %v2816 = vld [vmem:[%s2788 + $0xd8] sm:$0xff]
    %v2817 = vld [vmem:[%s2788 + $0xe0] sm:$0xff]
    %v2818 = vld [vmem:[%s2788 + $0xe8] sm:$0xff]
    %v2819 = vld [vmem:[%s2788 + $0xf0] sm:$0xff]
    %v2820 = vld [vmem:[%s2788 + $0xf8] sm:$0xff]
    %v2853 = vunpack.c.l.b16 %v2789
    %v2854 = vunpack.c.h.b16 %v2789
    %v2855 = vunpack.c.l.b16 %v2790
    %v2856 = vunpack.c.h.b16 %v2790
    %v2857 = vunpack.c.l.b16 %v2791
    %v2858 = vunpack.c.h.b16 %v2791
    %v2859 = vunpack.c.l.b16 %v2792
    %v2860 = vunpack.c.h.b16 %v2792
    %v2861 = vunpack.c.l.b16 %v2793
    %v2862 = vunpack.c.h.b16 %v2793
    %v2863 = vunpack.c.l.b16 %v2794
    %v2864 = vunpack.c.h.b16 %v2794
    %v2865 = vunpack.c.l.b16 %v2795
    %v2866 = vunpack.c.h.b16 %v2795
    %v2867 = vunpack.c.l.b16 %v2796
    %v2868 = vunpack.c.h.b16 %v2796
    %v2869 = vunpack.c.l.b16 %v2797
    %v2870 = vunpack.c.h.b16 %v2797
    %v2871 = vunpack.c.l.b16 %v2798
    %v2872 = vunpack.c.h.b16 %v2798
    %v2873 = vunpack.c.l.b16 %v2799
    %v2874 = vunpack.c.h.b16 %v2799
    %v2875 = vunpack.c.l.b16 %v2800
    %v2876 = vunpack.c.h.b16 %v2800
    %v2877 = vunpack.c.l.b16 %v2801
    %v2878 = vunpack.c.h.b16 %v2801
    %v2879 = vunpack.c.l.b16 %v2802
    %v2880 = vunpack.c.h.b16 %v2802
    %v2881 = vunpack.c.l.b16 %v2803
    %v2882 = vunpack.c.h.b16 %v2803
    %v2883 = vunpack.c.l.b16 %v2804
    %v2884 = vunpack.c.h.b16 %v2804
    %v2885 = vunpack.c.l.b16 %v2805
    %v2886 = vunpack.c.h.b16 %v2805
    %v2887 = vunpack.c.l.b16 %v2806
    %v2888 = vunpack.c.h.b16 %v2806
    %v2889 = vunpack.c.l.b16 %v2807
    %v2890 = vunpack.c.h.b16 %v2807
    %v2891 = vunpack.c.l.b16 %v2808
    %v2892 = vunpack.c.h.b16 %v2808
    %v2893 = vunpack.c.l.b16 %v2809
    %v2894 = vunpack.c.h.b16 %v2809
    %v2895 = vunpack.c.l.b16 %v2810
    %v2896 = vunpack.c.h.b16 %v2810
    %v2897 = vunpack.c.l.b16 %v2811
    %v2898 = vunpack.c.h.b16 %v2811
    %v2899 = vunpack.c.l.b16 %v2812
    %v2900 = vunpack.c.h.b16 %v2812
    %v2901 = vunpack.c.l.b16 %v2813
    %v2902 = vunpack.c.h.b16 %v2813
    %v2903 = vunpack.c.l.b16 %v2814
    %v2904 = vunpack.c.h.b16 %v2814
    %v2905 = vunpack.c.l.b16 %v2815
    %v2906 = vunpack.c.h.b16 %v2815
    %v2907 = vunpack.c.l.b16 %v2816
    %v2908 = vunpack.c.h.b16 %v2816
    %v2909 = vunpack.c.l.b16 %v2817
    %v2910 = vunpack.c.h.b16 %v2817
    %v2911 = vunpack.c.l.b16 %v2818
    %v2912 = vunpack.c.h.b16 %v2818
    %v2913 = vunpack.c.l.b16 %v2819
    %v2914 = vunpack.c.h.b16 %v2819
    %v2915 = vunpack.c.l.b16 %v2820
    %v2916 = vunpack.c.h.b16 %v2820
    %v2917 = vpack.c.b16 %v2855, %v2853
    %v2918 = vpack.c.b16 %v2856, %v2854
    %v2919 = vpack.c.b16 %v2859, %v2857
    %v2920 = vpack.c.b16 %v2860, %v2858
    %v2921 = vpack.c.b16 %v2863, %v2861
    %v2922 = vpack.c.b16 %v2864, %v2862
    %v2923 = vpack.c.b16 %v2867, %v2865
    %v2924 = vpack.c.b16 %v2868, %v2866
    %v2925 = vpack.c.b16 %v2871, %v2869
    %v2926 = vpack.c.b16 %v2872, %v2870
    %v2927 = vpack.c.b16 %v2875, %v2873
    %v2928 = vpack.c.b16 %v2876, %v2874
    %v2929 = vpack.c.b16 %v2879, %v2877
    %v2930 = vpack.c.b16 %v2880, %v2878
    %v2931 = vpack.c.b16 %v2883, %v2881
    %v2932 = vpack.c.b16 %v2884, %v2882
    %v2933 = vpack.c.b16 %v2887, %v2885
    %v2934 = vpack.c.b16 %v2888, %v2886
    %v2935 = vpack.c.b16 %v2891, %v2889
    %v2936 = vpack.c.b16 %v2892, %v2890
    %v2937 = vpack.c.b16 %v2895, %v2893
    %v2938 = vpack.c.b16 %v2896, %v2894
    %v2939 = vpack.c.b16 %v2899, %v2897
    %v2940 = vpack.c.b16 %v2900, %v2898
    %v2941 = vpack.c.b16 %v2903, %v2901
    %v2942 = vpack.c.b16 %v2904, %v2902
    %v2943 = vpack.c.b16 %v2907, %v2905
    %v2944 = vpack.c.b16 %v2908, %v2906
    %v2945 = vpack.c.b16 %v2911, %v2909
    %v2946 = vpack.c.b16 %v2912, %v2910
    %v2947 = vpack.c.b16 %v2915, %v2913
    %v2948 = vpack.c.b16 %v2916, %v2914
    %2981 = vmatprep.subr.bf16.mxu0 %v2932
    %2982 = vmatpush1.bf16.msra.mxu0 %v2931
    %2983 = vmatprep.subr.bf16.mxu0 %v2930
    %2984 = vmatpush1.bf16.msra.mxu0 %v2929
    %2985 = vmatprep.subr.bf16.mxu0 %v2928
    %2986 = vmatpush1.bf16.msra.mxu0 %v2927
    %2987 = vmatprep.subr.bf16.mxu0 %v2926
    %2988 = vmatpush1.bf16.msra.mxu0 %v2925
    %2989 = vmatprep.subr.bf16.mxu0 %v2924
    %2990 = vmatpush1.bf16.msra.mxu0 %v2923
    %2991 = vmatprep.subr.bf16.mxu0 %v2922
    %2992 = vmatpush1.bf16.msra.mxu0 %v2921
    %2993 = vmatprep.subr.bf16.mxu0 %v2920
    %2994 = vmatpush1.bf16.msra.mxu0 %v2919
    %2995 = vmatprep.subr.bf16.mxu0 %v2918
    %2996 = vmatpush1.bf16.msra.mxu0 %v2917
    %2997 = vmatprep.subr.bf16.mxu0 %v2948
    %2998 = vmatpush2.bf16.msra.mxu0 %v2947
    %2999 = vmatprep.subr.bf16.mxu0 %v2946
    %3000 = vmatpush2.bf16.msra.mxu0 %v2945
    %3001 = vmatprep.subr.bf16.mxu0 %v2944
    %3002 = vmatpush2.bf16.msra.mxu0 %v2943
    %3003 = vmatprep.subr.bf16.mxu0 %v2942
    %3004 = vmatpush2.bf16.msra.mxu0 %v2941
    %3005 = vmatprep.subr.bf16.mxu0 %v2940
    %3006 = vmatpush2.bf16.msra.mxu0 %v2939
    %3007 = vmatprep.subr.bf16.mxu0 %v2938
    %3008 = vmatpush2.bf16.msra.mxu0 %v2937
    %3009 = vmatprep.subr.bf16.mxu0 %v2936
    %3010 = vmatpush2.bf16.msra.mxu0 %v2935
    %3011 = vmatprep.subr.bf16.mxu0 %v2934
    %3012 = vmatpush2.bf16.msra.mxu0 %v2933
    %3013 = vmatprep.mubr.bf16.mxu0 %v2250
    %3014 = vmatmul.mubr.bf16.gmra.mxu0 %v2249
    %v3015 = vpop.f32.mrf.mxu0
    %v3016 = vadd.f32 0.0, %v3015
    %v3017 = vpop.f32.mrf.mxu0
    %v3018 = vadd.f32 0.0, %v3017
    %v3019 = vpop.f32.mrf.mxu0
    %v3020 = vadd.f32 0.0, %v3019
    %v3021 = vpop.f32.mrf.mxu0
    %v3022 = vadd.f32 0.0, %v3021
    %3023 = vmatprep.mubr.bf16.mxu0 %v2252
    %3024 = vmatmul.mubr.bf16.gmra.mxu0 %v2251
    %v3025 = vpop.f32.mrf.mxu0
    %v3026 = vadd.f32 0.0, %v3025
    %v3027 = vpop.f32.mrf.mxu0
    %v3028 = vadd.f32 0.0, %v3027
    %v3029 = vpop.f32.mrf.mxu0
    %v3030 = vadd.f32 0.0, %v3029
    %v3031 = vpop.f32.mrf.mxu0
    %v3032 = vadd.f32 0.0, %v3031
    %3033 = vmatprep.mubr.bf16.mxu0 %v2254
    %3034 = vmatmul.mubr.bf16.gmra.mxu0 %v2253
    %v3035 = vpop.f32.mrf.mxu0
    %v3036 = vadd.f32 0.0, %v3035
    %v3037 = vpop.f32.mrf.mxu0
    %v3038 = vadd.f32 0.0, %v3037
    %v3039 = vpop.f32.mrf.mxu0
    %v3040 = vadd.f32 0.0, %v3039
    %v3041 = vpop.f32.mrf.mxu0
    %v3042 = vadd.f32 0.0, %v3041
    %3043 = vmatprep.mubr.bf16.mxu0 %v2256
    %3044 = vmatmul.mubr.bf16.gmra.mxu0 %v2255
    %v3045 = vpop.f32.mrf.mxu0
    %v3046 = vadd.f32 0.0, %v3045
    %v3047 = vpop.f32.mrf.mxu0
    %v3048 = vadd.f32 0.0, %v3047
    %v3049 = vpop.f32.mrf.mxu0
    %v3050 = vadd.f32 0.0, %v3049
    %v3051 = vpop.f32.mrf.mxu0
    %v3052 = vadd.f32 0.0, %v3051
    %3053 = vdwg.mxu0
    %v3054 = vadd.f32 %v2750, %v3016
    %v3055 = vadd.f32 %v2752, %v3018
    %v3056 = vadd.f32 %v2754, %v3020
    %v3057 = vadd.f32 %v2756, %v3022
    %v3058 = vadd.f32 %v2760, %v3026
    %v3059 = vadd.f32 %v2762, %v3028
    %v3060 = vadd.f32 %v2764, %v3030
    %v3061 = vadd.f32 %v2766, %v3032
    %v3062 = vadd.f32 %v2770, %v3036
    %v3063 = vadd.f32 %v2772, %v3038
    %v3064 = vadd.f32 %v2774, %v3040
    %v3065 = vadd.f32 %v2776, %v3042
    %v3066 = vadd.f32 %v2780, %v3046
    %v3067 = vadd.f32 %v2782, %v3048
    %v3068 = vadd.f32 %v2784, %v3050
    %v3069 = vadd.f32 %v2786, %v3052
    %v3070 = vld [vmem:[%s15] sm:$0x3]
    %v3072 = vlaneseq
    %v3073 = vshrl.u32 %v3072, 7
    %v3074 = vsub.s32 0, %v3073
    %v3075 = vrot.slane %v3070, %v3074
    %v3076 = vlaneseq
    %v3077 = vshrl.u32 %v3076, 7
    %v3078 = vsub.s32 1, %v3077
    %v3079 = vrot.slane %v3070, %v3078
    %v3082 = vadd.f32 %v3054, %v3075
    %v3083 = vadd.f32 %v3055, %v3079
    %v3084 = vadd.f32 %v3056, %v3075
    %v3085 = vadd.f32 %v3057, %v3079
    %v3086 = vadd.f32 %v3058, %v3075
    %v3087 = vadd.f32 %v3059, %v3079
    %v3088 = vadd.f32 %v3060, %v3075
    %v3089 = vadd.f32 %v3061, %v3079
    %v3090 = vadd.f32 %v3062, %v3075
    %v3091 = vadd.f32 %v3063, %v3079
    %v3092 = vadd.f32 %v3064, %v3075
    %v3093 = vadd.f32 %v3065, %v3079
    %v3094 = vadd.f32 %v3066, %v3075
    %v3095 = vadd.f32 %v3067, %v3079
    %v3096 = vadd.f32 %v3068, %v3075
    %v3097 = vadd.f32 %v3069, %v3079
    %v3098 = vpack.c.bf16 %v174, %v173
    %v3099 = vpack.c.bf16 %v176, %v175
    %v3100 = vpack.c.bf16 %v178, %v177
    %v3101 = vpack.c.bf16 %v180, %v179
    %v3102 = vld [vmem:[#allocation16] sm:$0xff]
    %v3103 = vld [vmem:[#allocation16 + $0x8] sm:$0xff]
    %v3104 = vld [vmem:[#allocation16 + $0x10] sm:$0xff]
    %v3105 = vld [vmem:[#allocation16 + $0x18] sm:$0xff]
    %v3106 = vld [vmem:[#allocation16 + $0x20] sm:$0xff]
    %v3107 = vld [vmem:[#allocation16 + $0x28] sm:$0xff]
    %v3108 = vld [vmem:[#allocation16 + $0x30] sm:$0xff]
    %v3109 = vld [vmem:[#allocation16 + $0x38] sm:$0xff]
    %v3110 = vld [vmem:[#allocation16 + $0x40] sm:$0xff]
    %v3111 = vld [vmem:[#allocation16 + $0x48] sm:$0xff]
    %v3112 = vld [vmem:[#allocation16 + $0x50] sm:$0xff]
    %v3113 = vld [vmem:[#allocation16 + $0x58] sm:$0xff]
    %v3114 = vld [vmem:[#allocation16 + $0x60] sm:$0xff]
    %v3115 = vld [vmem:[#allocation16 + $0x68] sm:$0xff]
    %v3116 = vld [vmem:[#allocation16 + $0x70] sm:$0xff]
    %v3117 = vld [vmem:[#allocation16 + $0x78] sm:$0xff]
    %v3134 = vunpack.c.l.b16 %v3102
    %v3135 = vunpack.c.h.b16 %v3102
    %v3136 = vunpack.c.l.b16 %v3103
    %v3137 = vunpack.c.h.b16 %v3103
    %v3138 = vunpack.c.l.b16 %v3104
    %v3139 = vunpack.c.h.b16 %v3104
    %v3140 = vunpack.c.l.b16 %v3105
    %v3141 = vunpack.c.h.b16 %v3105
    %v3142 = vunpack.c.l.b16 %v3106
    %v3143 = vunpack.c.h.b16 %v3106
    %v3144 = vunpack.c.l.b16 %v3107
    %v3145 = vunpack.c.h.b16 %v3107
    %v3146 = vunpack.c.l.b16 %v3108
    %v3147 = vunpack.c.h.b16 %v3108
    %v3148 = vunpack.c.l.b16 %v3109
    %v3149 = vunpack.c.h.b16 %v3109
    %v3150 = vunpack.c.l.b16 %v3110
    %v3151 = vunpack.c.h.b16 %v3110
    %v3152 = vunpack.c.l.b16 %v3111
    %v3153 = vunpack.c.h.b16 %v3111
    %v3154 = vunpack.c.l.b16 %v3112
    %v3155 = vunpack.c.h.b16 %v3112
    %v3156 = vunpack.c.l.b16 %v3113
    %v3157 = vunpack.c.h.b16 %v3113
    %v3158 = vunpack.c.l.b16 %v3114
    %v3159 = vunpack.c.h.b16 %v3114
    %v3160 = vunpack.c.l.b16 %v3115
    %v3161 = vunpack.c.h.b16 %v3115
    %v3162 = vunpack.c.l.b16 %v3116
    %v3163 = vunpack.c.h.b16 %v3116
    %v3164 = vunpack.c.l.b16 %v3117
    %v3165 = vunpack.c.h.b16 %v3117
    %v3166 = vpack.c.b16 %v3136, %v3134
    %v3167 = vpack.c.b16 %v3137, %v3135
    %v3168 = vpack.c.b16 %v3140, %v3138
    %v3169 = vpack.c.b16 %v3141, %v3139
    %v3170 = vpack.c.b16 %v3144, %v3142
    %v3171 = vpack.c.b16 %v3145, %v3143
    %v3172 = vpack.c.b16 %v3148, %v3146
    %v3173 = vpack.c.b16 %v3149, %v3147
    %v3174 = vpack.c.b16 %v3152, %v3150
    %v3175 = vpack.c.b16 %v3153, %v3151
    %v3176 = vpack.c.b16 %v3156, %v3154
    %v3177 = vpack.c.b16 %v3157, %v3155
    %v3178 = vpack.c.b16 %v3160, %v3158
    %v3179 = vpack.c.b16 %v3161, %v3159
    %v3180 = vpack.c.b16 %v3164, %v3162
    %v3181 = vpack.c.b16 %v3165, %v3163
    %3198 = vmatprep.subr.bf16.mxu0 %v3181
    %3199 = vmatpush1.bf16.msra.mxu0 %v3180
    %3200 = vmatprep.subr.bf16.mxu0 %v3179
    %3201 = vmatpush1.bf16.msra.mxu0 %v3178
    %3202 = vmatprep.subr.bf16.mxu0 %v3177
    %3203 = vmatpush1.bf16.msra.mxu0 %v3176
    %3204 = vmatprep.subr.bf16.mxu0 %v3175
    %3205 = vmatpush1.bf16.msra.mxu0 %v3174
    %3206 = vmatprep.subr.bf16.mxu0 %v3173
    %3207 = vmatpush1.bf16.msra.mxu0 %v3172
    %3208 = vmatprep.subr.bf16.mxu0 %v3171
    %3209 = vmatpush1.bf16.msra.mxu0 %v3170
    %3210 = vmatprep.subr.bf16.mxu0 %v3169
    %3211 = vmatpush1.bf16.msra.mxu0 %v3168
    %3212 = vmatprep.subr.bf16.mxu0 %v3167
    %3213 = vmatpush1.bf16.msra.mxu0 %v3166
    %3214 = vmatprep.subr.bf16.mxu0 0
    %3215 = vmatpush2.bf16.msra.mxu0 0
    %3216 = vmatprep.subr.bf16.mxu0 0
    %3217 = vmatpush2.bf16.msra.mxu0 0
    %3218 = vmatprep.subr.bf16.mxu0 0
    %3219 = vmatpush2.bf16.msra.mxu0 0
    %3220 = vmatprep.subr.bf16.mxu0 0
    %3221 = vmatpush2.bf16.msra.mxu0 0
    %3222 = vmatprep.subr.bf16.mxu0 0
    %3223 = vmatpush2.bf16.msra.mxu0 0
    %3224 = vmatprep.subr.bf16.mxu0 0
    %3225 = vmatpush2.bf16.msra.mxu0 0
    %3226 = vmatprep.subr.bf16.mxu0 0
    %3227 = vmatpush2.bf16.msra.mxu0 0
    %3228 = vmatprep.subr.bf16.mxu0 0
    %3229 = vmatpush2.bf16.msra.mxu0 0
    %3230 = vmatprep.mubr.bf16.mxu0 0
    %3231 = vmatmul.mubr.bf16.gmra.mxu0 %v3098
    %v3232 = vpop.f32.mrf.mxu0
    %v3233 = vadd.f32 0.0, %v3232
    %v3234 = vpop.f32.mrf.mxu0
    %v3235 = vadd.f32 0.0, %v3234
    %v3236 = vpop.f32.mrf.mxu0
    %v3237 = vadd.f32 0.0, %v3236
    %v3238 = vpop.f32.mrf.mxu0
    %v3239 = vadd.f32 0.0, %v3238
    %3240 = vmatprep.mubr.bf16.mxu0 0
    %3241 = vmatmul.mubr.bf16.gmra.mxu0 %v3099
    %v3242 = vpop.f32.mrf.mxu0
    %v3243 = vadd.f32 0.0, %v3242
    %v3244 = vpop.f32.mrf.mxu0
    %v3245 = vadd.f32 0.0, %v3244
    %v3246 = vpop.f32.mrf.mxu0
    %v3247 = vadd.f32 0.0, %v3246
    %v3248 = vpop.f32.mrf.mxu0
    %v3249 = vadd.f32 0.0, %v3248
    %3250 = vmatprep.mubr.bf16.mxu0 0
    %3251 = vmatmul.mubr.bf16.gmra.mxu0 %v3100
    %v3252 = vpop.f32.mrf.mxu0
    %v3253 = vadd.f32 0.0, %v3252
    %v3254 = vpop.f32.mrf.mxu0
    %v3255 = vadd.f32 0.0, %v3254
    %v3256 = vpop.f32.mrf.mxu0
    %v3257 = vadd.f32 0.0, %v3256
    %v3258 = vpop.f32.mrf.mxu0
    %v3259 = vadd.f32 0.0, %v3258
    %3260 = vmatprep.mubr.bf16.mxu0 0
    %3261 = vmatmul.mubr.bf16.gmra.mxu0 %v3101
    %v3262 = vpop.f32.mrf.mxu0
    %v3263 = vadd.f32 0.0, %v3262
    %v3264 = vpop.f32.mrf.mxu0
    %v3265 = vadd.f32 0.0, %v3264
    %v3266 = vpop.f32.mrf.mxu0
    %v3267 = vadd.f32 0.0, %v3266
    %v3268 = vpop.f32.mrf.mxu0
    %v3269 = vadd.f32 0.0, %v3268
    %3270 = vdwg.mxu0
    %v3271 = vld [vmem:[%s17] sm:$0x3]
    %v3273 = vlaneseq
    %v3274 = vshrl.u32 %v3273, 7
    %v3275 = vsub.s32 0, %v3274
    %v3276 = vrot.slane %v3271, %v3275
    %v3277 = vlaneseq
    %v3278 = vshrl.u32 %v3277, 7
    %v3279 = vsub.s32 1, %v3278
    %v3280 = vrot.slane %v3271, %v3279
    %v3283 = vadd.f32 %v3233, %v3276
    %v3284 = vadd.f32 %v3235, %v3280
    %v3285 = vadd.f32 %v3237, %v3276
    %v3286 = vadd.f32 %v3239, %v3280
    %v3287 = vadd.f32 %v3243, %v3276
    %v3288 = vadd.f32 %v3245, %v3280
    %v3289 = vadd.f32 %v3247, %v3276
    %v3290 = vadd.f32 %v3249, %v3280
    %v3291 = vadd.f32 %v3253, %v3276
    %v3292 = vadd.f32 %v3255, %v3280
    %v3293 = vadd.f32 %v3257, %v3276
    %v3294 = vadd.f32 %v3259, %v3280
    %v3295 = vadd.f32 %v3263, %v3276
    %v3296 = vadd.f32 %v3265, %v3280
    %v3297 = vadd.f32 %v3267, %v3276
    %v3298 = vadd.f32 %v3269, %v3280
    %v3299 = vadd.f32 %v3082, %v3283
    %v3300 = vadd.f32 %v3083, %v3284
    %v3301 = vadd.f32 %v3084, %v3285
    %v3302 = vadd.f32 %v3085, %v3286
    %v3303 = vadd.f32 %v3086, %v3287
    %v3304 = vadd.f32 %v3087, %v3288
    %v3305 = vadd.f32 %v3088, %v3289
    %v3306 = vadd.f32 %v3089, %v3290
    %v3307 = vadd.f32 %v3090, %v3291
    %v3308 = vadd.f32 %v3091, %v3292
    %v3309 = vadd.f32 %v3092, %v3293
    %v3310 = vadd.f32 %v3093, %v3294
    %v3311 = vadd.f32 %v3094, %v3295
    %v3312 = vadd.f32 %v3095, %v3296
    %v3313 = vadd.f32 %v3096, %v3297
    %v3314 = vadd.f32 %v3097, %v3298
    %3315 = vst [vmem:[#allocation17] sm:$0xff] %v3299
    %3316 = vst [vmem:[#allocation17 + $0x8] sm:$0xff] %v3300
    %3317 = vst [vmem:[#allocation17 + $0x10] sm:$0xff] %v3301
    %3318 = vst [vmem:[#allocation17 + $0x18] sm:$0xff] %v3302
    %3319 = vst [vmem:[#allocation17 + $0x20] sm:$0xff] %v3303
    %3320 = vst [vmem:[#allocation17 + $0x28] sm:$0xff] %v3304
    %3321 = vst [vmem:[#allocation17 + $0x30] sm:$0xff] %v3305
    %3322 = vst [vmem:[#allocation17 + $0x38] sm:$0xff] %v3306
    %3323 = vst [vmem:[#allocation17 + $0x40] sm:$0xff] %v3307
    %3324 = vst [vmem:[#allocation17 + $0x48] sm:$0xff] %v3308
    %3325 = vst [vmem:[#allocation17 + $0x50] sm:$0xff] %v3309
    %3326 = vst [vmem:[#allocation17 + $0x58] sm:$0xff] %v3310
    %3327 = vst [vmem:[#allocation17 + $0x60] sm:$0xff] %v3311
    %3328 = vst [vmem:[#allocation17 + $0x68] sm:$0xff] %v3312
    %3329 = vst [vmem:[#allocation17 + $0x70] sm:$0xff] %v3313
    %3330 = vst [vmem:[#allocation17 + $0x78] sm:$0xff] %v3314
    // Predicated region
    $region110: #{tpu_custom_call.1} parent=1 // pred_check
      _
    $region111: #{tpu_custom_call.1} parent=1 // pred_check_branch
      %3332 = sbr.rel (0) target = $region113
    $region112: #{tpu_custom_call.1} parent=1 // pred_region
      %s3334 = ssub.s32 2048, 2048
      %3335 = vsyncadd [#allocation4], %s3334
      %s3336 = sshll.u32 [#allocation17], 4
      %s3337 = int_to_ptr.vmem [resolvable:$true] %s3336
      %3342 = dma.vmem_to_hbm [thread:$0]  %s3337, 2048, %s18, [#allocation4], 256, 256, 16
    $region113: #{tpu_custom_call.1} parent=1 // pred_fallthru
      _
    // Predicated region
    $region114: #{tpu_custom_call.1} parent=1 // pred_check
      _
    $region115: #{tpu_custom_call.1} parent=1 // pred_check_branch
      %3344 = sbr.rel (0) target = $region117
    $region116: #{tpu_custom_call.1} parent=1 // pred_region
      %3345 = dma.done [#allocation4], 2048
    $region117: #{tpu_custom_call.1} parent=1 // pred_fallthru
      _
    %3346 = vsyncpa [#allocation3], 1
    %3347 = vsyncpa [#allocation6], 1
    %3348 = vsyncpa [#allocation9], 1
    %3349 = vsyncpa [#allocation12], 1
    %3350 = vsyncpa [#allocation15], 1
    %3351 = vsyncpa [#allocation4], 1

// kernel: tpu_custom_call.1
$region0: #{tpu_custom_call.1}
  #allocation0 [shape = 'u32[]', space=smem, size = 0x4, offset = 0x4, fixed_abs, tag = 'smem constant byte address 0x4 - core index']
  #allocation1 [shape = 'u32[144,128]{1,0:T(1,128)}', space=vmem, size = 0x12000, scoped, tag = 'internal scratch']
  %s0 = inlined_call_operand.hbm [shape: f32[4,16,128], index: 0, kind: input, shape index: {}]
  %s1 = inlined_call_operand.hbm [shape: f32[4,8], index: 1, kind: input, shape index: {}]
  %s2 = inlined_call_operand.hbm [shape: f32[1,128], index: 2, kind: input, shape index: {}]
  %s3 = inlined_call_operand.hbm [shape: f32[1,128], index: 3, kind: input, shape index: {}]
  %s4 = inlined_call_operand.vmem [shape: f32[128,4], index: 4, kind: input, shape index: {}]
  %s5 = inlined_call_operand.hbm [shape: f32[4,128], index: 5, kind: input, shape index: {}]
  %s6 = inlined_call_operand.vmem [shape: bf16[3,128,256], index: 6, kind: input, shape index: {}]
  %s7 = inlined_call_operand.hbm [shape: f32[1,256], index: 7, kind: input, shape index: {}]
  %s8 = inlined_call_operand.vmem [shape: f32[8,16], index: 8, kind: input, shape index: {}]
  %s9 = inlined_call_operand.hbm [shape: f32[16,256], index: 9, kind: input, shape index: {}]
  %s10 = inlined_call_operand.vmem [shape: f32[1,256], index: 10, kind: input, shape index: {}]
  %s11 = inlined_call_operand.vmem [shape: f32[1,256], index: 11, kind: input, shape index: {}]
  %s12 = inlined_call_operand.vmem [shape: f32[256,4], index: 12, kind: input, shape index: {}]
  %s13 = inlined_call_operand.vmem [shape: f32[4,256], index: 13, kind: input, shape index: {}]
  %s14 = inlined_call_operand.hbm [shape: bf16[3,256,256], index: 14, kind: input, shape index: {}]
  %s15 = inlined_call_operand.vmem [shape: f32[1,256], index: 15, kind: input, shape index: {}]
  %s16 = inlined_call_operand.hbm [shape: bf16[128,256], index: 16, kind: input, shape index: {}]
  %s17 = inlined_call_operand.vmem [shape: f32[1,256], index: 17, kind: input, shape index: {}]
  %s18 = inlined_call_operand.hbm [shape: f32[4,16,256], index: 18, kind: output, shape index: {}]
  %s19 = sld [smem:[#allocation0]]
  $region118: #{tpu_custom_call.1} parent=0
    _
  %s21 = ssub.s32 1, %s19
  %s22 = scalar_select 0, %s21, %s19
  $region1: #{tpu_custom_call.1} parent=0
    #allocation2 [shape = 'u8[32768]{0}', space=vmem, size = 0x8000, scoped, tag = 'input window, operand 0, single buffered']
    #allocation3 [shape = 's32[1]{0}', space=sflag, size = 0x4, scoped, tag = 'scoped memory for tpu_custom_call.1']
    #allocation4 [shape = 's32[1]{0}', space=sflag, size = 0x4, scoped, tag = 'scoped memory for tpu_custom_call.1']
    #allocation5 [shape = 'u8[2048]{0}', space=vmem, size = 0x800, scoped, tag = 'input window, operand 1, single buffered']
    #allocation6 [shape = 's32[1]{0}', space=sflag, size = 0x4, scoped, tag = 'scoped memory for tpu_custom_call.1']
    #allocation7 [shape = 'u8[512]{0}', space=vmem, size = 0x400, scoped, tag = 'input window, operand 2, single buffered']
    #allocation8 [shape = 'u8[512]{0}', space=vmem, size = 0x400, scoped, tag = 'input window, operand 3, single buffered']
    #allocation9 [shape = 's32[1]{0}', space=sflag, size = 0x4, scoped, tag = 'scoped memory for tpu_custom_call.1']
    #allocation10 [shape = 'u8[2048]{0}', space=vmem, size = 0x800, scoped, tag = 'input window, operand 5, single buffered']
    #allocation11 [shape = 'u8[1024]{0}', space=vmem, size = 0x400, scoped, tag = 'input window, operand 7, single buffered']
    #allocation12 [shape = 's32[1]{0}', space=sflag, size = 0x4, scoped, tag = 'scoped memory for tpu_custom_call.1']
    #allocation13 [shape = 'u8[16384]{0}', space=vmem, size = 0x4000, scoped, tag = 'input window, operand 9, single buffered']
    #allocation14 [shape = 'u8[393216]{0}', space=vmem, size = 0x60000, scoped, tag = 'input window, operand 14, single buffered']
    #allocation15 [shape = 's32[1]{0}', space=sflag, size = 0x4, scoped, tag = 'scoped memory for tpu_custom_call.1']
    #allocation16 [shape = 'u8[65536]{0}', space=vmem, size = 0x10000, scoped, tag = 'input window, operand 16, single buffered']
    #allocation17 [shape = 'u8[65536]{0}', space=vmem, size = 0x10000, scoped, tag = 'output window, operand 0, single buffered']
    %23 = vsyncpa [#allocation3], 0
    %24 = vsyncpa [#allocation6], 0
    %25 = vsyncpa [#allocation9], 0
    %26 = vsyncpa [#allocation12], 0
    %27 = vsyncpa [#allocation15], 0
    %28 = vsyncpa [#allocation4], 0
    // Predicated region
    $region2: #{tpu_custom_call.1} parent=1 // pred_check
      _
    $region3: #{tpu_custom_call.1} parent=1 // pred_check_branch
      %30 = sbr.rel (0) target = $region5
    $region4: #{tpu_custom_call.1} parent=1 // pred_region
      %s32 = ssub.s32 1024, 1024
      %33 = vsyncadd [#allocation3], %s32
      %s34 = sshll.u32 [#allocation2], 4
      %s35 = int_to_ptr.vmem [resolvable:$true] %s34
      %40 = dma.hbm_to_vmem [thread:$0]  %s0, 1024, %s35, [#allocation3], 128, 128, 8
    $region5: #{tpu_custom_call.1} parent=1 // pred_fallthru
      _
    // Predicated region
    $region6: #{tpu_custom_call.1} parent=1 // pred_check
      _
    $region7: #{tpu_custom_call.1} parent=1 // pred_check_branch
      %42 = sbr.rel (0) target = $region9
    $region8: #{tpu_custom_call.1} parent=1 // pred_region
      %s44 = ssub.s32 64, 64
      %45 = vsyncadd [#allocation6], %s44
      %s47 = sshll.u32 [#allocation5], 4
      %s48 = int_to_ptr.vmem [resolvable:$true] %s47
      %50 = dma.hbm_to_vmem [thread:$0]  %s1, 64, %s48, [#allocation6]
    $region9: #{tpu_custom_call.1} parent=1 // pred_fallthru
      _
    // Predicated region
    $region10: #{tpu_custom_call.1} parent=1 // pred_check
      _
    $region11: #{tpu_custom_call.1} parent=1 // pred_check_branch
      %52 = sbr.rel (0) target = $region13
    $region12: #{tpu_custom_call.1} parent=1 // pred_region
      %s54 = ssub.s32 16, 16
      %55 = vsyncadd [#allocation6], %s54
      %s57 = sshll.u32 [#allocation7], 4
      %s58 = int_to_ptr.vmem [resolvable:$true] %s57
      %60 = dma.hbm_to_vmem [thread:$0]  %s2, 16, %s58, [#allocation6]
    $region13: #{tpu_custom_call.1} parent=1 // pred_fallthru
      _
    // Predicated region
    $region14: #{tpu_custom_call.1} parent=1 // pred_check
      _
    $region15: #{tpu_custom_call.1} parent=1 // pred_check_branch
      %62 = sbr.rel (0) target = $region17
    $region16: #{tpu_custom_call.1} parent=1 // pred_region
      %s64 = ssub.s32 16, 16
      %65 = vsyncadd [#allocation9], %s64
      %s67 = sshll.u32 [#allocation8], 4
      %s68 = int_to_ptr.vmem [resolvable:$true] %s67
      %70 = dma.hbm_to_vmem [thread:$0]  %s3, 16, %s68, [#allocation9]
    $region17: #{tpu_custom_call.1} parent=1 // pred_fallthru
      _
    // Predicated region
    $region18: #{tpu_custom_call.1} parent=1 // pred_check
      _
    $region19: #{tpu_custom_call.1} parent=1 // pred_check_branch
      %72 = sbr.rel (0) target = $region21
    $region20: #{tpu_custom_call.1} parent=1 // pred_region
      _
    $region21: #{tpu_custom_call.1} parent=1 // pred_fallthru
      _
    // Predicated region
    $region22: #{tpu_custom_call.1} parent=1 // pred_check
      _
    $region23: #{tpu_custom_call.1} parent=1 // pred_check_branch
      %74 = sbr.rel (0) target = $region25
    $region24: #{tpu_custom_call.1} parent=1 // pred_region
      %s76 = ssub.s32 64, 64
      %77 = vsyncadd [#allocation9], %s76
      %s79 = sshll.u32 [#allocation10], 4
      %s80 = int_to_ptr.vmem [resolvable:$true] %s79
      %82 = dma.hbm_to_vmem [thread:$0]  %s5, 64, %s80, [#allocation9]
    $region25: #{tpu_custom_call.1} parent=1 // pred_fallthru
      _
    // Predicated region
    $region26: #{tpu_custom_call.1} parent=1 // pred_check
      _
    $region27: #{tpu_custom_call.1} parent=1 // pred_check_branch
      %84 = sbr.rel (0) target = $region29
    $region28: #{tpu_custom_call.1} parent=1 // pred_region
      _
    $region29: #{tpu_custom_call.1} parent=1 // pred_fallthru
      _
    // Predicated region
    $region30: #{tpu_custom_call.1} parent=1 // pred_check
      _
    $region31: #{tpu_custom_call.1} parent=1 // pred_check_branch
      %86 = sbr.rel (0) target = $region33
    $region32: #{tpu_custom_call.1} parent=1 // pred_region
      %s88 = ssub.s32 32, 32
      %89 = vsyncadd [#allocation12], %s88
      %s91 = sshll.u32 [#allocation11], 4
      %s92 = int_to_ptr.vmem [resolvable:$true] %s91
      %94 = dma.hbm_to_vmem [thread:$0]  %s7, 32, %s92, [#allocation12]
    $region33: #{tpu_custom_call.1} parent=1 // pred_fallthru
      _
    // Predicated region
    $region34: #{tpu_custom_call.1} parent=1 // pred_check
      _
    $region35: #{tpu_custom_call.1} parent=1 // pred_check_branch
      %96 = sbr.rel (0) target = $region37
    $region36: #{tpu_custom_call.1} parent=1 // pred_region
      _
    $region37: #{tpu_custom_call.1} parent=1 // pred_fallthru
      _
    // Predicated region
    $region38: #{tpu_custom_call.1} parent=1 // pred_check
      _
    $region39: #{tpu_custom_call.1} parent=1 // pred_check_branch
      %98 = sbr.rel (0) target = $region41
    $region40: #{tpu_custom_call.1} parent=1 // pred_region
      %s100 = ssub.s32 512, 512
      %101 = vsyncadd [#allocation12], %s100
      %s102 = sshll.u32 [#allocation13], 4
      %s103 = int_to_ptr.vmem [resolvable:$true] %s102
      %108 = dma.hbm_to_vmem [thread:$0]  %s9, 512, %s103, [#allocation12], 256, 256, 16
    $region41: #{tpu_custom_call.1} parent=1 // pred_fallthru
      _
    // Predicated region
    $region42: #{tpu_custom_call.1} parent=1 // pred_check
      _
    $region43: #{tpu_custom_call.1} parent=1 // pred_check_branch
      %110 = sbr.rel (0) target = $region45
    $region44: #{tpu_custom_call.1} parent=1 // pred_region
      _
    $region45: #{tpu_custom_call.1} parent=1 // pred_fallthru
      _
    // Predicated region
    $region46: #{tpu_custom_call.1} parent=1 // pred_check
      _
    $region47: #{tpu_custom_call.1} parent=1 // pred_check_branch
      %112 = sbr.rel (0) target = $region49
    $region48: #{tpu_custom_call.1} parent=1 // pred_region
      _
    $region49: #{tpu_custom_call.1} parent=1 // pred_fallthru
      _
    // Predicated region
    $region50: #{tpu_custom_call.1} parent=1 // pred_check
      _
    $region51: #{tpu_custom_call.1} parent=1 // pred_check_branch
      %114 = sbr.rel (0) target = $region53
    $region52: #{tpu_custom_call.1} parent=1 // pred_region
      _
    $region53: #{tpu_custom_call.1} parent=1 // pred_fallthru
      _
    // Predicated region
    $region54: #{tpu_custom_call.1} parent=1 // pred_check
      _
    $region55: #{tpu_custom_call.1} parent=1 // pred_check_branch
      %116 = sbr.rel (0) target = $region57
    $region56: #{tpu_custom_call.1} parent=1 // pred_region
      _
    $region57: #{tpu_custom_call.1} parent=1 // pred_fallthru
      _
    // Predicated region
    $region58: #{tpu_custom_call.1} parent=1 // pred_check
      _
    $region59: #{tpu_custom_call.1} parent=1 // pred_check_branch
      %118 = sbr.rel (0) target = $region61
    $region60: #{tpu_custom_call.1} parent=1 // pred_region
      %s120 = ssub.s32 12288, 12288
      %121 = vsyncadd [#allocation15], %s120
      %s122 = sshll.u32 [#allocation14], 4
      %s123 = int_to_ptr.vmem [resolvable:$true] %s122
      %128 = dma.hbm_to_vmem [thread:$0]  %s14, 12288, %s123, [#allocation15], 128, 128, 8
    $region61: #{tpu_custom_call.1} parent=1 // pred_fallthru
      _
    // Predicated region
    $region62: #{tpu_custom_call.1} parent=1 // pred_check
      _
    $region63: #{tpu_custom_call.1} parent=1 // pred_check_branch
      %130 = sbr.rel (0) target = $region65
    $region64: #{tpu_custom_call.1} parent=1 // pred_region
      _
    $region65: #{tpu_custom_call.1} parent=1 // pred_fallthru
      _
    // Predicated region
    $region66: #{tpu_custom_call.1} parent=1 // pred_check
      _
    $region67: #{tpu_custom_call.1} parent=1 // pred_check_branch
      %132 = sbr.rel (0) target = $region69
    $region68: #{tpu_custom_call.1} parent=1 // pred_region
      %s134 = ssub.s32 2048, 2048
      %135 = vsyncadd [#allocation15], %s134
      %s136 = sshll.u32 [#allocation16], 4
      %s137 = int_to_ptr.vmem [resolvable:$true] %s136
      %142 = dma.hbm_to_vmem [thread:$0]  %s16, 2048, %s137, [#allocation15], 128, 128, 8
    $region69: #{tpu_custom_call.1} parent=1 // pred_fallthru
      _
    // Predicated region
    $region70: #{tpu_custom_call.1} parent=1 // pred_check
      _
    $region71: #{tpu_custom_call.1} parent=1 // pred_check_branch
      %144 = sbr.rel (0) target = $region73
    $region72: #{tpu_custom_call.1} parent=1 // pred_region
      _
    $region73: #{tpu_custom_call.1} parent=1 // pred_fallthru
      _
    // Predicated region
    $region74: #{tpu_custom_call.1} parent=1 // pred_check
      _
    $region75: #{tpu_custom_call.1} parent=1 // pred_check_branch
      %146 = sbr.rel (0) target = $region77
    $region76: #{tpu_custom_call.1} parent=1 // pred_region
      %147 = dma.done [#allocation3], 1024
    $region77: #{tpu_custom_call.1} parent=1 // pred_fallthru
      _
    // Predicated region
    $region78: #{tpu_custom_call.1} parent=1 // pred_check
      _
    $region79: #{tpu_custom_call.1} parent=1 // pred_check_branch
      %149 = sbr.rel (0) target = $region81
    $region80: #{tpu_custom_call.1} parent=1 // pred_region
      %150 = dma.done [#allocation6], 64
    $region81: #{tpu_custom_call.1} parent=1 // pred_fallthru
      _
    // Predicated region
    $region82: #{tpu_custom_call.1} parent=1 // pred_check
      _
    $region83: #{tpu_custom_call.1} parent=1 // pred_check_branch
      %152 = sbr.rel (0) target = $region85
    $region84: #{tpu_custom_call.1} parent=1 // pred_region
      %153 = dma.done [#allocation6], 16
    $region85: #{tpu_custom_call.1} parent=1 // pred_fallthru
      _
    // Predicated region
    $region86: #{tpu_custom_call.1} parent=1 // pred_check
      _
    $region87: #{tpu_custom_call.1} parent=1 // pred_check_branch
      %155 = sbr.rel (0) target = $region89
    $region88: #{tpu_custom_call.1} parent=1 // pred_region
      %156 = dma.done [#allocation9], 16
    $region89: #{tpu_custom_call.1} parent=1 // pred_fallthru
      _
    // Predicated region
    $region90: #{tpu_custom_call.1} parent=1 // pred_check
      _
    $region91: #{tpu_custom_call.1} parent=1 // pred_check_branch
      %158 = sbr.rel (0) target = $region93
    $region92: #{tpu_custom_call.1} parent=1 // pred_region
      %159 = dma.done [#allocation9], 64
    $region93: #{tpu_custom_call.1} parent=1 // pred_fallthru
      _
    // Predicated region
    $region94: #{tpu_custom_call.1} parent=1 // pred_check
      _
    $region95: #{tpu_custom_call.1} parent=1 // pred_check_branch
      %161 = sbr.rel (0) target = $region97
    $region96: #{tpu_custom_call.1} parent=1 // pred_region
      %162 = dma.done [#allocation12], 32
    $region97: #{tpu_custom_call.1} parent=1 // pred_fallthru
      _
    // Predicated region
    $region98: #{tpu_custom_call.1} parent=1 // pred_check
      _
    $region99: #{tpu_custom_call.1} parent=1 // pred_check_branch
      %164 = sbr.rel (0) target = $region101
    $region100: #{tpu_custom_call.1} parent=1 // pred_region
      %165 = dma.done [#allocation12], 512
    $region101: #{tpu_custom_call.1} parent=1 // pred_fallthru
      _
    // Predicated region
    $region102: #{tpu_custom_call.1} parent=1 // pred_check
      _
    $region103: #{tpu_custom_call.1} parent=1 // pred_check_branch
      %167 = sbr.rel (0) target = $region105
    $region104: #{tpu_custom_call.1} parent=1 // pred_region
      %168 = dma.done [#allocation15], 12288
    $region105: #{tpu_custom_call.1} parent=1 // pred_fallthru
      _
    // Predicated region
    $region106: #{tpu_custom_call.1} parent=1 // pred_check
      _
    $region107: #{tpu_custom_call.1} parent=1 // pred_check_branch
      %170 = sbr.rel (0) target = $region109
    $region108: #{tpu_custom_call.1} parent=1 // pred_region
      %171 = dma.done [#allocation15], 2048
    $region109: #{tpu_custom_call.1} parent=1 // pred_fallthru
      _
    %v173 = vld [vmem:[#allocation2] sm:$0xff]
    %v174 = vld [vmem:[#allocation2 + $0x8] sm:$0xff]
    %v175 = vld [vmem:[#allocation2 + $0x10] sm:$0xff]
    %v176 = vld [vmem:[#allocation2 + $0x18] sm:$0xff]
    %v177 = vld [vmem:[#allocation2 + $0x20] sm:$0xff]
    %v178 = vld [vmem:[#allocation2 + $0x28] sm:$0xff]
    %v179 = vld [vmem:[#allocation2 + $0x30] sm:$0xff]
    %v180 = vld [vmem:[#allocation2 + $0x38] sm:$0xff]
    %v181 = vld [vmem:[#allocation7] sm:$0x1]
    %v182 = vld [vmem:[#allocation8] sm:$0x1]
    %v183 = vld [vmem:[%s4] sm:$0xff]
    %v184 = vld [vmem:[%s4 + $0x8] sm:$0xff]
    %v185 = vld [vmem:[%s4 + $0x10] sm:$0xff]
    %v186 = vld [vmem:[%s4 + $0x18] sm:$0xff]
    %v187 = vld [vmem:[%s4 + $0x20] sm:$0xff]
    %v188 = vld [vmem:[%s4 + $0x28] sm:$0xff]
    %v189 = vld [vmem:[%s4 + $0x30] sm:$0xff]
    %v190 = vld [vmem:[%s4 + $0x38] sm:$0xff]
    %v191 = vld [vmem:[%s4 + $0x40] sm:$0xff]
    %v192 = vld [vmem:[%s4 + $0x48] sm:$0xff]
    %v193 = vld [vmem:[%s4 + $0x50] sm:$0xff]
    %v194 = vld [vmem:[%s4 + $0x58] sm:$0xff]
    %v195 = vld [vmem:[%s4 + $0x60] sm:$0xff]
    %v196 = vld [vmem:[%s4 + $0x68] sm:$0xff]
    %v197 = vld [vmem:[%s4 + $0x70] sm:$0xff]
    %v198 = vld [vmem:[%s4 + $0x78] sm:$0xff]
    %v199 = vld [vmem:[#allocation10] sm:$0xf]
    %v200 = vadd.f32 %v173, %v174
    %v201 = vrot.slane %v200, 4
    %v202 = vadd.f32 %v200, %v201
    %v203 = vrot.slane %v202, 2
    %v204 = vadd.f32 %v202, %v203
    %v205 = vrot.slane %v204, 1
    %v206 = vadd.f32 %v204, %v205
    %v207 = vadd.f32 %v175, %v176
    %v208 = vrot.slane %v207, 4
    %v209 = vadd.f32 %v207, %v208
    %v210 = vrot.slane %v209, 2
    %v211 = vadd.f32 %v209, %v210
    %v212 = vrot.slane %v211, 1
    %v213 = vadd.f32 %v211, %v212
    %v214 = vadd.f32 %v177, %v178
    %v215 = vrot.slane %v214, 4
    %v216 = vadd.f32 %v214, %v215
    %v217 = vrot.slane %v216, 2
    %v218 = vadd.f32 %v216, %v217
    %v219 = vrot.slane %v218, 1
    %v220 = vadd.f32 %v218, %v219
    %v221 = vadd.f32 %v179, %v180
    %v222 = vrot.slane %v221, 4
    %v223 = vadd.f32 %v221, %v222
    %v224 = vrot.slane %v223, 2
    %v225 = vadd.f32 %v223, %v224
    %v226 = vrot.slane %v225, 1
    %v227 = vadd.f32 %v225, %v226
    %v228 = vmul.f32 %v173, %v173
    %v229 = vmul.f32 %v174, %v174
    %v230 = vmul.f32 %v175, %v175
    %v231 = vmul.f32 %v176, %v176
    %v232 = vmul.f32 %v177, %v177
    %v233 = vmul.f32 %v178, %v178
    %v234 = vmul.f32 %v179, %v179
    %v235 = vmul.f32 %v180, %v180
    %v236 = vadd.f32 %v228, %v229
    %v237 = vrot.slane %v236, 4
    %v238 = vadd.f32 %v236, %v237
    %v239 = vrot.slane %v238, 2
    %v240 = vadd.f32 %v238, %v239
    %v241 = vrot.slane %v240, 1
    %v242 = vadd.f32 %v240, %v241
    %v243 = vadd.f32 %v230, %v231
    %v244 = vrot.slane %v243, 4
    %v245 = vadd.f32 %v243, %v244
    %v246 = vrot.slane %v245, 2
    %v247 = vadd.f32 %v245, %v246
    %v248 = vrot.slane %v247, 1
    %v249 = vadd.f32 %v247, %v248
    %v250 = vadd.f32 %v232, %v233
    %v251 = vrot.slane %v250, 4
    %v252 = vadd.f32 %v250, %v251
    %v253 = vrot.slane %v252, 2
    %v254 = vadd.f32 %v252, %v253
    %v255 = vrot.slane %v254, 1
    %v256 = vadd.f32 %v254, %v255
    %v257 = vadd.f32 %v234, %v235
    %v258 = vrot.slane %v257, 4
    %v259 = vadd.f32 %v257, %v258
    %v260 = vrot.slane %v259, 2
    %v261 = vadd.f32 %v259, %v260
    %v262 = vrot.slane %v261, 1
    %v263 = vadd.f32 %v261, %v262
    %vm268 = vcmask 1041409
    %v269 = vsel %vm268, %v213, %v206
    %vm270 = vcmask 1042434
    %v271 = vsel %vm270, %v220, %v269
    %vm272 = vcmask 1043459
    %v273 = vsel %vm272, %v227, %v271
    %vm279 = vcmask 1045509
    %v280 = vsel %vm279, %v249, %v242
    %vm281 = vcmask 1046534
    %v282 = vsel %vm281, %v256, %v280
    %vm283 = vcmask 1047559
    %v284 = vsel %vm283, %v263, %v282
    %vm286 = vcmask 1043456
    %v287 = vsel %vm286, %v273, %v284
    %288 = vmatprep.subr.mxu0 0.0
    %289 = vmatpush1.msra.mxu0 %v198
    %290 = vmatprep.subr.mxu0 0.0
    %291 = vmatpush1.msra.mxu0 %v197
    %292 = vmatprep.subr.mxu0 0.0
    %293 = vmatpush1.msra.mxu0 %v196
    %294 = vmatprep.subr.mxu0 0.0
    %295 = vmatpush1.msra.mxu0 %v195
    %296 = vmatprep.subr.mxu0 0.0
    %297 = vmatpush1.msra.mxu0 %v194
    %298 = vmatprep.subr.mxu0 0.0
    %299 = vmatpush1.msra.mxu0 %v193
    %300 = vmatprep.subr.mxu0 0.0
    %301 = vmatpush1.msra.mxu0 %v192
    %302 = vmatprep.subr.mxu0 0.0
    %303 = vmatpush1.msra.mxu0 %v191
    %304 = vmatprep.subr.mxu0 0.0
    %305 = vmatpush1.msra.mxu0 %v190
    %306 = vmatprep.subr.mxu0 0.0
    %307 = vmatpush1.msra.mxu0 %v189
    %308 = vmatprep.subr.mxu0 0.0
    %309 = vmatpush1.msra.mxu0 %v188
    %310 = vmatprep.subr.mxu0 0.0
    %311 = vmatpush1.msra.mxu0 %v187
    %312 = vmatprep.subr.mxu0 0.0
    %313 = vmatpush1.msra.mxu0 %v186
    %314 = vmatprep.subr.mxu0 0.0
    %315 = vmatpush1.msra.mxu0 %v185
    %316 = vmatprep.subr.mxu0 0.0
    %317 = vmatpush1.msra.mxu0 %v184
    %318 = vmatprep.subr.mxu0 0.0
    %319 = vmatpush1.msra.mxu0 %v183
    %320 = vmatprep.subr.mxu0 0.0
    %321 = vmatpush2.msra.mxu0 0.0
    %322 = vmatprep.subr.mxu0 0.0
    %323 = vmatpush2.msra.mxu0 0.0
    %324 = vmatprep.subr.mxu0 0.0
    %325 = vmatpush2.msra.mxu0 0.0
    %326 = vmatprep.subr.mxu0 0.0
    %327 = vmatpush2.msra.mxu0 0.0
    %328 = vmatprep.subr.mxu0 0.0
    %329 = vmatpush2.msra.mxu0 0.0
    %330 = vmatprep.subr.mxu0 0.0
    %331 = vmatpush2.msra.mxu0 0.0
    %332 = vmatprep.subr.mxu0 0.0
    %333 = vmatpush2.msra.mxu0 0.0
    %334 = vmatprep.subr.mxu0 0.0
    %335 = vmatpush2.msra.mxu0 0.0
    %336 = vmatprep.subr.mxu0 0.0
    %337 = vmatpush2.msra.mxu0 0.0
    %338 = vmatprep.subr.mxu0 0.0
    %339 = vmatpush2.msra.mxu0 0.0
    %340 = vmatprep.subr.mxu0 0.0
    %341 = vmatpush2.msra.mxu0 0.0
    %342 = vmatprep.subr.mxu0 0.0
    %343 = vmatpush2.msra.mxu0 0.0
    %344 = vmatprep.subr.mxu0 0.0
    %345 = vmatpush2.msra.mxu0 0.0
    %346 = vmatprep.subr.mxu0 0.0
    %347 = vmatpush2.msra.mxu0 0.0
    %348 = vmatprep.subr.mxu0 0.0
    %349 = vmatpush2.msra.mxu0 0.0
    %350 = vmatprep.subr.mxu0 0.0
    %351 = vmatpush2.msra.mxu0 0.0
    %352 = vmatprep.mubr.f32.mxu0 0.0
    %353 = vmatmul.mubr.f32.gmra.mxu0 %v287
    %v354 = vpop.f32.mrf.mxu0
    %v355 = vadd.f32 0.0, %v354
    %v356 = vpop.f32.mrf.mxu0
    %357 = vdwg.mxu0
    %v358 = vmul.f32 %v355, 0.001953125
    %v359 = vmul.f32 %v358, %v358
    %v361 = vrot.slane %v359, 4
    %v363 = vsub.f32 %v358, %v361
    %v364 = vmax.f32 %v363, 0.0
    %v365 = vadd.f32 %v364, 1e-05
    %v366 = vrsqrt.pop %v365
    %v367 = vsel %vm286, %v358, %v366
    %vm368 = vcmask 31744
    %v370 = vsel %vm368, %v367, 0
    %v373 = vsel %vm286, %v199, 0
    %375 = vmatprep.subr.mxu0 0.0
    %376 = vmatpush1.msra.mxu0 0.0
    %377 = vmatprep.subr.mxu0 0.0
    %378 = vmatpush1.msra.mxu0 0.0
    %379 = vmatprep.subr.mxu0 0.0
    %380 = vmatpush1.msra.mxu0 0.0
    %381 = vmatprep.subr.mxu0 0.0
    %382 = vmatpush1.msra.mxu0 0.0
    %383 = vmatprep.subr.mxu0 0.0
    %384 = vmatpush1.msra.mxu0 0.0
    %385 = vmatprep.subr.mxu0 0.0
    %386 = vmatpush1.msra.mxu0 0.0
    %387 = vmatprep.subr.mxu0 0.0
    %388 = vmatpush1.msra.mxu0 0.0
    %389 = vmatprep.subr.mxu0 0.0
    %390 = vmatpush1.msra.mxu0 0.0
    %391 = vmatprep.subr.mxu0 0.0
    %392 = vmatpush1.msra.mxu0 0.0
    %393 = vmatprep.subr.mxu0 0.0
    %394 = vmatpush1.msra.mxu0 0.0
    %395 = vmatprep.subr.mxu0 0.0
    %396 = vmatpush1.msra.mxu0 0.0
    %397 = vmatprep.subr.mxu0 0.0
    %398 = vmatpush1.msra.mxu0 0.0
    %399 = vmatprep.subr.mxu0 0.0
    %400 = vmatpush1.msra.mxu0 0.0
    %401 = vmatprep.subr.mxu0 0.0
    %402 = vmatpush1.msra.mxu0 0.0
    %403 = vmatprep.subr.mxu0 0.0
    %404 = vmatpush1.msra.mxu0 0.0
    %405 = vmatprep.subr.mxu0 0.0
    %406 = vmatpush1.msra.mxu0 %v373
    %407 = vmatprep.subr.mxu0 0.0
    %408 = vmatpush2.msra.mxu0 0.0
    %409 = vmatprep.subr.mxu0 0.0
    %410 = vmatpush2.msra.mxu0 0.0
    %411 = vmatprep.subr.mxu0 0.0
    %412 = vmatpush2.msra.mxu0 0.0
    %413 = vmatprep.subr.mxu0 0.0
    %414 = vmatpush2.msra.mxu0 0.0
    %415 = vmatprep.subr.mxu0 0.0
    %416 = vmatpush2.msra.mxu0 0.0
    %417 = vmatprep.subr.mxu0 0.0
    %418 = vmatpush2.msra.mxu0 0.0
    %419 = vmatprep.subr.mxu0 0.0
    %420 = vmatpush2.msra.mxu0 0.0
    %421 = vmatprep.subr.mxu0 0.0
    %422 = vmatpush2.msra.mxu0 0.0
    %423 = vmatprep.subr.mxu0 0.0
    %424 = vmatpush2.msra.mxu0 0.0
    %425 = vmatprep.subr.mxu0 0.0
    %426 = vmatpush2.msra.mxu0 0.0
    %427 = vmatprep.subr.mxu0 0.0
    %428 = vmatpush2.msra.mxu0 0.0
    %429 = vmatprep.subr.mxu0 0.0
    %430 = vmatpush2.msra.mxu0 0.0
    %431 = vmatprep.subr.mxu0 0.0
    %432 = vmatpush2.msra.mxu0 0.0
    %433 = vmatprep.subr.mxu0 0.0
    %434 = vmatpush2.msra.mxu0 0.0
    %435 = vmatprep.subr.mxu0 0.0
    %436 = vmatpush2.msra.mxu0 0.0
    %437 = vmatprep.subr.mxu0 0.0
    %438 = vmatpush2.msra.mxu0 0.0
    %439 = vmatprep.mubr.f32.mxu0 0.0
    %440 = vmatmul.mubr.f32.gmra.mxu0 %v370
    %v441 = vpop.f32.mrf.mxu0
    %v442 = vadd.f32 0.0, %v441
    %v443 = vpop.f32.mrf.mxu0
    %444 = vdwg.mxu0
    %v446 = vlaneseq
    %v447 = vshrl.u32 %v446, 7
    %v448 = vsub.s32 0, %v447
    %v449 = vrot.slane %v181, %v448
    %v451 = vmul.f32 %v442, %v449
    %v453 = vrot.slane %v451, 4
    %v455 = vmul.f32 %v442, %v453
    %v457 = vlaneseq
    %v458 = vshrl.u32 %v457, 7
    %v459 = vsub.s32 0, %v458
    %v460 = vrot.slane %v182, %v459
    %v462 = vsub.f32 %v460, %v455
    %v463 = vcombine.high %v451, %v451
    %v465 = vunpack.c.l.s4 1966171168
    %v466 = vunpack.c.0.s8 %v465
    %v467 = vlaneseq
    %v468 = vshrl.u32 %v467, 7
    %v469 = vsub.s32 %v466, %v468
    %v470 = vrot.slane %v463, %v469
    %v471 = vcombine.high %v470, %v470
    %v473 = vunpack.c.l.s4 1966171168
    %v474 = vunpack.c.0.s8 %v473
    %v475 = vlaneseq
    %v476 = vshrl.u32 %v475, 7
    %v477 = vsub.s32 %v474, %v476
    %v478 = vrot.slane %v470, %v477
    %v480 = vunpack.c.l.s4 1966171168
    %v481 = vunpack.c.0.s8 %v480
    %v482 = vlaneseq
    %v483 = vshrl.u32 %v482, 7
    %v484 = vsub.s32 %v481, %v483
    %v485 = vrot.slane %v471, %v484
    %v486 = vcombine.high %v478, %v478
    %v487 = vcombine.high %v485, %v485
    %v488 = vlaneseq
    %v489 = vshrl.u32 %v488, 7
    %v490 = vsub.s32 0, %v489
    %v491 = vrot.slane %v478, %v490
    %v492 = vlaneseq
    %v493 = vshrl.u32 %v492, 7
    %v494 = vsub.s32 0, %v493
    %v495 = vrot.slane %v485, %v494
    %v496 = vlaneseq
    %v497 = vshrl.u32 %v496, 7
    %v498 = vsub.s32 0, %v497
    %v499 = vrot.slane %v486, %v498
    %v500 = vlaneseq
    %v501 = vshrl.u32 %v500, 7
    %v502 = vsub.s32 0, %v501
    %v503 = vrot.slane %v487, %v502
    %v508 = vmul.f32 %v173, %v491
    %v509 = vmul.f32 %v174, %v491
    %v510 = vmul.f32 %v175, %v495
    %v511 = vmul.f32 %v176, %v495
    %v512 = vmul.f32 %v177, %v499
    %v513 = vmul.f32 %v178, %v499
    %v514 = vmul.f32 %v179, %v503
    %v515 = vmul.f32 %v180, %v503
    %v518 = vunpack.c.l.s4 1966171168
    %v519 = vunpack.c.0.s8 %v518
    %v520 = vlaneseq
    %v521 = vshrl.u32 %v520, 7
    %v522 = vsub.s32 %v519, %v521
    %v523 = vrot.slane %v462, %v522
    %v524 = vcombine.high %v523, %v523
    %v526 = vunpack.c.l.s4 1966171168
    %v527 = vunpack.c.0.s8 %v526
    %v528 = vlaneseq
    %v529 = vshrl.u32 %v528, 7
    %v530 = vsub.s32 %v527, %v529
    %v531 = vrot.slane %v523, %v530
    %v533 = vunpack.c.l.s4 1966171168
    %v534 = vunpack.c.0.s8 %v533
    %v535 = vlaneseq
    %v536 = vshrl.u32 %v535, 7
    %v537 = vsub.s32 %v534, %v536
    %v538 = vrot.slane %v524, %v537
    %v539 = vcombine.high %v531, %v531
    %v540 = vcombine.high %v538, %v538
    %v541 = vlaneseq
    %v542 = vshrl.u32 %v541, 7
    %v543 = vsub.s32 0, %v542
    %v544 = vrot.slane %v531, %v543
    %v545 = vlaneseq
    %v546 = vshrl.u32 %v545, 7
    %v547 = vsub.s32 0, %v546
    %v548 = vrot.slane %v538, %v547
    %v549 = vlaneseq
    %v550 = vshrl.u32 %v549, 7
    %v551 = vsub.s32 0, %v550
    %v552 = vrot.slane %v539, %v551
    %v553 = vlaneseq
    %v554 = vshrl.u32 %v553, 7
    %v555 = vsub.s32 0, %v554
    %v556 = vrot.slane %v540, %v555
    %v561 = vadd.f32 %v508, %v544
    %v562 = vadd.f32 %v509, %v544
    %v563 = vadd.f32 %v510, %v548
    %v564 = vadd.f32 %v511, %v548
    %v565 = vadd.f32 %v512, %v552
    %v566 = vadd.f32 %v513, %v552
    %v567 = vadd.f32 %v514, %v556
    %v568 = vadd.f32 %v515, %v556
    %v569 = vxor.u32 %v561, 2147483648
    %v570 = vxor.u32 %v562, 2147483648
    %v571 = vxor.u32 %v563, 2147483648
    %v572 = vxor.u32 %v564, 2147483648
    %v573 = vxor.u32 %v565, 2147483648
    %v574 = vxor.u32 %v566, 2147483648
    %v575 = vxor.u32 %v567, 2147483648
    %v576 = vxor.u32 %v568, 2147483648
    %v577 = vmul.f32 %v569, 1.442695
    %v578 = vpow.pop %v577
    %v579 = vmul.f32 %v570, 1.442695
    %v580 = vpow.pop %v579
    %v581 = vmul.f32 %v571, 1.442695
    %v582 = vpow.pop %v581
    %v583 = vmul.f32 %v572, 1.442695
    %v584 = vpow.pop %v583
    %v585 = vmul.f32 %v573, 1.442695
    %v586 = vpow.pop %v585
    %v587 = vmul.f32 %v574, 1.442695
    %v588 = vpow.pop %v587
    %v589 = vmul.f32 %v575, 1.442695
    %v590 = vpow.pop %v589
    %v591 = vmul.f32 %v576, 1.442695
    %v592 = vpow.pop %v591
    %v593 = vadd.f32 %v578, 1.0
    %v594 = vadd.f32 %v580, 1.0
    %v595 = vadd.f32 %v582, 1.0
    %v596 = vadd.f32 %v584, 1.0
    %v597 = vadd.f32 %v586, 1.0
    %v598 = vadd.f32 %v588, 1.0
    %v599 = vadd.f32 %v590, 1.0
    %v600 = vadd.f32 %v592, 1.0
    %v601 = vrcp.pop %v593
    %v602 = vmul.f32 1.0, %v601
    %v603 = vrcp.pop %v594
    %v604 = vmul.f32 1.0, %v603
    %v605 = vrcp.pop %v595
    %v606 = vmul.f32 1.0, %v605
    %v607 = vrcp.pop %v596
    %v608 = vmul.f32 1.0, %v607
    %v609 = vrcp.pop %v597
    %v610 = vmul.f32 1.0, %v609
    %v611 = vrcp.pop %v598
    %v612 = vmul.f32 1.0, %v611
    %v613 = vrcp.pop %v599
    %v614 = vmul.f32 1.0, %v613
    %v615 = vrcp.pop %v600
    %v616 = vmul.f32 1.0, %v615
    %v617 = vmul.f32 %v561, %v602
    %v618 = vmul.f32 %v562, %v604
    %v619 = vmul.f32 %v563, %v606
    %v620 = vmul.f32 %v564, %v608
    %v621 = vmul.f32 %v565, %v610
    %v622 = vmul.f32 %v566, %v612
    %v623 = vmul.f32 %v567, %v614
    %v624 = vmul.f32 %v568, %v616
    %v625 = vpack.c.bf16 %v618, %v617
    %v626 = vpack.c.bf16 %v620, %v619
    %v627 = vpack.c.bf16 %v622, %v621
    %v628 = vpack.c.bf16 %v624, %v623
    %v630 = vshrl.u32 %v625, 16
    %v632 = vrot.slane %v630, 7
    %v633 = vshll.u32 %v625, 16
    %v635 = vor.u32 %v632, %v633
    %v637 = vshrl.u32 %v626, 16
    %v639 = vrot.slane %v637, 7
    %v640 = vshll.u32 %v626, 16
    %v642 = vor.u32 %v639, %v640
    %v644 = vshrl.u32 %v627, 16
    %v646 = vrot.slane %v644, 7
    %v647 = vshll.u32 %v627, 16
    %v649 = vor.u32 %v646, %v647
    %v651 = vshrl.u32 %v628, 16
    %v653 = vrot.slane %v651, 7
    %v654 = vshll.u32 %v628, 16
    %v656 = vor.u32 %v653, %v654
    %vm661 = vcmask 1040384
    %vm662 = vsmask.f32 256
    %vm663 = vmand %vm661, %vm662
    %v664 = vsel %vm663, 0, %v635
    %v665 = vsel %vm663, 0, %v642
    %v666 = vsel %vm663, 0, %v649
    %v667 = vsel %vm663, 0, %v656
    %v668 = vrot.slane %v633, 1
    %v669 = vor.u32 %v630, %v668
    %v670 = vrot.slane %v640, 1
    %v671 = vor.u32 %v637, %v670
    %v672 = vrot.slane %v647, 1
    %v673 = vor.u32 %v644, %v672
    %v674 = vrot.slane %v654, 1
    %v675 = vor.u32 %v651, %v674
    %vm680 = vcmask 1047552
    %vm681 = vsmask.f32 7424
    %vm682 = vmand %vm680, %vm681
    %v683 = vsel %vm682, %v669, 0
    %v684 = vsel %vm682, %v671, 0
    %v685 = vsel %vm682, %v673, 0
    %v686 = vsel %vm682, %v675, 0
    %v687 = vld [vmem:[%s6] sm:$0xff]
    %v688 = vld [vmem:[%s6 + $0x8] sm:$0xff]
    %v689 = vld [vmem:[%s6 + $0x10] sm:$0xff]
    %v690 = vld [vmem:[%s6 + $0x18] sm:$0xff]
    %v691 = vld [vmem:[%s6 + $0x20] sm:$0xff]
    %v692 = vld [vmem:[%s6 + $0x28] sm:$0xff]
    %v693 = vld [vmem:[%s6 + $0x30] sm:$0xff]
    %v694 = vld [vmem:[%s6 + $0x38] sm:$0xff]
    %v695 = vld [vmem:[%s6 + $0x40] sm:$0xff]
    %v696 = vld [vmem:[%s6 + $0x48] sm:$0xff]
    %v697 = vld [vmem:[%s6 + $0x50] sm:$0xff]
    %v698 = vld [vmem:[%s6 + $0x58] sm:$0xff]
    %v699 = vld [vmem:[%s6 + $0x60] sm:$0xff]
    %v700 = vld [vmem:[%s6 + $0x68] sm:$0xff]
    %v701 = vld [vmem:[%s6 + $0x70] sm:$0xff]
    %v702 = vld [vmem:[%s6 + $0x78] sm:$0xff]
    %s703 = scalar_lea.vmem %s6, 128
    %v704 = vld [vmem:[%s703] sm:$0xff]
    %v705 = vld [vmem:[%s703 + $0x8] sm:$0xff]
    %v706 = vld [vmem:[%s703 + $0x10] sm:$0xff]
    %v707 = vld [vmem:[%s703 + $0x18] sm:$0xff]
    %v708 = vld [vmem:[%s703 + $0x20] sm:$0xff]
    %v709 = vld [vmem:[%s703 + $0x28] sm:$0xff]
    %v710 = vld [vmem:[%s703 + $0x30] sm:$0xff]
    %v711 = vld [vmem:[%s703 + $0x38] sm:$0xff]
    %v712 = vld [vmem:[%s703 + $0x40] sm:$0xff]
    %v713 = vld [vmem:[%s703 + $0x48] sm:$0xff]
    %v714 = vld [vmem:[%s703 + $0x50] sm:$0xff]
    %v715 = vld [vmem:[%s703 + $0x58] sm:$0xff]
    %v716 = vld [vmem:[%s703 + $0x60] sm:$0xff]
    %v717 = vld [vmem:[%s703 + $0x68] sm:$0xff]
    %v718 = vld [vmem:[%s703 + $0x70] sm:$0xff]
    %v719 = vld [vmem:[%s703 + $0x78] sm:$0xff]
    %v736 = vunpack.c.l.b16 %v704
    %v737 = vunpack.c.h.b16 %v704
    %v738 = vunpack.c.l.b16 %v705
    %v739 = vunpack.c.h.b16 %v705
    %v740 = vunpack.c.l.b16 %v706
    %v741 = vunpack.c.h.b16 %v706
    %v742 = vunpack.c.l.b16 %v707
    %v743 = vunpack.c.h.b16 %v707
    %v744 = vunpack.c.l.b16 %v708
    %v745 = vunpack.c.h.b16 %v708
    %v746 = vunpack.c.l.b16 %v709
    %v747 = vunpack.c.h.b16 %v709
    %v748 = vunpack.c.l.b16 %v710
    %v749 = vunpack.c.h.b16 %v710
    %v750 = vunpack.c.l.b16 %v711
    %v751 = vunpack.c.h.b16 %v711
    %v752 = vunpack.c.l.b16 %v712
    %v753 = vunpack.c.h.b16 %v712
    %v754 = vunpack.c.l.b16 %v713
    %v755 = vunpack.c.h.b16 %v713
    %v756 = vunpack.c.l.b16 %v714
    %v757 = vunpack.c.h.b16 %v714
    %v758 = vunpack.c.l.b16 %v715
    %v759 = vunpack.c.h.b16 %v715
    %v760 = vunpack.c.l.b16 %v716
    %v761 = vunpack.c.h.b16 %v716
    %v762 = vunpack.c.l.b16 %v717
    %v763 = vunpack.c.h.b16 %v717
    %v764 = vunpack.c.l.b16 %v718
    %v765 = vunpack.c.h.b16 %v718
    %v766 = vunpack.c.l.b16 %v719
    %v767 = vunpack.c.h.b16 %v719
    %v768 = vpack.c.b16 %v738, %v736
    %v769 = vpack.c.b16 %v739, %v737
    %v770 = vpack.c.b16 %v742, %v740
    %v771 = vpack.c.b16 %v743, %v741
    %v772 = vpack.c.b16 %v746, %v744
    %v773 = vpack.c.b16 %v747, %v745
    %v774 = vpack.c.b16 %v750, %v748
    %v775 = vpack.c.b16 %v751, %v749
    %v776 = vpack.c.b16 %v754, %v752
    %v777 = vpack.c.b16 %v755, %v753
    %v778 = vpack.c.b16 %v758, %v756
    %v779 = vpack.c.b16 %v759, %v757
    %v780 = vpack.c.b16 %v762, %v760
    %v781 = vpack.c.b16 %v763, %v761
    %v782 = vpack.c.b16 %v766, %v764
    %v783 = vpack.c.b16 %v767, %v765
    %800 = vmatprep.subr.bf16.mxu0 %v783
    %801 = vmatpush1.bf16.msra.mxu0 %v782
    %802 = vmatprep.subr.bf16.mxu0 %v781
    %803 = vmatpush1.bf16.msra.mxu0 %v780
    %804 = vmatprep.subr.bf16.mxu0 %v779
    %805 = vmatpush1.bf16.msra.mxu0 %v778
    %806 = vmatprep.subr.bf16.mxu0 %v777
    %807 = vmatpush1.bf16.msra.mxu0 %v776
    %808 = vmatprep.subr.bf16.mxu0 %v775
    %809 = vmatpush1.bf16.msra.mxu0 %v774
    %810 = vmatprep.subr.bf16.mxu0 %v773
    %811 = vmatpush1.bf16.msra.mxu0 %v772
    %812 = vmatprep.subr.bf16.mxu0 %v771
    %813 = vmatpush1.bf16.msra.mxu0 %v770
    %814 = vmatprep.subr.bf16.mxu0 %v769
    %815 = vmatpush1.bf16.msra.mxu0 %v768
    %816 = vmatprep.subr.bf16.mxu0 0
    %817 = vmatpush2.bf16.msra.mxu0 0
    %818 = vmatprep.subr.bf16.mxu0 0
    %819 = vmatpush2.bf16.msra.mxu0 0
    %820 = vmatprep.subr.bf16.mxu0 0
    %821 = vmatpush2.bf16.msra.mxu0 0
    %822 = vmatprep.subr.bf16.mxu0 0
    %823 = vmatpush2.bf16.msra.mxu0 0
    %824 = vmatprep.subr.bf16.mxu0 0
    %825 = vmatpush2.bf16.msra.mxu0 0
    %826 = vmatprep.subr.bf16.mxu0 0
    %827 = vmatpush2.bf16.msra.mxu0 0
    %828 = vmatprep.subr.bf16.mxu0 0
    %829 = vmatpush2.bf16.msra.mxu0 0
    %830 = vmatprep.subr.bf16.mxu0 0
    %831 = vmatpush2.bf16.msra.mxu0 0
    %832 = vmatprep.mubr.bf16.mxu0 0
    %833 = vmatmul.mubr.bf16.gmra.mxu0 %v625
    %v834 = vpop.f32.mrf.mxu0
    %v835 = vadd.f32 0.0, %v834
    %v836 = vpop.f32.mrf.mxu0
    %v837 = vadd.f32 0.0, %v836
    %v838 = vpop.f32.mrf.mxu0
    %v839 = vadd.f32 0.0, %v838
    %v840 = vpop.f32.mrf.mxu0
    %v841 = vadd.f32 0.0, %v840
    %842 = vmatprep.mubr.bf16.mxu0 0
    %843 = vmatmul.mubr.bf16.gmra.mxu0 %v626
    %v844 = vpop.f32.mrf.mxu0
    %v845 = vadd.f32 0.0, %v844
    %v846 = vpop.f32.mrf.mxu0
    %v847 = vadd.f32 0.0, %v846
    %v848 = vpop.f32.mrf.mxu0
    %v849 = vadd.f32 0.0, %v848
    %v850 = vpop.f32.mrf.mxu0
    %v851 = vadd.f32 0.0, %v850
    %852 = vmatprep.mubr.bf16.mxu0 0
    %853 = vmatmul.mubr.bf16.gmra.mxu0 %v627
    %v854 = vpop.f32.mrf.mxu0
    %v855 = vadd.f32 0.0, %v854
    %v856 = vpop.f32.mrf.mxu0
    %v857 = vadd.f32 0.0, %v856
    %v858 = vpop.f32.mrf.mxu0
    %v859 = vadd.f32 0.0, %v858
    %v860 = vpop.f32.mrf.mxu0
    %v861 = vadd.f32 0.0, %v860
    %862 = vmatprep.mubr.bf16.mxu0 0
    %863 = vmatmul.mubr.bf16.gmra.mxu0 %v628
    %v864 = vpop.f32.mrf.mxu0
    %v865 = vadd.f32 0.0, %v864
    %v866 = vpop.f32.mrf.mxu0
    %v867 = vadd.f32 0.0, %v866
    %v868 = vpop.f32.mrf.mxu0
    %v869 = vadd.f32 0.0, %v868
    %v870 = vpop.f32.mrf.mxu0
    %v871 = vadd.f32 0.0, %v870
    %872 = vdwg.mxu0
    %v889 = vunpack.c.l.b16 %v687
    %v890 = vunpack.c.h.b16 %v687
    %v891 = vunpack.c.l.b16 %v688
    %v892 = vunpack.c.h.b16 %v688
    %v893 = vunpack.c.l.b16 %v689
    %v894 = vunpack.c.h.b16 %v689
    %v895 = vunpack.c.l.b16 %v690
    %v896 = vunpack.c.h.b16 %v690
    %v897 = vunpack.c.l.b16 %v691
    %v898 = vunpack.c.h.b16 %v691
    %v899 = vunpack.c.l.b16 %v692
    %v900 = vunpack.c.h.b16 %v692
    %v901 = vunpack.c.l.b16 %v693
    %v902 = vunpack.c.h.b16 %v693
    %v903 = vunpack.c.l.b16 %v694
    %v904 = vunpack.c.h.b16 %v694
    %v905 = vunpack.c.l.b16 %v695
    %v906 = vunpack.c.h.b16 %v695
    %v907 = vunpack.c.l.b16 %v696
    %v908 = vunpack.c.h.b16 %v696
    %v909 = vunpack.c.l.b16 %v697
    %v910 = vunpack.c.h.b16 %v697
    %v911 = vunpack.c.l.b16 %v698
    %v912 = vunpack.c.h.b16 %v698
    %v913 = vunpack.c.l.b16 %v699
    %v914 = vunpack.c.h.b16 %v699
    %v915 = vunpack.c.l.b16 %v700
    %v916 = vunpack.c.h.b16 %v700
    %v917 = vunpack.c.l.b16 %v701
    %v918 = vunpack.c.h.b16 %v701
    %v919 = vunpack.c.l.b16 %v702
    %v920 = vunpack.c.h.b16 %v702
    %v921 = vpack.c.b16 %v891, %v889
    %v922 = vpack.c.b16 %v892, %v890
    %v923 = vpack.c.b16 %v895, %v893
    %v924 = vpack.c.b16 %v896, %v894
    %v925 = vpack.c.b16 %v899, %v897
    %v926 = vpack.c.b16 %v900, %v898
    %v927 = vpack.c.b16 %v903, %v901
    %v928 = vpack.c.b16 %v904, %v902
    %v929 = vpack.c.b16 %v907, %v905
    %v930 = vpack.c.b16 %v908, %v906
    %v931 = vpack.c.b16 %v911, %v909
    %v932 = vpack.c.b16 %v912, %v910
    %v933 = vpack.c.b16 %v915, %v913
    %v934 = vpack.c.b16 %v916, %v914
    %v935 = vpack.c.b16 %v919, %v917
    %v936 = vpack.c.b16 %v920, %v918
    %953 = vmatprep.subr.bf16.mxu0 %v936
    %954 = vmatpush1.bf16.msra.mxu0 %v935
    %955 = vmatprep.subr.bf16.mxu0 %v934
    %956 = vmatpush1.bf16.msra.mxu0 %v933
    %957 = vmatprep.subr.bf16.mxu0 %v932
    %958 = vmatpush1.bf16.msra.mxu0 %v931
    %959 = vmatprep.subr.bf16.mxu0 %v930
    %960 = vmatpush1.bf16.msra.mxu0 %v929
    %961 = vmatprep.subr.bf16.mxu0 %v928
    %962 = vmatpush1.bf16.msra.mxu0 %v927
    %963 = vmatprep.subr.bf16.mxu0 %v926
    %964 = vmatpush1.bf16.msra.mxu0 %v925
    %965 = vmatprep.subr.bf16.mxu0 %v924
    %966 = vmatpush1.bf16.msra.mxu0 %v923
    %967 = vmatprep.subr.bf16.mxu0 %v922
    %968 = vmatpush1.bf16.msra.mxu0 %v921
    %969 = vmatprep.subr.bf16.mxu0 0
    %970 = vmatpush2.bf16.msra.mxu0 0
    %971 = vmatprep.subr.bf16.mxu0 0
    %972 = vmatpush2.bf16.msra.mxu0 0
    %973 = vmatprep.subr.bf16.mxu0 0
    %974 = vmatpush2.bf16.msra.mxu0 0
    %975 = vmatprep.subr.bf16.mxu0 0
    %976 = vmatpush2.bf16.msra.mxu0 0
    %977 = vmatprep.subr.bf16.mxu0 0
    %978 = vmatpush2.bf16.msra.mxu0 0
    %979 = vmatprep.subr.bf16.mxu0 0
    %980 = vmatpush2.bf16.msra.mxu0 0
    %981 = vmatprep.subr.bf16.mxu0 0
    %982 = vmatpush2.bf16.msra.mxu0 0
    %983 = vmatprep.subr.bf16.mxu0 0
    %984 = vmatpush2.bf16.msra.mxu0 0
    %985 = vmatprep.mubr.bf16.mxu0 0
    %986 = vmatmul.mubr.bf16.gmra.mxu0 %v664
    %v987 = vpop.f32.mrf.mxu0
    %v988 = vadd.f32 %v835, %v987
    %v989 = vpop.f32.mrf.mxu0
    %v990 = vadd.f32 %v837, %v989
    %v991 = vpop.f32.mrf.mxu0
    %v992 = vadd.f32 %v839, %v991
    %v993 = vpop.f32.mrf.mxu0
    %v994 = vadd.f32 %v841, %v993
    %995 = vmatprep.mubr.bf16.mxu0 0
    %996 = vmatmul.mubr.bf16.gmra.mxu0 %v665
    %v997 = vpop.f32.mrf.mxu0
    %v998 = vadd.f32 %v845, %v997
    %v999 = vpop.f32.mrf.mxu0
    %v1000 = vadd.f32 %v847, %v999
    %v1001 = vpop.f32.mrf.mxu0
    %v1002 = vadd.f32 %v849, %v1001
    %v1003 = vpop.f32.mrf.mxu0
    %v1004 = vadd.f32 %v851, %v1003
    %1005 = vmatprep.mubr.bf16.mxu0 0
    %1006 = vmatmul.mubr.bf16.gmra.mxu0 %v666
    %v1007 = vpop.f32.mrf.mxu0
    %v1008 = vadd.f32 %v855, %v1007
    %v1009 = vpop.f32.mrf.mxu0
    %v1010 = vadd.f32 %v857, %v1009
    %v1011 = vpop.f32.mrf.mxu0
    %v1012 = vadd.f32 %v859, %v1011
    %v1013 = vpop.f32.mrf.mxu0
    %v1014 = vadd.f32 %v861, %v1013
    %1015 = vmatprep.mubr.bf16.mxu0 0
    %1016 = vmatmul.mubr.bf16.gmra.mxu0 %v667
    %v1017 = vpop.f32.mrf.mxu0
    %v1018 = vadd.f32 %v865, %v1017
    %v1019 = vpop.f32.mrf.mxu0
    %v1020 = vadd.f32 %v867, %v1019
    %v1021 = vpop.f32.mrf.mxu0
    %v1022 = vadd.f32 %v869, %v1021
    %v1023 = vpop.f32.mrf.mxu0
    %v1024 = vadd.f32 %v871, %v1023
    %1025 = vdwg.mxu0
    %s1026 = scalar_lea.vmem %s6, 256
    %v1027 = vld [vmem:[%s1026] sm:$0xff]
    %v1028 = vld [vmem:[%s1026 + $0x8] sm:$0xff]
    %v1029 = vld [vmem:[%s1026 + $0x10] sm:$0xff]
    %v1030 = vld [vmem:[%s1026 + $0x18] sm:$0xff]
    %v1031 = vld [vmem:[%s1026 + $0x20] sm:$0xff]
    %v1032 = vld [vmem:[%s1026 + $0x28] sm:$0xff]
    %v1033 = vld [vmem:[%s1026 + $0x30] sm:$0xff]
    %v1034 = vld [vmem:[%s1026 + $0x38] sm:$0xff]
    %v1035 = vld [vmem:[%s1026 + $0x40] sm:$0xff]
    %v1036 = vld [vmem:[%s1026 + $0x48] sm:$0xff]
    %v1037 = vld [vmem:[%s1026 + $0x50] sm:$0xff]
    %v1038 = vld [vmem:[%s1026 + $0x58] sm:$0xff]
    %v1039 = vld [vmem:[%s1026 + $0x60] sm:$0xff]
    %v1040 = vld [vmem:[%s1026 + $0x68] sm:$0xff]
    %v1041 = vld [vmem:[%s1026 + $0x70] sm:$0xff]
    %v1042 = vld [vmem:[%s1026 + $0x78] sm:$0xff]
    %v1059 = vunpack.c.l.b16 %v1027
    %v1060 = vunpack.c.h.b16 %v1027
    %v1061 = vunpack.c.l.b16 %v1028
    %v1062 = vunpack.c.h.b16 %v1028
    %v1063 = vunpack.c.l.b16 %v1029
    %v1064 = vunpack.c.h.b16 %v1029
    %v1065 = vunpack.c.l.b16 %v1030
    %v1066 = vunpack.c.h.b16 %v1030
    %v1067 = vunpack.c.l.b16 %v1031
    %v1068 = vunpack.c.h.b16 %v1031
    %v1069 = vunpack.c.l.b16 %v1032
    %v1070 = vunpack.c.h.b16 %v1032
    %v1071 = vunpack.c.l.b16 %v1033
    %v1072 = vunpack.c.h.b16 %v1033
    %v1073 = vunpack.c.l.b16 %v1034
    %v1074 = vunpack.c.h.b16 %v1034
    %v1075 = vunpack.c.l.b16 %v1035
    %v1076 = vunpack.c.h.b16 %v1035
    %v1077 = vunpack.c.l.b16 %v1036
    %v1078 = vunpack.c.h.b16 %v1036
    %v1079 = vunpack.c.l.b16 %v1037
    %v1080 = vunpack.c.h.b16 %v1037
    %v1081 = vunpack.c.l.b16 %v1038
    %v1082 = vunpack.c.h.b16 %v1038
    %v1083 = vunpack.c.l.b16 %v1039
    %v1084 = vunpack.c.h.b16 %v1039
    %v1085 = vunpack.c.l.b16 %v1040
    %v1086 = vunpack.c.h.b16 %v1040
    %v1087 = vunpack.c.l.b16 %v1041
    %v1088 = vunpack.c.h.b16 %v1041
    %v1089 = vunpack.c.l.b16 %v1042
    %v1090 = vunpack.c.h.b16 %v1042
    %v1091 = vpack.c.b16 %v1061, %v1059
    %v1092 = vpack.c.b16 %v1062, %v1060
    %v1093 = vpack.c.b16 %v1065, %v1063
    %v1094 = vpack.c.b16 %v1066, %v1064
    %v1095 = vpack.c.b16 %v1069, %v1067
    %v1096 = vpack.c.b16 %v1070, %v1068
    %v1097 = vpack.c.b16 %v1073, %v1071
    %v1098 = vpack.c.b16 %v1074, %v1072
    %v1099 = vpack.c.b16 %v1077, %v1075
    %v1100 = vpack.c.b16 %v1078, %v1076
    %v1101 = vpack.c.b16 %v1081, %v1079
    %v1102 = vpack.c.b16 %v1082, %v1080
    %v1103 = vpack.c.b16 %v1085, %v1083
    %v1104 = vpack.c.b16 %v1086, %v1084
    %v1105 = vpack.c.b16 %v1089, %v1087
    %v1106 = vpack.c.b16 %v1090, %v1088
    %1123 = vmatprep.subr.bf16.mxu0 %v1106
    %1124 = vmatpush1.bf16.msra.mxu0 %v1105
    %1125 = vmatprep.subr.bf16.mxu0 %v1104
    %1126 = vmatpush1.bf16.msra.mxu0 %v1103
    %1127 = vmatprep.subr.bf16.mxu0 %v1102
    %1128 = vmatpush1.bf16.msra.mxu0 %v1101
    %1129 = vmatprep.subr.bf16.mxu0 %v1100
    %1130 = vmatpush1.bf16.msra.mxu0 %v1099
    %1131 = vmatprep.subr.bf16.mxu0 %v1098
    %1132 = vmatpush1.bf16.msra.mxu0 %v1097
    %1133 = vmatprep.subr.bf16.mxu0 %v1096
    %1134 = vmatpush1.bf16.msra.mxu0 %v1095
    %1135 = vmatprep.subr.bf16.mxu0 %v1094
    %1136 = vmatpush1.bf16.msra.mxu0 %v1093
    %1137 = vmatprep.subr.bf16.mxu0 %v1092
    %1138 = vmatpush1.bf16.msra.mxu0 %v1091
    %1139 = vmatprep.subr.bf16.mxu0 0
    %1140 = vmatpush2.bf16.msra.mxu0 0
    %1141 = vmatprep.subr.bf16.mxu0 0
    %1142 = vmatpush2.bf16.msra.mxu0 0
    %1143 = vmatprep.subr.bf16.mxu0 0
    %1144 = vmatpush2.bf16.msra.mxu0 0
    %1145 = vmatprep.subr.bf16.mxu0 0
    %1146 = vmatpush2.bf16.msra.mxu0 0
    %1147 = vmatprep.subr.bf16.mxu0 0
    %1148 = vmatpush2.bf16.msra.mxu0 0
    %1149 = vmatprep.subr.bf16.mxu0 0
    %1150 = vmatpush2.bf16.msra.mxu0 0
    %1151 = vmatprep.subr.bf16.mxu0 0
    %1152 = vmatpush2.bf16.msra.mxu0 0
    %1153 = vmatprep.subr.bf16.mxu0 0
    %1154 = vmatpush2.bf16.msra.mxu0 0
    %1155 = vmatprep.mubr.bf16.mxu0 0
    %1156 = vmatmul.mubr.bf16.gmra.mxu0 %v683
    %v1157 = vpop.f32.mrf.mxu0
    %v1158 = vadd.f32 0.0, %v1157
    %v1159 = vpop.f32.mrf.mxu0
    %v1160 = vadd.f32 0.0, %v1159
    %v1161 = vpop.f32.mrf.mxu0
    %v1162 = vadd.f32 0.0, %v1161
    %v1163 = vpop.f32.mrf.mxu0
    %v1164 = vadd.f32 0.0, %v1163
    %1165 = vmatprep.mubr.bf16.mxu0 0
    %1166 = vmatmul.mubr.bf16.gmra.mxu0 %v684
    %v1167 = vpop.f32.mrf.mxu0
    %v1168 = vadd.f32 0.0, %v1167
    %v1169 = vpop.f32.mrf.mxu0
    %v1170 = vadd.f32 0.0, %v1169
    %v1171 = vpop.f32.mrf.mxu0
    %v1172 = vadd.f32 0.0, %v1171
    %v1173 = vpop.f32.mrf.mxu0
    %v1174 = vadd.f32 0.0, %v1173
    %1175 = vmatprep.mubr.bf16.mxu0 0
    %1176 = vmatmul.mubr.bf16.gmra.mxu0 %v685
    %v1177 = vpop.f32.mrf.mxu0
    %v1178 = vadd.f32 0.0, %v1177
    %v1179 = vpop.f32.mrf.mxu0
    %v1180 = vadd.f32 0.0, %v1179
    %v1181 = vpop.f32.mrf.mxu0
    %v1182 = vadd.f32 0.0, %v1181
    %v1183 = vpop.f32.mrf.mxu0
    %v1184 = vadd.f32 0.0, %v1183
    %1185 = vmatprep.mubr.bf16.mxu0 0
    %1186 = vmatmul.mubr.bf16.gmra.mxu0 %v686
    %v1187 = vpop.f32.mrf.mxu0
    %v1188 = vadd.f32 0.0, %v1187
    %v1189 = vpop.f32.mrf.mxu0
    %v1190 = vadd.f32 0.0, %v1189
    %v1191 = vpop.f32.mrf.mxu0
    %v1192 = vadd.f32 0.0, %v1191
    %v1193 = vpop.f32.mrf.mxu0
    %v1194 = vadd.f32 0.0, %v1193
    %1195 = vdwg.mxu0
    %v1196 = vadd.f32 %v988, %v1158
    %v1197 = vadd.f32 %v990, %v1160
    %v1198 = vadd.f32 %v992, %v1162
    %v1199 = vadd.f32 %v994, %v1164
    %v1200 = vadd.f32 %v998, %v1168
    %v1201 = vadd.f32 %v1000, %v1170
    %v1202 = vadd.f32 %v1002, %v1172
    %v1203 = vadd.f32 %v1004, %v1174
    %v1204 = vadd.f32 %v1008, %v1178
    %v1205 = vadd.f32 %v1010, %v1180
    %v1206 = vadd.f32 %v1012, %v1182
    %v1207 = vadd.f32 %v1014, %v1184
    %v1208 = vadd.f32 %v1018, %v1188
    %v1209 = vadd.f32 %v1020, %v1190
    %v1210 = vadd.f32 %v1022, %v1192
    %v1211 = vadd.f32 %v1024, %v1194
    %v1212 = vld [vmem:[#allocation11] sm:$0x3]
    %v1214 = vlaneseq
    %v1215 = vshrl.u32 %v1214, 7
    %v1216 = vsub.s32 0, %v1215
    %v1217 = vrot.slane %v1212, %v1216
    %v1218 = vlaneseq
    %v1219 = vshrl.u32 %v1218, 7
    %v1220 = vsub.s32 1, %v1219
    %v1221 = vrot.slane %v1212, %v1220
    %v1224 = vadd.f32 %v1196, %v1217
    %v1225 = vadd.f32 %v1197, %v1221
    %v1226 = vadd.f32 %v1198, %v1217
    %v1227 = vadd.f32 %v1199, %v1221
    %v1228 = vadd.f32 %v1200, %v1217
    %v1229 = vadd.f32 %v1201, %v1221
    %v1230 = vadd.f32 %v1202, %v1217
    %v1231 = vadd.f32 %v1203, %v1221
    %v1232 = vadd.f32 %v1204, %v1217
    %v1233 = vadd.f32 %v1205, %v1221
    %v1234 = vadd.f32 %v1206, %v1217
    %v1235 = vadd.f32 %v1207, %v1221
    %v1236 = vadd.f32 %v1208, %v1217
    %v1237 = vadd.f32 %v1209, %v1221
    %v1238 = vadd.f32 %v1210, %v1217
    %v1239 = vadd.f32 %v1211, %v1221
    %v1240 = vld [vmem:[#allocation5] sm:$0xf]
    %v1241 = vld [vmem:[%s8] sm:$0xff]
    %vm1242 = vcmask 64512
    %v1244 = vsel %vm1242, %v1240, 0
    %1246 = vmatprep.subr.mxu0 0.0
    %1247 = vmatpush1.msra.mxu0 0.0
    %1248 = vmatprep.subr.mxu0 0.0
    %1249 = vmatpush1.msra.mxu0 0.0
    %1250 = vmatprep.subr.mxu0 0.0
    %1251 = vmatpush1.msra.mxu0 0.0
    %1252 = vmatprep.subr.mxu0 0.0
    %1253 = vmatpush1.msra.mxu0 0.0
    %1254 = vmatprep.subr.mxu0 0.0
    %1255 = vmatpush1.msra.mxu0 0.0
    %1256 = vmatprep.subr.mxu0 0.0
    %1257 = vmatpush1.msra.mxu0 0.0
    %1258 = vmatprep.subr.mxu0 0.0
    %1259 = vmatpush1.msra.mxu0 0.0
    %1260 = vmatprep.subr.mxu0 0.0
    %1261 = vmatpush1.msra.mxu0 0.0
    %1262 = vmatprep.subr.mxu0 0.0
    %1263 = vmatpush1.msra.mxu0 0.0
    %1264 = vmatprep.subr.mxu0 0.0
    %1265 = vmatpush1.msra.mxu0 0.0
    %1266 = vmatprep.subr.mxu0 0.0
    %1267 = vmatpush1.msra.mxu0 0.0
    %1268 = vmatprep.subr.mxu0 0.0
    %1269 = vmatpush1.msra.mxu0 0.0
    %1270 = vmatprep.subr.mxu0 0.0
    %1271 = vmatpush1.msra.mxu0 0.0
    %1272 = vmatprep.subr.mxu0 0.0
    %1273 = vmatpush1.msra.mxu0 0.0
    %1274 = vmatprep.subr.mxu0 0.0
    %1275 = vmatpush1.msra.mxu0 0.0
    %1276 = vmatprep.subr.mxu0 0.0
    %1277 = vmatpush1.msra.mxu0 %v1241
    %1278 = vmatprep.subr.mxu0 0.0
    %1279 = vmatpush2.msra.mxu0 0.0
    %1280 = vmatprep.subr.mxu0 0.0
    %1281 = vmatpush2.msra.mxu0 0.0
    %1282 = vmatprep.subr.mxu0 0.0
    %1283 = vmatpush2.msra.mxu0 0.0
    %1284 = vmatprep.subr.mxu0 0.0
    %1285 = vmatpush2.msra.mxu0 0.0
    %1286 = vmatprep.subr.mxu0 0.0
    %1287 = vmatpush2.msra.mxu0 0.0
    %1288 = vmatprep.subr.mxu0 0.0
    %1289 = vmatpush2.msra.mxu0 0.0
    %1290 = vmatprep.subr.mxu0 0.0
    %1291 = vmatpush2.msra.mxu0 0.0
    %1292 = vmatprep.subr.mxu0 0.0
    %1293 = vmatpush2.msra.mxu0 0.0
    %1294 = vmatprep.subr.mxu0 0.0
    %1295 = vmatpush2.msra.mxu0 0.0
    %1296 = vmatprep.subr.mxu0 0.0
    %1297 = vmatpush2.msra.mxu0 0.0
    %1298 = vmatprep.subr.mxu0 0.0
    %1299 = vmatpush2.msra.mxu0 0.0
    %1300 = vmatprep.subr.mxu0 0.0
    %1301 = vmatpush2.msra.mxu0 0.0
    %1302 = vmatprep.subr.mxu0 0.0
    %1303 = vmatpush2.msra.mxu0 0.0
    %1304 = vmatprep.subr.mxu0 0.0
    %1305 = vmatpush2.msra.mxu0 0.0
    %1306 = vmatprep.subr.mxu0 0.0
    %1307 = vmatpush2.msra.mxu0 0.0
    %1308 = vmatprep.subr.mxu0 0.0
    %1309 = vmatpush2.msra.mxu0 0.0
    %1310 = vmatprep.mubr.f32.mxu0 0.0
    %1311 = vmatmul.mubr.f32.gmra.mxu0 %v1244
    %v1312 = vpop.f32.mrf.mxu0
    %v1313 = vadd.f32 0.0, %v1312
    %v1314 = vpop.f32.mrf.mxu0
    %1315 = vdwg.mxu0
    %v1316 = vld [vmem:[#allocation13] sm:$0xff]
    %v1317 = vld [vmem:[#allocation13 + $0x8] sm:$0xff]
    %v1318 = vld [vmem:[#allocation13 + $0x10] sm:$0xff]
    %v1319 = vld [vmem:[#allocation13 + $0x18] sm:$0xff]
    %vm1320 = vcmask 130048
    %v1322 = vsel %vm1320, %v1313, 0
    %1324 = vmatprep.subr.mxu0 0.0
    %1325 = vmatpush1.msra.mxu0 0.0
    %1326 = vmatprep.subr.mxu0 0.0
    %1327 = vmatpush1.msra.mxu0 0.0
    %1328 = vmatprep.subr.mxu0 0.0
    %1329 = vmatpush1.msra.mxu0 0.0
    %1330 = vmatprep.subr.mxu0 0.0
    %1331 = vmatpush1.msra.mxu0 0.0
    %1332 = vmatprep.subr.mxu0 0.0
    %1333 = vmatpush1.msra.mxu0 0.0
    %1334 = vmatprep.subr.mxu0 0.0
    %1335 = vmatpush1.msra.mxu0 0.0
    %1336 = vmatprep.subr.mxu0 0.0
    %1337 = vmatpush1.msra.mxu0 0.0
    %1338 = vmatprep.subr.mxu0 0.0
    %1339 = vmatpush1.msra.mxu0 0.0
    %1340 = vmatprep.subr.mxu0 0.0
    %1341 = vmatpush1.msra.mxu0 0.0
    %1342 = vmatprep.subr.mxu0 0.0
    %1343 = vmatpush1.msra.mxu0 0.0
    %1344 = vmatprep.subr.mxu0 0.0
    %1345 = vmatpush1.msra.mxu0 0.0
    %1346 = vmatprep.subr.mxu0 0.0
    %1347 = vmatpush1.msra.mxu0 0.0
    %1348 = vmatprep.subr.mxu0 0.0
    %1349 = vmatpush1.msra.mxu0 0.0
    %1350 = vmatprep.subr.mxu0 0.0
    %1351 = vmatpush1.msra.mxu0 0.0
    %1352 = vmatprep.subr.mxu0 %v1319
    %1353 = vmatpush1.msra.mxu0 %v1318
    %1354 = vmatprep.subr.mxu0 %v1317
    %1355 = vmatpush1.msra.mxu0 %v1316
    %1356 = vmatprep.subr.mxu0 0.0
    %1357 = vmatpush2.msra.mxu0 0.0
    %1358 = vmatprep.subr.mxu0 0.0
    %1359 = vmatpush2.msra.mxu0 0.0
    %1360 = vmatprep.subr.mxu0 0.0
    %1361 = vmatpush2.msra.mxu0 0.0
    %1362 = vmatprep.subr.mxu0 0.0
    %1363 = vmatpush2.msra.mxu0 0.0
    %1364 = vmatprep.subr.mxu0 0.0
    %1365 = vmatpush2.msra.mxu0 0.0
    %1366 = vmatprep.subr.mxu0 0.0
    %1367 = vmatpush2.msra.mxu0 0.0
    %1368 = vmatprep.subr.mxu0 0.0
    %1369 = vmatpush2.msra.mxu0 0.0
    %1370 = vmatprep.subr.mxu0 0.0
    %1371 = vmatpush2.msra.mxu0 0.0
    %1372 = vmatprep.subr.mxu0 0.0
    %1373 = vmatpush2.msra.mxu0 0.0
    %1374 = vmatprep.subr.mxu0 0.0
    %1375 = vmatpush2.msra.mxu0 0.0
    %1376 = vmatprep.subr.mxu0 0.0
    %1377 = vmatpush2.msra.mxu0 0.0
    %1378 = vmatprep.subr.mxu0 0.0
    %1379 = vmatpush2.msra.mxu0 0.0
    %1380 = vmatprep.subr.mxu0 0.0
    %1381 = vmatpush2.msra.mxu0 0.0
    %1382 = vmatprep.subr.mxu0 0.0
    %1383 = vmatpush2.msra.mxu0 0.0
    %1384 = vmatprep.subr.mxu0 0.0
    %1385 = vmatpush2.msra.mxu0 0.0
    %1386 = vmatprep.subr.mxu0 0.0
    %1387 = vmatpush2.msra.mxu0 0.0
    %1388 = vmatprep.mubr.f32.mxu0 0.0
    %1389 = vmatmul.mubr.f32.gmra.mxu0 %v1322
    %v1390 = vpop.f32.mrf.mxu0
    %v1391 = vadd.f32 0.0, %v1390
    %v1392 = vpop.f32.mrf.mxu0
    %v1393 = vadd.f32 0.0, %v1392
    %1394 = vdwg.mxu0
    %v1397 = vcombine.low %v1391, %v1393
    %v1399 = vunpack.c.l.s4 1966171168
    %v1400 = vunpack.c.0.s8 %v1399
    %v1401 = vlaneseq
    %v1402 = vshrl.u32 %v1401, 7
    %v1403 = vsub.s32 %v1400, %v1402
    %v1404 = vrot.slane %v1397, %v1403
    %v1405 = vcombine.high %v1404, %v1404
    %v1407 = vunpack.c.l.s4 1966171168
    %v1408 = vunpack.c.0.s8 %v1407
    %v1409 = vlaneseq
    %v1410 = vshrl.u32 %v1409, 7
    %v1411 = vsub.s32 %v1408, %v1410
    %v1412 = vrot.slane %v1404, %v1411
    %v1414 = vunpack.c.l.s4 1966171168
    %v1415 = vunpack.c.0.s8 %v1414
    %v1416 = vlaneseq
    %v1417 = vshrl.u32 %v1416, 7
    %v1418 = vsub.s32 %v1415, %v1417
    %v1419 = vrot.slane %v1405, %v1418
    %v1420 = vcombine.high %v1412, %v1412
    %v1421 = vcombine.high %v1419, %v1419
    %v1422 = vlaneseq
    %v1423 = vshrl.u32 %v1422, 7
    %v1424 = vsub.s32 0, %v1423
    %v1425 = vrot.slane %v1412, %v1424
    %v1426 = vlaneseq
    %v1427 = vshrl.u32 %v1426, 7
    %v1428 = vsub.s32 1, %v1427
    %v1429 = vrot.slane %v1412, %v1428
    %v1430 = vlaneseq
    %v1431 = vshrl.u32 %v1430, 7
    %v1432 = vsub.s32 0, %v1431
    %v1433 = vrot.slane %v1419, %v1432
    %v1434 = vlaneseq
    %v1435 = vshrl.u32 %v1434, 7
    %v1436 = vsub.s32 1, %v1435
    %v1437 = vrot.slane %v1419, %v1436
    %v1438 = vlaneseq
    %v1439 = vshrl.u32 %v1438, 7
    %v1440 = vsub.s32 0, %v1439
    %v1441 = vrot.slane %v1420, %v1440
    %v1442 = vlaneseq
    %v1443 = vshrl.u32 %v1442, 7
    %v1444 = vsub.s32 1, %v1443
    %v1445 = vrot.slane %v1420, %v1444
    %v1446 = vlaneseq
    %v1447 = vshrl.u32 %v1446, 7
    %v1448 = vsub.s32 0, %v1447
    %v1449 = vrot.slane %v1421, %v1448
    %v1450 = vlaneseq
    %v1451 = vshrl.u32 %v1450, 7
    %v1452 = vsub.s32 1, %v1451
    %v1453 = vrot.slane %v1421, %v1452
    %v1462 = vadd.f32 %v1224, %v1425
    %v1463 = vadd.f32 %v1225, %v1429
    %v1464 = vadd.f32 %v1226, %v1425
    %v1465 = vadd.f32 %v1227, %v1429
    %v1466 = vadd.f32 %v1228, %v1433
    %v1467 = vadd.f32 %v1229, %v1437
    %v1468 = vadd.f32 %v1230, %v1433
    %v1469 = vadd.f32 %v1231, %v1437
    %v1470 = vadd.f32 %v1232, %v1441
    %v1471 = vadd.f32 %v1233, %v1445
    %v1472 = vadd.f32 %v1234, %v1441
    %v1473 = vadd.f32 %v1235, %v1445
    %v1474 = vadd.f32 %v1236, %v1449
    %v1475 = vadd.f32 %v1237, %v1453
    %v1476 = vadd.f32 %v1238, %v1449
    %v1477 = vadd.f32 %v1239, %v1453
    %v1478 = vld [vmem:[%s10] sm:$0x3]
    %v1479 = vld [vmem:[%s11] sm:$0x3]
    %v1480 = vld [vmem:[%s12] sm:$0xff]
    %v1481 = vld [vmem:[%s12 + $0x8] sm:$0xff]
    %v1482 = vld [vmem:[%s12 + $0x10] sm:$0xff]
    %v1483 = vld [vmem:[%s12 + $0x18] sm:$0xff]
    %v1484 = vld [vmem:[%s12 + $0x20] sm:$0xff]
    %v1485 = vld [vmem:[%s12 + $0x28] sm:$0xff]
    %v1486 = vld [vmem:[%s12 + $0x30] sm:$0xff]
    %v1487 = vld [vmem:[%s12 + $0x38] sm:$0xff]
    %v1488 = vld [vmem:[%s12 + $0x40] sm:$0xff]
    %v1489 = vld [vmem:[%s12 + $0x48] sm:$0xff]
    %v1490 = vld [vmem:[%s12 + $0x50] sm:$0xff]
    %v1491 = vld [vmem:[%s12 + $0x58] sm:$0xff]
    %v1492 = vld [vmem:[%s12 + $0x60] sm:$0xff]
    %v1493 = vld [vmem:[%s12 + $0x68] sm:$0xff]
    %v1494 = vld [vmem:[%s12 + $0x70] sm:$0xff]
    %v1495 = vld [vmem:[%s12 + $0x78] sm:$0xff]
    %v1496 = vld [vmem:[%s12 + $0x80] sm:$0xff]
    %v1497 = vld [vmem:[%s12 + $0x88] sm:$0xff]
    %v1498 = vld [vmem:[%s12 + $0x90] sm:$0xff]
    %v1499 = vld [vmem:[%s12 + $0x98] sm:$0xff]
    %v1500 = vld [vmem:[%s12 + $0xa0] sm:$0xff]
    %v1501 = vld [vmem:[%s12 + $0xa8] sm:$0xff]
    %v1502 = vld [vmem:[%s12 + $0xb0] sm:$0xff]
    %v1503 = vld [vmem:[%s12 + $0xb8] sm:$0xff]
    %v1504 = vld [vmem:[%s12 + $0xc0] sm:$0xff]
    %v1505 = vld [vmem:[%s12 + $0xc8] sm:$0xff]
    %v1506 = vld [vmem:[%s12 + $0xd0] sm:$0xff]
    %v1507 = vld [vmem:[%s12 + $0xd8] sm:$0xff]
    %v1508 = vld [vmem:[%s12 + $0xe0] sm:$0xff]
    %v1509 = vld [vmem:[%s12 + $0xe8] sm:$0xff]
    %v1510 = vld [vmem:[%s12 + $0xf0] sm:$0xff]
    %v1511 = vld [vmem:[%s12 + $0xf8] sm:$0xff]
    %v1512 = vld [vmem:[%s13] sm:$0xff]
    %v1513 = vadd.f32 %v1462, %v1464
    %v1514 = vrot.slane %v1513, 4
    %v1515 = vadd.f32 %v1513, %v1514
    %v1516 = vrot.slane %v1515, 2
    %v1517 = vadd.f32 %v1515, %v1516
    %v1518 = vrot.slane %v1517, 1
    %v1519 = vadd.f32 %v1517, %v1518
    %v1520 = vadd.f32 %v1463, %v1465
    %v1521 = vrot.slane %v1520, 4
    %v1522 = vadd.f32 %v1520, %v1521
    %v1523 = vrot.slane %v1522, 2
    %v1524 = vadd.f32 %v1522, %v1523
    %v1525 = vrot.slane %v1524, 1
    %v1526 = vadd.f32 %v1524, %v1525
    %v1527 = vadd.f32 %v1466, %v1468
    %v1528 = vrot.slane %v1527, 4
    %v1529 = vadd.f32 %v1527, %v1528
    %v1530 = vrot.slane %v1529, 2
    %v1531 = vadd.f32 %v1529, %v1530
    %v1532 = vrot.slane %v1531, 1
    %v1533 = vadd.f32 %v1531, %v1532
    %v1534 = vadd.f32 %v1467, %v1469
    %v1535 = vrot.slane %v1534, 4
    %v1536 = vadd.f32 %v1534, %v1535
    %v1537 = vrot.slane %v1536, 2
    %v1538 = vadd.f32 %v1536, %v1537
    %v1539 = vrot.slane %v1538, 1
    %v1540 = vadd.f32 %v1538, %v1539
    %v1541 = vadd.f32 %v1470, %v1472
    %v1542 = vrot.slane %v1541, 4
    %v1543 = vadd.f32 %v1541, %v1542
    %v1544 = vrot.slane %v1543, 2
    %v1545 = vadd.f32 %v1543, %v1544
    %v1546 = vrot.slane %v1545, 1
    %v1547 = vadd.f32 %v1545, %v1546
    %v1548 = vadd.f32 %v1471, %v1473
    %v1549 = vrot.slane %v1548, 4
    %v1550 = vadd.f32 %v1548, %v1549
    %v1551 = vrot.slane %v1550, 2
    %v1552 = vadd.f32 %v1550, %v1551
    %v1553 = vrot.slane %v1552, 1
    %v1554 = vadd.f32 %v1552, %v1553
    %v1555 = vadd.f32 %v1474, %v1476
    %v1556 = vrot.slane %v1555, 4
    %v1557 = vadd.f32 %v1555, %v1556
    %v1558 = vrot.slane %v1557, 2
    %v1559 = vadd.f32 %v1557, %v1558
    %v1560 = vrot.slane %v1559, 1
    %v1561 = vadd.f32 %v1559, %v1560
    %v1562 = vadd.f32 %v1475, %v1477
    %v1563 = vrot.slane %v1562, 4
    %v1564 = vadd.f32 %v1562, %v1563
    %v1565 = vrot.slane %v1564, 2
    %v1566 = vadd.f32 %v1564, %v1565
    %v1567 = vrot.slane %v1566, 1
    %v1568 = vadd.f32 %v1566, %v1567
    %v1569 = vmul.f32 %v1462, %v1462
    %v1570 = vmul.f32 %v1463, %v1463
    %v1571 = vmul.f32 %v1464, %v1464
    %v1572 = vmul.f32 %v1465, %v1465
    %v1573 = vmul.f32 %v1466, %v1466
    %v1574 = vmul.f32 %v1467, %v1467
    %v1575 = vmul.f32 %v1468, %v1468
    %v1576 = vmul.f32 %v1469, %v1469
    %v1577 = vmul.f32 %v1470, %v1470
    %v1578 = vmul.f32 %v1471, %v1471
    %v1579 = vmul.f32 %v1472, %v1472
    %v1580 = vmul.f32 %v1473, %v1473
    %v1581 = vmul.f32 %v1474, %v1474
    %v1582 = vmul.f32 %v1475, %v1475
    %v1583 = vmul.f32 %v1476, %v1476
    %v1584 = vmul.f32 %v1477, %v1477
    %v1585 = vadd.f32 %v1569, %v1571
    %v1586 = vrot.slane %v1585, 4
    %v1587 = vadd.f32 %v1585, %v1586
    %v1588 = vrot.slane %v1587, 2
    %v1589 = vadd.f32 %v1587, %v1588
    %v1590 = vrot.slane %v1589, 1
    %v1591 = vadd.f32 %v1589, %v1590
    %v1592 = vadd.f32 %v1570, %v1572
    %v1593 = vrot.slane %v1592, 4
    %v1594 = vadd.f32 %v1592, %v1593
    %v1595 = vrot.slane %v1594, 2
    %v1596 = vadd.f32 %v1594, %v1595
    %v1597 = vrot.slane %v1596, 1
    %v1598 = vadd.f32 %v1596, %v1597
    %v1599 = vadd.f32 %v1573, %v1575
    %v1600 = vrot.slane %v1599, 4
    %v1601 = vadd.f32 %v1599, %v1600
    %v1602 = vrot.slane %v1601, 2
    %v1603 = vadd.f32 %v1601, %v1602
    %v1604 = vrot.slane %v1603, 1
    %v1605 = vadd.f32 %v1603, %v1604
    %v1606 = vadd.f32 %v1574, %v1576
    %v1607 = vrot.slane %v1606, 4
    %v1608 = vadd.f32 %v1606, %v1607
    %v1609 = vrot.slane %v1608, 2
    %v1610 = vadd.f32 %v1608, %v1609
    %v1611 = vrot.slane %v1610, 1
    %v1612 = vadd.f32 %v1610, %v1611
    %v1613 = vadd.f32 %v1577, %v1579
    %v1614 = vrot.slane %v1613, 4
    %v1615 = vadd.f32 %v1613, %v1614
    %v1616 = vrot.slane %v1615, 2
    %v1617 = vadd.f32 %v1615, %v1616
    %v1618 = vrot.slane %v1617, 1
    %v1619 = vadd.f32 %v1617, %v1618
    %v1620 = vadd.f32 %v1578, %v1580
    %v1621 = vrot.slane %v1620, 4
    %v1622 = vadd.f32 %v1620, %v1621
    %v1623 = vrot.slane %v1622, 2
    %v1624 = vadd.f32 %v1622, %v1623
    %v1625 = vrot.slane %v1624, 1
    %v1626 = vadd.f32 %v1624, %v1625
    %v1627 = vadd.f32 %v1581, %v1583
    %v1628 = vrot.slane %v1627, 4
    %v1629 = vadd.f32 %v1627, %v1628
    %v1630 = vrot.slane %v1629, 2
    %v1631 = vadd.f32 %v1629, %v1630
    %v1632 = vrot.slane %v1631, 1
    %v1633 = vadd.f32 %v1631, %v1632
    %v1634 = vadd.f32 %v1582, %v1584
    %v1635 = vrot.slane %v1634, 4
    %v1636 = vadd.f32 %v1634, %v1635
    %v1637 = vrot.slane %v1636, 2
    %v1638 = vadd.f32 %v1636, %v1637
    %v1639 = vrot.slane %v1638, 1
    %v1640 = vadd.f32 %v1638, %v1639
    %v1649 = vsel %vm268, %v1533, %v1519
    %v1650 = vsel %vm270, %v1547, %v1649
    %v1651 = vsel %vm272, %v1561, %v1650
    %v1652 = vsel %vm268, %v1540, %v1526
    %v1653 = vsel %vm270, %v1554, %v1652
    %v1654 = vsel %vm272, %v1568, %v1653
    %v1665 = vsel %vm279, %v1605, %v1591
    %v1666 = vsel %vm281, %v1619, %v1665
    %v1667 = vsel %vm283, %v1633, %v1666
    %v1668 = vsel %vm279, %v1612, %v1598
    %v1669 = vsel %vm281, %v1626, %v1668
    %v1670 = vsel %vm283, %v1640, %v1669
    %v1673 = vsel %vm286, %v1651, %v1667
    %v1674 = vsel %vm286, %v1654, %v1670
    %1675 = vmatprep.subr.mxu0 0.0
    %1676 = vmatpush1.msra.mxu0 %v1495
    %1677 = vmatprep.subr.mxu0 0.0
    %1678 = vmatpush1.msra.mxu0 %v1494
    %1679 = vmatprep.subr.mxu0 0.0
    %1680 = vmatpush1.msra.mxu0 %v1493
    %1681 = vmatprep.subr.mxu0 0.0
    %1682 = vmatpush1.msra.mxu0 %v1492
    %1683 = vmatprep.subr.mxu0 0.0
    %1684 = vmatpush1.msra.mxu0 %v1491
    %1685 = vmatprep.subr.mxu0 0.0
    %1686 = vmatpush1.msra.mxu0 %v1490
    %1687 = vmatprep.subr.mxu0 0.0
    %1688 = vmatpush1.msra.mxu0 %v1489
    %1689 = vmatprep.subr.mxu0 0.0
    %1690 = vmatpush1.msra.mxu0 %v1488
    %1691 = vmatprep.subr.mxu0 0.0
    %1692 = vmatpush1.msra.mxu0 %v1487
    %1693 = vmatprep.subr.mxu0 0.0
    %1694 = vmatpush1.msra.mxu0 %v1486
    %1695 = vmatprep.subr.mxu0 0.0
    %1696 = vmatpush1.msra.mxu0 %v1485
    %1697 = vmatprep.subr.mxu0 0.0
    %1698 = vmatpush1.msra.mxu0 %v1484
    %1699 = vmatprep.subr.mxu0 0.0
    %1700 = vmatpush1.msra.mxu0 %v1483
    %1701 = vmatprep.subr.mxu0 0.0
    %1702 = vmatpush1.msra.mxu0 %v1482
    %1703 = vmatprep.subr.mxu0 0.0
    %1704 = vmatpush1.msra.mxu0 %v1481
    %1705 = vmatprep.subr.mxu0 0.0
    %1706 = vmatpush1.msra.mxu0 %v1480
    %1707 = vmatprep.subr.mxu0 0.0
    %1708 = vmatpush2.msra.mxu0 %v1511
    %1709 = vmatprep.subr.mxu0 0.0
    %1710 = vmatpush2.msra.mxu0 %v1510
    %1711 = vmatprep.subr.mxu0 0.0
    %1712 = vmatpush2.msra.mxu0 %v1509
    %1713 = vmatprep.subr.mxu0 0.0
    %1714 = vmatpush2.msra.mxu0 %v1508
    %1715 = vmatprep.subr.mxu0 0.0
    %1716 = vmatpush2.msra.mxu0 %v1507
    %1717 = vmatprep.subr.mxu0 0.0
    %1718 = vmatpush2.msra.mxu0 %v1506
    %1719 = vmatprep.subr.mxu0 0.0
    %1720 = vmatpush2.msra.mxu0 %v1505
    %1721 = vmatprep.subr.mxu0 0.0
    %1722 = vmatpush2.msra.mxu0 %v1504
    %1723 = vmatprep.subr.mxu0 0.0
    %1724 = vmatpush2.msra.mxu0 %v1503
    %1725 = vmatprep.subr.mxu0 0.0
    %1726 = vmatpush2.msra.mxu0 %v1502
    %1727 = vmatprep.subr.mxu0 0.0
    %1728 = vmatpush2.msra.mxu0 %v1501
    %1729 = vmatprep.subr.mxu0 0.0
    %1730 = vmatpush2.msra.mxu0 %v1500
    %1731 = vmatprep.subr.mxu0 0.0
    %1732 = vmatpush2.msra.mxu0 %v1499
    %1733 = vmatprep.subr.mxu0 0.0
    %1734 = vmatpush2.msra.mxu0 %v1498
    %1735 = vmatprep.subr.mxu0 0.0
    %1736 = vmatpush2.msra.mxu0 %v1497
    %1737 = vmatprep.subr.mxu0 0.0
    %1738 = vmatpush2.msra.mxu0 %v1496
    %1739 = vmatprep.mubr.f32.mxu0 %v1674
    %1740 = vmatmul.mubr.f32.gmra.mxu0 %v1673
    %v1741 = vpop.f32.mrf.mxu0
    %v1742 = vadd.f32 0.0, %v1741
    %v1743 = vpop.f32.mrf.mxu0
    %1744 = vdwg.mxu0
    %v1745 = vmul.f32 %v1742, 0.0009765625
    %v1746 = vmul.f32 %v1745, %v1745
    %v1748 = vrot.slane %v1746, 4
    %v1750 = vsub.f32 %v1745, %v1748
    %v1751 = vmax.f32 %v1750, 0.0
    %v1752 = vadd.f32 %v1751, 1e-05
    %v1753 = vrsqrt.pop %v1752
    %v1754 = vsel %vm286, %v1745, %v1753
    %v1756 = vcombine.high %v1512, %v1512
    %v1758 = vsel %vm368, %v1754, 0
    %v1760 = vsel %vm286, %v1512, 0
    %v1762 = vsel %vm286, %v1756, 0
    %1764 = vmatprep.subr.mxu0 0.0
    %1765 = vmatpush1.msra.mxu0 0.0
    %1766 = vmatprep.subr.mxu0 0.0
    %1767 = vmatpush1.msra.mxu0 0.0
    %1768 = vmatprep.subr.mxu0 0.0
    %1769 = vmatpush1.msra.mxu0 0.0
    %1770 = vmatprep.subr.mxu0 0.0
    %1771 = vmatpush1.msra.mxu0 0.0
    %1772 = vmatprep.subr.mxu0 0.0
    %1773 = vmatpush1.msra.mxu0 0.0
    %1774 = vmatprep.subr.mxu0 0.0
    %1775 = vmatpush1.msra.mxu0 0.0
    %1776 = vmatprep.subr.mxu0 0.0
    %1777 = vmatpush1.msra.mxu0 0.0
    %1778 = vmatprep.subr.mxu0 0.0
    %1779 = vmatpush1.msra.mxu0 0.0
    %1780 = vmatprep.subr.mxu0 0.0
    %1781 = vmatpush1.msra.mxu0 0.0
    %1782 = vmatprep.subr.mxu0 0.0
    %1783 = vmatpush1.msra.mxu0 0.0
    %1784 = vmatprep.subr.mxu0 0.0
    %1785 = vmatpush1.msra.mxu0 0.0
    %1786 = vmatprep.subr.mxu0 0.0
    %1787 = vmatpush1.msra.mxu0 0.0
    %1788 = vmatprep.subr.mxu0 0.0
    %1789 = vmatpush1.msra.mxu0 0.0
    %1790 = vmatprep.subr.mxu0 0.0
    %1791 = vmatpush1.msra.mxu0 0.0
    %1792 = vmatprep.subr.mxu0 0.0
    %1793 = vmatpush1.msra.mxu0 0.0
    %1794 = vmatprep.subr.mxu0 %v1762
    %1795 = vmatpush1.msra.mxu0 %v1760
    %1796 = vmatprep.subr.mxu0 0.0
    %1797 = vmatpush2.msra.mxu0 0.0
    %1798 = vmatprep.subr.mxu0 0.0
    %1799 = vmatpush2.msra.mxu0 0.0
    %1800 = vmatprep.subr.mxu0 0.0
    %1801 = vmatpush2.msra.mxu0 0.0
    %1802 = vmatprep.subr.mxu0 0.0
    %1803 = vmatpush2.msra.mxu0 0.0
    %1804 = vmatprep.subr.mxu0 0.0
    %1805 = vmatpush2.msra.mxu0 0.0
    %1806 = vmatprep.subr.mxu0 0.0
    %1807 = vmatpush2.msra.mxu0 0.0
    %1808 = vmatprep.subr.mxu0 0.0
    %1809 = vmatpush2.msra.mxu0 0.0
    %1810 = vmatprep.subr.mxu0 0.0
    %1811 = vmatpush2.msra.mxu0 0.0
    %1812 = vmatprep.subr.mxu0 0.0
    %1813 = vmatpush2.msra.mxu0 0.0
    %1814 = vmatprep.subr.mxu0 0.0
    %1815 = vmatpush2.msra.mxu0 0.0
    %1816 = vmatprep.subr.mxu0 0.0
    %1817 = vmatpush2.msra.mxu0 0.0
    %1818 = vmatprep.subr.mxu0 0.0
    %1819 = vmatpush2.msra.mxu0 0.0
    %1820 = vmatprep.subr.mxu0 0.0
    %1821 = vmatpush2.msra.mxu0 0.0
    %1822 = vmatprep.subr.mxu0 0.0
    %1823 = vmatpush2.msra.mxu0 0.0
    %1824 = vmatprep.subr.mxu0 0.0
    %1825 = vmatpush2.msra.mxu0 0.0
    %1826 = vmatprep.subr.mxu0 0.0
    %1827 = vmatpush2.msra.mxu0 0.0
    %1828 = vmatprep.mubr.f32.mxu0 0.0
    %1829 = vmatmul.mubr.f32.gmra.mxu0 %v1758
    %v1830 = vpop.f32.mrf.mxu0
    %v1831 = vadd.f32 0.0, %v1830
    %v1832 = vpop.f32.mrf.mxu0
    %v1833 = vadd.f32 0.0, %v1832
    %1834 = vdwg.mxu0
    %v1836 = vlaneseq
    %v1837 = vshrl.u32 %v1836, 7
    %v1838 = vsub.s32 0, %v1837
    %v1839 = vrot.slane %v1478, %v1838
    %v1840 = vlaneseq
    %v1841 = vshrl.u32 %v1840, 7
    %v1842 = vsub.s32 1, %v1841
    %v1843 = vrot.slane %v1478, %v1842
    %v1846 = vmul.f32 %v1831, %v1839
    %v1847 = vmul.f32 %v1833, %v1843
    %v1850 = vrot.slane %v1846, 4
    %v1851 = vrot.slane %v1847, 4
    %v1854 = vmul.f32 %v1831, %v1850
    %v1855 = vmul.f32 %v1833, %v1851
    %v1857 = vlaneseq
    %v1858 = vshrl.u32 %v1857, 7
    %v1859 = vsub.s32 0, %v1858
    %v1860 = vrot.slane %v1479, %v1859
    %v1861 = vlaneseq
    %v1862 = vshrl.u32 %v1861, 7
    %v1863 = vsub.s32 1, %v1862
    %v1864 = vrot.slane %v1479, %v1863
    %v1867 = vsub.f32 %v1860, %v1854
    %v1868 = vsub.f32 %v1864, %v1855
    %v1869 = vcombine.high %v1846, %v1847
    %v1871 = vunpack.c.l.s4 1966171168
    %v1872 = vunpack.c.0.s8 %v1871
    %v1873 = vlaneseq
    %v1874 = vshrl.u32 %v1873, 7
    %v1875 = vsub.s32 %v1872, %v1874
    %v1876 = vrot.slane %v1869, %v1875
    %v1877 = vcombine.high %v1876, %v1876
    %v1879 = vunpack.c.l.s4 1966171168
    %v1880 = vunpack.c.0.s8 %v1879
    %v1881 = vlaneseq
    %v1882 = vshrl.u32 %v1881, 7
    %v1883 = vsub.s32 %v1880, %v1882
    %v1884 = vrot.slane %v1876, %v1883
    %v1886 = vunpack.c.l.s4 1966171168
    %v1887 = vunpack.c.0.s8 %v1886
    %v1888 = vlaneseq
    %v1889 = vshrl.u32 %v1888, 7
    %v1890 = vsub.s32 %v1887, %v1889
    %v1891 = vrot.slane %v1877, %v1890
    %v1892 = vcombine.high %v1884, %v1884
    %v1893 = vcombine.high %v1891, %v1891
    %v1894 = vlaneseq
    %v1895 = vshrl.u32 %v1894, 7
    %v1896 = vsub.s32 0, %v1895
    %v1897 = vrot.slane %v1884, %v1896
    %v1898 = vlaneseq
    %v1899 = vshrl.u32 %v1898, 7
    %v1900 = vsub.s32 1, %v1899
    %v1901 = vrot.slane %v1884, %v1900
    %v1902 = vlaneseq
    %v1903 = vshrl.u32 %v1902, 7
    %v1904 = vsub.s32 0, %v1903
    %v1905 = vrot.slane %v1891, %v1904
    %v1906 = vlaneseq
    %v1907 = vshrl.u32 %v1906, 7
    %v1908 = vsub.s32 1, %v1907
    %v1909 = vrot.slane %v1891, %v1908
    %v1910 = vlaneseq
    %v1911 = vshrl.u32 %v1910, 7
    %v1912 = vsub.s32 0, %v1911
    %v1913 = vrot.slane %v1892, %v1912
    %v1914 = vlaneseq
    %v1915 = vshrl.u32 %v1914, 7
    %v1916 = vsub.s32 1, %v1915
    %v1917 = vrot.slane %v1892, %v1916
    %v1918 = vlaneseq
    %v1919 = vshrl.u32 %v1918, 7
    %v1920 = vsub.s32 0, %v1919
    %v1921 = vrot.slane %v1893, %v1920
    %v1922 = vlaneseq
    %v1923 = vshrl.u32 %v1922, 7
    %v1924 = vsub.s32 1, %v1923
    %v1925 = vrot.slane %v1893, %v1924
    %v1934 = vmul.f32 %v1462, %v1897
    %v1935 = vmul.f32 %v1463, %v1901
    %v1936 = vmul.f32 %v1464, %v1897
    %v1937 = vmul.f32 %v1465, %v1901
    %v1938 = vmul.f32 %v1466, %v1905
    %v1939 = vmul.f32 %v1467, %v1909
    %v1940 = vmul.f32 %v1468, %v1905
    %v1941 = vmul.f32 %v1469, %v1909
    %v1942 = vmul.f32 %v1470, %v1913
    %v1943 = vmul.f32 %v1471, %v1917
    %v1944 = vmul.f32 %v1472, %v1913
    %v1945 = vmul.f32 %v1473, %v1917
    %v1946 = vmul.f32 %v1474, %v1921
    %v1947 = vmul.f32 %v1475, %v1925
    %v1948 = vmul.f32 %v1476, %v1921
    %v1949 = vmul.f32 %v1477, %v1925
    %v1952 = vcombine.low %v1867, %v1868
    %v1954 = vunpack.c.l.s4 1966171168
    %v1955 = vunpack.c.0.s8 %v1954
    %v1956 = vlaneseq
    %v1957 = vshrl.u32 %v1956, 7
    %v1958 = vsub.s32 %v1955, %v1957
    %v1959 = vrot.slane %v1952, %v1958
    %v1960 = vcombine.high %v1959, %v1959
    %v1962 = vunpack.c.l.s4 1966171168
    %v1963 = vunpack.c.0.s8 %v1962
    %v1964 = vlaneseq
    %v1965 = vshrl.u32 %v1964, 7
    %v1966 = vsub.s32 %v1963, %v1965
    %v1967 = vrot.slane %v1959, %v1966
    %v1969 = vunpack.c.l.s4 1966171168
    %v1970 = vunpack.c.0.s8 %v1969
    %v1971 = vlaneseq
    %v1972 = vshrl.u32 %v1971, 7
    %v1973 = vsub.s32 %v1970, %v1972
    %v1974 = vrot.slane %v1960, %v1973
    %v1975 = vcombine.high %v1967, %v1967
    %v1976 = vcombine.high %v1974, %v1974
    %v1977 = vlaneseq
    %v1978 = vshrl.u32 %v1977, 7
    %v1979 = vsub.s32 0, %v1978
    %v1980 = vrot.slane %v1967, %v1979
    %v1981 = vlaneseq
    %v1982 = vshrl.u32 %v1981, 7
    %v1983 = vsub.s32 1, %v1982
    %v1984 = vrot.slane %v1967, %v1983
    %v1985 = vlaneseq
    %v1986 = vshrl.u32 %v1985, 7
    %v1987 = vsub.s32 0, %v1986
    %v1988 = vrot.slane %v1974, %v1987
    %v1989 = vlaneseq
    %v1990 = vshrl.u32 %v1989, 7
    %v1991 = vsub.s32 1, %v1990
    %v1992 = vrot.slane %v1974, %v1991
    %v1993 = vlaneseq
    %v1994 = vshrl.u32 %v1993, 7
    %v1995 = vsub.s32 0, %v1994
    %v1996 = vrot.slane %v1975, %v1995
    %v1997 = vlaneseq
    %v1998 = vshrl.u32 %v1997, 7
    %v1999 = vsub.s32 1, %v1998
    %v2000 = vrot.slane %v1975, %v1999
    %v2001 = vlaneseq
    %v2002 = vshrl.u32 %v2001, 7
    %v2003 = vsub.s32 0, %v2002
    %v2004 = vrot.slane %v1976, %v2003
    %v2005 = vlaneseq
    %v2006 = vshrl.u32 %v2005, 7
    %v2007 = vsub.s32 1, %v2006
    %v2008 = vrot.slane %v1976, %v2007
    %v2017 = vadd.f32 %v1934, %v1980
    %v2018 = vadd.f32 %v1935, %v1984
    %v2019 = vadd.f32 %v1936, %v1980
    %v2020 = vadd.f32 %v1937, %v1984
    %v2021 = vadd.f32 %v1938, %v1988
    %v2022 = vadd.f32 %v1939, %v1992
    %v2023 = vadd.f32 %v1940, %v1988
    %v2024 = vadd.f32 %v1941, %v1992
    %v2025 = vadd.f32 %v1942, %v1996
    %v2026 = vadd.f32 %v1943, %v2000
    %v2027 = vadd.f32 %v1944, %v1996
    %v2028 = vadd.f32 %v1945, %v2000
    %v2029 = vadd.f32 %v1946, %v2004
    %v2030 = vadd.f32 %v1947, %v2008
    %v2031 = vadd.f32 %v1948, %v2004
    %v2032 = vadd.f32 %v1949, %v2008
    %v2033 = vxor.u32 %v2017, 2147483648
    %v2034 = vxor.u32 %v2018, 2147483648
    %v2035 = vxor.u32 %v2019, 2147483648
    %v2036 = vxor.u32 %v2020, 2147483648
    %v2037 = vxor.u32 %v2021, 2147483648
    %v2038 = vxor.u32 %v2022, 2147483648
    %v2039 = vxor.u32 %v2023, 2147483648
    %v2040 = vxor.u32 %v2024, 2147483648
    %v2041 = vxor.u32 %v2025, 2147483648
    %v2042 = vxor.u32 %v2026, 2147483648
    %v2043 = vxor.u32 %v2027, 2147483648
    %v2044 = vxor.u32 %v2028, 2147483648
    %v2045 = vxor.u32 %v2029, 2147483648
    %v2046 = vxor.u32 %v2030, 2147483648
    %v2047 = vxor.u32 %v2031, 2147483648
    %v2048 = vxor.u32 %v2032, 2147483648
    %v2049 = vmul.f32 %v2033, 1.442695
    %v2050 = vpow.pop %v2049
    %v2051 = vmul.f32 %v2034, 1.442695
    %v2052 = vpow.pop %v2051
    %v2053 = vmul.f32 %v2035, 1.442695
    %v2054 = vpow.pop %v2053
    %v2055 = vmul.f32 %v2036, 1.442695
    %v2056 = vpow.pop %v2055
    %v2057 = vmul.f32 %v2037, 1.442695
    %v2058 = vpow.pop %v2057
    %v2059 = vmul.f32 %v2038, 1.442695
    %v2060 = vpow.pop %v2059
    %v2061 = vmul.f32 %v2039, 1.442695
    %v2062 = vpow.pop %v2061
    %v2063 = vmul.f32 %v2040, 1.442695
    %v2064 = vpow.pop %v2063
    %v2065 = vmul.f32 %v2041, 1.442695
    %v2066 = vpow.pop %v2065
    %v2067 = vmul.f32 %v2042, 1.442695
    %v2068 = vpow.pop %v2067
    %v2069 = vmul.f32 %v2043, 1.442695
    %v2070 = vpow.pop %v2069
    %v2071 = vmul.f32 %v2044, 1.442695
    %v2072 = vpow.pop %v2071
    %v2073 = vmul.f32 %v2045, 1.442695
    %v2074 = vpow.pop %v2073
    %v2075 = vmul.f32 %v2046, 1.442695
    %v2076 = vpow.pop %v2075
    %v2077 = vmul.f32 %v2047, 1.442695
    %v2078 = vpow.pop %v2077
    %v2079 = vmul.f32 %v2048, 1.442695
    %v2080 = vpow.pop %v2079
    %v2081 = vadd.f32 %v2050, 1.0
    %v2082 = vadd.f32 %v2052, 1.0
    %v2083 = vadd.f32 %v2054, 1.0
    %v2084 = vadd.f32 %v2056, 1.0
    %v2085 = vadd.f32 %v2058, 1.0
    %v2086 = vadd.f32 %v2060, 1.0
    %v2087 = vadd.f32 %v2062, 1.0
    %v2088 = vadd.f32 %v2064, 1.0
    %v2089 = vadd.f32 %v2066, 1.0
    %v2090 = vadd.f32 %v2068, 1.0
    %v2091 = vadd.f32 %v2070, 1.0
    %v2092 = vadd.f32 %v2072, 1.0
    %v2093 = vadd.f32 %v2074, 1.0
    %v2094 = vadd.f32 %v2076, 1.0
    %v2095 = vadd.f32 %v2078, 1.0
    %v2096 = vadd.f32 %v2080, 1.0
    %v2097 = vrcp.pop %v2081
    %v2098 = vmul.f32 1.0, %v2097
    %v2099 = vrcp.pop %v2082
    %v2100 = vmul.f32 1.0, %v2099
    %v2101 = vrcp.pop %v2083
    %v2102 = vmul.f32 1.0, %v2101
    %v2103 = vrcp.pop %v2084
    %v2104 = vmul.f32 1.0, %v2103
    %v2105 = vrcp.pop %v2085
    %v2106 = vmul.f32 1.0, %v2105
    %v2107 = vrcp.pop %v2086
    %v2108 = vmul.f32 1.0, %v2107
    %v2109 = vrcp.pop %v2087
    %v2110 = vmul.f32 1.0, %v2109
    %v2111 = vrcp.pop %v2088
    %v2112 = vmul.f32 1.0, %v2111
    %v2113 = vrcp.pop %v2089
    %v2114 = vmul.f32 1.0, %v2113
    %v2115 = vrcp.pop %v2090
    %v2116 = vmul.f32 1.0, %v2115
    %v2117 = vrcp.pop %v2091
    %v2118 = vmul.f32 1.0, %v2117
    %v2119 = vrcp.pop %v2092
    %v2120 = vmul.f32 1.0, %v2119
    %v2121 = vrcp.pop %v2093
    %v2122 = vmul.f32 1.0, %v2121
    %v2123 = vrcp.pop %v2094
    %v2124 = vmul.f32 1.0, %v2123
    %v2125 = vrcp.pop %v2095
    %v2126 = vmul.f32 1.0, %v2125
    %v2127 = vrcp.pop %v2096
    %v2128 = vmul.f32 1.0, %v2127
    %v2129 = vmul.f32 %v2017, %v2098
    %v2130 = vmul.f32 %v2018, %v2100
    %v2131 = vmul.f32 %v2019, %v2102
    %v2132 = vmul.f32 %v2020, %v2104
    %v2133 = vmul.f32 %v2021, %v2106
    %v2134 = vmul.f32 %v2022, %v2108
    %v2135 = vmul.f32 %v2023, %v2110
    %v2136 = vmul.f32 %v2024, %v2112
    %v2137 = vmul.f32 %v2025, %v2114
    %v2138 = vmul.f32 %v2026, %v2116
    %v2139 = vmul.f32 %v2027, %v2118
    %v2140 = vmul.f32 %v2028, %v2120
    %v2141 = vmul.f32 %v2029, %v2122
    %v2142 = vmul.f32 %v2030, %v2124
    %v2143 = vmul.f32 %v2031, %v2126
    %v2144 = vmul.f32 %v2032, %v2128
    %v2145 = vpack.c.bf16 %v2131, %v2129
    %v2146 = vpack.c.bf16 %v2132, %v2130
    %v2147 = vpack.c.bf16 %v2135, %v2133
    %v2148 = vpack.c.bf16 %v2136, %v2134
    %v2149 = vpack.c.bf16 %v2139, %v2137
    %v2150 = vpack.c.bf16 %v2140, %v2138
    %v2151 = vpack.c.bf16 %v2143, %v2141
    %v2152 = vpack.c.bf16 %v2144, %v2142
    %v2154 = vshrl.u32 %v2145, 16
    %v2156 = vrot.slane %v2154, 7
    %v2157 = vshll.u32 %v2145, 16
    %v2159 = vor.u32 %v2156, %v2157
    %v2161 = vshrl.u32 %v2146, 16
    %v2163 = vrot.slane %v2161, 7
    %v2164 = vshll.u32 %v2146, 16
    %v2166 = vor.u32 %v2163, %v2164
    %v2168 = vshrl.u32 %v2147, 16
    %v2170 = vrot.slane %v2168, 7
    %v2171 = vshll.u32 %v2147, 16
    %v2173 = vor.u32 %v2170, %v2171
    %v2175 = vshrl.u32 %v2148, 16
    %v2177 = vrot.slane %v2175, 7
    %v2178 = vshll.u32 %v2148, 16
    %v2180 = vor.u32 %v2177, %v2178
    %v2182 = vshrl.u32 %v2149, 16
    %v2184 = vrot.slane %v2182, 7
    %v2185 = vshll.u32 %v2149, 16
    %v2187 = vor.u32 %v2184, %v2185
    %v2189 = vshrl.u32 %v2150, 16
    %v2191 = vrot.slane %v2189, 7
    %v2192 = vshll.u32 %v2150, 16
    %v2194 = vor.u32 %v2191, %v2192
    %v2196 = vshrl.u32 %v2151, 16
    %v2198 = vrot.slane %v2196, 7
    %v2199 = vshll.u32 %v2151, 16
    %v2201 = vor.u32 %v2198, %v2199
    %v2203 = vshrl.u32 %v2152, 16
    %v2205 = vrot.slane %v2203, 7
    %v2206 = vshll.u32 %v2152, 16
    %v2208 = vor.u32 %v2205, %v2206
    %v2217 = vsel %vm663, 0, %v2159
    %v2218 = vsel %vm663, 0, %v2166
    %v2219 = vsel %vm663, 0, %v2173
    %v2220 = vsel %vm663, 0, %v2180
    %v2221 = vsel %vm663, 0, %v2187
    %v2222 = vsel %vm663, 0, %v2194
    %v2223 = vsel %vm663, 0, %v2201
    %v2224 = vsel %vm663, 0, %v2208
    %v2225 = vrot.slane %v2157, 1
    %v2226 = vor.u32 %v2154, %v2225
    %v2227 = vrot.slane %v2164, 1
    %v2228 = vor.u32 %v2161, %v2227
    %v2229 = vrot.slane %v2171, 1
    %v2230 = vor.u32 %v2168, %v2229
    %v2231 = vrot.slane %v2178, 1
    %v2232 = vor.u32 %v2175, %v2231
    %v2233 = vrot.slane %v2185, 1
    %v2234 = vor.u32 %v2182, %v2233
    %v2235 = vrot.slane %v2192, 1
    %v2236 = vor.u32 %v2189, %v2235
    %v2237 = vrot.slane %v2199, 1
    %v2238 = vor.u32 %v2196, %v2237
    %v2239 = vrot.slane %v2206, 1
    %v2240 = vor.u32 %v2203, %v2239
    %v2249 = vsel %vm682, %v2226, 0
    %v2250 = vsel %vm682, %v2228, 0
    %v2251 = vsel %vm682, %v2230, 0
    %v2252 = vsel %vm682, %v2232, 0
    %v2253 = vsel %vm682, %v2234, 0
    %v2254 = vsel %vm682, %v2236, 0
    %v2255 = vsel %vm682, %v2238, 0
    %v2256 = vsel %vm682, %v2240, 0
    %v2257 = vld [vmem:[#allocation14] sm:$0xff]
    %v2258 = vld [vmem:[#allocation14 + $0x8] sm:$0xff]
    %v2259 = vld [vmem:[#allocation14 + $0x10] sm:$0xff]
    %v2260 = vld [vmem:[#allocation14 + $0x18] sm:$0xff]
    %v2261 = vld [vmem:[#allocation14 + $0x20] sm:$0xff]
    %v2262 = vld [vmem:[#allocation14 + $0x28] sm:$0xff]
    %v2263 = vld [vmem:[#allocation14 + $0x30] sm:$0xff]
    %v2264 = vld [vmem:[#allocation14 + $0x38] sm:$0xff]
    %v2265 = vld [vmem:[#allocation14 + $0x40] sm:$0xff]
    %v2266 = vld [vmem:[#allocation14 + $0x48] sm:$0xff]
    %v2267 = vld [vmem:[#allocation14 + $0x50] sm:$0xff]
    %v2268 = vld [vmem:[#allocation14 + $0x58] sm:$0xff]
    %v2269 = vld [vmem:[#allocation14 + $0x60] sm:$0xff]
    %v2270 = vld [vmem:[#allocation14 + $0x68] sm:$0xff]
    %v2271 = vld [vmem:[#allocation14 + $0x70] sm:$0xff]
    %v2272 = vld [vmem:[#allocation14 + $0x78] sm:$0xff]
    %v2273 = vld [vmem:[#allocation14 + $0x80] sm:$0xff]
    %v2274 = vld [vmem:[#allocation14 + $0x88] sm:$0xff]
    %v2275 = vld [vmem:[#allocation14 + $0x90] sm:$0xff]
    %v2276 = vld [vmem:[#allocation14 + $0x98] sm:$0xff]
    %v2277 = vld [vmem:[#allocation14 + $0xa0] sm:$0xff]
    %v2278 = vld [vmem:[#allocation14 + $0xa8] sm:$0xff]
    %v2279 = vld [vmem:[#allocation14 + $0xb0] sm:$0xff]
    %v2280 = vld [vmem:[#allocation14 + $0xb8] sm:$0xff]
    %v2281 = vld [vmem:[#allocation14 + $0xc0] sm:$0xff]
    %v2282 = vld [vmem:[#allocation14 + $0xc8] sm:$0xff]
    %v2283 = vld [vmem:[#allocation14 + $0xd0] sm:$0xff]
    %v2284 = vld [vmem:[#allocation14 + $0xd8] sm:$0xff]
    %v2285 = vld [vmem:[#allocation14 + $0xe0] sm:$0xff]
    %v2286 = vld [vmem:[#allocation14 + $0xe8] sm:$0xff]
    %v2287 = vld [vmem:[#allocation14 + $0xf0] sm:$0xff]
    %v2288 = vld [vmem:[#allocation14 + $0xf8] sm:$0xff]
    %s2289 = scalar_lea.vmem [#allocation14], 256
    %v2290 = vld [vmem:[%s2289] sm:$0xff]
    %v2291 = vld [vmem:[%s2289 + $0x8] sm:$0xff]
    %v2292 = vld [vmem:[%s2289 + $0x10] sm:$0xff]
    %v2293 = vld [vmem:[%s2289 + $0x18] sm:$0xff]
    %v2294 = vld [vmem:[%s2289 + $0x20] sm:$0xff]
    %v2295 = vld [vmem:[%s2289 + $0x28] sm:$0xff]
    %v2296 = vld [vmem:[%s2289 + $0x30] sm:$0xff]
    %v2297 = vld [vmem:[%s2289 + $0x38] sm:$0xff]
    %v2298 = vld [vmem:[%s2289 + $0x40] sm:$0xff]
    %v2299 = vld [vmem:[%s2289 + $0x48] sm:$0xff]
    %v2300 = vld [vmem:[%s2289 + $0x50] sm:$0xff]
    %v2301 = vld [vmem:[%s2289 + $0x58] sm:$0xff]
    %v2302 = vld [vmem:[%s2289 + $0x60] sm:$0xff]
    %v2303 = vld [vmem:[%s2289 + $0x68] sm:$0xff]
    %v2304 = vld [vmem:[%s2289 + $0x70] sm:$0xff]
    %v2305 = vld [vmem:[%s2289 + $0x78] sm:$0xff]
    %v2306 = vld [vmem:[%s2289 + $0x80] sm:$0xff]
    %v2307 = vld [vmem:[%s2289 + $0x88] sm:$0xff]
    %v2308 = vld [vmem:[%s2289 + $0x90] sm:$0xff]
    %v2309 = vld [vmem:[%s2289 + $0x98] sm:$0xff]
    %v2310 = vld [vmem:[%s2289 + $0xa0] sm:$0xff]
    %v2311 = vld [vmem:[%s2289 + $0xa8] sm:$0xff]
    %v2312 = vld [vmem:[%s2289 + $0xb0] sm:$0xff]
    %v2313 = vld [vmem:[%s2289 + $0xb8] sm:$0xff]
    %v2314 = vld [vmem:[%s2289 + $0xc0] sm:$0xff]
    %v2315 = vld [vmem:[%s2289 + $0xc8] sm:$0xff]
    %v2316 = vld [vmem:[%s2289 + $0xd0] sm:$0xff]
    %v2317 = vld [vmem:[%s2289 + $0xd8] sm:$0xff]
    %v2318 = vld [vmem:[%s2289 + $0xe0] sm:$0xff]
    %v2319 = vld [vmem:[%s2289 + $0xe8] sm:$0xff]
    %v2320 = vld [vmem:[%s2289 + $0xf0] sm:$0xff]
    %v2321 = vld [vmem:[%s2289 + $0xf8] sm:$0xff]
    %v2354 = vunpack.c.l.b16 %v2290
    %v2355 = vunpack.c.h.b16 %v2290
    %v2356 = vunpack.c.l.b16 %v2291
    %v2357 = vunpack.c.h.b16 %v2291
    %v2358 = vunpack.c.l.b16 %v2292
    %v2359 = vunpack.c.h.b16 %v2292
    %v2360 = vunpack.c.l.b16 %v2293
    %v2361 = vunpack.c.h.b16 %v2293
    %v2362 = vunpack.c.l.b16 %v2294
    %v2363 = vunpack.c.h.b16 %v2294
    %v2364 = vunpack.c.l.b16 %v2295
    %v2365 = vunpack.c.h.b16 %v2295
    %v2366 = vunpack.c.l.b16 %v2296
    %v2367 = vunpack.c.h.b16 %v2296
    %v2368 = vunpack.c.l.b16 %v2297
    %v2369 = vunpack.c.h.b16 %v2297
    %v2370 = vunpack.c.l.b16 %v2298
    %v2371 = vunpack.c.h.b16 %v2298
    %v2372 = vunpack.c.l.b16 %v2299
    %v2373 = vunpack.c.h.b16 %v2299
    %v2374 = vunpack.c.l.b16 %v2300
    %v2375 = vunpack.c.h.b16 %v2300
    %v2376 = vunpack.c.l.b16 %v2301
    %v2377 = vunpack.c.h.b16 %v2301
    %v2378 = vunpack.c.l.b16 %v2302
    %v2379 = vunpack.c.h.b16 %v2302
    %v2380 = vunpack.c.l.b16 %v2303
    %v2381 = vunpack.c.h.b16 %v2303
    %v2382 = vunpack.c.l.b16 %v2304
    %v2383 = vunpack.c.h.b16 %v2304
    %v2384 = vunpack.c.l.b16 %v2305
    %v2385 = vunpack.c.h.b16 %v2305
    %v2386 = vunpack.c.l.b16 %v2306
    %v2387 = vunpack.c.h.b16 %v2306
    %v2388 = vunpack.c.l.b16 %v2307
    %v2389 = vunpack.c.h.b16 %v2307
    %v2390 = vunpack.c.l.b16 %v2308
    %v2391 = vunpack.c.h.b16 %v2308
    %v2392 = vunpack.c.l.b16 %v2309
    %v2393 = vunpack.c.h.b16 %v2309
    %v2394 = vunpack.c.l.b16 %v2310
    %v2395 = vunpack.c.h.b16 %v2310
    %v2396 = vunpack.c.l.b16 %v2311
    %v2397 = vunpack.c.h.b16 %v2311
    %v2398 = vunpack.c.l.b16 %v2312
    %v2399 = vunpack.c.h.b16 %v2312
    %v2400 = vunpack.c.l.b16 %v2313
    %v2401 = vunpack.c.h.b16 %v2313
    %v2402 = vunpack.c.l.b16 %v2314
    %v2403 = vunpack.c.h.b16 %v2314
    %v2404 = vunpack.c.l.b16 %v2315
    %v2405 = vunpack.c.h.b16 %v2315
    %v2406 = vunpack.c.l.b16 %v2316
    %v2407 = vunpack.c.h.b16 %v2316
    %v2408 = vunpack.c.l.b16 %v2317
    %v2409 = vunpack.c.h.b16 %v2317
    %v2410 = vunpack.c.l.b16 %v2318
    %v2411 = vunpack.c.h.b16 %v2318
    %v2412 = vunpack.c.l.b16 %v2319
    %v2413 = vunpack.c.h.b16 %v2319
    %v2414 = vunpack.c.l.b16 %v2320
    %v2415 = vunpack.c.h.b16 %v2320
    %v2416 = vunpack.c.l.b16 %v2321
    %v2417 = vunpack.c.h.b16 %v2321
    %v2418 = vpack.c.b16 %v2356, %v2354
    %v2419 = vpack.c.b16 %v2357, %v2355
    %v2420 = vpack.c.b16 %v2360, %v2358
    %v2421 = vpack.c.b16 %v2361, %v2359
    %v2422 = vpack.c.b16 %v2364, %v2362
    %v2423 = vpack.c.b16 %v2365, %v2363
    %v2424 = vpack.c.b16 %v2368, %v2366
    %v2425 = vpack.c.b16 %v2369, %v2367
    %v2426 = vpack.c.b16 %v2372, %v2370
    %v2427 = vpack.c.b16 %v2373, %v2371
    %v2428 = vpack.c.b16 %v2376, %v2374
    %v2429 = vpack.c.b16 %v2377, %v2375
    %v2430 = vpack.c.b16 %v2380, %v2378
    %v2431 = vpack.c.b16 %v2381, %v2379
    %v2432 = vpack.c.b16 %v2384, %v2382
    %v2433 = vpack.c.b16 %v2385, %v2383
    %v2434 = vpack.c.b16 %v2388, %v2386
    %v2435 = vpack.c.b16 %v2389, %v2387
    %v2436 = vpack.c.b16 %v2392, %v2390
    %v2437 = vpack.c.b16 %v2393, %v2391
    %v2438 = vpack.c.b16 %v2396, %v2394
    %v2439 = vpack.c.b16 %v2397, %v2395
    %v2440 = vpack.c.b16 %v2400, %v2398
    %v2441 = vpack.c.b16 %v2401, %v2399
    %v2442 = vpack.c.b16 %v2404, %v2402
    %v2443 = vpack.c.b16 %v2405, %v2403
    %v2444 = vpack.c.b16 %v2408, %v2406
    %v2445 = vpack.c.b16 %v2409, %v2407
    %v2446 = vpack.c.b16 %v2412, %v2410
    %v2447 = vpack.c.b16 %v2413, %v2411
    %v2448 = vpack.c.b16 %v2416, %v2414
    %v2449 = vpack.c.b16 %v2417, %v2415
    %2482 = vmatprep.subr.bf16.mxu0 %v2433
    %2483 = vmatpush1.bf16.msra.mxu0 %v2432
    %2484 = vmatprep.subr.bf16.mxu0 %v2431
    %2485 = vmatpush1.bf16.msra.mxu0 %v2430
    %2486 = vmatprep.subr.bf16.mxu0 %v2429
    %2487 = vmatpush1.bf16.msra.mxu0 %v2428
    %2488 = vmatprep.subr.bf16.mxu0 %v2427
    %2489 = vmatpush1.bf16.msra.mxu0 %v2426
    %2490 = vmatprep.subr.bf16.mxu0 %v2425
    %2491 = vmatpush1.bf16.msra.mxu0 %v2424
    %2492 = vmatprep.subr.bf16.mxu0 %v2423
    %2493 = vmatpush1.bf16.msra.mxu0 %v2422
    %2494 = vmatprep.subr.bf16.mxu0 %v2421
    %2495 = vmatpush1.bf16.msra.mxu0 %v2420
    %2496 = vmatprep.subr.bf16.mxu0 %v2419
    %2497 = vmatpush1.bf16.msra.mxu0 %v2418
    %2498 = vmatprep.subr.bf16.mxu0 %v2449
    %2499 = vmatpush2.bf16.msra.mxu0 %v2448
    %2500 = vmatprep.subr.bf16.mxu0 %v2447
    %2501 = vmatpush2.bf16.msra.mxu0 %v2446
    %2502 = vmatprep.subr.bf16.mxu0 %v2445
    %2503 = vmatpush2.bf16.msra.mxu0 %v2444
    %2504 = vmatprep.subr.bf16.mxu0 %v2443
    %2505 = vmatpush2.bf16.msra.mxu0 %v2442
    %2506 = vmatprep.subr.bf16.mxu0 %v2441
    %2507 = vmatpush2.bf16.msra.mxu0 %v2440
    %2508 = vmatprep.subr.bf16.mxu0 %v2439
    %2509 = vmatpush2.bf16.msra.mxu0 %v2438
    %2510 = vmatprep.subr.bf16.mxu0 %v2437
    %2511 = vmatpush2.bf16.msra.mxu0 %v2436
    %2512 = vmatprep.subr.bf16.mxu0 %v2435
    %2513 = vmatpush2.bf16.msra.mxu0 %v2434
    %2514 = vmatprep.mubr.bf16.mxu0 %v2146
    %2515 = vmatmul.mubr.bf16.gmra.mxu0 %v2145
    %v2516 = vpop.f32.mrf.mxu0
    %v2517 = vadd.f32 0.0, %v2516
    %v2518 = vpop.f32.mrf.mxu0
    %v2519 = vadd.f32 0.0, %v2518
    %v2520 = vpop.f32.mrf.mxu0
    %v2521 = vadd.f32 0.0, %v2520
    %v2522 = vpop.f32.mrf.mxu0
    %v2523 = vadd.f32 0.0, %v2522
    %2524 = vmatprep.mubr.bf16.mxu0 %v2148
    %2525 = vmatmul.mubr.bf16.gmra.mxu0 %v2147
    %v2526 = vpop.f32.mrf.mxu0
    %v2527 = vadd.f32 0.0, %v2526
    %v2528 = vpop.f32.mrf.mxu0
    %v2529 = vadd.f32 0.0, %v2528
    %v2530 = vpop.f32.mrf.mxu0
    %v2531 = vadd.f32 0.0, %v2530
    %v2532 = vpop.f32.mrf.mxu0
    %v2533 = vadd.f32 0.0, %v2532
    %2534 = vmatprep.mubr.bf16.mxu0 %v2150
    %2535 = vmatmul.mubr.bf16.gmra.mxu0 %v2149
    %v2536 = vpop.f32.mrf.mxu0
    %v2537 = vadd.f32 0.0, %v2536
    %v2538 = vpop.f32.mrf.mxu0
    %v2539 = vadd.f32 0.0, %v2538
    %v2540 = vpop.f32.mrf.mxu0
    %v2541 = vadd.f32 0.0, %v2540
    %v2542 = vpop.f32.mrf.mxu0
    %v2543 = vadd.f32 0.0, %v2542
    %2544 = vmatprep.mubr.bf16.mxu0 %v2152
    %2545 = vmatmul.mubr.bf16.gmra.mxu0 %v2151
    %v2546 = vpop.f32.mrf.mxu0
    %v2547 = vadd.f32 0.0, %v2546
    %v2548 = vpop.f32.mrf.mxu0
    %v2549 = vadd.f32 0.0, %v2548
    %v2550 = vpop.f32.mrf.mxu0
    %v2551 = vadd.f32 0.0, %v2550
    %v2552 = vpop.f32.mrf.mxu0
    %v2553 = vadd.f32 0.0, %v2552
    %2554 = vdwg.mxu0
    %v2587 = vunpack.c.l.b16 %v2257
    %v2588 = vunpack.c.h.b16 %v2257
    %v2589 = vunpack.c.l.b16 %v2258
    %v2590 = vunpack.c.h.b16 %v2258
    %v2591 = vunpack.c.l.b16 %v2259
    %v2592 = vunpack.c.h.b16 %v2259
    %v2593 = vunpack.c.l.b16 %v2260
    %v2594 = vunpack.c.h.b16 %v2260
    %v2595 = vunpack.c.l.b16 %v2261
    %v2596 = vunpack.c.h.b16 %v2261
    %v2597 = vunpack.c.l.b16 %v2262
    %v2598 = vunpack.c.h.b16 %v2262
    %v2599 = vunpack.c.l.b16 %v2263
    %v2600 = vunpack.c.h.b16 %v2263
    %v2601 = vunpack.c.l.b16 %v2264
    %v2602 = vunpack.c.h.b16 %v2264
    %v2603 = vunpack.c.l.b16 %v2265
    %v2604 = vunpack.c.h.b16 %v2265
    %v2605 = vunpack.c.l.b16 %v2266
    %v2606 = vunpack.c.h.b16 %v2266
    %v2607 = vunpack.c.l.b16 %v2267
    %v2608 = vunpack.c.h.b16 %v2267
    %v2609 = vunpack.c.l.b16 %v2268
    %v2610 = vunpack.c.h.b16 %v2268
    %v2611 = vunpack.c.l.b16 %v2269
    %v2612 = vunpack.c.h.b16 %v2269
    %v2613 = vunpack.c.l.b16 %v2270
    %v2614 = vunpack.c.h.b16 %v2270
    %v2615 = vunpack.c.l.b16 %v2271
    %v2616 = vunpack.c.h.b16 %v2271
    %v2617 = vunpack.c.l.b16 %v2272
    %v2618 = vunpack.c.h.b16 %v2272
    %v2619 = vunpack.c.l.b16 %v2273
    %v2620 = vunpack.c.h.b16 %v2273
    %v2621 = vunpack.c.l.b16 %v2274
    %v2622 = vunpack.c.h.b16 %v2274
    %v2623 = vunpack.c.l.b16 %v2275
    %v2624 = vunpack.c.h.b16 %v2275
    %v2625 = vunpack.c.l.b16 %v2276
    %v2626 = vunpack.c.h.b16 %v2276
    %v2627 = vunpack.c.l.b16 %v2277
    %v2628 = vunpack.c.h.b16 %v2277
    %v2629 = vunpack.c.l.b16 %v2278
    %v2630 = vunpack.c.h.b16 %v2278
    %v2631 = vunpack.c.l.b16 %v2279
    %v2632 = vunpack.c.h.b16 %v2279
    %v2633 = vunpack.c.l.b16 %v2280
    %v2634 = vunpack.c.h.b16 %v2280
    %v2635 = vunpack.c.l.b16 %v2281
    %v2636 = vunpack.c.h.b16 %v2281
    %v2637 = vunpack.c.l.b16 %v2282
    %v2638 = vunpack.c.h.b16 %v2282
    %v2639 = vunpack.c.l.b16 %v2283
    %v2640 = vunpack.c.h.b16 %v2283
    %v2641 = vunpack.c.l.b16 %v2284
    %v2642 = vunpack.c.h.b16 %v2284
    %v2643 = vunpack.c.l.b16 %v2285
    %v2644 = vunpack.c.h.b16 %v2285
    %v2645 = vunpack.c.l.b16 %v2286
    %v2646 = vunpack.c.h.b16 %v2286
    %v2647 = vunpack.c.l.b16 %v2287
    %v2648 = vunpack.c.h.b16 %v2287
    %v2649 = vunpack.c.l.b16 %v2288
    %v2650 = vunpack.c.h.b16 %v2288
    %v2651 = vpack.c.b16 %v2589, %v2587
    %v2652 = vpack.c.b16 %v2590, %v2588
    %v2653 = vpack.c.b16 %v2593, %v2591
    %v2654 = vpack.c.b16 %v2594, %v2592
    %v2655 = vpack.c.b16 %v2597, %v2595
    %v2656 = vpack.c.b16 %v2598, %v2596
    %v2657 = vpack.c.b16 %v2601, %v2599
    %v2658 = vpack.c.b16 %v2602, %v2600
    %v2659 = vpack.c.b16 %v2605, %v2603
    %v2660 = vpack.c.b16 %v2606, %v2604
    %v2661 = vpack.c.b16 %v2609, %v2607
    %v2662 = vpack.c.b16 %v2610, %v2608
    %v2663 = vpack.c.b16 %v2613, %v2611
    %v2664 = vpack.c.b16 %v2614, %v2612
    %v2665 = vpack.c.b16 %v2617, %v2615
    %v2666 = vpack.c.b16 %v2618, %v2616
    %v2667 = vpack.c.b16 %v2621, %v2619
    %v2668 = vpack.c.b16 %v2622, %v2620
    %v2669 = vpack.c.b16 %v2625, %v2623
    %v2670 = vpack.c.b16 %v2626, %v2624
    %v2671 = vpack.c.b16 %v2629, %v2627
    %v2672 = vpack.c.b16 %v2630, %v2628
    %v2673 = vpack.c.b16 %v2633, %v2631
    %v2674 = vpack.c.b16 %v2634, %v2632
    %v2675 = vpack.c.b16 %v2637, %v2635
    %v2676 = vpack.c.b16 %v2638, %v2636
    %v2677 = vpack.c.b16 %v2641, %v2639
    %v2678 = vpack.c.b16 %v2642, %v2640
    %v2679 = vpack.c.b16 %v2645, %v2643
    %v2680 = vpack.c.b16 %v2646, %v2644
    %v2681 = vpack.c.b16 %v2649, %v2647
    %v2682 = vpack.c.b16 %v2650, %v2648
    %2715 = vmatprep.subr.bf16.mxu0 %v2666
    %2716 = vmatpush1.bf16.msra.mxu0 %v2665
    %2717 = vmatprep.subr.bf16.mxu0 %v2664
    %2718 = vmatpush1.bf16.msra.mxu0 %v2663
    %2719 = vmatprep.subr.bf16.mxu0 %v2662
    %2720 = vmatpush1.bf16.msra.mxu0 %v2661
    %2721 = vmatprep.subr.bf16.mxu0 %v2660
    %2722 = vmatpush1.bf16.msra.mxu0 %v2659
    %2723 = vmatprep.subr.bf16.mxu0 %v2658
    %2724 = vmatpush1.bf16.msra.mxu0 %v2657
    %2725 = vmatprep.subr.bf16.mxu0 %v2656
    %2726 = vmatpush1.bf16.msra.mxu0 %v2655
    %2727 = vmatprep.subr.bf16.mxu0 %v2654
    %2728 = vmatpush1.bf16.msra.mxu0 %v2653
    %2729 = vmatprep.subr.bf16.mxu0 %v2652
    %2730 = vmatpush1.bf16.msra.mxu0 %v2651
    %2731 = vmatprep.subr.bf16.mxu0 %v2682
    %2732 = vmatpush2.bf16.msra.mxu0 %v2681
    %2733 = vmatprep.subr.bf16.mxu0 %v2680
    %2734 = vmatpush2.bf16.msra.mxu0 %v2679
    %2735 = vmatprep.subr.bf16.mxu0 %v2678
    %2736 = vmatpush2.bf16.msra.mxu0 %v2677
    %2737 = vmatprep.subr.bf16.mxu0 %v2676
    %2738 = vmatpush2.bf16.msra.mxu0 %v2675
    %2739 = vmatprep.subr.bf16.mxu0 %v2674
    %2740 = vmatpush2.bf16.msra.mxu0 %v2673
    %2741 = vmatprep.subr.bf16.mxu0 %v2672
    %2742 = vmatpush2.bf16.msra.mxu0 %v2671
    %2743 = vmatprep.subr.bf16.mxu0 %v2670
    %2744 = vmatpush2.bf16.msra.mxu0 %v2669
    %2745 = vmatprep.subr.bf16.mxu0 %v2668
    %2746 = vmatpush2.bf16.msra.mxu0 %v2667
    %2747 = vmatprep.mubr.bf16.mxu0 %v2218
    %2748 = vmatmul.mubr.bf16.gmra.mxu0 %v2217
    %v2749 = vpop.f32.mrf.mxu0
    %v2750 = vadd.f32 %v2517, %v2749
    %v2751 = vpop.f32.mrf.mxu0
    %v2752 = vadd.f32 %v2519, %v2751
    %v2753 = vpop.f32.mrf.mxu0
    %v2754 = vadd.f32 %v2521, %v2753
    %v2755 = vpop.f32.mrf.mxu0
    %v2756 = vadd.f32 %v2523, %v2755
    %2757 = vmatprep.mubr.bf16.mxu0 %v2220
    %2758 = vmatmul.mubr.bf16.gmra.mxu0 %v2219
    %v2759 = vpop.f32.mrf.mxu0
    %v2760 = vadd.f32 %v2527, %v2759
    %v2761 = vpop.f32.mrf.mxu0
    %v2762 = vadd.f32 %v2529, %v2761
    %v2763 = vpop.f32.mrf.mxu0
    %v2764 = vadd.f32 %v2531, %v2763
    %v2765 = vpop.f32.mrf.mxu0
    %v2766 = vadd.f32 %v2533, %v2765
    %2767 = vmatprep.mubr.bf16.mxu0 %v2222
    %2768 = vmatmul.mubr.bf16.gmra.mxu0 %v2221
    %v2769 = vpop.f32.mrf.mxu0
    %v2770 = vadd.f32 %v2537, %v2769
    %v2771 = vpop.f32.mrf.mxu0
    %v2772 = vadd.f32 %v2539, %v2771
    %v2773 = vpop.f32.mrf.mxu0
    %v2774 = vadd.f32 %v2541, %v2773
    %v2775 = vpop.f32.mrf.mxu0
    %v2776 = vadd.f32 %v2543, %v2775
    %2777 = vmatprep.mubr.bf16.mxu0 %v2224
    %2778 = vmatmul.mubr.bf16.gmra.mxu0 %v2223
    %v2779 = vpop.f32.mrf.mxu0
    %v2780 = vadd.f32 %v2547, %v2779
    %v2781 = vpop.f32.mrf.mxu0
    %v2782 = vadd.f32 %v2549, %v2781
    %v2783 = vpop.f32.mrf.mxu0
    %v2784 = vadd.f32 %v2551, %v2783
    %v2785 = vpop.f32.mrf.mxu0
    %v2786 = vadd.f32 %v2553, %v2785
    %2787 = vdwg.mxu0
    %s2788 = scalar_lea.vmem [#allocation14], 512
    %v2789 = vld [vmem:[%s2788] sm:$0xff]
    %v2790 = vld [vmem:[%s2788 + $0x8] sm:$0xff]
    %v2791 = vld [vmem:[%s2788 + $0x10] sm:$0xff]
    %v2792 = vld [vmem:[%s2788 + $0x18] sm:$0xff]
    %v2793 = vld [vmem:[%s2788 + $0x20] sm:$0xff]
    %v2794 = vld [vmem:[%s2788 + $0x28] sm:$0xff]
    %v2795 = vld [vmem:[%s2788 + $0x30] sm:$0xff]
    %v2796 = vld [vmem:[%s2788 + $0x38] sm:$0xff]
    %v2797 = vld [vmem:[%s2788 + $0x40] sm:$0xff]
    %v2798 = vld [vmem:[%s2788 + $0x48] sm:$0xff]
    %v2799 = vld [vmem:[%s2788 + $0x50] sm:$0xff]
    %v2800 = vld [vmem:[%s2788 + $0x58] sm:$0xff]
    %v2801 = vld [vmem:[%s2788 + $0x60] sm:$0xff]
    %v2802 = vld [vmem:[%s2788 + $0x68] sm:$0xff]
    %v2803 = vld [vmem:[%s2788 + $0x70] sm:$0xff]
    %v2804 = vld [vmem:[%s2788 + $0x78] sm:$0xff]
    %v2805 = vld [vmem:[%s2788 + $0x80] sm:$0xff]
    %v2806 = vld [vmem:[%s2788 + $0x88] sm:$0xff]
    %v2807 = vld [vmem:[%s2788 + $0x90] sm:$0xff]
    %v2808 = vld [vmem:[%s2788 + $0x98] sm:$0xff]
    %v2809 = vld [vmem:[%s2788 + $0xa0] sm:$0xff]
    %v2810 = vld [vmem:[%s2788 + $0xa8] sm:$0xff]
    %v2811 = vld [vmem:[%s2788 + $0xb0] sm:$0xff]
    %v2812 = vld [vmem:[%s2788 + $0xb8] sm:$0xff]
    %v2813 = vld [vmem:[%s2788 + $0xc0] sm:$0xff]
    %v2814 = vld [vmem:[%s2788 + $0xc8] sm:$0xff]
    %v2815 = vld [vmem:[%s2788 + $0xd0] sm:$0xff]
    %v2816 = vld [vmem:[%s2788 + $0xd8] sm:$0xff]
    %v2817 = vld [vmem:[%s2788 + $0xe0] sm:$0xff]
    %v2818 = vld [vmem:[%s2788 + $0xe8] sm:$0xff]
    %v2819 = vld [vmem:[%s2788 + $0xf0] sm:$0xff]
    %v2820 = vld [vmem:[%s2788 + $0xf8] sm:$0xff]
    %v2853 = vunpack.c.l.b16 %v2789
    %v2854 = vunpack.c.h.b16 %v2789
    %v2855 = vunpack.c.l.b16 %v2790
    %v2856 = vunpack.c.h.b16 %v2790
    %v2857 = vunpack.c.l.b16 %v2791
    %v2858 = vunpack.c.h.b16 %v2791
    %v2859 = vunpack.c.l.b16 %v2792
    %v2860 = vunpack.c.h.b16 %v2792
    %v2861 = vunpack.c.l.b16 %v2793
    %v2862 = vunpack.c.h.b16 %v2793
    %v2863 = vunpack.c.l.b16 %v2794
    %v2864 = vunpack.c.h.b16 %v2794
    %v2865 = vunpack.c.l.b16 %v2795
    %v2866 = vunpack.c.h.b16 %v2795
    %v2867 = vunpack.c.l.b16 %v2796
    %v2868 = vunpack.c.h.b16 %v2796
    %v2869 = vunpack.c.l.b16 %v2797
    %v2870 = vunpack.c.h.b16 %v2797
    %v2871 = vunpack.c.l.b16 %v2798
    %v2872 = vunpack.c.h.b16 %v2798
    %v2873 = vunpack.c.l.b16 %v2799
    %v2874 = vunpack.c.h.b16 %v2799
    %v2875 = vunpack.c.l.b16 %v2800
    %v2876 = vunpack.c.h.b16 %v2800
    %v2877 = vunpack.c.l.b16 %v2801
    %v2878 = vunpack.c.h.b16 %v2801
    %v2879 = vunpack.c.l.b16 %v2802
    %v2880 = vunpack.c.h.b16 %v2802
    %v2881 = vunpack.c.l.b16 %v2803
    %v2882 = vunpack.c.h.b16 %v2803
    %v2883 = vunpack.c.l.b16 %v2804
    %v2884 = vunpack.c.h.b16 %v2804
    %v2885 = vunpack.c.l.b16 %v2805
    %v2886 = vunpack.c.h.b16 %v2805
    %v2887 = vunpack.c.l.b16 %v2806
    %v2888 = vunpack.c.h.b16 %v2806
    %v2889 = vunpack.c.l.b16 %v2807
    %v2890 = vunpack.c.h.b16 %v2807
    %v2891 = vunpack.c.l.b16 %v2808
    %v2892 = vunpack.c.h.b16 %v2808
    %v2893 = vunpack.c.l.b16 %v2809
    %v2894 = vunpack.c.h.b16 %v2809
    %v2895 = vunpack.c.l.b16 %v2810
    %v2896 = vunpack.c.h.b16 %v2810
    %v2897 = vunpack.c.l.b16 %v2811
    %v2898 = vunpack.c.h.b16 %v2811
    %v2899 = vunpack.c.l.b16 %v2812
    %v2900 = vunpack.c.h.b16 %v2812
    %v2901 = vunpack.c.l.b16 %v2813
    %v2902 = vunpack.c.h.b16 %v2813
    %v2903 = vunpack.c.l.b16 %v2814
    %v2904 = vunpack.c.h.b16 %v2814
    %v2905 = vunpack.c.l.b16 %v2815
    %v2906 = vunpack.c.h.b16 %v2815
    %v2907 = vunpack.c.l.b16 %v2816
    %v2908 = vunpack.c.h.b16 %v2816
    %v2909 = vunpack.c.l.b16 %v2817
    %v2910 = vunpack.c.h.b16 %v2817
    %v2911 = vunpack.c.l.b16 %v2818
    %v2912 = vunpack.c.h.b16 %v2818
    %v2913 = vunpack.c.l.b16 %v2819
    %v2914 = vunpack.c.h.b16 %v2819
    %v2915 = vunpack.c.l.b16 %v2820
    %v2916 = vunpack.c.h.b16 %v2820
    %v2917 = vpack.c.b16 %v2855, %v2853
    %v2918 = vpack.c.b16 %v2856, %v2854
    %v2919 = vpack.c.b16 %v2859, %v2857
    %v2920 = vpack.c.b16 %v2860, %v2858
    %v2921 = vpack.c.b16 %v2863, %v2861
    %v2922 = vpack.c.b16 %v2864, %v2862
    %v2923 = vpack.c.b16 %v2867, %v2865
    %v2924 = vpack.c.b16 %v2868, %v2866
    %v2925 = vpack.c.b16 %v2871, %v2869
    %v2926 = vpack.c.b16 %v2872, %v2870
    %v2927 = vpack.c.b16 %v2875, %v2873
    %v2928 = vpack.c.b16 %v2876, %v2874
    %v2929 = vpack.c.b16 %v2879, %v2877
    %v2930 = vpack.c.b16 %v2880, %v2878
    %v2931 = vpack.c.b16 %v2883, %v2881
    %v2932 = vpack.c.b16 %v2884, %v2882
    %v2933 = vpack.c.b16 %v2887, %v2885
    %v2934 = vpack.c.b16 %v2888, %v2886
    %v2935 = vpack.c.b16 %v2891, %v2889
    %v2936 = vpack.c.b16 %v2892, %v2890
    %v2937 = vpack.c.b16 %v2895, %v2893
    %v2938 = vpack.c.b16 %v2896, %v2894
    %v2939 = vpack.c.b16 %v2899, %v2897
    %v2940 = vpack.c.b16 %v2900, %v2898
    %v2941 = vpack.c.b16 %v2903, %v2901
    %v2942 = vpack.c.b16 %v2904, %v2902
    %v2943 = vpack.c.b16 %v2907, %v2905
    %v2944 = vpack.c.b16 %v2908, %v2906
    %v2945 = vpack.c.b16 %v2911, %v2909
    %v2946 = vpack.c.b16 %v2912, %v2910
    %v2947 = vpack.c.b16 %v2915, %v2913
    %v2948 = vpack.c.b16 %v2916, %v2914
    %2981 = vmatprep.subr.bf16.mxu0 %v2932
    %2982 = vmatpush1.bf16.msra.mxu0 %v2931
    %2983 = vmatprep.subr.bf16.mxu0 %v2930
    %2984 = vmatpush1.bf16.msra.mxu0 %v2929
    %2985 = vmatprep.subr.bf16.mxu0 %v2928
    %2986 = vmatpush1.bf16.msra.mxu0 %v2927
    %2987 = vmatprep.subr.bf16.mxu0 %v2926
    %2988 = vmatpush1.bf16.msra.mxu0 %v2925
    %2989 = vmatprep.subr.bf16.mxu0 %v2924
    %2990 = vmatpush1.bf16.msra.mxu0 %v2923
    %2991 = vmatprep.subr.bf16.mxu0 %v2922
    %2992 = vmatpush1.bf16.msra.mxu0 %v2921
    %2993 = vmatprep.subr.bf16.mxu0 %v2920
    %2994 = vmatpush1.bf16.msra.mxu0 %v2919
    %2995 = vmatprep.subr.bf16.mxu0 %v2918
    %2996 = vmatpush1.bf16.msra.mxu0 %v2917
    %2997 = vmatprep.subr.bf16.mxu0 %v2948
    %2998 = vmatpush2.bf16.msra.mxu0 %v2947
    %2999 = vmatprep.subr.bf16.mxu0 %v2946
    %3000 = vmatpush2.bf16.msra.mxu0 %v2945
    %3001 = vmatprep.subr.bf16.mxu0 %v2944
    %3002 = vmatpush2.bf16.msra.mxu0 %v2943
    %3003 = vmatprep.subr.bf16.mxu0 %v2942
    %3004 = vmatpush2.bf16.msra.mxu0 %v2941
    %3005 = vmatprep.subr.bf16.mxu0 %v2940
    %3006 = vmatpush2.bf16.msra.mxu0 %v2939
    %3007 = vmatprep.subr.bf16.mxu0 %v2938
    %3008 = vmatpush2.bf16.msra.mxu0 %v2937
    %3009 = vmatprep.subr.bf16.mxu0 %v2936
    %3010 = vmatpush2.bf16.msra.mxu0 %v2935
    %3011 = vmatprep.subr.bf16.mxu0 %v2934
    %3012 = vmatpush2.bf16.msra.mxu0 %v2933
    %3013 = vmatprep.mubr.bf16.mxu0 %v2250
    %3014 = vmatmul.mubr.bf16.gmra.mxu0 %v2249
    %v3015 = vpop.f32.mrf.mxu0
    %v3016 = vadd.f32 0.0, %v3015
    %v3017 = vpop.f32.mrf.mxu0
    %v3018 = vadd.f32 0.0, %v3017
    %v3019 = vpop.f32.mrf.mxu0
    %v3020 = vadd.f32 0.0, %v3019
    %v3021 = vpop.f32.mrf.mxu0
    %v3022 = vadd.f32 0.0, %v3021
    %3023 = vmatprep.mubr.bf16.mxu0 %v2252
    %3024 = vmatmul.mubr.bf16.gmra.mxu0 %v2251
    %v3025 = vpop.f32.mrf.mxu0
    %v3026 = vadd.f32 0.0, %v3025
    %v3027 = vpop.f32.mrf.mxu0
    %v3028 = vadd.f32 0.0, %v3027
    %v3029 = vpop.f32.mrf.mxu0
    %v3030 = vadd.f32 0.0, %v3029
    %v3031 = vpop.f32.mrf.mxu0
    %v3032 = vadd.f32 0.0, %v3031
    %3033 = vmatprep.mubr.bf16.mxu0 %v2254
    %3034 = vmatmul.mubr.bf16.gmra.mxu0 %v2253
    %v3035 = vpop.f32.mrf.mxu0
    %v3036 = vadd.f32 0.0, %v3035
    %v3037 = vpop.f32.mrf.mxu0
    %v3038 = vadd.f32 0.0, %v3037
    %v3039 = vpop.f32.mrf.mxu0
    %v3040 = vadd.f32 0.0, %v3039
    %v3041 = vpop.f32.mrf.mxu0
    %v3042 = vadd.f32 0.0, %v3041
    %3043 = vmatprep.mubr.bf16.mxu0 %v2256
    %3044 = vmatmul.mubr.bf16.gmra.mxu0 %v2255
    %v3045 = vpop.f32.mrf.mxu0
    %v3046 = vadd.f32 0.0, %v3045
    %v3047 = vpop.f32.mrf.mxu0
    %v3048 = vadd.f32 0.0, %v3047
    %v3049 = vpop.f32.mrf.mxu0
    %v3050 = vadd.f32 0.0, %v3049
    %v3051 = vpop.f32.mrf.mxu0
    %v3052 = vadd.f32 0.0, %v3051
    %3053 = vdwg.mxu0
    %v3054 = vadd.f32 %v2750, %v3016
    %v3055 = vadd.f32 %v2752, %v3018
    %v3056 = vadd.f32 %v2754, %v3020
    %v3057 = vadd.f32 %v2756, %v3022
    %v3058 = vadd.f32 %v2760, %v3026
    %v3059 = vadd.f32 %v2762, %v3028
    %v3060 = vadd.f32 %v2764, %v3030
    %v3061 = vadd.f32 %v2766, %v3032
    %v3062 = vadd.f32 %v2770, %v3036
    %v3063 = vadd.f32 %v2772, %v3038
    %v3064 = vadd.f32 %v2774, %v3040
    %v3065 = vadd.f32 %v2776, %v3042
    %v3066 = vadd.f32 %v2780, %v3046
    %v3067 = vadd.f32 %v2782, %v3048
    %v3068 = vadd.f32 %v2784, %v3050
    %v3069 = vadd.f32 %v2786, %v3052
    %v3070 = vld [vmem:[%s15] sm:$0x3]
    %v3072 = vlaneseq
    %v3073 = vshrl.u32 %v3072, 7
    %v3074 = vsub.s32 0, %v3073
    %v3075 = vrot.slane %v3070, %v3074
    %v3076 = vlaneseq
    %v3077 = vshrl.u32 %v3076, 7
    %v3078 = vsub.s32 1, %v3077
    %v3079 = vrot.slane %v3070, %v3078
    %v3082 = vadd.f32 %v3054, %v3075
    %v3083 = vadd.f32 %v3055, %v3079
    %v3084 = vadd.f32 %v3056, %v3075
    %v3085 = vadd.f32 %v3057, %v3079
    %v3086 = vadd.f32 %v3058, %v3075
    %v3087 = vadd.f32 %v3059, %v3079
    %v3088 = vadd.f32 %v3060, %v3075
    %v3089 = vadd.f32 %v3061, %v3079
    %v3090 = vadd.f32 %v3062, %v3075
    %v3091 = vadd.f32 %v3063, %v3079
    %v3092 = vadd.f32 %v3064, %v3075
    %v3093 = vadd.f32 %v3065, %v3079
    %v3094 = vadd.f32 %v3066, %v3075
    %v3095 = vadd.f32 %v3067, %v3079
    %v3096 = vadd.f32 %v3068, %v3075
    %v3097 = vadd.f32 %v3069, %v3079
    %v3098 = vpack.c.bf16 %v174, %v173
    %v3099 = vpack.c.bf16 %v176, %v175
    %v3100 = vpack.c.bf16 %v178, %v177
    %v3101 = vpack.c.bf16 %v180, %v179
    %v3102 = vld [vmem:[#allocation16] sm:$0xff]
    %v3103 = vld [vmem:[#allocation16 + $0x8] sm:$0xff]
    %v3104 = vld [vmem:[#allocation16 + $0x10] sm:$0xff]
    %v3105 = vld [vmem:[#allocation16 + $0x18] sm:$0xff]
    %v3106 = vld [vmem:[#allocation16 + $0x20] sm:$0xff]
    %v3107 = vld [vmem:[#allocation16 + $0x28] sm:$0xff]
    %v3108 = vld [vmem:[#allocation16 + $0x30] sm:$0xff]
    %v3109 = vld [vmem:[#allocation16 + $0x38] sm:$0xff]
    %v3110 = vld [vmem:[#allocation16 + $0x40] sm:$0xff]
    %v3111 = vld [vmem:[#allocation16 + $0x48] sm:$0xff]
    %v3112 = vld [vmem:[#allocation16 + $0x50] sm:$0xff]
    %v3113 = vld [vmem:[#allocation16 + $0x58] sm:$0xff]
    %v3114 = vld [vmem:[#allocation16 + $0x60] sm:$0xff]
    %v3115 = vld [vmem:[#allocation16 + $0x68] sm:$0xff]
    %v3116 = vld [vmem:[#allocation16 + $0x70] sm:$0xff]
    %v3117 = vld [vmem:[#allocation16 + $0x78] sm:$0xff]
    %v3134 = vunpack.c.l.b16 %v3102
    %v3135 = vunpack.c.h.b16 %v3102
    %v3136 = vunpack.c.l.b16 %v3103
    %v3137 = vunpack.c.h.b16 %v3103
    %v3138 = vunpack.c.l.b16 %v3104
    %v3139 = vunpack.c.h.b16 %v3104
    %v3140 = vunpack.c.l.b16 %v3105
    %v3141 = vunpack.c.h.b16 %v3105
    %v3142 = vunpack.c.l.b16 %v3106
    %v3143 = vunpack.c.h.b16 %v3106
    %v3144 = vunpack.c.l.b16 %v3107
    %v3145 = vunpack.c.h.b16 %v3107
    %v3146 = vunpack.c.l.b16 %v3108
    %v3147 = vunpack.c.h.b16 %v3108
    %v3148 = vunpack.c.l.b16 %v3109
    %v3149 = vunpack.c.h.b16 %v3109
    %v3150 = vunpack.c.l.b16 %v3110
    %v3151 = vunpack.c.h.b16 %v3110
    %v3152 = vunpack.c.l.b16 %v3111
    %v3153 = vunpack.c.h.b16 %v3111
    %v3154 = vunpack.c.l.b16 %v3112
    %v3155 = vunpack.c.h.b16 %v3112
    %v3156 = vunpack.c.l.b16 %v3113
    %v3157 = vunpack.c.h.b16 %v3113
    %v3158 = vunpack.c.l.b16 %v3114
    %v3159 = vunpack.c.h.b16 %v3114
    %v3160 = vunpack.c.l.b16 %v3115
    %v3161 = vunpack.c.h.b16 %v3115
    %v3162 = vunpack.c.l.b16 %v3116
    %v3163 = vunpack.c.h.b16 %v3116
    %v3164 = vunpack.c.l.b16 %v3117
    %v3165 = vunpack.c.h.b16 %v3117
    %v3166 = vpack.c.b16 %v3136, %v3134
    %v3167 = vpack.c.b16 %v3137, %v3135
    %v3168 = vpack.c.b16 %v3140, %v3138
    %v3169 = vpack.c.b16 %v3141, %v3139
    %v3170 = vpack.c.b16 %v3144, %v3142
    %v3171 = vpack.c.b16 %v3145, %v3143
    %v3172 = vpack.c.b16 %v3148, %v3146
    %v3173 = vpack.c.b16 %v3149, %v3147
    %v3174 = vpack.c.b16 %v3152, %v3150
    %v3175 = vpack.c.b16 %v3153, %v3151
    %v3176 = vpack.c.b16 %v3156, %v3154
    %v3177 = vpack.c.b16 %v3157, %v3155
    %v3178 = vpack.c.b16 %v3160, %v3158
    %v3179 = vpack.c.b16 %v3161, %v3159
    %v3180 = vpack.c.b16 %v3164, %v3162
    %v3181 = vpack.c.b16 %v3165, %v3163
    %3198 = vmatprep.subr.bf16.mxu0 %v3181
    %3199 = vmatpush1.bf16.msra.mxu0 %v3180
    %3200 = vmatprep.subr.bf16.mxu0 %v3179
    %3201 = vmatpush1.bf16.msra.mxu0 %v3178
    %3202 = vmatprep.subr.bf16.mxu0 %v3177
    %3203 = vmatpush1.bf16.msra.mxu0 %v3176
    %3204 = vmatprep.subr.bf16.mxu0 %v3175
    %3205 = vmatpush1.bf16.msra.mxu0 %v3174
    %3206 = vmatprep.subr.bf16.mxu0 %v3173
    %3207 = vmatpush1.bf16.msra.mxu0 %v3172
    %3208 = vmatprep.subr.bf16.mxu0 %v3171
    %3209 = vmatpush1.bf16.msra.mxu0 %v3170
    %3210 = vmatprep.subr.bf16.mxu0 %v3169
    %3211 = vmatpush1.bf16.msra.mxu0 %v3168
    %3212 = vmatprep.subr.bf16.mxu0 %v3167
    %3213 = vmatpush1.bf16.msra.mxu0 %v3166
    %3214 = vmatprep.subr.bf16.mxu0 0
    %3215 = vmatpush2.bf16.msra.mxu0 0
    %3216 = vmatprep.subr.bf16.mxu0 0
    %3217 = vmatpush2.bf16.msra.mxu0 0
    %3218 = vmatprep.subr.bf16.mxu0 0
    %3219 = vmatpush2.bf16.msra.mxu0 0
    %3220 = vmatprep.subr.bf16.mxu0 0
    %3221 = vmatpush2.bf16.msra.mxu0 0
    %3222 = vmatprep.subr.bf16.mxu0 0
    %3223 = vmatpush2.bf16.msra.mxu0 0
    %3224 = vmatprep.subr.bf16.mxu0 0
    %3225 = vmatpush2.bf16.msra.mxu0 0
    %3226 = vmatprep.subr.bf16.mxu0 0
    %3227 = vmatpush2.bf16.msra.mxu0 0
    %3228 = vmatprep.subr.bf16.mxu0 0
    %3229 = vmatpush2.bf16.msra.mxu0 0
    %3230 = vmatprep.mubr.bf16.mxu0 0
    %3231 = vmatmul.mubr.bf16.gmra.mxu0 %v3098
    %v3232 = vpop.f32.mrf.mxu0
    %v3233 = vadd.f32 0.0, %v3232
    %v3234 = vpop.f32.mrf.mxu0
    %v3235 = vadd.f32 0.0, %v3234
    %v3236 = vpop.f32.mrf.mxu0
    %v3237 = vadd.f32 0.0, %v3236
    %v3238 = vpop.f32.mrf.mxu0
    %v3239 = vadd.f32 0.0, %v3238
    %3240 = vmatprep.mubr.bf16.mxu0 0
    %3241 = vmatmul.mubr.bf16.gmra.mxu0 %v3099
    %v3242 = vpop.f32.mrf.mxu0
    %v3243 = vadd.f32 0.0, %v3242
    %v3244 = vpop.f32.mrf.mxu0
    %v3245 = vadd.f32 0.0, %v3244
    %v3246 = vpop.f32.mrf.mxu0
    %v3247 = vadd.f32 0.0, %v3246
    %v3248 = vpop.f32.mrf.mxu0
    %v3249 = vadd.f32 0.0, %v3248
    %3250 = vmatprep.mubr.bf16.mxu0 0
    %3251 = vmatmul.mubr.bf16.gmra.mxu0 %v3100
    %v3252 = vpop.f32.mrf.mxu0
    %v3253 = vadd.f32 0.0, %v3252
    %v3254 = vpop.f32.mrf.mxu0
    %v3255 = vadd.f32 0.0, %v3254
    %v3256 = vpop.f32.mrf.mxu0
    %v3257 = vadd.f32 0.0, %v3256
    %v3258 = vpop.f32.mrf.mxu0
    %v3259 = vadd.f32 0.0, %v3258
    %3260 = vmatprep.mubr.bf16.mxu0 0
    %3261 = vmatmul.mubr.bf16.gmra.mxu0 %v3101
    %v3262 = vpop.f32.mrf.mxu0
    %v3263 = vadd.f32 0.0, %v3262
    %v3264 = vpop.f32.mrf.mxu0
    %v3265 = vadd.f32 0.0, %v3264
    %v3266 = vpop.f32.mrf.mxu0
    %v3267 = vadd.f32 0.0, %v3266
    %v3268 = vpop.f32.mrf.mxu0
    %v3269 = vadd.f32 0.0, %v3268
    %3270 = vdwg.mxu0
    %v3271 = vld [vmem:[%s17] sm:$0x3]
    %v3273 = vlaneseq
    %v3274 = vshrl.u32 %v3273, 7
    %v3275 = vsub.s32 0, %v3274
    %v3276 = vrot.slane %v3271, %v3275
    %v3277 = vlaneseq
    %v3278 = vshrl.u32 %v3277, 7
    %v3279 = vsub.s32 1, %v3278
    %v3280 = vrot.slane %v3271, %v3279
    %v3283 = vadd.f32 %v3233, %v3276
    %v3284 = vadd.f32 %v3235, %v3280
    %v3285 = vadd.f32 %v3237, %v3276
    %v3286 = vadd.f32 %v3239, %v3280
    %v3287 = vadd.f32 %v3243, %v3276
    %v3288 = vadd.f32 %v3245, %v3280
    %v3289 = vadd.f32 %v3247, %v3276
    %v3290 = vadd.f32 %v3249, %v3280
    %v3291 = vadd.f32 %v3253, %v3276
    %v3292 = vadd.f32 %v3255, %v3280
    %v3293 = vadd.f32 %v3257, %v3276
    %v3294 = vadd.f32 %v3259, %v3280
    %v3295 = vadd.f32 %v3263, %v3276
    %v3296 = vadd.f32 %v3265, %v3280
    %v3297 = vadd.f32 %v3267, %v3276
    %v3298 = vadd.f32 %v3269, %v3280
    %v3299 = vadd.f32 %v3082, %v3283
    %v3300 = vadd.f32 %v3083, %v3284
    %v3301 = vadd.f32 %v3084, %v3285
    %v3302 = vadd.f32 %v3085, %v3286
    %v3303 = vadd.f32 %v3086, %v3287
    %v3304 = vadd.f32 %v3087, %v3288
    %v3305 = vadd.f32 %v3088, %v3289
    %v3306 = vadd.f32 %v3089, %v3290
    %v3307 = vadd.f32 %v3090, %v3291
    %v3308 = vadd.f32 %v3091, %v3292
    %v3309 = vadd.f32 %v3092, %v3293
    %v3310 = vadd.f32 %v3093, %v3294
    %v3311 = vadd.f32 %v3094, %v3295
    %v3312 = vadd.f32 %v3095, %v3296
    %v3313 = vadd.f32 %v3096, %v3297
    %v3314 = vadd.f32 %v3097, %v3298
    %3315 = vst [vmem:[#allocation17] sm:$0xff] %v3299
    %3316 = vst [vmem:[#allocation17 + $0x8] sm:$0xff] %v3300
    %3317 = vst [vmem:[#allocation17 + $0x10] sm:$0xff] %v3301
    %3318 = vst [vmem:[#allocation17 + $0x18] sm:$0xff] %v3302
    %3319 = vst [vmem:[#allocation17 + $0x20] sm:$0xff] %v3303
    %3320 = vst [vmem:[#allocation17 + $0x28] sm:$0xff] %v3304
    %3321 = vst [vmem:[#allocation17 + $0x30] sm:$0xff] %v3305
    %3322 = vst [vmem:[#allocation17 + $0x38] sm:$0xff] %v3306
    %3323 = vst [vmem:[#allocation17 + $0x40] sm:$0xff] %v3307
    %3324 = vst [vmem:[#allocation17 + $0x48] sm:$0xff] %v3308
    %3325 = vst [vmem:[#allocation17 + $0x50] sm:$0xff] %v3309
    %3326 = vst [vmem:[#allocation17 + $0x58] sm:$0xff] %v3310
    %3327 = vst [vmem:[#allocation17 + $0x60] sm:$0xff] %v3311
    %3328 = vst [vmem:[#allocation17 + $0x68] sm:$0xff] %v3312
    %3329 = vst [vmem:[#allocation17 + $0x70] sm:$0xff] %v3313
    %3330 = vst [vmem:[#allocation17 + $0x78] sm:$0xff] %v3314
    // Predicated region
    $region110: #{tpu_custom_call.1} parent=1 // pred_check
      _
    $region111: #{tpu_custom_call.1} parent=1 // pred_check_branch
      %3332 = sbr.rel (0) target = $region113
    $region112: #{tpu_custom_call.1} parent=1 // pred_region
      %s3334 = ssub.s32 2048, 2048
      %3335 = vsyncadd [#allocation4], %s3334
      %s3336 = sshll.u32 [#allocation17], 4
      %s3337 = int_to_ptr.vmem [resolvable:$true] %s3336
      %3342 = dma.vmem_to_hbm [thread:$0]  %s3337, 2048, %s18, [#allocation4], 256, 256, 16
    $region113: #{tpu_custom_call.1} parent=1 // pred_fallthru
      _
    // Predicated region
    $region114: #{tpu_custom_call.1} parent=1 // pred_check
      _
    $region115: #{tpu_custom_call.1} parent=1 // pred_check_branch
      %3344 = sbr.rel (0) target = $region117
    $region116: #{tpu_custom_call.1} parent=1 // pred_region
      %3345 = dma.done [#allocation4], 2048
    $region117: #{tpu_custom_call.1} parent=1 // pred_fallthru
      _
    %3346 = vsyncpa [#allocation3], 1
    %3347 = vsyncpa [#allocation6], 1
    %3348 = vsyncpa [#allocation9], 1
    %3349 = vsyncpa [#allocation12], 1
    %3350 = vsyncpa [#allocation15], 1
    %3351 = vsyncpa [#allocation4], 1

</llo_original>
